<compile_context>
chip_gen: v5e
topology: v5e:2x2
jax: 0.10.0
libtpu: 0.0.40
codegen_flags: <defaults>
</compile_context>

<pallas_src>
import functools

import jax
import jax.numpy as jnp
import numpy as np
from jax.experimental import pallas as pl
from jax.experimental.pallas import tpu as pltpu

EPS = 1e-5


# ----------------------------- tiling helpers ------------------------------ #

def _pick_tile_h(H, W, max_rows, n_batch):
    """Largest TH dividing H with TH*W <= max_rows; prefers TH*W % 16 == 0 (bf16 sublane
    packing) and, for N==1, at least 2 row tiles (v7x has 2 TensorCores)."""
    for mod in (16, 8):
        cand = [th for th in range(1, H + 1)
                if H % th == 0 and th * W <= max_rows and (th * W) % mod == 0]
        if cand:
            if n_batch == 1:
                c2 = [th for th in cand if H // th >= 2]
                if c2:
                    return max(c2)
            return max(cand)
    if n_batch > 1 and (H * W) % 8 != 0:
        raise ValueError(f"cannot tile H={H}, W={W} under the (8,128) block constraint; "
                         f"pad the spatial dims")
    return H


def _pick_tile_rows(n_rows, max_rows, n_batch):
    """Largest divisor of n_rows <= max_rows; prefers multiples of 16 and >= 2 tiles."""
    for mod in (16, 8):
        cand = [t for t in range(1, n_rows + 1)
                if n_rows % t == 0 and t <= max_rows and t % mod == 0]
        if cand:
            if n_batch == 1:
                c2 = [t for t in cand if n_rows // t >= 2]
                if c2:
                    return max(c2)
            return max(cand)
    if n_batch > 1 and n_rows % 8 != 0:
        raise ValueError(f"cannot tile HW={n_rows} under the (8,128) block constraint")
    return n_rows


def _vmem_limit(est_bytes):
    return int(min(max(2 * est_bytes + (4 << 20), 32 << 20), 64 << 20))


# ----------------------------- Pallas kernels ------------------------------ #

def _make_conv_kernel(TH, W, Cin, Cout, fuse_in_bn_relu):
    """Tiled 3x3 same-padded conv (padding + im2col done in-kernel).

    body_ref : (1, TH, W, Cin)  -- un-padded input rows [t*TH, t*TH+TH)
    top_ref  : (1, 1, W, Cin)   -- input row t*TH-1 (clamped; masked to 0 when t == 0)
    bot_ref  : (1, 1, W, Cin)   -- input row t*TH+TH (clamped; masked to 0 when last tile)
    w_ref    : (9*Cin, Cout) bf16
    sc/sh    : (1, Cin) f32     -- fused BN scale/shift applied to the INPUT (prev layer)
    y_ref    : (TH*W, Cout)     -- raw conv output tile (bf16 in HBM)
    st_ref   : (1, 2, Cout) f32 -- per-tile (sum, sumsq) for the global BN stats
    win_ref  : (TH+2, W+2, Cin) bf16 VMEM -- zero-padded, BN+ReLU'd staging window
    col_ref  : (TH*W, 9*Cin)   bf16 VMEM -- im2col buffer (one MXU matmul, K = 9*Cin)
    """
    Wp = W + 2
    THW = TH * W

    def kernel(body_ref, top_ref, bot_ref, w_ref, sc_ref, sh_ref,
               y_ref, st_ref, win_ref, col_ref):
        t = pl.program_id(1)
        last_t = pl.num_programs(1) - 1

        def xform(v):
            v = v.astype(jnp.float32)
            if fuse_in_bn_relu:
                # previous layer's BN + ReLU fused into this conv's input staging
                v = jnp.maximum(v * sc_ref[...] + sh_ref[...], 0.0)
            return v.astype(jnp.bfloat16)

        body = xform(body_ref[0])                       # (TH, W, Cin) bf16
        top = xform(top_ref[0, 0])                      # (W, Cin)
        bot = xform(bot_ref[0, 0])                      # (W, Cin)
        # image-border rows -> zeros (padding is in the post-transform domain)
        top = jnp.where(t == 0, jnp.zeros_like(top), top)
        bot = jnp.where(t == last_t, jnp.zeros_like(bot), bot)

        # stage the zero-padded window: border columns, then halo rows + body interior
        zcol = jnp.zeros((TH + 2, 1, Cin), jnp.bfloat16)
        win_ref[:, 0:1, :] = zcol
        win_ref[:, Wp - 1:Wp, :] = zcol
        win_ref[0:1, 1:Wp - 1, :] = top[None]
        win_ref[1:TH + 1, 1:Wp - 1, :] = body
        win_ref[TH + 1:TH + 2, 1:Wp - 1, :] = bot[None]

        # im2col: 9 bf16 strided copies into (TH*W, 9*Cin)
        for ky in range(3):
            for kx in range(3):
                k = ky * 3 + kx
                patch = win_ref[ky:ky + TH, kx:kx + W, :].reshape(THW, Cin)
                col_ref[:, k * Cin:(k + 1) * Cin] = patch

        # single MXU matmul, f32 accumulation
        acc = jnp.dot(col_ref[...], w_ref[...], preferred_element_type=jnp.float32)
        y_ref[...] = acc.astype(y_ref.dtype)

        s = jnp.sum(acc, axis=0, keepdims=True)          # (1, Cout)
        ss = jnp.sum(acc * acc, axis=0, keepdims=True)   # (1, Cout)
        st_ref[0] = jnp.concatenate([s, ss], axis=0)     # (2, Cout)

    return kernel


def _pool_kernel(y_ref, sc_ref, sh_ref, o_ref):
    """SCSE pass 1: per-tile channel partial sums of x = relu(BN(y))."""
    x = jnp.maximum(y_ref[0].astype(jnp.float32) * sc_ref[...] + sh_ref[...], 0.0)
    o_ref[0, 0] = jnp.sum(x, axis=0, keepdims=True)      # (1, C)


def _gate_kernel(y_ref, sc_ref, sh_ref, s_ref, wc_ref, bc_ref, o_ref):
    """SCSE pass 2: x = relu(BN(y)); out = x * (s + sigmoid(x . wc + bc))  (factored gate)."""
    x = jnp.maximum(y_ref[0].astype(jnp.float32) * sc_ref[...] + sh_ref[...], 0.0)
    # channel gate logit as a VPU multiply + lane reduction (no (C,1) MXU matmul)
    logit = jnp.sum(x * wc_ref[...], axis=-1, keepdims=True) + bc_ref[...]
    o_ref[0] = (x * (s_ref[0] + jax.nn.sigmoid(logit))).astype(o_ref.dtype)


# ------------------------------- JAX glue ---------------------------------- #

def upsample_bilinear_x2_align_corners(x):
    """x: NHWC.  Matches F.upsample(scale_factor=2, mode='bilinear', align_corners=True)."""
    N, H, W, C = x.shape

    def interp(v, n_in, n_out, axis):
        pos = jnp.linspace(0.0, n_in - 1.0, n_out)
        lo = jnp.floor(pos).astype(jnp.int32)
        hi = jnp.minimum(lo + 1, n_in - 1)
        w = (pos - lo.astype(pos.dtype)).astype(v.dtype)
        a = jnp.take(v, lo, axis=axis)
        b = jnp.take(v, hi, axis=axis)
        shape = [1] * v.ndim
        shape[axis] = n_out
        return a * (1.0 - w.reshape(shape)) + b * w.reshape(shape)

    x = interp(x, H, 2 * H, 1)
    x = interp(x, W, 2 * W, 2)
    return x


def conv3x3_bnstats(x, w_hwio, in_scale, in_shift, fuse_in_bn_relu,
                    max_tile_rows, out_dtype=jnp.bfloat16):
    """x: (N, H, W, Cin) UN-padded activation (zero padding happens in-kernel).
    Returns (y_raw (N*H*W, Cout) out_dtype, mean (Cout,), scale (Cout,)) — mean/scale are
    the BN batch statistics of the raw conv output."""
    N, H, W, Cin = x.shape
    Cout = w_hwio.shape[-1]
    TH = _pick_tile_h(H, W, max_tile_rows, N)
    HT = H // TH
    M = N * H * W
    THW = TH * W
    K = 9 * Cin

    wk = w_hwio.reshape(K, Cout).astype(jnp.bfloat16)
    kernel = _make_conv_kernel(TH, W, Cin, Cout, fuse_in_bn_relu)

    itm_in = jnp.dtype(x.dtype).itemsize
    itm_out = jnp.dtype(out_dtype).itemsize
    est = (2 * (THW + 2 * W) * Cin * itm_in          # double-buffered body + halo rows
           + 2 * K * Cout * 2                        # weights (bf16)
           + 2 * (THW * Cout * itm_out + 2 * Cout * 4)   # outputs
           + (TH + 2) * (W + 2) * Cin * 2            # window scratch (bf16)
           + THW * K * 2)                            # im2col scratch (bf16)

    y, st = pl.pallas_call(
        kernel,
        grid=(N, HT),
        in_specs=[
            pl.BlockSpec((1, TH, W, Cin), lambda n, t: (n, t, 0, 0)),
            # halo rows fetched from the same array (clamped at the image borders;
            # masked to zero in-kernel) — no host-side halo materialization.
            pl.BlockSpec((1, 1, W, Cin),
                         lambda n, t: (n, jnp.maximum(t * TH - 1, 0), 0, 0)),
            pl.BlockSpec((1, 1, W, Cin),
                         lambda n, t: (n, jnp.minimum(t * TH + TH, H - 1), 0, 0)),
            pl.BlockSpec((K, Cout), lambda n, t: (0, 0)),
            pl.BlockSpec((1, Cin), lambda n, t: (0, 0)),
            pl.BlockSpec((1, Cin), lambda n, t: (0, 0)),
        ],
        out_specs=[
            pl.BlockSpec((THW, Cout), lambda n, t: (n * HT + t, 0)),
            pl.BlockSpec((1, 2, Cout), lambda n, t: (n * HT + t, 0, 0)),
        ],
        out_shape=[
            jax.ShapeDtypeStruct((M, Cout), out_dtype),
            jax.ShapeDtypeStruct((N * HT, 2, Cout), jnp.float32),
        ],
        scratch_shapes=[
            pltpu.VMEM((TH + 2, W + 2, Cin), jnp.bfloat16),
            pltpu.VMEM((THW, K), jnp.bfloat16),
        ],
        compiler_params=pltpu.CompilerParams(
            dimension_semantics=("parallel", "parallel"),
            vmem_limit_bytes=_vmem_limit(est)),
    )(x, x, x, wk, in_scale, in_shift)

    # tiny cross-tile BN-stat finalize (C-sized) in plain JAX.
    # NOTE: E[x^2]-E[x]^2 in f32 is adequate here; switch to per-tile mean-centered
    # sums for very large M if cancellation becomes visible.
    ssum = jnp.sum(st[:, 0, :], axis=0)
    ssq = jnp.sum(st[:, 1, :], axis=0)
    mean = ssum / M
    var = jnp.maximum(ssq / M - mean * mean, 0.0)
    scale = jax.lax.rsqrt(var + EPS)
    return y, mean, scale


def scse_apply(y2, scale2, shift2, params, N, H, W, C, max_tile_rows):
    """SCSE on x2 = relu(y2*scale2 + shift2), fully tiled over HW (y2 stored bf16)."""
    HW = H * W
    y2r = y2.reshape(N, HW, C)
    THW = _pick_tile_rows(HW, max_tile_rows, N)
    T = HW // THW
    itm = jnp.dtype(y2r.dtype).itemsize

    # pass 1: tiled global-average-pool partial sums -> (N, T, 1, C), no row broadcast
    part = pl.pallas_call(
        _pool_kernel,
        grid=(N, T),
        in_specs=[
            pl.BlockSpec((1, THW, C), lambda n, t: (n, t, 0)),
            pl.BlockSpec((1, C), lambda n, t: (0, 0)),
            pl.BlockSpec((1, C), lambda n, t: (0, 0)),
        ],
        out_specs=pl.BlockSpec((1, 1, 1, C), lambda n, t: (n, t, 0, 0)),
        out_shape=jax.ShapeDtypeStruct((N, T, 1, C), jnp.float32),
        compiler_params=pltpu.CompilerParams(
            dimension_semantics=("parallel", "parallel"),
            vmem_limit_bytes=_vmem_limit(2 * THW * C * itm + 2 * C * 4)),
    )(y2r, scale2, shift2)
    pooled = jnp.sum(part[:, :, 0, :], axis=1) / HW                # (N, C)

    # SE bottleneck MLP: N x C, negligible work -> plain JAX (f32)
    h = jnp.maximum(pooled @ params["w1"] + params["b1"], 0.0)
    s = jax.nn.sigmoid(h @ params["w2"] + params["b2"])            # (N, C)
    s3 = s.reshape(N, 1, C)
    wc_row = params["wc"].reshape(1, C)

    # pass 2: tiled factored gating (conv2's BN+ReLU fused here as well)
    out = pl.pallas_call(
        _gate_kernel,
        grid=(N, T),
        in_specs=[
            pl.BlockSpec((1, THW, C), lambda n, t: (n, t, 0)),
            pl.BlockSpec((1, C), lambda n, t: (0, 0)),
            pl.BlockSpec((1, C), lambda n, t: (0, 0)),
            pl.BlockSpec((1, 1, C), lambda n, t: (n, 0, 0)),
            pl.BlockSpec((1, C), lambda n, t: (0, 0)),
            pl.BlockSpec((1, 1), lambda n, t: (0, 0)),
        ],
        out_specs=pl.BlockSpec((1, THW, C), lambda n, t: (n, t, 0)),
        out_shape=jax.ShapeDtypeStruct((N, HW, C), jnp.float32),
        compiler_params=pltpu.CompilerParams(
            dimension_semantics=("parallel", "parallel"),
            vmem_limit_bytes=_vmem_limit(2 * THW * C * (itm + 4) + 4 * C * 4)),
    )(y2r, scale2, shift2, s3, wc_row, params["bc"])
    return out.reshape(N, H, W, C)


def decoder_forward(x_nchw, e_nchw, params, *, conv_tile_rows=1024, scse_tile_rows=2048):
    x = jnp.transpose(x_nchw, (0, 2, 3, 1)).astype(jnp.float32)    # NCHW -> NHWC
    x = upsample_bilinear_x2_align_corners(x)
    if e_nchw is not None:
        e = jnp.transpose(e_nchw, (0, 2, 3, 1)).astype(jnp.float32)
        x = jnp.concatenate([x, e], axis=-1)                        # torch.cat([x, e], 1)
    # bf16 stream into conv1 — the conv matmul is bf16 anyway; halves the HBM pass.
    x = x.astype(jnp.bfloat16)
    N, H, W, Cin = x.shape
    C1 = params["w_conv1"].shape[-1]
    C2 = params["w_conv2"].shape[-1]

    # ---- ConvBn #1: conv on the UN-padded input (padding in-kernel); BN stats emitted,
    #      normalize+ReLU fused into conv2's input staging.
    ones_c = jnp.ones((1, Cin), jnp.float32)
    zeros_c = jnp.zeros((1, Cin), jnp.float32)
    y1, mean1, scale1 = conv3x3_bnstats(x, params["w_conv1"], ones_c, zeros_c,
                                        False, conv_tile_rows)

    # ---- ConvBn #2 with conv1's BN+ReLU fused into its input transform
    #      (shift = -mean*scale, so no extra HBM pass for the mean subtraction).
    y1r = y1.reshape(N, H, W, C1)
    sc1 = scale1.reshape(1, C1)
    sh1 = (-mean1 * scale1).reshape(1, C1)
    y2, mean2, scale2 = conv3x3_bnstats(y1r, params["w_conv2"], sc1, sh1,
                                        True, conv_tile_rows)

    # ---- SCSE (conv2's BN+ReLU fused into both SCSE passes)
    sc2 = scale2.reshape(1, C2)
    sh2 = (-mean2 * scale2).reshape(1, C2)
    out = scse_apply(y2, sc2, sh2, params, N, H, W, C2, scse_tile_rows)
    return jnp.transpose(out, (0, 3, 1, 2))                         # back to NCHW


# ------------------------- params (deterministic) --------------------------- #
# Mapping to PyTorch: w_conv[ky,kx,i,o] == conv.weight[o,i,ky,kx];
# w1 == linear_1.weight.T, w2 == linear_2.weight.T;
# wc == channel_gate.conv.weight.reshape(C,1), bc == its bias.

def init_params(key, in_channels, channels, out_channels, r=16):
    ks = jax.random.split(key, 8)
    rr = max(out_channels // r, 1)
    return {
        "w_conv1": 0.1 * jax.random.normal(ks[0], (3, 3, in_channels, channels), jnp.float32),
        "w_conv2": 0.1 * jax.random.normal(ks[1], (3, 3, channels, out_channels), jnp.float32),
        "w1": 0.3 * jax.random.normal(ks[2], (out_channels, rr), jnp.float32),
        "b1": 0.1 * jax.random.normal(ks[3], (1, rr), jnp.float32),
        "w2": 0.3 * jax.random.normal(ks[4], (rr, out_channels), jnp.float32),
        "b2": 0.1 * jax.random.normal(ks[5], (1, out_channels), jnp.float32),
        "wc": 0.3 * jax.random.normal(ks[6], (out_channels, 1), jnp.float32),
        "bc": 0.05 * jax.random.normal(ks[7], (1, 1), jnp.float32),
    }


# ------------------------- pure-JAX reference check ------------------------- #

def reference_decoder(x_nchw, e_nchw, params):
    x = jnp.transpose(x_nchw, (0, 2, 3, 1))
    x = upsample_bilinear_x2_align_corners(x)
    if e_nchw is not None:
        e = jnp.transpose(e_nchw, (0, 2, 3, 1))
        x = jnp.concatenate([x, e], axis=-1)

    def cbr(z, w):
        y = jax.lax.conv_general_dilated(
            z, w, (1, 1), ((1, 1), (1, 1)),
            dimension_numbers=("NHWC", "HWIO", "NHWC"),
            precision=jax.lax.Precision.HIGHEST)
        mean = jnp.mean(y, axis=(0, 1, 2), keepdims=True)
        var = jnp.mean((y - mean) ** 2, axis=(0, 1, 2), keepdims=True)
        return jnp.maximum((y - mean) / jnp.sqrt(var + EPS), 0.0)

    x = cbr(x, params["w_conv1"])
    x = cbr(x, params["w_conv2"])

    pooled = jnp.mean(x, axis=(1, 2))                               # (N, C)
    h = jnp.maximum(pooled @ params["w1"] + params["b1"], 0.0)
    s = jax.nn.sigmoid(h @ params["w2"] + params["b2"])             # (N, C)
    g1 = x * s[:, None, None, :]
    c = jax.nn.sigmoid(
        jnp.einsum("nhwc,cd->nhwd", x, params["wc"],
                   precision=jax.lax.Precision.HIGHEST) + params["bc"][0, 0])
    g2 = x * c
    return jnp.transpose(g1 + g2, (0, 3, 1, 2))


# ---------------------------------- main ------------------------------------ #

if __name__ == "__main__":
    key = jax.random.PRNGKey(0)
    kx, ke, kp = jax.random.split(key, 3)

    N, Cx, H, W = 2, 4, 8, 8          # x before upsample
    Ce = 4                            # skip-connection channels
    in_channels = Cx + Ce             # channels after concat = conv1 in_channels
    channels, out_channels = 16, 16   # out_channels // 16 == 1 for the SE bottleneck

    x = jax.random.normal(kx, (N, Cx, H, W), jnp.float32)
    e = jax.random.normal(ke, (N, Ce, 2 * H, 2 * W), jnp.float32)
    params = init_params(kp, in_channels, channels, out_channels)

    # small tile caps so the test exercises multi-tile conv (cross-tile BN stats, halo
    # fetch + in-kernel padding) and multi-tile SCSE pooling/gating paths.
    fwd = jax.jit(functools.partial(decoder_forward,
                                    conv_tile_rows=128, scse_tile_rows=128))
    out = jax.block_until_ready(fwd(x, e, params))
    assert out.shape == (N, out_channels, 2 * H, 2 * W)

    ref = jax.block_until_ready(reference_decoder(x, e, params))
    # kernel uses bf16 MXU operands and bf16 HBM intermediates (f32 accumulate / BN stats);
    # reference is f32 HIGHEST.
    np.testing.assert_allclose(np.asarray(out), np.asarray(ref), rtol=3e-2, atol=3e-2)

    print("KERNEL_OK")
</pallas_src>

<mosaic_0001>
module attributes {stable_mosaic.version = 11 : i64} {
  func.func @kernel(%arg0: i32, %arg1: i32, %arg2: memref<1x8x16x8xbf16, #tpu.memory_space<vmem>>, %arg3: memref<1x1x16x8xbf16, #tpu.memory_space<vmem>>, %arg4: memref<1x1x16x8xbf16, #tpu.memory_space<vmem>>, %arg5: memref<72x16xbf16, #tpu.memory_space<vmem>>, %arg6: memref<1x8xf32, #tpu.memory_space<vmem>>, %arg7: memref<1x8xf32, #tpu.memory_space<vmem>>, %arg8: memref<128x16xbf16, #tpu.memory_space<vmem>>, %arg9: memref<1x2x16xf32, #tpu.memory_space<vmem>>, %arg10: memref<10x18x8xbf16, #tpu.memory_space<vmem>>, %arg11: memref<128x72xbf16, #tpu.memory_space<vmem>>) attributes {dimension_semantics = [#tpu.dimension_semantics<parallel>, #tpu.dimension_semantics<parallel>], iteration_bounds = array<i64: 2, 2>, scalar_prefetch = 0 : i64, scratch_operands = 2 : i64, tpu.core_type = #tpu.core_type<tc>, window_params = [{transform_indices = @transform_0, window_bounds = array<i64: 1, 8, 16, 8>}, {transform_indices = @transform_1, window_bounds = array<i64: 1, 1, 16, 8>}, {transform_indices = @transform_2, window_bounds = array<i64: 1, 1, 16, 8>}, {pipeline_mode = #tpu.pipeline_mode<synchronous>, transform_indices = @transform_3, window_bounds = array<i64: 72, 16>}, {pipeline_mode = #tpu.pipeline_mode<synchronous>, transform_indices = @transform_4, window_bounds = array<i64: 1, 8>}, {pipeline_mode = #tpu.pipeline_mode<synchronous>, transform_indices = @transform_5, window_bounds = array<i64: 1, 8>}, {transform_indices = @transform_6, window_bounds = array<i64: 128, 16>}, {transform_indices = @transform_7, window_bounds = array<i64: 1, 2, 16>}]} {
    %c0 = arith.constant 0 : index
    %c0_0 = arith.constant 0 : index
    %c0_1 = arith.constant 0 : index
    %c0_2 = arith.constant 0 : index
    %0 = vector.load %arg2[%c0, %c0_0, %c0_1, %c0_2] : memref<1x8x16x8xbf16, #tpu.memory_space<vmem>>, vector<1x8x16x8xbf16>
    %1 = vector.shape_cast %0 : vector<1x8x16x8xbf16> to vector<8x16x8xbf16>
    %2 = arith.extf %1 : vector<8x16x8xbf16> to vector<8x16x8xf32>
    %3 = arith.truncf %2 : vector<8x16x8xf32> to vector<8x16x8xbf16>
    %c0_3 = arith.constant 0 : index
    %c0_4 = arith.constant 0 : index
    %c0_5 = arith.constant 0 : index
    %c0_6 = arith.constant 0 : index
    %4 = vector.load %arg3[%c0_3, %c0_4, %c0_5, %c0_6] : memref<1x1x16x8xbf16, #tpu.memory_space<vmem>>, vector<1x1x16x8xbf16>
    %5 = vector.shape_cast %4 : vector<1x1x16x8xbf16> to vector<16x8xbf16>
    %6 = arith.extf %5 : vector<16x8xbf16> to vector<16x8xf32>
    %7 = arith.truncf %6 : vector<16x8xf32> to vector<16x8xbf16>
    %c0_7 = arith.constant 0 : index
    %c0_8 = arith.constant 0 : index
    %c0_9 = arith.constant 0 : index
    %c0_10 = arith.constant 0 : index
    %8 = vector.load %arg4[%c0_7, %c0_8, %c0_9, %c0_10] : memref<1x1x16x8xbf16, #tpu.memory_space<vmem>>, vector<1x1x16x8xbf16>
    %9 = vector.shape_cast %8 : vector<1x1x16x8xbf16> to vector<16x8xbf16>
    %10 = arith.extf %9 : vector<16x8xbf16> to vector<16x8xf32>
    %11 = arith.truncf %10 : vector<16x8xf32> to vector<16x8xbf16>
    %c0_i32 = arith.constant 0 : i32
    %12 = arith.cmpi eq, %arg1, %c0_i32 : i32
    %cst = arith.constant 0.000000e+00 : bf16
    %13 = vector.broadcast %cst : bf16 to vector<16x8xbf16>
    %14 = arith.select %12, %13, %7 : vector<16x8xbf16>
    %c1_i32 = arith.constant 1 : i32
    %15 = arith.cmpi eq, %arg1, %c1_i32 : i32
    %cst_11 = arith.constant 0.000000e+00 : bf16
    %16 = vector.broadcast %cst_11 : bf16 to vector<16x8xbf16>
    %17 = arith.select %15, %16, %11 : vector<16x8xbf16>
    %cst_12 = arith.constant 0.000000e+00 : bf16
    %18 = vector.broadcast %cst_12 : bf16 to vector<10x1x8xbf16>
    %c0_13 = arith.constant 0 : index
    %c0_14 = arith.constant 0 : index
    %c0_15 = arith.constant 0 : index
    %19 = vector.load %arg10[%c0_13, %c0_14, %c0_15] : memref<10x18x8xbf16, #tpu.memory_space<vmem>>, vector<10x1x8xbf16>
    tpu.vector_store %arg10[%c0_13, %c0_14, %c0_15], %18 {strides = array<i32>} : memref<10x18x8xbf16, #tpu.memory_space<vmem>>, vector<10x1x8xbf16>,
    %c0_16 = arith.constant 0 : index
    %c17 = arith.constant 17 : index
    %c0_17 = arith.constant 0 : index
    %20 = vector.load %arg10[%c0_16, %c17, %c0_17] : memref<10x18x8xbf16, #tpu.memory_space<vmem>>, vector<10x1x8xbf16>
    tpu.vector_store %arg10[%c0_16, %c17, %c0_17], %18 {strides = array<i32>} : memref<10x18x8xbf16, #tpu.memory_space<vmem>>, vector<10x1x8xbf16>,
    %21 = vector.shape_cast %14 : vector<16x8xbf16> to vector<1x16x8xbf16>
    %c0_18 = arith.constant 0 : index
    %c1 = arith.constant 1 : index
    %c0_19 = arith.constant 0 : index
    %22 = vector.load %arg10[%c0_18, %c1, %c0_19] : memref<10x18x8xbf16, #tpu.memory_space<vmem>>, vector<1x16x8xbf16>
    tpu.vector_store %arg10[%c0_18, %c1, %c0_19], %21 {strides = array<i32>} : memref<10x18x8xbf16, #tpu.memory_space<vmem>>, vector<1x16x8xbf16>,
    %c1_20 = arith.constant 1 : index
    %c1_21 = arith.constant 1 : index
    %c0_22 = arith.constant 0 : index
    %23 = vector.load %arg10[%c1_20, %c1_21, %c0_22] : memref<10x18x8xbf16, #tpu.memory_space<vmem>>, vector<8x16x8xbf16>
    tpu.vector_store %arg10[%c1_20, %c1_21, %c0_22], %3 {strides = array<i32>} : memref<10x18x8xbf16, #tpu.memory_space<vmem>>, vector<8x16x8xbf16>,
    %24 = vector.shape_cast %17 : vector<16x8xbf16> to vector<1x16x8xbf16>
    %c9 = arith.constant 9 : index
    %c1_23 = arith.constant 1 : index
    %c0_24 = arith.constant 0 : index
    %25 = vector.load %arg10[%c9, %c1_23, %c0_24] : memref<10x18x8xbf16, #tpu.memory_space<vmem>>, vector<1x16x8xbf16>
    tpu.vector_store %arg10[%c9, %c1_23, %c0_24], %24 {strides = array<i32>} : memref<10x18x8xbf16, #tpu.memory_space<vmem>>, vector<1x16x8xbf16>,
    %c0_25 = arith.constant 0 : index
    %c0_26 = arith.constant 0 : index
    %c0_27 = arith.constant 0 : index
    %26 = vector.load %arg10[%c0_25, %c0_26, %c0_27] : memref<10x18x8xbf16, #tpu.memory_space<vmem>>, vector<8x16x8xbf16>
    %27 = vector.shape_cast %26 : vector<8x16x8xbf16> to vector<128x8xbf16>
    %c0_28 = arith.constant 0 : index
    %c0_29 = arith.constant 0 : index
    %28 = vector.load %arg11[%c0_28, %c0_29] : memref<128x72xbf16, #tpu.memory_space<vmem>>, vector<128x8xbf16>
    tpu.vector_store %arg11[%c0_28, %c0_29], %27 {strides = array<i32>} : memref<128x72xbf16, #tpu.memory_space<vmem>>, vector<128x8xbf16>,
    %c0_30 = arith.constant 0 : index
    %c1_31 = arith.constant 1 : index
    %c0_32 = arith.constant 0 : index
    %29 = vector.load %arg10[%c0_30, %c1_31, %c0_32] : memref<10x18x8xbf16, #tpu.memory_space<vmem>>, vector<8x16x8xbf16>
    %30 = vector.shape_cast %29 : vector<8x16x8xbf16> to vector<128x8xbf16>
    %c0_33 = arith.constant 0 : index
    %c8 = arith.constant 8 : index
    %31 = vector.load %arg11[%c0_33, %c8] : memref<128x72xbf16, #tpu.memory_space<vmem>>, vector<128x8xbf16>
    tpu.vector_store %arg11[%c0_33, %c8], %30 {strides = array<i32>} : memref<128x72xbf16, #tpu.memory_space<vmem>>, vector<128x8xbf16>,
    %c0_34 = arith.constant 0 : index
    %c2 = arith.constant 2 : index
    %c0_35 = arith.constant 0 : index
    %32 = vector.load %arg10[%c0_34, %c2, %c0_35] : memref<10x18x8xbf16, #tpu.memory_space<vmem>>, vector<8x16x8xbf16>
    %33 = vector.shape_cast %32 : vector<8x16x8xbf16> to vector<128x8xbf16>
    %c0_36 = arith.constant 0 : index
    %c16 = arith.constant 16 : index
    %34 = vector.load %arg11[%c0_36, %c16] : memref<128x72xbf16, #tpu.memory_space<vmem>>, vector<128x8xbf16>
    tpu.vector_store %arg11[%c0_36, %c16], %33 {strides = array<i32>} : memref<128x72xbf16, #tpu.memory_space<vmem>>, vector<128x8xbf16>,
    %c1_37 = arith.constant 1 : index
    %c0_38 = arith.constant 0 : index
    %c0_39 = arith.constant 0 : index
    %35 = vector.load %arg10[%c1_37, %c0_38, %c0_39] : memref<10x18x8xbf16, #tpu.memory_space<vmem>>, vector<8x16x8xbf16>
    %36 = vector.shape_cast %35 : vector<8x16x8xbf16> to vector<128x8xbf16>
    %c0_40 = arith.constant 0 : index
    %c24 = arith.constant 24 : index
    %37 = vector.load %arg11[%c0_40, %c24] : memref<128x72xbf16, #tpu.memory_space<vmem>>, vector<128x8xbf16>
    tpu.vector_store %arg11[%c0_40, %c24], %36 {strides = array<i32>} : memref<128x72xbf16, #tpu.memory_space<vmem>>, vector<128x8xbf16>,
    %c1_41 = arith.constant 1 : index
    %c1_42 = arith.constant 1 : index
    %c0_43 = arith.constant 0 : index
    %38 = vector.load %arg10[%c1_41, %c1_42, %c0_43] : memref<10x18x8xbf16, #tpu.memory_space<vmem>>, vector<8x16x8xbf16>
    %39 = vector.shape_cast %38 : vector<8x16x8xbf16> to vector<128x8xbf16>
    %c0_44 = arith.constant 0 : index
    %c32 = arith.constant 32 : index
    %40 = vector.load %arg11[%c0_44, %c32] : memref<128x72xbf16, #tpu.memory_space<vmem>>, vector<128x8xbf16>
    tpu.vector_store %arg11[%c0_44, %c32], %39 {strides = array<i32>} : memref<128x72xbf16, #tpu.memory_space<vmem>>, vector<128x8xbf16>,
    %c1_45 = arith.constant 1 : index
    %c2_46 = arith.constant 2 : index
    %c0_47 = arith.constant 0 : index
    %41 = vector.load %arg10[%c1_45, %c2_46, %c0_47] : memref<10x18x8xbf16, #tpu.memory_space<vmem>>, vector<8x16x8xbf16>
    %42 = vector.shape_cast %41 : vector<8x16x8xbf16> to vector<128x8xbf16>
    %c0_48 = arith.constant 0 : index
    %c40 = arith.constant 40 : index
    %43 = vector.load %arg11[%c0_48, %c40] : memref<128x72xbf16, #tpu.memory_space<vmem>>, vector<128x8xbf16>
    tpu.vector_store %arg11[%c0_48, %c40], %42 {strides = array<i32>} : memref<128x72xbf16, #tpu.memory_space<vmem>>, vector<128x8xbf16>,
    %c2_49 = arith.constant 2 : index
    %c0_50 = arith.constant 0 : index
    %c0_51 = arith.constant 0 : index
    %44 = vector.load %arg10[%c2_49, %c0_50, %c0_51] : memref<10x18x8xbf16, #tpu.memory_space<vmem>>, vector<8x16x8xbf16>
    %45 = vector.shape_cast %44 : vector<8x16x8xbf16> to vector<128x8xbf16>
    %c0_52 = arith.constant 0 : index
    %c48 = arith.constant 48 : index
    %46 = vector.load %arg11[%c0_52, %c48] : memref<128x72xbf16, #tpu.memory_space<vmem>>, vector<128x8xbf16>
    tpu.vector_store %arg11[%c0_52, %c48], %45 {strides = array<i32>} : memref<128x72xbf16, #tpu.memory_space<vmem>>, vector<128x8xbf16>,
    %c2_53 = arith.constant 2 : index
    %c1_54 = arith.constant 1 : index
    %c0_55 = arith.constant 0 : index
    %47 = vector.load %arg10[%c2_53, %c1_54, %c0_55] : memref<10x18x8xbf16, #tpu.memory_space<vmem>>, vector<8x16x8xbf16>
    %48 = vector.shape_cast %47 : vector<8x16x8xbf16> to vector<128x8xbf16>
    %c0_56 = arith.constant 0 : index
    %c56 = arith.constant 56 : index
    %49 = vector.load %arg11[%c0_56, %c56] : memref<128x72xbf16, #tpu.memory_space<vmem>>, vector<128x8xbf16>
    tpu.vector_store %arg11[%c0_56, %c56], %48 {strides = array<i32>} : memref<128x72xbf16, #tpu.memory_space<vmem>>, vector<128x8xbf16>,
    %c2_57 = arith.constant 2 : index
    %c2_58 = arith.constant 2 : index
    %c0_59 = arith.constant 0 : index
    %50 = vector.load %arg10[%c2_57, %c2_58, %c0_59] : memref<10x18x8xbf16, #tpu.memory_space<vmem>>, vector<8x16x8xbf16>
    %51 = vector.shape_cast %50 : vector<8x16x8xbf16> to vector<128x8xbf16>
    %c0_60 = arith.constant 0 : index
    %c64 = arith.constant 64 : index
    %52 = vector.load %arg11[%c0_60, %c64] : memref<128x72xbf16, #tpu.memory_space<vmem>>, vector<128x8xbf16>
    tpu.vector_store %arg11[%c0_60, %c64], %51 {strides = array<i32>} : memref<128x72xbf16, #tpu.memory_space<vmem>>, vector<128x8xbf16>,
    %c0_61 = arith.constant 0 : index
    %c0_62 = arith.constant 0 : index
    %53 = vector.load %arg11[%c0_61, %c0_62] : memref<128x72xbf16, #tpu.memory_space<vmem>>, vector<128x72xbf16>
    %c0_63 = arith.constant 0 : index
    %c0_64 = arith.constant 0 : index
    %54 = vector.load %arg5[%c0_63, %c0_64] : memref<72x16xbf16, #tpu.memory_space<vmem>>, vector<72x16xbf16>
    %cst_65 = arith.constant dense<0.000000e+00> : vector<128x16xf32>
    %55 = tpu.matmul %53, %54, %cst_65 {dimension_numbers = #tpu.dot_dimension_numbers<[1], [0], [0], [1], [0, 0, 1, 1], [], []>} : vector<128x72xbf16>, vector<72x16xbf16>, vector<128x16xf32> -> vector<128x16xf32>
    %56 = arith.truncf %55 : vector<128x16xf32> to vector<128x16xbf16>
    %c0_66 = arith.constant 0 : index
    %c0_67 = arith.constant 0 : index
    %57 = vector.load %arg8[%c0_66, %c0_67] : memref<128x16xbf16, #tpu.memory_space<vmem>>, vector<128x16xbf16>
    tpu.vector_store %arg8[%c0_66, %c0_67], %56 {strides = array<i32>} : memref<128x16xbf16, #tpu.memory_space<vmem>>, vector<128x16xbf16>,
    %cst_68 = arith.constant dense<0.000000e+00> : vector<16xf32>
    %58 = vector.multi_reduction <add>, %55, %cst_68 [0] : vector<128x16xf32> to vector<16xf32>
    %59 = vector.shape_cast %58 : vector<16xf32> to vector<1x16xf32>
    %60 = arith.mulf %55, %55 : vector<128x16xf32>
    %cst_69 = arith.constant dense<0.000000e+00> : vector<16xf32>
    %61 = vector.multi_reduction <add>, %60, %cst_69 [0] : vector<128x16xf32> to vector<16xf32>
    %62 = vector.shape_cast %61 : vector<16xf32> to vector<1x16xf32>
    %63 = tpu.concatenate %59, %62 in 0 : vector<1x16xf32>, vector<1x16xf32> -> vector<2x16xf32>
    %c0_70 = arith.constant 0 : index
    %c0_71 = arith.constant 0 : index
    %c0_72 = arith.constant 0 : index
    %64 = vector.load %arg9[%c0_70, %c0_71, %c0_72] : memref<1x2x16xf32, #tpu.memory_space<vmem>>, vector<1x2x16xf32>
    %65 = vector.shape_cast %64 : vector<1x2x16xf32> to vector<2x16xf32>
    %66 = vector.shape_cast %63 : vector<2x16xf32> to vector<1x2x16xf32>
    tpu.vector_store %arg9[%c0_70, %c0_71, %c0_72], %66 {strides = array<i32>} : memref<1x2x16xf32, #tpu.memory_space<vmem>>, vector<1x2x16xf32>,
    return
  }
  func.func @transform_0(%arg0: i32, %arg1: i32) -> (i32, i32, i32, i32) {
    %c0_i32 = arith.constant 0 : i32
    %c0_i32_0 = arith.constant 0 : i32
    %c0_i32_1 = arith.constant 0 : i32
    return %arg0, %arg1, %c0_i32, %c0_i32_0 : i32, i32, i32, i32
  }
  func.func @transform_1(%arg0: i32, %arg1: i32) -> (i32, i32, i32, i32) {
    %c8_i32 = arith.constant 8 : i32
    %0 = arith.muli %arg1, %c8_i32 : i32
    %c1_i32 = arith.constant 1 : i32
    %1 = arith.subi %0, %c1_i32 : i32
    %c0_i32 = arith.constant 0 : i32
    %2 = arith.maxsi %1, %c0_i32 : i32
    %c0_i32_0 = arith.constant 0 : i32
    %c0_i32_1 = arith.constant 0 : i32
    %c0_i32_2 = arith.constant 0 : i32
    return %arg0, %2, %c0_i32_0, %c0_i32_1 : i32, i32, i32, i32
  }
  func.func @transform_2(%arg0: i32, %arg1: i32) -> (i32, i32, i32, i32) {
    %c8_i32 = arith.constant 8 : i32
    %0 = arith.muli %arg1, %c8_i32 : i32
    %c8_i32_0 = arith.constant 8 : i32
    %1 = arith.addi %0, %c8_i32_0 : i32
    %c15_i32 = arith.constant 15 : i32
    %2 = arith.minsi %1, %c15_i32 : i32
    %c0_i32 = arith.constant 0 : i32
    %c0_i32_1 = arith.constant 0 : i32
    %c0_i32_2 = arith.constant 0 : i32
    return %arg0, %2, %c0_i32, %c0_i32_1 : i32, i32, i32, i32
  }
  func.func @transform_3(%arg0: i32, %arg1: i32) -> (i32, i32) {
    %c0_i32 = arith.constant 0 : i32
    %c0_i32_0 = arith.constant 0 : i32
    %c0_i32_1 = arith.constant 0 : i32
    return %c0_i32, %c0_i32_0 : i32, i32
  }
  func.func @transform_4(%arg0: i32, %arg1: i32) -> (i32, i32) {
    %c0_i32 = arith.constant 0 : i32
    %c0_i32_0 = arith.constant 0 : i32
    %c0_i32_1 = arith.constant 0 : i32
    return %c0_i32, %c0_i32_0 : i32, i32
  }
  func.func @transform_5(%arg0: i32, %arg1: i32) -> (i32, i32) {
    %c0_i32 = arith.constant 0 : i32
    %c0_i32_0 = arith.constant 0 : i32
    %c0_i32_1 = arith.constant 0 : i32
    return %c0_i32, %c0_i32_0 : i32, i32
  }
  func.func @transform_6(%arg0: i32, %arg1: i32) -> (i32, i32) {
    %c2_i32 = arith.constant 2 : i32
    %0 = arith.muli %arg0, %c2_i32 : i32
    %1 = arith.addi %0, %arg1 : i32
    %c0_i32 = arith.constant 0 : i32
    %c0_i32_0 = arith.constant 0 : i32
    return %1, %c0_i32 : i32, i32
  }
  func.func @transform_7(%arg0: i32, %arg1: i32) -> (i32, i32, i32) {
    %c2_i32 = arith.constant 2 : i32
    %0 = arith.muli %arg0, %c2_i32 : i32
    %1 = arith.addi %0, %arg1 : i32
    %c0_i32 = arith.constant 0 : i32
    %c0_i32_0 = arith.constant 0 : i32
    %c0_i32_1 = arith.constant 0 : i32
    return %1, %c0_i32, %c0_i32_0 : i32, i32, i32
  }
}

module attributes {stable_mosaic.version = 11 : i64} {
  func.func @_pool_kernel(%arg0: i32, %arg1: i32, %arg2: memref<1x128x16xbf16, #tpu.memory_space<vmem>>, %arg3: memref<1x16xf32, #tpu.memory_space<vmem>>, %arg4: memref<1x16xf32, #tpu.memory_space<vmem>>, %arg5: memref<1x1x1x16xf32, #tpu.memory_space<vmem>>) attributes {dimension_semantics = [#tpu.dimension_semantics<parallel>, #tpu.dimension_semantics<parallel>], iteration_bounds = array<i64: 2, 2>, scalar_prefetch = 0 : i64, scratch_operands = 0 : i64, tpu.core_type = #tpu.core_type<tc>, window_params = [{transform_indices = @transform_0, window_bounds = array<i64: 1, 128, 16>}, {pipeline_mode = #tpu.pipeline_mode<synchronous>, transform_indices = @transform_1, window_bounds = array<i64: 1, 16>}, {pipeline_mode = #tpu.pipeline_mode<synchronous>, transform_indices = @transform_2, window_bounds = array<i64: 1, 16>}, {transform_indices = @transform_3, window_bounds = array<i64: 1, 1, 1, 16>}]} {
    %c0 = arith.constant 0 : index
    %c0_0 = arith.constant 0 : index
    %c0_1 = arith.constant 0 : index
    %0 = vector.load %arg2[%c0, %c0_0, %c0_1] : memref<1x128x16xbf16, #tpu.memory_space<vmem>>, vector<1x128x16xbf16>
    %1 = vector.shape_cast %0 : vector<1x128x16xbf16> to vector<128x16xbf16>
    %2 = arith.extf %1 : vector<128x16xbf16> to vector<128x16xf32>
    %c0_2 = arith.constant 0 : index
    %c0_3 = arith.constant 0 : index
    %3 = vector.load %arg3[%c0_2, %c0_3] : memref<1x16xf32, #tpu.memory_space<vmem>>, vector<1x16xf32>
    %4 = vector.broadcast %3 : vector<1x16xf32> to vector<128x16xf32>
    %5 = arith.mulf %2, %4 : vector<128x16xf32>
    %c0_4 = arith.constant 0 : index
    %c0_5 = arith.constant 0 : index
    %6 = vector.load %arg4[%c0_4, %c0_5] : memref<1x16xf32, #tpu.memory_space<vmem>>, vector<1x16xf32>
    %7 = vector.broadcast %6 : vector<1x16xf32> to vector<128x16xf32>
    %8 = arith.addf %5, %7 : vector<128x16xf32>
    %cst = arith.constant 0.000000e+00 : f32
    %9 = vector.broadcast %cst : f32 to vector<128x16xf32>
    %10 = arith.maximumf %8, %9 : vector<128x16xf32>
    %cst_6 = arith.constant dense<0.000000e+00> : vector<16xf32>
    %11 = vector.multi_reduction <add>, %10, %cst_6 [0] : vector<128x16xf32> to vector<16xf32>
    %12 = vector.shape_cast %11 : vector<16xf32> to vector<1x16xf32>
    %c0_7 = arith.constant 0 : index
    %c0_8 = arith.constant 0 : index
    %c0_9 = arith.constant 0 : index
    %c0_10 = arith.constant 0 : index
    %13 = vector.load %arg5[%c0_7, %c0_8, %c0_9, %c0_10] : memref<1x1x1x16xf32, #tpu.memory_space<vmem>>, vector<1x1x1x16xf32>
    %14 = vector.shape_cast %13 : vector<1x1x1x16xf32> to vector<1x16xf32>
    %15 = vector.shape_cast %12 : vector<1x16xf32> to vector<1x1x1x16xf32>
    tpu.vector_store %arg5[%c0_7, %c0_8, %c0_9, %c0_10], %15 {strides = array<i32>} : memref<1x1x1x16xf32, #tpu.memory_space<vmem>>, vector<1x1x1x16xf32>,
    return
  }
  func.func @transform_0(%arg0: i32, %arg1: i32) -> (i32, i32, i32) {
    %c0_i32 = arith.constant 0 : i32
    %c0_i32_0 = arith.constant 0 : i32
    return %arg0, %arg1, %c0_i32 : i32, i32, i32
  }
  func.func @transform_1(%arg0: i32, %arg1: i32) -> (i32, i32) {
    %c0_i32 = arith.constant 0 : i32
    %c0_i32_0 = arith.constant 0 : i32
    %c0_i32_1 = arith.constant 0 : i32
    return %c0_i32, %c0_i32_0 : i32, i32
  }
  func.func @transform_2(%arg0: i32, %arg1: i32) -> (i32, i32) {
    %c0_i32 = arith.constant 0 : i32
    %c0_i32_0 = arith.constant 0 : i32
    %c0_i32_1 = arith.constant 0 : i32
    return %c0_i32, %c0_i32_0 : i32, i32
  }
  func.func @transform_3(%arg0: i32, %arg1: i32) -> (i32, i32, i32, i32) {
    %c0_i32 = arith.constant 0 : i32
    %c0_i32_0 = arith.constant 0 : i32
    %c0_i32_1 = arith.constant 0 : i32
    return %arg0, %arg1, %c0_i32, %c0_i32_0 : i32, i32, i32, i32
  }
}

module attributes {stable_mosaic.version = 11 : i64} {
  func.func @kernel(%arg0: i32, %arg1: i32, %arg2: memref<1x8x16x16xbf16, #tpu.memory_space<vmem>>, %arg3: memref<1x1x16x16xbf16, #tpu.memory_space<vmem>>, %arg4: memref<1x1x16x16xbf16, #tpu.memory_space<vmem>>, %arg5: memref<144x16xbf16, #tpu.memory_space<vmem>>, %arg6: memref<1x16xf32, #tpu.memory_space<vmem>>, %arg7: memref<1x16xf32, #tpu.memory_space<vmem>>, %arg8: memref<128x16xbf16, #tpu.memory_space<vmem>>, %arg9: memref<1x2x16xf32, #tpu.memory_space<vmem>>, %arg10: memref<10x18x16xbf16, #tpu.memory_space<vmem>>, %arg11: memref<128x144xbf16, #tpu.memory_space<vmem>>) attributes {dimension_semantics = [#tpu.dimension_semantics<parallel>, #tpu.dimension_semantics<parallel>], iteration_bounds = array<i64: 2, 2>, scalar_prefetch = 0 : i64, scratch_operands = 2 : i64, tpu.core_type = #tpu.core_type<tc>, window_params = [{transform_indices = @transform_0, window_bounds = array<i64: 1, 8, 16, 16>}, {transform_indices = @transform_1, window_bounds = array<i64: 1, 1, 16, 16>}, {transform_indices = @transform_2, window_bounds = array<i64: 1, 1, 16, 16>}, {pipeline_mode = #tpu.pipeline_mode<synchronous>, transform_indices = @transform_3, window_bounds = array<i64: 144, 16>}, {pipeline_mode = #tpu.pipeline_mode<synchronous>, transform_indices = @transform_4, window_bounds = array<i64: 1, 16>}, {pipeline_mode = #tpu.pipeline_mode<synchronous>, transform_indices = @transform_5, window_bounds = array<i64: 1, 16>}, {transform_indices = @transform_6, window_bounds = array<i64: 128, 16>}, {transform_indices = @transform_7, window_bounds = array<i64: 1, 2, 16>}]} {
    %c0 = arith.constant 0 : index
    %c0_0 = arith.constant 0 : index
    %c0_1 = arith.constant 0 : index
    %c0_2 = arith.constant 0 : index
    %0 = vector.load %arg2[%c0, %c0_0, %c0_1, %c0_2] : memref<1x8x16x16xbf16, #tpu.memory_space<vmem>>, vector<1x8x16x16xbf16>
    %1 = vector.shape_cast %0 : vector<1x8x16x16xbf16> to vector<8x16x16xbf16>
    %2 = arith.extf %1 : vector<8x16x16xbf16> to vector<8x16x16xf32>
    %c0_3 = arith.constant 0 : index
    %c0_4 = arith.constant 0 : index
    %3 = vector.load %arg6[%c0_3, %c0_4] : memref<1x16xf32, #tpu.memory_space<vmem>>, vector<1x16xf32>
    %4 = vector.shape_cast %3 : vector<1x16xf32> to vector<1x1x16xf32>
    %5 = vector.broadcast %4 : vector<1x1x16xf32> to vector<8x16x16xf32>
    %6 = arith.mulf %2, %5 : vector<8x16x16xf32>
    %c0_5 = arith.constant 0 : index
    %c0_6 = arith.constant 0 : index
    %7 = vector.load %arg7[%c0_5, %c0_6] : memref<1x16xf32, #tpu.memory_space<vmem>>, vector<1x16xf32>
    %8 = vector.shape_cast %7 : vector<1x16xf32> to vector<1x1x16xf32>
    %9 = vector.broadcast %8 : vector<1x1x16xf32> to vector<8x16x16xf32>
    %10 = arith.addf %6, %9 : vector<8x16x16xf32>
    %cst = arith.constant 0.000000e+00 : f32
    %11 = vector.broadcast %cst : f32 to vector<8x16x16xf32>
    %12 = arith.maximumf %10, %11 : vector<8x16x16xf32>
    %13 = arith.truncf %12 : vector<8x16x16xf32> to vector<8x16x16xbf16>
    %c0_7 = arith.constant 0 : index
    %c0_8 = arith.constant 0 : index
    %c0_9 = arith.constant 0 : index
    %c0_10 = arith.constant 0 : index
    %14 = vector.load %arg3[%c0_7, %c0_8, %c0_9, %c0_10] : memref<1x1x16x16xbf16, #tpu.memory_space<vmem>>, vector<1x1x16x16xbf16>
    %15 = vector.shape_cast %14 : vector<1x1x16x16xbf16> to vector<16x16xbf16>
    %16 = arith.extf %15 : vector<16x16xbf16> to vector<16x16xf32>
    %c0_11 = arith.constant 0 : index
    %c0_12 = arith.constant 0 : index
    %17 = vector.load %arg6[%c0_11, %c0_12] : memref<1x16xf32, #tpu.memory_space<vmem>>, vector<1x16xf32>
    %18 = vector.broadcast %17 : vector<1x16xf32> to vector<16x16xf32>
    %19 = arith.mulf %16, %18 : vector<16x16xf32>
    %c0_13 = arith.constant 0 : index
    %c0_14 = arith.constant 0 : index
    %20 = vector.load %arg7[%c0_13, %c0_14] : memref<1x16xf32, #tpu.memory_space<vmem>>, vector<1x16xf32>
    %21 = vector.broadcast %20 : vector<1x16xf32> to vector<16x16xf32>
    %22 = arith.addf %19, %21 : vector<16x16xf32>
    %cst_15 = arith.constant 0.000000e+00 : f32
    %23 = vector.broadcast %cst_15 : f32 to vector<16x16xf32>
    %24 = arith.maximumf %22, %23 : vector<16x16xf32>
    %25 = arith.truncf %24 : vector<16x16xf32> to vector<16x16xbf16>
    %c0_16 = arith.constant 0 : index
    %c0_17 = arith.constant 0 : index
    %c0_18 = arith.constant 0 : index
    %c0_19 = arith.constant 0 : index
    %26 = vector.load %arg4[%c0_16, %c0_17, %c0_18, %c0_19] : memref<1x1x16x16xbf16, #tpu.memory_space<vmem>>, vector<1x1x16x16xbf16>
    %27 = vector.shape_cast %26 : vector<1x1x16x16xbf16> to vector<16x16xbf16>
    %28 = arith.extf %27 : vector<16x16xbf16> to vector<16x16xf32>
    %c0_20 = arith.constant 0 : index
    %c0_21 = arith.constant 0 : index
    %29 = vector.load %arg6[%c0_20, %c0_21] : memref<1x16xf32, #tpu.memory_space<vmem>>, vector<1x16xf32>
    %30 = vector.broadcast %29 : vector<1x16xf32> to vector<16x16xf32>
    %31 = arith.mulf %28, %30 : vector<16x16xf32>
    %c0_22 = arith.constant 0 : index
    %c0_23 = arith.constant 0 : index
    %32 = vector.load %arg7[%c0_22, %c0_23] : memref<1x16xf32, #tpu.memory_space<vmem>>, vector<1x16xf32>
    %33 = vector.broadcast %32 : vector<1x16xf32> to vector<16x16xf32>
    %34 = arith.addf %31, %33 : vector<16x16xf32>
    %cst_24 = arith.constant 0.000000e+00 : f32
    %35 = vector.broadcast %cst_24 : f32 to vector<16x16xf32>
    %36 = arith.maximumf %34, %35 : vector<16x16xf32>
    %37 = arith.truncf %36 : vector<16x16xf32> to vector<16x16xbf16>
    %c0_i32 = arith.constant 0 : i32
    %38 = arith.cmpi eq, %arg1, %c0_i32 : i32
    %cst_25 = arith.constant 0.000000e+00 : bf16
    %39 = vector.broadcast %cst_25 : bf16 to vector<16x16xbf16>
    %40 = arith.select %38, %39, %25 : vector<16x16xbf16>
    %c1_i32 = arith.constant 1 : i32
    %41 = arith.cmpi eq, %arg1, %c1_i32 : i32
    %cst_26 = arith.constant 0.000000e+00 : bf16
    %42 = vector.broadcast %cst_26 : bf16 to vector<16x16xbf16>
    %43 = arith.select %41, %42, %37 : vector<16x16xbf16>
    %cst_27 = arith.constant 0.000000e+00 : bf16
    %44 = vector.broadcast %cst_27 : bf16 to vector<10x1x16xbf16>
    %c0_28 = arith.constant 0 : index
    %c0_29 = arith.constant 0 : index
    %c0_30 = arith.constant 0 : index
    %45 = vector.load %arg10[%c0_28, %c0_29, %c0_30] : memref<10x18x16xbf16, #tpu.memory_space<vmem>>, vector<10x1x16xbf16>
    tpu.vector_store %arg10[%c0_28, %c0_29, %c0_30], %44 {strides = array<i32>} : memref<10x18x16xbf16, #tpu.memory_space<vmem>>, vector<10x1x16xbf16>,
    %c0_31 = arith.constant 0 : index
    %c17 = arith.constant 17 : index
    %c0_32 = arith.constant 0 : index
    %46 = vector.load %arg10[%c0_31, %c17, %c0_32] : memref<10x18x16xbf16, #tpu.memory_space<vmem>>, vector<10x1x16xbf16>
    tpu.vector_store %arg10[%c0_31, %c17, %c0_32], %44 {strides = array<i32>} : memref<10x18x16xbf16, #tpu.memory_space<vmem>>, vector<10x1x16xbf16>,
    %47 = vector.shape_cast %40 : vector<16x16xbf16> to vector<1x16x16xbf16>
    %c0_33 = arith.constant 0 : index
    %c1 = arith.constant 1 : index
    %c0_34 = arith.constant 0 : index
    %48 = vector.load %arg10[%c0_33, %c1, %c0_34] : memref<10x18x16xbf16, #tpu.memory_space<vmem>>, vector<1x16x16xbf16>
    tpu.vector_store %arg10[%c0_33, %c1, %c0_34], %47 {strides = array<i32>} : memref<10x18x16xbf16, #tpu.memory_space<vmem>>, vector<1x16x16xbf16>,
    %c1_35 = arith.constant 1 : index
    %c1_36 = arith.constant 1 : index
    %c0_37 = arith.constant 0 : index
    %49 = vector.load %arg10[%c1_35, %c1_36, %c0_37] : memref<10x18x16xbf16, #tpu.memory_space<vmem>>, vector<8x16x16xbf16>
    tpu.vector_store %arg10[%c1_35, %c1_36, %c0_37], %13 {strides = array<i32>} : memref<10x18x16xbf16, #tpu.memory_space<vmem>>, vector<8x16x16xbf16>,
    %50 = vector.shape_cast %43 : vector<16x16xbf16> to vector<1x16x16xbf16>
    %c9 = arith.constant 9 : index
    %c1_38 = arith.constant 1 : index
    %c0_39 = arith.constant 0 : index
    %51 = vector.load %arg10[%c9, %c1_38, %c0_39] : memref<10x18x16xbf16, #tpu.memory_space<vmem>>, vector<1x16x16xbf16>
    tpu.vector_store %arg10[%c9, %c1_38, %c0_39], %50 {strides = array<i32>} : memref<10x18x16xbf16, #tpu.memory_space<vmem>>, vector<1x16x16xbf16>,
    %c0_40 = arith.constant 0 : index
    %c0_41 = arith.constant 0 : index
    %c0_42 = arith.constant 0 : index
    %52 = vector.load %arg10[%c0_40, %c0_41, %c0_42] : memref<10x18x16xbf16, #tpu.memory_space<vmem>>, vector<8x16x16xbf16>
    %53 = vector.shape_cast %52 : vector<8x16x16xbf16> to vector<128x16xbf16>
    %c0_43 = arith.constant 0 : index
    %c0_44 = arith.constant 0 : index
    %54 = vector.load %arg11[%c0_43, %c0_44] : memref<128x144xbf16, #tpu.memory_space<vmem>>, vector<128x16xbf16>
    tpu.vector_store %arg11[%c0_43, %c0_44], %53 {strides = array<i32>} : memref<128x144xbf16, #tpu.memory_space<vmem>>, vector<128x16xbf16>,
    %c0_45 = arith.constant 0 : index
    %c1_46 = arith.constant 1 : index
    %c0_47 = arith.constant 0 : index
    %55 = vector.load %arg10[%c0_45, %c1_46, %c0_47] : memref<10x18x16xbf16, #tpu.memory_space<vmem>>, vector<8x16x16xbf16>
    %56 = vector.shape_cast %55 : vector<8x16x16xbf16> to vector<128x16xbf16>
    %c0_48 = arith.constant 0 : index
    %c16 = arith.constant 16 : index
    %57 = vector.load %arg11[%c0_48, %c16] : memref<128x144xbf16, #tpu.memory_space<vmem>>, vector<128x16xbf16>
    tpu.vector_store %arg11[%c0_48, %c16], %56 {strides = array<i32>} : memref<128x144xbf16, #tpu.memory_space<vmem>>, vector<128x16xbf16>,
    %c0_49 = arith.constant 0 : index
    %c2 = arith.constant 2 : index
    %c0_50 = arith.constant 0 : index
    %58 = vector.load %arg10[%c0_49, %c2, %c0_50] : memref<10x18x16xbf16, #tpu.memory_space<vmem>>, vector<8x16x16xbf16>
    %59 = vector.shape_cast %58 : vector<8x16x16xbf16> to vector<128x16xbf16>
    %c0_51 = arith.constant 0 : index
    %c32 = arith.constant 32 : index
    %60 = vector.load %arg11[%c0_51, %c32] : memref<128x144xbf16, #tpu.memory_space<vmem>>, vector<128x16xbf16>
    tpu.vector_store %arg11[%c0_51, %c32], %59 {strides = array<i32>} : memref<128x144xbf16, #tpu.memory_space<vmem>>, vector<128x16xbf16>,
    %c1_52 = arith.constant 1 : index
    %c0_53 = arith.constant 0 : index
    %c0_54 = arith.constant 0 : index
    %61 = vector.load %arg10[%c1_52, %c0_53, %c0_54] : memref<10x18x16xbf16, #tpu.memory_space<vmem>>, vector<8x16x16xbf16>
    %62 = vector.shape_cast %61 : vector<8x16x16xbf16> to vector<128x16xbf16>
    %c0_55 = arith.constant 0 : index
    %c48 = arith.constant 48 : index
    %63 = vector.load %arg11[%c0_55, %c48] : memref<128x144xbf16, #tpu.memory_space<vmem>>, vector<128x16xbf16>
    tpu.vector_store %arg11[%c0_55, %c48], %62 {strides = array<i32>} : memref<128x144xbf16, #tpu.memory_space<vmem>>, vector<128x16xbf16>,
    %c1_56 = arith.constant 1 : index
    %c1_57 = arith.constant 1 : index
    %c0_58 = arith.constant 0 : index
    %64 = vector.load %arg10[%c1_56, %c1_57, %c0_58] : memref<10x18x16xbf16, #tpu.memory_space<vmem>>, vector<8x16x16xbf16>
    %65 = vector.shape_cast %64 : vector<8x16x16xbf16> to vector<128x16xbf16>
    %c0_59 = arith.constant 0 : index
    %c64 = arith.constant 64 : index
    %66 = vector.load %arg11[%c0_59, %c64] : memref<128x144xbf16, #tpu.memory_space<vmem>>, vector<128x16xbf16>
    tpu.vector_store %arg11[%c0_59, %c64], %65 {strides = array<i32>} : memref<128x144xbf16, #tpu.memory_space<vmem>>, vector<128x16xbf16>,
    %c1_60 = arith.constant 1 : index
    %c2_61 = arith.constant 2 : index
    %c0_62 = arith.constant 0 : index
    %67 = vector.load %arg10[%c1_60, %c2_61, %c0_62] : memref<10x18x16xbf16, #tpu.memory_space<vmem>>, vector<8x16x16xbf16>
    %68 = vector.shape_cast %67 : vector<8x16x16xbf16> to vector<128x16xbf16>
    %c0_63 = arith.constant 0 : index
    %c80 = arith.constant 80 : index
    %69 = vector.load %arg11[%c0_63, %c80] : memref<128x144xbf16, #tpu.memory_space<vmem>>, vector<128x16xbf16>
    tpu.vector_store %arg11[%c0_63, %c80], %68 {strides = array<i32>} : memref<128x144xbf16, #tpu.memory_space<vmem>>, vector<128x16xbf16>,
    %c2_64 = arith.constant 2 : index
    %c0_65 = arith.constant 0 : index
    %c0_66 = arith.constant 0 : index
    %70 = vector.load %arg10[%c2_64, %c0_65, %c0_66] : memref<10x18x16xbf16, #tpu.memory_space<vmem>>, vector<8x16x16xbf16>
    %71 = vector.shape_cast %70 : vector<8x16x16xbf16> to vector<128x16xbf16>
    %c0_67 = arith.constant 0 : index
    %c96 = arith.constant 96 : index
    %72 = vector.load %arg11[%c0_67, %c96] : memref<128x144xbf16, #tpu.memory_space<vmem>>, vector<128x16xbf16>
    tpu.vector_store %arg11[%c0_67, %c96], %71 {strides = array<i32>} : memref<128x144xbf16, #tpu.memory_space<vmem>>, vector<128x16xbf16>,
    %c2_68 = arith.constant 2 : index
    %c1_69 = arith.constant 1 : index
    %c0_70 = arith.constant 0 : index
    %73 = vector.load %arg10[%c2_68, %c1_69, %c0_70] : memref<10x18x16xbf16, #tpu.memory_space<vmem>>, vector<8x16x16xbf16>
    %74 = vector.shape_cast %73 : vector<8x16x16xbf16> to vector<128x16xbf16>
    %c0_71 = arith.constant 0 : index
    %c112 = arith.constant 112 : index
    %75 = vector.load %arg11[%c0_71, %c112] : memref<128x144xbf16, #tpu.memory_space<vmem>>, vector<128x16xbf16>
    tpu.vector_store %arg11[%c0_71, %c112], %74 {strides = array<i32>} : memref<128x144xbf16, #tpu.memory_space<vmem>>, vector<128x16xbf16>,
    %c2_72 = arith.constant 2 : index
    %c2_73 = arith.constant 2 : index
    %c0_74 = arith.constant 0 : index
    %76 = vector.load %arg10[%c2_72, %c2_73, %c0_74] : memref<10x18x16xbf16, #tpu.memory_space<vmem>>, vector<8x16x16xbf16>
    %77 = vector.shape_cast %76 : vector<8x16x16xbf16> to vector<128x16xbf16>
    %c0_75 = arith.constant 0 : index
    %c128 = arith.constant 128 : index
    %78 = vector.load %arg11[%c0_75, %c128] : memref<128x144xbf16, #tpu.memory_space<vmem>>, vector<128x16xbf16>
    tpu.vector_store %arg11[%c0_75, %c128], %77 {strides = array<i32>} : memref<128x144xbf16, #tpu.memory_space<vmem>>, vector<128x16xbf16>,
    %c0_76 = arith.constant 0 : index
    %c0_77 = arith.constant 0 : index
    %79 = vector.load %arg11[%c0_76, %c0_77] : memref<128x144xbf16, #tpu.memory_space<vmem>>, vector<128x144xbf16>
    %c0_78 = arith.constant 0 : index
    %c0_79 = arith.constant 0 : index
    %80 = vector.load %arg5[%c0_78, %c0_79] : memref<144x16xbf16, #tpu.memory_space<vmem>>, vector<144x16xbf16>
    %cst_80 = arith.constant dense<0.000000e+00> : vector<128x16xf32>
    %81 = tpu.matmul %79, %80, %cst_80 {dimension_numbers = #tpu.dot_dimension_numbers<[1], [0], [0], [1], [0, 0, 1, 1], [], []>} : vector<128x144xbf16>, vector<144x16xbf16>, vector<128x16xf32> -> vector<128x16xf32>
    %82 = arith.truncf %81 : vector<128x16xf32> to vector<128x16xbf16>
    %c0_81 = arith.constant 0 : index
    %c0_82 = arith.constant 0 : index
    %83 = vector.load %arg8[%c0_81, %c0_82] : memref<128x16xbf16, #tpu.memory_space<vmem>>, vector<128x16xbf16>
    tpu.vector_store %arg8[%c0_81, %c0_82], %82 {strides = array<i32>} : memref<128x16xbf16, #tpu.memory_space<vmem>>, vector<128x16xbf16>,
    %cst_83 = arith.constant dense<0.000000e+00> : vector<16xf32>
    %84 = vector.multi_reduction <add>, %81, %cst_83 [0] : vector<128x16xf32> to vector<16xf32>
    %85 = vector.shape_cast %84 : vector<16xf32> to vector<1x16xf32>
    %86 = arith.mulf %81, %81 : vector<128x16xf32>
    %cst_84 = arith.constant dense<0.000000e+00> : vector<16xf32>
    %87 = vector.multi_reduction <add>, %86, %cst_84 [0] : vector<128x16xf32> to vector<16xf32>
    %88 = vector.shape_cast %87 : vector<16xf32> to vector<1x16xf32>
    %89 = tpu.concatenate %85, %88 in 0 : vector<1x16xf32>, vector<1x16xf32> -> vector<2x16xf32>
    %c0_85 = arith.constant 0 : index
    %c0_86 = arith.constant 0 : index
    %c0_87 = arith.constant 0 : index
    %90 = vector.load %arg9[%c0_85, %c0_86, %c0_87] : memref<1x2x16xf32, #tpu.memory_space<vmem>>, vector<1x2x16xf32>
    %91 = vector.shape_cast %90 : vector<1x2x16xf32> to vector<2x16xf32>
    %92 = vector.shape_cast %89 : vector<2x16xf32> to vector<1x2x16xf32>
    tpu.vector_store %arg9[%c0_85, %c0_86, %c0_87], %92 {strides = array<i32>} : memref<1x2x16xf32, #tpu.memory_space<vmem>>, vector<1x2x16xf32>,
    return
  }
  func.func @transform_0(%arg0: i32, %arg1: i32) -> (i32, i32, i32, i32) {
    %c0_i32 = arith.constant 0 : i32
    %c0_i32_0 = arith.constant 0 : i32
    %c0_i32_1 = arith.constant 0 : i32
    return %arg0, %arg1, %c0_i32, %c0_i32_0 : i32, i32, i32, i32
  }
  func.func @transform_1(%arg0: i32, %arg1: i32) -> (i32, i32, i32, i32) {
    %c8_i32 = arith.constant 8 : i32
    %0 = arith.muli %arg1, %c8_i32 : i32
    %c1_i32 = arith.constant 1 : i32
    %1 = arith.subi %0, %c1_i32 : i32
    %c0_i32 = arith.constant 0 : i32
    %2 = arith.maxsi %1, %c0_i32 : i32
    %c0_i32_0 = arith.constant 0 : i32
    %c0_i32_1 = arith.constant 0 : i32
    %c0_i32_2 = arith.constant 0 : i32
    return %arg0, %2, %c0_i32_0, %c0_i32_1 : i32, i32, i32, i32
  }
  func.func @transform_2(%arg0: i32, %arg1: i32) -> (i32, i32, i32, i32) {
    %c8_i32 = arith.constant 8 : i32
    %0 = arith.muli %arg1, %c8_i32 : i32
    %c8_i32_0 = arith.constant 8 : i32
    %1 = arith.addi %0, %c8_i32_0 : i32
    %c15_i32 = arith.constant 15 : i32
    %2 = arith.minsi %1, %c15_i32 : i32
    %c0_i32 = arith.constant 0 : i32
    %c0_i32_1 = arith.constant 0 : i32
    %c0_i32_2 = arith.constant 0 : i32
    return %arg0, %2, %c0_i32, %c0_i32_1 : i32, i32, i32, i32
  }
  func.func @transform_3(%arg0: i32, %arg1: i32) -> (i32, i32) {
    %c0_i32 = arith.constant 0 : i32
    %c0_i32_0 = arith.constant 0 : i32
    %c0_i32_1 = arith.constant 0 : i32
    return %c0_i32, %c0_i32_0 : i32, i32
  }
  func.func @transform_4(%arg0: i32, %arg1: i32) -> (i32, i32) {
    %c0_i32 = arith.constant 0 : i32
    %c0_i32_0 = arith.constant 0 : i32
    %c0_i32_1 = arith.constant 0 : i32
    return %c0_i32, %c0_i32_0 : i32, i32
  }
  func.func @transform_5(%arg0: i32, %arg1: i32) -> (i32, i32) {
    %c0_i32 = arith.constant 0 : i32
    %c0_i32_0 = arith.constant 0 : i32
    %c0_i32_1 = arith.constant 0 : i32
    return %c0_i32, %c0_i32_0 : i32, i32
  }
  func.func @transform_6(%arg0: i32, %arg1: i32) -> (i32, i32) {
    %c2_i32 = arith.constant 2 : i32
    %0 = arith.muli %arg0, %c2_i32 : i32
    %1 = arith.addi %0, %arg1 : i32
    %c0_i32 = arith.constant 0 : i32
    %c0_i32_0 = arith.constant 0 : i32
    return %1, %c0_i32 : i32, i32
  }
  func.func @transform_7(%arg0: i32, %arg1: i32) -> (i32, i32, i32) {
    %c2_i32 = arith.constant 2 : i32
    %0 = arith.muli %arg0, %c2_i32 : i32
    %1 = arith.addi %0, %arg1 : i32
    %c0_i32 = arith.constant 0 : i32
    %c0_i32_0 = arith.constant 0 : i32
    %c0_i32_1 = arith.constant 0 : i32
    return %1, %c0_i32, %c0_i32_0 : i32, i32, i32
  }
}

module attributes {stable_mosaic.version = 11 : i64} {
  func.func @_gate_kernel(%arg0: i32, %arg1: i32, %arg2: memref<1x128x16xbf16, #tpu.memory_space<vmem>>, %arg3: memref<1x16xf32, #tpu.memory_space<vmem>>, %arg4: memref<1x16xf32, #tpu.memory_space<vmem>>, %arg5: memref<1x1x16xf32, #tpu.memory_space<vmem>>, %arg6: memref<1x16xf32, #tpu.memory_space<vmem>>, %arg7: memref<1x1xf32, #tpu.memory_space<vmem>>, %arg8: memref<1x128x16xf32, #tpu.memory_space<vmem>>) attributes {dimension_semantics = [#tpu.dimension_semantics<parallel>, #tpu.dimension_semantics<parallel>], iteration_bounds = array<i64: 2, 2>, scalar_prefetch = 0 : i64, scratch_operands = 0 : i64, tpu.core_type = #tpu.core_type<tc>, window_params = [{transform_indices = @transform_0, window_bounds = array<i64: 1, 128, 16>}, {pipeline_mode = #tpu.pipeline_mode<synchronous>, transform_indices = @transform_1, window_bounds = array<i64: 1, 16>}, {pipeline_mode = #tpu.pipeline_mode<synchronous>, transform_indices = @transform_2, window_bounds = array<i64: 1, 16>}, {transform_indices = @transform_3, window_bounds = array<i64: 1, 1, 16>}, {pipeline_mode = #tpu.pipeline_mode<synchronous>, transform_indices = @transform_4, window_bounds = array<i64: 1, 16>}, {pipeline_mode = #tpu.pipeline_mode<synchronous>, transform_indices = @transform_5, window_bounds = array<i64: 1, 1>}, {transform_indices = @transform_6, window_bounds = array<i64: 1, 128, 16>}]} {
    %c0 = arith.constant 0 : index
    %c0_0 = arith.constant 0 : index
    %c0_1 = arith.constant 0 : index
    %0 = vector.load %arg2[%c0, %c0_0, %c0_1] : memref<1x128x16xbf16, #tpu.memory_space<vmem>>, vector<1x128x16xbf16>
    %1 = vector.shape_cast %0 : vector<1x128x16xbf16> to vector<128x16xbf16>
    %2 = arith.extf %1 : vector<128x16xbf16> to vector<128x16xf32>
    %c0_2 = arith.constant 0 : index
    %c0_3 = arith.constant 0 : index
    %3 = vector.load %arg3[%c0_2, %c0_3] : memref<1x16xf32, #tpu.memory_space<vmem>>, vector<1x16xf32>
    %4 = vector.broadcast %3 : vector<1x16xf32> to vector<128x16xf32>
    %5 = arith.mulf %2, %4 : vector<128x16xf32>
    %c0_4 = arith.constant 0 : index
    %c0_5 = arith.constant 0 : index
    %6 = vector.load %arg4[%c0_4, %c0_5] : memref<1x16xf32, #tpu.memory_space<vmem>>, vector<1x16xf32>
    %7 = vector.broadcast %6 : vector<1x16xf32> to vector<128x16xf32>
    %8 = arith.addf %5, %7 : vector<128x16xf32>
    %cst = arith.constant 0.000000e+00 : f32
    %9 = vector.broadcast %cst : f32 to vector<128x16xf32>
    %10 = arith.maximumf %8, %9 : vector<128x16xf32>
    %c0_6 = arith.constant 0 : index
    %c0_7 = arith.constant 0 : index
    %11 = vector.load %arg6[%c0_6, %c0_7] : memref<1x16xf32, #tpu.memory_space<vmem>>, vector<1x16xf32>
    %12 = vector.broadcast %11 : vector<1x16xf32> to vector<128x16xf32>
    %13 = arith.mulf %10, %12 : vector<128x16xf32>
    %cst_8 = arith.constant dense<0.000000e+00> : vector<128xf32>
    %14 = vector.multi_reduction <add>, %13, %cst_8 [1] : vector<128x16xf32> to vector<128xf32>
    %15 = vector.shape_cast %14 : vector<128xf32> to vector<128x1xf32>
    %c0_9 = arith.constant 0 : index
    %c0_10 = arith.constant 0 : index
    %16 = vector.load %arg7[%c0_9, %c0_10] : memref<1x1xf32, #tpu.memory_space<vmem>>, vector<1x1xf32>
    %17 = vector.broadcast %16 : vector<1x1xf32> to vector<128x1xf32>
    %18 = arith.addf %15, %17 : vector<128x1xf32>
    %c0_11 = arith.constant 0 : index
    %c0_12 = arith.constant 0 : index
    %c0_13 = arith.constant 0 : index
    %19 = vector.load %arg5[%c0_11, %c0_12, %c0_13] : memref<1x1x16xf32, #tpu.memory_space<vmem>>, vector<1x1x16xf32>
    %20 = vector.shape_cast %19 : vector<1x1x16xf32> to vector<1x16xf32>
    %21 = arith.negf %18 : vector<128x1xf32>
    %22 = math.exp %21 : vector<128x1xf32>
    %cst_14 = arith.constant 1.000000e+00 : f32
    %23 = vector.broadcast %cst_14 : f32 to vector<128x1xf32>
    %24 = arith.addf %23, %22 : vector<128x1xf32>
    %25 = arith.divf %23, %24 : vector<128x1xf32>
    %26 = vector.broadcast %20 : vector<1x16xf32> to vector<128x16xf32>
    %27 = vector.broadcast %25 : vector<128x1xf32> to vector<128x16xf32>
    %28 = arith.addf %26, %27 : vector<128x16xf32>
    %29 = arith.mulf %10, %28 : vector<128x16xf32>
    %c0_15 = arith.constant 0 : index
    %c0_16 = arith.constant 0 : index
    %c0_17 = arith.constant 0 : index
    %30 = vector.load %arg8[%c0_15, %c0_16, %c0_17] : memref<1x128x16xf32, #tpu.memory_space<vmem>>, vector<1x128x16xf32>
    %31 = vector.shape_cast %30 : vector<1x128x16xf32> to vector<128x16xf32>
    %32 = vector.shape_cast %29 : vector<128x16xf32> to vector<1x128x16xf32>
    tpu.vector_store %arg8[%c0_15, %c0_16, %c0_17], %32 {strides = array<i32>} : memref<1x128x16xf32, #tpu.memory_space<vmem>>, vector<1x128x16xf32>,
    return
  }
  func.func @transform_0(%arg0: i32, %arg1: i32) -> (i32, i32, i32) {
    %c0_i32 = arith.constant 0 : i32
    %c0_i32_0 = arith.constant 0 : i32
    return %arg0, %arg1, %c0_i32 : i32, i32, i32
  }
  func.func @transform_1(%arg0: i32, %arg1: i32) -> (i32, i32) {
    %c0_i32 = arith.constant 0 : i32
    %c0_i32_0 = arith.constant 0 : i32
    %c0_i32_1 = arith.constant 0 : i32
    return %c0_i32, %c0_i32_0 : i32, i32
  }
  func.func @transform_2(%arg0: i32, %arg1: i32) -> (i32, i32) {
    %c0_i32 = arith.constant 0 : i32
    %c0_i32_0 = arith.constant 0 : i32
    %c0_i32_1 = arith.constant 0 : i32
    return %c0_i32, %c0_i32_0 : i32, i32
  }
  func.func @transform_3(%arg0: i32, %arg1: i32) -> (i32, i32, i32) {
    %c0_i32 = arith.constant 0 : i32
    %c0_i32_0 = arith.constant 0 : i32
    %c0_i32_1 = arith.constant 0 : i32
    return %arg0, %c0_i32, %c0_i32_0 : i32, i32, i32
  }
  func.func @transform_4(%arg0: i32, %arg1: i32) -> (i32, i32) {
    %c0_i32 = arith.constant 0 : i32
    %c0_i32_0 = arith.constant 0 : i32
    %c0_i32_1 = arith.constant 0 : i32
    return %c0_i32, %c0_i32_0 : i32, i32
  }
  func.func @transform_5(%arg0: i32, %arg1: i32) -> (i32, i32) {
    %c0_i32 = arith.constant 0 : i32
    %c0_i32_0 = arith.constant 0 : i32
    %c0_i32_1 = arith.constant 0 : i32
    return %c0_i32, %c0_i32_0 : i32, i32
  }
  func.func @transform_6(%arg0: i32, %arg1: i32) -> (i32, i32, i32) {
    %c0_i32 = arith.constant 0 : i32
    %c0_i32_0 = arith.constant 0 : i32
    return %arg0, %arg1, %c0_i32 : i32, i32, i32
  }
}

</mosaic_0001>

<llo_original>
// kernel: decoder_forward.6
$region0: #{decoder_forward.6}
  #allocation0 [shape = 'u32[]', space=smem, size = 0x4, offset = 0x4, fixed_abs, tag = 'smem constant byte address 0x4 - core index']
  #allocation1 [shape = 'u32[72,128]{1,0:T(1,128)}', space=vmem, size = 0x9000, scoped, tag = 'internal scratch']
  %s0 = inlined_call_operand.vmem [shape: bf16[2,256,16], index: 0, kind: input, shape index: {}]
  %s1 = inlined_call_operand.vmem [shape: f32[1,16], index: 1, kind: input, shape index: {}]
  %s2 = inlined_call_operand.vmem [shape: f32[1,16], index: 2, kind: input, shape index: {}]
  %s3 = inlined_call_operand.vmem [shape: f32[2,2,1,16], index: 3, kind: output, shape index: {}]
  %s4 = sld [smem:[#allocation0]]
  $region45: #{decoder_forward.6} parent=0
    _
  %s6 = ssub.s32 1, %s4
  %s7 = scalar_select 0, %s6, %s4
  loop: start=0, step=1, limit=6
  $region2: #{decoder_forward.6} parent=0 // loop_pre_header
    _
  $region3: #{decoder_forward.6} parent=0 // loop_header
    %s9 = sphi 0, %s13
    %p10 = scmp.ge.s32.totalorder %s9, 6
    %s16 = sphi 0, %s28
    %s17 = sphi 0, %s24
    %s18 = sphi 0, %s16
    %s19 = sphi 0, %s17
    %s20 = sphi 0, %s18
    %s21 = sphi 0, %s19
    %s33 = sphi 0, %s35
    %s36 = sphi 0, %s33
    %s37 = sphi 0, %s36
    %s53 = sphi 0, %s37
    %s57 = sphi 0, %s57
    %s59 = sphi 0, %s57
    %s60 = sphi 0, %s59
    %s74 = sphi 0, %s60
    %s78 = sphi 0, %s78
    %s80 = sphi 0, %s78
    %s81 = sphi 0, %s80
    %s95 = sphi 0, %s81
    %s103 = sphi 0, %s105
    %s106 = sphi 0, %s103
    %s107 = sphi 0, %s106
    %s123 = sphi 0, %s107
  $region4: #{decoder_forward.6} parent=0 // loop_header_branch
    %12 = sbr.rel (%p10) target = $region8
  $region5: #{decoder_forward.6} parent=0 // loop_body
    %s14 = ssub.s32 %s9, 1
    %s15 = ssub.s32 %s9, 2
    %s22 = sadd.s32 1, %s17
    %p23 = scmp.ge.s32.totalorder %s22, 2
    %s24 = scalar_select %p23, 0, %s22
    %s25 = sadd.s32 1, %s16
    %s26 = scalar_select %p23, %s25, %s16
    %p27 = scmp.ge.s32.totalorder %s26, 2
    %s28 = scalar_select %p27, 0, %s26
    %s29 = ssub.s32 %s16, %s28
    %s30 = ssub.s32 %s17, %s24
    %s31 = sor.u32 %s29, %s30
    %p32 = scmp.eq.s32.totalorder %s31, 0
    %s34 = sadd.s32 %s33, 1
    %s35 = scalar_select %p32, %s33, %s34
    %p38 = pneg %p32
    %p39 = scmp.eq.s32.totalorder %s9, 3
    %p40 = por %p38, %p39
    %p41 = scmp.ne.s32.totalorder %s33, %s36
    %p42 = scmp.eq.s32.totalorder %s9, 0
    %p43 = por %p41, %p42
    %p44 = scmp.ne.s32.totalorder %s33, %s36
    %p45 = scmp.eq.s32.totalorder %s14, 3
    %p46 = por %p44, %p45
    %p47 = scmp.ne.s32.totalorder %s36, %s37
    %p48 = scmp.eq.s32.totalorder %s14, 0
    %p49 = por %p47, %p48
    %p50 = scmp.ne.s32.totalorder %s36, %s37
    %p51 = scmp.eq.s32.totalorder %s15, 3
    %p52 = por %p50, %p51
    %p54 = scmp.ne.s32.totalorder %s37, %s53
    %p55 = scmp.eq.s32.totalorder %s15, 0
    %p56 = por %p54, %p55
    %s58 = sadd.s32 %s57, 1
    %p61 = scmp.eq.s32.totalorder %s9, 3
    %p62 = scmp.ne.s32.totalorder %s57, %s59
    %p63 = scmp.eq.s32.totalorder %s9, 0
    %p64 = por %p62, %p63
    %p65 = scmp.ne.s32.totalorder %s57, %s59
    %p66 = scmp.eq.s32.totalorder %s14, 3
    %p67 = por %p65, %p66
    %p68 = scmp.ne.s32.totalorder %s59, %s60
    %p69 = scmp.eq.s32.totalorder %s14, 0
    %p70 = por %p68, %p69
    %p71 = scmp.ne.s32.totalorder %s59, %s60
    %p72 = scmp.eq.s32.totalorder %s15, 3
    %p73 = por %p71, %p72
    %p75 = scmp.ne.s32.totalorder %s60, %s74
    %p76 = scmp.eq.s32.totalorder %s15, 0
    %p77 = por %p75, %p76
    %s79 = sadd.s32 %s78, 1
    %p82 = scmp.eq.s32.totalorder %s9, 3
    %p83 = scmp.ne.s32.totalorder %s78, %s80
    %p84 = scmp.eq.s32.totalorder %s9, 0
    %p85 = por %p83, %p84
    %p86 = scmp.ne.s32.totalorder %s78, %s80
    %p87 = scmp.eq.s32.totalorder %s14, 3
    %p88 = por %p86, %p87
    %p89 = scmp.ne.s32.totalorder %s80, %s81
    %p90 = scmp.eq.s32.totalorder %s14, 0
    %p91 = por %p89, %p90
    %p92 = scmp.ne.s32.totalorder %s80, %s81
    %p93 = scmp.eq.s32.totalorder %s15, 3
    %p94 = por %p92, %p93
    %p96 = scmp.ne.s32.totalorder %s81, %s95
    %p97 = scmp.eq.s32.totalorder %s15, 0
    %p98 = por %p96, %p97
    %s99 = ssub.s32 %s16, %s28
    %s100 = ssub.s32 %s17, %s24
    %s101 = sor.u32 %s99, %s100
    %p102 = scmp.eq.s32.totalorder %s101, 0
    %s104 = sadd.s32 %s103, 1
    %s105 = scalar_select %p102, %s103, %s104
    %p108 = pneg %p102
    %p109 = scmp.eq.s32.totalorder %s9, 3
    %p110 = por %p108, %p109
    %p111 = scmp.ne.s32.totalorder %s103, %s106
    %p112 = scmp.eq.s32.totalorder %s9, 0
    %p113 = por %p111, %p112
    %p114 = scmp.ne.s32.totalorder %s103, %s106
    %p115 = scmp.eq.s32.totalorder %s14, 3
    %p116 = por %p114, %p115
    %p117 = scmp.ne.s32.totalorder %s106, %s107
    %p118 = scmp.eq.s32.totalorder %s14, 0
    %p119 = por %p117, %p118
    %p120 = scmp.ne.s32.totalorder %s106, %s107
    %p121 = scmp.eq.s32.totalorder %s15, 3
    %p122 = por %p120, %p121
    %p124 = scmp.ne.s32.totalorder %s107, %s123
    %p125 = scmp.eq.s32.totalorder %s15, 0
    %p126 = por %p124, %p125
    %p127 = scmp.le.s32.totalorder 1, %s9
    %p128 = scmp.lt.s32.totalorder %s9, 5
    %p129 = pnand %p127, %p128
    %p130 = pneg %p129
    // Predicated region
    $region9: #{decoder_forward.6} parent=5 // pred_check
      _
    $region10: #{decoder_forward.6} parent=5 // pred_check_branch
      %132 = sbr.rel (%p129) target = $region12
    $region11: #{decoder_forward.6} parent=5 // pred_region
      %s133 = ssub.s32 %s9, 1
      // Predicated region
      $region13: #{decoder_forward.6} parent=11 // pred_check
        %p134 = pneg %p70
      $region14: #{decoder_forward.6} parent=11 // pred_check_branch
        %136 = sbr.rel (%p134) target = $region16
      $region15: #{decoder_forward.6} parent=11 // pred_region
        _
      $region16: #{decoder_forward.6} parent=11 // pred_fallthru
        _
      // Predicated region
      $region17: #{decoder_forward.6} parent=11 // pred_check
        %p137 = pneg %p91
      $region18: #{decoder_forward.6} parent=11 // pred_check_branch
        %139 = sbr.rel (%p137) target = $region20
      $region19: #{decoder_forward.6} parent=11 // pred_region
        _
      $region20: #{decoder_forward.6} parent=11 // pred_fallthru
        _
    $region12: #{decoder_forward.6} parent=5 // pred_fallthru
      _
    %p140 = scmp.lt.s32.totalorder %s9, 4
    // Predicated region
    $region21: #{decoder_forward.6} parent=5 // pred_check
      %p141 = pneg %p140
    $region22: #{decoder_forward.6} parent=5 // pred_check_branch
      %143 = sbr.rel (%p141) target = $region24
    $region23: #{decoder_forward.6} parent=5 // pred_region
      // Predicated region
      $region25: #{decoder_forward.6} parent=23 // pred_check
        %p144 = pneg %p43
      $region26: #{decoder_forward.6} parent=23 // pred_check_branch
        %146 = sbr.rel (%p144) target = $region28
      $region27: #{decoder_forward.6} parent=23 // pred_region
        %s147 = smul.u32 16, %s17
        %p148 = scmp.lt.s32.totalorder %s16, 1
        %s149 = scalar_select %p148, %s16, 1
        %p150 = scmp.lt.s32.totalorder %s147, 31
        %s151 = scalar_select %p150, %s147, 31
        %s152 = smul.addr %s149, 32
        %s153 = sadd.s32 %s151, %s152
        %s154 = smul.addr %s153, 4
        %s155 = scalar_lea.vmem %s0, %s154
        %s156 = smul.u32 16, %s17
      $region28: #{decoder_forward.6} parent=23 // pred_fallthru
        _
    $region24: #{decoder_forward.6} parent=5 // pred_fallthru
      _
    %p157 = scmp.le.s32.totalorder 1, %s9
    %p158 = scmp.lt.s32.totalorder %s9, 5
    %p159 = pnand %p157, %p158
    %p160 = pneg %p159
    // Predicated region
    $region29: #{decoder_forward.6} parent=5 // pred_check
      _
    $region30: #{decoder_forward.6} parent=5 // pred_check_branch
      %162 = sbr.rel (%p159) target = $region32
    $region31: #{decoder_forward.6} parent=5 // pred_region
      %s163 = ssub.s32 %s9, 1
      %s164 = smul.u32 16, %s19
      %p165 = scmp.lt.s32.totalorder %s18, 1
      %s166 = scalar_select %p165, %s18, 1
      %p167 = scmp.lt.s32.totalorder %s164, 31
      %s168 = scalar_select %p167, %s164, 31
      %s169 = smul.addr %s166, 32
      %s170 = sadd.s32 %s168, %s169
      %s171 = smul.addr %s170, 4
      %s172 = scalar_lea.vmem %s0, %s171
      %p173 = pneg %p49
      %p174 = pneg %p46
      %p175 = pneg %p70
      %p176 = pneg %p67
      %p177 = pneg %p91
      %p178 = pneg %p88
      %p179 = pneg %p119
      %p180 = pneg %p116
      %p181 = scmp.lt.s32.totalorder %s18, 1
      %s182 = scalar_select %p181, %s18, 1
      %p183 = scmp.lt.s32.totalorder %s19, 1
      %s184 = scalar_select %p183, %s19, 1
      %s185 = smul.addr %s182, 2
      %s186 = sadd.s32 %s184, %s185
      %s187 = scalar_lea.vmem %s3, %s186
      %s188 = smul.u32 16, %s19
      %p189 = scmp.lt.s32.totalorder %s18, 1
      %s190 = scalar_select %p189, %s18, 1
      %p191 = scmp.lt.s32.totalorder %s188, 31
      %s192 = scalar_select %p191, %s188, 31
      %s193 = smul.addr %s190, 32
      %s194 = sadd.s32 %s192, %s193
      %s195 = smul.addr %s194, 4
      %s196 = scalar_lea.vmem %s0, %s195
      %s197 = smul.u32 16, %s19
      %p198 = scmp.lt.s32.totalorder %s18, 1
      %s199 = scalar_select %p198, %s18, 1
      %p200 = scmp.lt.s32.totalorder %s19, 1
      %s201 = scalar_select %p200, %s19, 1
      %s202 = smul.addr %s199, 2
      %s203 = sadd.s32 %s201, %s202
      %s204 = scalar_lea.vmem %s3, %s203
      %v205 = vld [vmem:[%s196] sm:$0xf]
      %v206 = vld [vmem:[%s196 + $0x4] sm:$0xf]
      %v207 = vld [vmem:[%s196 + $0x8] sm:$0xf]
      %v208 = vld [vmem:[%s196 + $0xc] sm:$0xf]
      %v209 = vld [vmem:[%s196 + $0x10] sm:$0xf]
      %v210 = vld [vmem:[%s196 + $0x14] sm:$0xf]
      %v211 = vld [vmem:[%s196 + $0x18] sm:$0xf]
      %v212 = vld [vmem:[%s196 + $0x1c] sm:$0xf]
      %v213 = vld [vmem:[%s196 + $0x20] sm:$0xf]
      %v214 = vld [vmem:[%s196 + $0x24] sm:$0xf]
      %v215 = vld [vmem:[%s196 + $0x28] sm:$0xf]
      %v216 = vld [vmem:[%s196 + $0x2c] sm:$0xf]
      %v217 = vld [vmem:[%s196 + $0x30] sm:$0xf]
      %v218 = vld [vmem:[%s196 + $0x34] sm:$0xf]
      %v219 = vld [vmem:[%s196 + $0x38] sm:$0xf]
      %v220 = vld [vmem:[%s196 + $0x3c] sm:$0xf]
      %v221 = vunpack.c.l.bf16 %v205
      %v222 = vunpack.c.l.bf16 %v206
      %v223 = vunpack.c.l.bf16 %v207
      %v224 = vunpack.c.l.bf16 %v208
      %v225 = vunpack.c.l.bf16 %v209
      %v226 = vunpack.c.l.bf16 %v210
      %v227 = vunpack.c.l.bf16 %v211
      %v228 = vunpack.c.l.bf16 %v212
      %v229 = vunpack.c.l.bf16 %v213
      %v230 = vunpack.c.l.bf16 %v214
      %v231 = vunpack.c.l.bf16 %v215
      %v232 = vunpack.c.l.bf16 %v216
      %v233 = vunpack.c.l.bf16 %v217
      %v234 = vunpack.c.l.bf16 %v218
      %v235 = vunpack.c.l.bf16 %v219
      %v236 = vunpack.c.l.bf16 %v220
      %v237 = vld [vmem:[%s1] sm:$0x1]
      %v239 = vperm.slane %v237, 0
      %v241 = vmul.f32 %v221, %v239
      %v242 = vmul.f32 %v222, %v239
      %v243 = vmul.f32 %v223, %v239
      %v244 = vmul.f32 %v224, %v239
      %v245 = vmul.f32 %v225, %v239
      %v246 = vmul.f32 %v226, %v239
      %v247 = vmul.f32 %v227, %v239
      %v248 = vmul.f32 %v228, %v239
      %v249 = vmul.f32 %v229, %v239
      %v250 = vmul.f32 %v230, %v239
      %v251 = vmul.f32 %v231, %v239
      %v252 = vmul.f32 %v232, %v239
      %v253 = vmul.f32 %v233, %v239
      %v254 = vmul.f32 %v234, %v239
      %v255 = vmul.f32 %v235, %v239
      %v256 = vmul.f32 %v236, %v239
      %v257 = vld [vmem:[%s2] sm:$0x1]
      %v259 = vperm.slane %v257, 0
      %v261 = vadd.f32 %v241, %v259
      %v262 = vadd.f32 %v242, %v259
      %v263 = vadd.f32 %v243, %v259
      %v264 = vadd.f32 %v244, %v259
      %v265 = vadd.f32 %v245, %v259
      %v266 = vadd.f32 %v246, %v259
      %v267 = vadd.f32 %v247, %v259
      %v268 = vadd.f32 %v248, %v259
      %v269 = vadd.f32 %v249, %v259
      %v270 = vadd.f32 %v250, %v259
      %v271 = vadd.f32 %v251, %v259
      %v272 = vadd.f32 %v252, %v259
      %v273 = vadd.f32 %v253, %v259
      %v274 = vadd.f32 %v254, %v259
      %v275 = vadd.f32 %v255, %v259
      %v276 = vadd.f32 %v256, %v259
      %v277 = vmax.f32 %v261, 0.0
      %v278 = vmax.f32 %v262, 0.0
      %v279 = vmax.f32 %v263, 0.0
      %v280 = vmax.f32 %v264, 0.0
      %v281 = vmax.f32 %v265, 0.0
      %v282 = vmax.f32 %v266, 0.0
      %v283 = vmax.f32 %v267, 0.0
      %v284 = vmax.f32 %v268, 0.0
      %v285 = vmax.f32 %v269, 0.0
      %v286 = vmax.f32 %v270, 0.0
      %v287 = vmax.f32 %v271, 0.0
      %v288 = vmax.f32 %v272, 0.0
      %v289 = vmax.f32 %v273, 0.0
      %v290 = vmax.f32 %v274, 0.0
      %v291 = vmax.f32 %v275, 0.0
      %v292 = vmax.f32 %v276, 0.0
      %vm293 = vcmask 130048
      %v294 = vsel %vm293, %v277, 0.0
      %v295 = vsel %vm293, %v278, 0.0
      %v296 = vadd.f32 %v294, %v295
      %v297 = vsel %vm293, %v279, 0.0
      %v298 = vadd.f32 %v296, %v297
      %v299 = vsel %vm293, %v280, 0.0
      %v300 = vadd.f32 %v298, %v299
      %v301 = vsel %vm293, %v281, 0.0
      %v302 = vadd.f32 %v300, %v301
      %v303 = vsel %vm293, %v282, 0.0
      %v304 = vadd.f32 %v302, %v303
      %v305 = vsel %vm293, %v283, 0.0
      %v306 = vadd.f32 %v304, %v305
      %v307 = vsel %vm293, %v284, 0.0
      %v308 = vadd.f32 %v306, %v307
      %v309 = vsel %vm293, %v285, 0.0
      %v310 = vadd.f32 %v308, %v309
      %v311 = vsel %vm293, %v286, 0.0
      %v312 = vadd.f32 %v310, %v311
      %v313 = vsel %vm293, %v287, 0.0
      %v314 = vadd.f32 %v312, %v313
      %v315 = vsel %vm293, %v288, 0.0
      %v316 = vadd.f32 %v314, %v315
      %v317 = vsel %vm293, %v289, 0.0
      %v318 = vadd.f32 %v316, %v317
      %v319 = vsel %vm293, %v290, 0.0
      %v320 = vadd.f32 %v318, %v319
      %v321 = vsel %vm293, %v291, 0.0
      %v322 = vadd.f32 %v320, %v321
      %v323 = vsel %vm293, %v292, 0.0
      %v324 = vadd.f32 %v322, %v323
      %v325 = vrot.slane %v324, 4
      %v326 = vadd.f32 %v324, %v325
      %v327 = vrot.slane %v326, 2
      %v328 = vadd.f32 %v326, %v327
      %v329 = vrot.slane %v328, 1
      %v330 = vadd.f32 %v328, %v329
      %vm331 = vcmask 122880
      %332 = vst.msk [vmem:[%s204] sm:$0x1] %vm331, %v330
      %p333 = scmp.lt.s32.totalorder %s18, 1
      %s334 = scalar_select %p333, %s18, 1
      %p335 = scmp.lt.s32.totalorder %s19, 1
      %s336 = scalar_select %p335, %s19, 1
      %s337 = smul.addr %s334, 2
      %s338 = sadd.s32 %s336, %s337
      %s339 = scalar_lea.vmem %s3, %s338
      // Predicated region
      $region33: #{decoder_forward.6} parent=31 // pred_check
        %p340 = pneg %p116
      $region34: #{decoder_forward.6} parent=31 // pred_check_branch
        %342 = sbr.rel (%p340) target = $region36
      $region35: #{decoder_forward.6} parent=31 // pred_region
        _
      $region36: #{decoder_forward.6} parent=31 // pred_fallthru
        _
    $region32: #{decoder_forward.6} parent=5 // pred_fallthru
      _
    %p343 = scmp.le.s32.totalorder 2, %s9
    // Predicated region
    $region37: #{decoder_forward.6} parent=5 // pred_check
      %p344 = pneg %p343
    $region38: #{decoder_forward.6} parent=5 // pred_check_branch
      %346 = sbr.rel (%p344) target = $region40
    $region39: #{decoder_forward.6} parent=5 // pred_region
      %s347 = ssub.s32 %s9, 2
      // Predicated region
      $region41: #{decoder_forward.6} parent=39 // pred_check
        %p348 = pneg %p122
      $region42: #{decoder_forward.6} parent=39 // pred_check_branch
        %350 = sbr.rel (%p348) target = $region44
      $region43: #{decoder_forward.6} parent=39 // pred_region
        %p351 = scmp.lt.s32.totalorder %s20, 1
        %s352 = scalar_select %p351, %s20, 1
        %p353 = scmp.lt.s32.totalorder %s21, 1
        %s354 = scalar_select %p353, %s21, 1
        %s355 = smul.addr %s352, 2
        %s356 = sadd.s32 %s354, %s355
        %s357 = scalar_lea.vmem %s3, %s356
      $region44: #{decoder_forward.6} parent=39 // pred_fallthru
        _
    $region40: #{decoder_forward.6} parent=5 // pred_fallthru
      _
  $region6: #{decoder_forward.6} parent=0 // loop_footer
    %s13 = sadd.s32 1, %s9
  $region7: #{decoder_forward.6} parent=0 // loop_footer_branch
    %8 = sbr.rel target = $region3
  $region8: #{decoder_forward.6} parent=0 // loop_exit
    _

// kernel: decoder_forward.7
$region0: #{decoder_forward.7}
  #allocation0 [shape = 'u32[]', space=smem, size = 0x4, offset = 0x4, fixed_abs, tag = 'smem constant byte address 0x4 - core index']
  #allocation1 [shape = 'u32[72,128]{1,0:T(1,128)}', space=vmem, size = 0x9000, scoped, tag = 'internal scratch']
  #allocation2 [shape = 'f32[1,1]{1,0:T(1,128)S(1)}', space=vmem, size = 0x200, scoped, tag = 'scoped memory for decoder_forward.7']
  %s0 = inlined_call_operand.vmem [shape: bf16[2,256,16], index: 0, kind: input, shape index: {}]
  %s1 = inlined_call_operand.vmem [shape: f32[1,16], index: 1, kind: input, shape index: {}]
  %s2 = inlined_call_operand.vmem [shape: f32[1,16], index: 2, kind: input, shape index: {}]
  %s3 = inlined_call_operand.vmem [shape: f32[2,1,16], index: 3, kind: input, shape index: {}]
  %s4 = inlined_call_operand.vmem [shape: f32[1,16], index: 4, kind: input, shape index: {}]
  %s5 = inlined_call_operand.<no memory space> [shape: f32[1,1], index: 5, kind: input, shape index: {}]
  %s6 = inlined_call_operand.vmem [shape: f32[2,256,16], index: 6, kind: output, shape index: {}]
  %s7 = sld [smem:[#allocation0]]
  $region57: #{decoder_forward.7} parent=0
    _
  %s9 = ssub.s32 1, %s7
  %s10 = scalar_select 0, %s9, %s7
  %v11 = vstv %s5
  %12 = vst [vmem:[#allocation2] sm:$0x1] %v11
  loop: start=0, step=1, limit=6
  $region2: #{decoder_forward.7} parent=0 // loop_pre_header
    _
  $region3: #{decoder_forward.7} parent=0 // loop_header
    %s14 = sphi 0, %s18
    %p15 = scmp.ge.s32.totalorder %s14, 6
    %s21 = sphi 0, %s33
    %s22 = sphi 0, %s29
    %s23 = sphi 0, %s21
    %s24 = sphi 0, %s22
    %s25 = sphi 0, %s23
    %s26 = sphi 0, %s24
    %s38 = sphi 0, %s40
    %s41 = sphi 0, %s38
    %s42 = sphi 0, %s41
    %s58 = sphi 0, %s42
    %s62 = sphi 0, %s62
    %s64 = sphi 0, %s62
    %s65 = sphi 0, %s64
    %s79 = sphi 0, %s65
    %s83 = sphi 0, %s83
    %s85 = sphi 0, %s83
    %s86 = sphi 0, %s85
    %s100 = sphi 0, %s86
    %s106 = sphi 0, %s108
    %s109 = sphi 0, %s106
    %s110 = sphi 0, %s109
    %s126 = sphi 0, %s110
    %s130 = sphi 0, %s130
    %s132 = sphi 0, %s130
    %s133 = sphi 0, %s132
    %s147 = sphi 0, %s133
    %s151 = sphi 0, %s151
    %s153 = sphi 0, %s151
    %s154 = sphi 0, %s153
    %s168 = sphi 0, %s154
    %s176 = sphi 0, %s178
    %s179 = sphi 0, %s176
    %s180 = sphi 0, %s179
    %s196 = sphi 0, %s180
  $region4: #{decoder_forward.7} parent=0 // loop_header_branch
    %17 = sbr.rel (%p15) target = $region8
  $region5: #{decoder_forward.7} parent=0 // loop_body
    %s19 = ssub.s32 %s14, 1
    %s20 = ssub.s32 %s14, 2
    %s27 = sadd.s32 1, %s22
    %p28 = scmp.ge.s32.totalorder %s27, 2
    %s29 = scalar_select %p28, 0, %s27
    %s30 = sadd.s32 1, %s21
    %s31 = scalar_select %p28, %s30, %s21
    %p32 = scmp.ge.s32.totalorder %s31, 2
    %s33 = scalar_select %p32, 0, %s31
    %s34 = ssub.s32 %s21, %s33
    %s35 = ssub.s32 %s22, %s29
    %s36 = sor.u32 %s34, %s35
    %p37 = scmp.eq.s32.totalorder %s36, 0
    %s39 = sadd.s32 %s38, 1
    %s40 = scalar_select %p37, %s38, %s39
    %p43 = pneg %p37
    %p44 = scmp.eq.s32.totalorder %s14, 3
    %p45 = por %p43, %p44
    %p46 = scmp.ne.s32.totalorder %s38, %s41
    %p47 = scmp.eq.s32.totalorder %s14, 0
    %p48 = por %p46, %p47
    %p49 = scmp.ne.s32.totalorder %s38, %s41
    %p50 = scmp.eq.s32.totalorder %s19, 3
    %p51 = por %p49, %p50
    %p52 = scmp.ne.s32.totalorder %s41, %s42
    %p53 = scmp.eq.s32.totalorder %s19, 0
    %p54 = por %p52, %p53
    %p55 = scmp.ne.s32.totalorder %s41, %s42
    %p56 = scmp.eq.s32.totalorder %s20, 3
    %p57 = por %p55, %p56
    %p59 = scmp.ne.s32.totalorder %s42, %s58
    %p60 = scmp.eq.s32.totalorder %s20, 0
    %p61 = por %p59, %p60
    %s63 = sadd.s32 %s62, 1
    %p66 = scmp.eq.s32.totalorder %s14, 3
    %p67 = scmp.ne.s32.totalorder %s62, %s64
    %p68 = scmp.eq.s32.totalorder %s14, 0
    %p69 = por %p67, %p68
    %p70 = scmp.ne.s32.totalorder %s62, %s64
    %p71 = scmp.eq.s32.totalorder %s19, 3
    %p72 = por %p70, %p71
    %p73 = scmp.ne.s32.totalorder %s64, %s65
    %p74 = scmp.eq.s32.totalorder %s19, 0
    %p75 = por %p73, %p74
    %p76 = scmp.ne.s32.totalorder %s64, %s65
    %p77 = scmp.eq.s32.totalorder %s20, 3
    %p78 = por %p76, %p77
    %p80 = scmp.ne.s32.totalorder %s65, %s79
    %p81 = scmp.eq.s32.totalorder %s20, 0
    %p82 = por %p80, %p81
    %s84 = sadd.s32 %s83, 1
    %p87 = scmp.eq.s32.totalorder %s14, 3
    %p88 = scmp.ne.s32.totalorder %s83, %s85
    %p89 = scmp.eq.s32.totalorder %s14, 0
    %p90 = por %p88, %p89
    %p91 = scmp.ne.s32.totalorder %s83, %s85
    %p92 = scmp.eq.s32.totalorder %s19, 3
    %p93 = por %p91, %p92
    %p94 = scmp.ne.s32.totalorder %s85, %s86
    %p95 = scmp.eq.s32.totalorder %s19, 0
    %p96 = por %p94, %p95
    %p97 = scmp.ne.s32.totalorder %s85, %s86
    %p98 = scmp.eq.s32.totalorder %s20, 3
    %p99 = por %p97, %p98
    %p101 = scmp.ne.s32.totalorder %s86, %s100
    %p102 = scmp.eq.s32.totalorder %s20, 0
    %p103 = por %p101, %p102
    %s104 = ssub.s32 %s21, %s33
    %p105 = scmp.eq.s32.totalorder %s104, 0
    %s107 = sadd.s32 %s106, 1
    %s108 = scalar_select %p105, %s106, %s107
    %p111 = pneg %p105
    %p112 = scmp.eq.s32.totalorder %s14, 3
    %p113 = por %p111, %p112
    %p114 = scmp.ne.s32.totalorder %s106, %s109
    %p115 = scmp.eq.s32.totalorder %s14, 0
    %p116 = por %p114, %p115
    %p117 = scmp.ne.s32.totalorder %s106, %s109
    %p118 = scmp.eq.s32.totalorder %s19, 3
    %p119 = por %p117, %p118
    %p120 = scmp.ne.s32.totalorder %s109, %s110
    %p121 = scmp.eq.s32.totalorder %s19, 0
    %p122 = por %p120, %p121
    %p123 = scmp.ne.s32.totalorder %s109, %s110
    %p124 = scmp.eq.s32.totalorder %s20, 3
    %p125 = por %p123, %p124
    %p127 = scmp.ne.s32.totalorder %s110, %s126
    %p128 = scmp.eq.s32.totalorder %s20, 0
    %p129 = por %p127, %p128
    %s131 = sadd.s32 %s130, 1
    %p134 = scmp.eq.s32.totalorder %s14, 3
    %p135 = scmp.ne.s32.totalorder %s130, %s132
    %p136 = scmp.eq.s32.totalorder %s14, 0
    %p137 = por %p135, %p136
    %p138 = scmp.ne.s32.totalorder %s130, %s132
    %p139 = scmp.eq.s32.totalorder %s19, 3
    %p140 = por %p138, %p139
    %p141 = scmp.ne.s32.totalorder %s132, %s133
    %p142 = scmp.eq.s32.totalorder %s19, 0
    %p143 = por %p141, %p142
    %p144 = scmp.ne.s32.totalorder %s132, %s133
    %p145 = scmp.eq.s32.totalorder %s20, 3
    %p146 = por %p144, %p145
    %p148 = scmp.ne.s32.totalorder %s133, %s147
    %p149 = scmp.eq.s32.totalorder %s20, 0
    %p150 = por %p148, %p149
    %s152 = sadd.s32 %s151, 1
    %p155 = scmp.eq.s32.totalorder %s14, 3
    %p156 = scmp.ne.s32.totalorder %s151, %s153
    %p157 = scmp.eq.s32.totalorder %s14, 0
    %p158 = por %p156, %p157
    %p159 = scmp.ne.s32.totalorder %s151, %s153
    %p160 = scmp.eq.s32.totalorder %s19, 3
    %p161 = por %p159, %p160
    %p162 = scmp.ne.s32.totalorder %s153, %s154
    %p163 = scmp.eq.s32.totalorder %s19, 0
    %p164 = por %p162, %p163
    %p165 = scmp.ne.s32.totalorder %s153, %s154
    %p166 = scmp.eq.s32.totalorder %s20, 3
    %p167 = por %p165, %p166
    %p169 = scmp.ne.s32.totalorder %s154, %s168
    %p170 = scmp.eq.s32.totalorder %s20, 0
    %p171 = por %p169, %p170
    %s172 = ssub.s32 %s21, %s33
    %s173 = ssub.s32 %s22, %s29
    %s174 = sor.u32 %s172, %s173
    %p175 = scmp.eq.s32.totalorder %s174, 0
    %s177 = sadd.s32 %s176, 1
    %s178 = scalar_select %p175, %s176, %s177
    %p181 = pneg %p175
    %p182 = scmp.eq.s32.totalorder %s14, 3
    %p183 = por %p181, %p182
    %p184 = scmp.ne.s32.totalorder %s176, %s179
    %p185 = scmp.eq.s32.totalorder %s14, 0
    %p186 = por %p184, %p185
    %p187 = scmp.ne.s32.totalorder %s176, %s179
    %p188 = scmp.eq.s32.totalorder %s19, 3
    %p189 = por %p187, %p188
    %p190 = scmp.ne.s32.totalorder %s179, %s180
    %p191 = scmp.eq.s32.totalorder %s19, 0
    %p192 = por %p190, %p191
    %p193 = scmp.ne.s32.totalorder %s179, %s180
    %p194 = scmp.eq.s32.totalorder %s20, 3
    %p195 = por %p193, %p194
    %p197 = scmp.ne.s32.totalorder %s180, %s196
    %p198 = scmp.eq.s32.totalorder %s20, 0
    %p199 = por %p197, %p198
    %p200 = scmp.le.s32.totalorder 1, %s14
    %p201 = scmp.lt.s32.totalorder %s14, 5
    %p202 = pnand %p200, %p201
    %p203 = pneg %p202
    // Predicated region
    $region9: #{decoder_forward.7} parent=5 // pred_check
      _
    $region10: #{decoder_forward.7} parent=5 // pred_check_branch
      %205 = sbr.rel (%p202) target = $region12
    $region11: #{decoder_forward.7} parent=5 // pred_region
      %s206 = ssub.s32 %s14, 1
      // Predicated region
      $region13: #{decoder_forward.7} parent=11 // pred_check
        %p207 = pneg %p75
      $region14: #{decoder_forward.7} parent=11 // pred_check_branch
        %209 = sbr.rel (%p207) target = $region16
      $region15: #{decoder_forward.7} parent=11 // pred_region
        _
      $region16: #{decoder_forward.7} parent=11 // pred_fallthru
        _
      // Predicated region
      $region17: #{decoder_forward.7} parent=11 // pred_check
        %p210 = pneg %p96
      $region18: #{decoder_forward.7} parent=11 // pred_check_branch
        %212 = sbr.rel (%p210) target = $region20
      $region19: #{decoder_forward.7} parent=11 // pred_region
        _
      $region20: #{decoder_forward.7} parent=11 // pred_fallthru
        _
      // Predicated region
      $region21: #{decoder_forward.7} parent=11 // pred_check
        %p213 = pneg %p143
      $region22: #{decoder_forward.7} parent=11 // pred_check_branch
        %215 = sbr.rel (%p213) target = $region24
      $region23: #{decoder_forward.7} parent=11 // pred_region
        _
      $region24: #{decoder_forward.7} parent=11 // pred_fallthru
        _
      // Predicated region
      $region25: #{decoder_forward.7} parent=11 // pred_check
        %p216 = pneg %p164
      $region26: #{decoder_forward.7} parent=11 // pred_check_branch
        %218 = sbr.rel (%p216) target = $region28
      $region27: #{decoder_forward.7} parent=11 // pred_region
        _
      $region28: #{decoder_forward.7} parent=11 // pred_fallthru
        _
    $region12: #{decoder_forward.7} parent=5 // pred_fallthru
      _
    %p219 = scmp.lt.s32.totalorder %s14, 4
    // Predicated region
    $region29: #{decoder_forward.7} parent=5 // pred_check
      %p220 = pneg %p219
    $region30: #{decoder_forward.7} parent=5 // pred_check_branch
      %222 = sbr.rel (%p220) target = $region32
    $region31: #{decoder_forward.7} parent=5 // pred_region
      // Predicated region
      $region33: #{decoder_forward.7} parent=31 // pred_check
        %p223 = pneg %p48
      $region34: #{decoder_forward.7} parent=31 // pred_check_branch
        %225 = sbr.rel (%p223) target = $region36
      $region35: #{decoder_forward.7} parent=31 // pred_region
        %s226 = smul.u32 16, %s22
        %p227 = scmp.lt.s32.totalorder %s21, 1
        %s228 = scalar_select %p227, %s21, 1
        %p229 = scmp.lt.s32.totalorder %s226, 31
        %s230 = scalar_select %p229, %s226, 31
        %s231 = smul.addr %s228, 32
        %s232 = sadd.s32 %s230, %s231
        %s233 = smul.addr %s232, 4
        %s234 = scalar_lea.vmem %s0, %s233
        %s235 = smul.u32 16, %s22
      $region36: #{decoder_forward.7} parent=31 // pred_fallthru
        _
      // Predicated region
      $region37: #{decoder_forward.7} parent=31 // pred_check
        %p236 = pneg %p116
      $region38: #{decoder_forward.7} parent=31 // pred_check_branch
        %238 = sbr.rel (%p236) target = $region40
      $region39: #{decoder_forward.7} parent=31 // pred_region
        %p239 = scmp.lt.s32.totalorder %s21, 1
        %s240 = scalar_select %p239, %s21, 1
        %s241 = scalar_lea.vmem %s3, %s240
      $region40: #{decoder_forward.7} parent=31 // pred_fallthru
        _
    $region32: #{decoder_forward.7} parent=5 // pred_fallthru
      _
    %p242 = scmp.le.s32.totalorder 1, %s14
    %p243 = scmp.lt.s32.totalorder %s14, 5
    %p244 = pnand %p242, %p243
    %p245 = pneg %p244
    // Predicated region
    $region41: #{decoder_forward.7} parent=5 // pred_check
      _
    $region42: #{decoder_forward.7} parent=5 // pred_check_branch
      %247 = sbr.rel (%p244) target = $region44
    $region43: #{decoder_forward.7} parent=5 // pred_region
      %s248 = ssub.s32 %s14, 1
      %s249 = smul.u32 16, %s24
      %p250 = scmp.lt.s32.totalorder %s23, 1
      %s251 = scalar_select %p250, %s23, 1
      %p252 = scmp.lt.s32.totalorder %s249, 31
      %s253 = scalar_select %p252, %s249, 31
      %s254 = smul.addr %s251, 32
      %s255 = sadd.s32 %s253, %s254
      %s256 = smul.addr %s255, 4
      %s257 = scalar_lea.vmem %s0, %s256
      %p258 = pneg %p54
      %p259 = pneg %p51
      %p260 = pneg %p75
      %p261 = pneg %p72
      %p262 = pneg %p96
      %p263 = pneg %p93
      %p264 = scmp.lt.s32.totalorder %s23, 1
      %s265 = scalar_select %p264, %s23, 1
      %s266 = scalar_lea.vmem %s3, %s265
      %p267 = pneg %p122
      %p268 = pneg %p119
      %p269 = pneg %p143
      %p270 = pneg %p140
      %p271 = pneg %p164
      %p272 = pneg %p161
      %p273 = pneg %p192
      %p274 = pneg %p189
      %s275 = smul.u32 16, %s24
      %p276 = scmp.lt.s32.totalorder %s23, 1
      %s277 = scalar_select %p276, %s23, 1
      %p278 = scmp.lt.s32.totalorder %s275, 31
      %s279 = scalar_select %p278, %s275, 31
      %s280 = smul.addr %s277, 32
      %s281 = sadd.s32 %s279, %s280
      %s282 = smul.addr %s281, 8
      %s283 = scalar_lea.vmem %s6, %s282
      %s284 = smul.u32 16, %s24
      %p285 = scmp.lt.s32.totalorder %s23, 1
      %s286 = scalar_select %p285, %s23, 1
      %p287 = scmp.lt.s32.totalorder %s284, 31
      %s288 = scalar_select %p287, %s284, 31
      %s289 = smul.addr %s286, 32
      %s290 = sadd.s32 %s288, %s289
      %s291 = smul.addr %s290, 4
      %s292 = scalar_lea.vmem %s0, %s291
      %s293 = smul.u32 16, %s24
      %p294 = scmp.lt.s32.totalorder %s23, 1
      %s295 = scalar_select %p294, %s23, 1
      %s296 = scalar_lea.vmem %s3, %s295
      %s297 = smul.u32 16, %s24
      %p298 = scmp.lt.s32.totalorder %s23, 1
      %s299 = scalar_select %p298, %s23, 1
      %p300 = scmp.lt.s32.totalorder %s297, 31
      %s301 = scalar_select %p300, %s297, 31
      %s302 = smul.addr %s299, 32
      %s303 = sadd.s32 %s301, %s302
      %s304 = smul.addr %s303, 8
      %s305 = scalar_lea.vmem %s6, %s304
      %s306 = smul.u32 16, %s24
      %v307 = vld [vmem:[%s292] sm:$0xf]
      %v308 = vld [vmem:[%s292 + $0x4] sm:$0xf]
      %v309 = vld [vmem:[%s292 + $0x8] sm:$0xf]
      %v310 = vld [vmem:[%s292 + $0xc] sm:$0xf]
      %v311 = vld [vmem:[%s292 + $0x10] sm:$0xf]
      %v312 = vld [vmem:[%s292 + $0x14] sm:$0xf]
      %v313 = vld [vmem:[%s292 + $0x18] sm:$0xf]
      %v314 = vld [vmem:[%s292 + $0x1c] sm:$0xf]
      %v315 = vld [vmem:[%s292 + $0x20] sm:$0xf]
      %v316 = vld [vmem:[%s292 + $0x24] sm:$0xf]
      %v317 = vld [vmem:[%s292 + $0x28] sm:$0xf]
      %v318 = vld [vmem:[%s292 + $0x2c] sm:$0xf]
      %v319 = vld [vmem:[%s292 + $0x30] sm:$0xf]
      %v320 = vld [vmem:[%s292 + $0x34] sm:$0xf]
      %v321 = vld [vmem:[%s292 + $0x38] sm:$0xf]
      %v322 = vld [vmem:[%s292 + $0x3c] sm:$0xf]
      %v323 = vunpack.c.l.bf16 %v307
      %v324 = vunpack.c.l.bf16 %v308
      %v325 = vunpack.c.l.bf16 %v309
      %v326 = vunpack.c.l.bf16 %v310
      %v327 = vunpack.c.l.bf16 %v311
      %v328 = vunpack.c.l.bf16 %v312
      %v329 = vunpack.c.l.bf16 %v313
      %v330 = vunpack.c.l.bf16 %v314
      %v331 = vunpack.c.l.bf16 %v315
      %v332 = vunpack.c.l.bf16 %v316
      %v333 = vunpack.c.l.bf16 %v317
      %v334 = vunpack.c.l.bf16 %v318
      %v335 = vunpack.c.l.bf16 %v319
      %v336 = vunpack.c.l.bf16 %v320
      %v337 = vunpack.c.l.bf16 %v321
      %v338 = vunpack.c.l.bf16 %v322
      %v339 = vld [vmem:[%s1] sm:$0x1]
      %v341 = vperm.slane %v339, 0
      %v343 = vmul.f32 %v323, %v341
      %v344 = vmul.f32 %v324, %v341
      %v345 = vmul.f32 %v325, %v341
      %v346 = vmul.f32 %v326, %v341
      %v347 = vmul.f32 %v327, %v341
      %v348 = vmul.f32 %v328, %v341
      %v349 = vmul.f32 %v329, %v341
      %v350 = vmul.f32 %v330, %v341
      %v351 = vmul.f32 %v331, %v341
      %v352 = vmul.f32 %v332, %v341
      %v353 = vmul.f32 %v333, %v341
      %v354 = vmul.f32 %v334, %v341
      %v355 = vmul.f32 %v335, %v341
      %v356 = vmul.f32 %v336, %v341
      %v357 = vmul.f32 %v337, %v341
      %v358 = vmul.f32 %v338, %v341
      %v359 = vld [vmem:[%s2] sm:$0x1]
      %v361 = vperm.slane %v359, 0
      %v363 = vadd.f32 %v343, %v361
      %v364 = vadd.f32 %v344, %v361
      %v365 = vadd.f32 %v345, %v361
      %v366 = vadd.f32 %v346, %v361
      %v367 = vadd.f32 %v347, %v361
      %v368 = vadd.f32 %v348, %v361
      %v369 = vadd.f32 %v349, %v361
      %v370 = vadd.f32 %v350, %v361
      %v371 = vadd.f32 %v351, %v361
      %v372 = vadd.f32 %v352, %v361
      %v373 = vadd.f32 %v353, %v361
      %v374 = vadd.f32 %v354, %v361
      %v375 = vadd.f32 %v355, %v361
      %v376 = vadd.f32 %v356, %v361
      %v377 = vadd.f32 %v357, %v361
      %v378 = vadd.f32 %v358, %v361
      %v379 = vmax.f32 %v363, 0.0
      %v380 = vmax.f32 %v364, 0.0
      %v381 = vmax.f32 %v365, 0.0
      %v382 = vmax.f32 %v366, 0.0
      %v383 = vmax.f32 %v367, 0.0
      %v384 = vmax.f32 %v368, 0.0
      %v385 = vmax.f32 %v369, 0.0
      %v386 = vmax.f32 %v370, 0.0
      %v387 = vmax.f32 %v371, 0.0
      %v388 = vmax.f32 %v372, 0.0
      %v389 = vmax.f32 %v373, 0.0
      %v390 = vmax.f32 %v374, 0.0
      %v391 = vmax.f32 %v375, 0.0
      %v392 = vmax.f32 %v376, 0.0
      %v393 = vmax.f32 %v377, 0.0
      %v394 = vmax.f32 %v378, 0.0
      %v395 = vld [vmem:[%s4] sm:$0x1]
      %v397 = vperm.slane %v395, 0
      %v399 = vmul.f32 %v379, %v397
      %v400 = vmul.f32 %v380, %v397
      %v401 = vmul.f32 %v381, %v397
      %v402 = vmul.f32 %v382, %v397
      %v403 = vmul.f32 %v383, %v397
      %v404 = vmul.f32 %v384, %v397
      %v405 = vmul.f32 %v385, %v397
      %v406 = vmul.f32 %v386, %v397
      %v407 = vmul.f32 %v387, %v397
      %v408 = vmul.f32 %v388, %v397
      %v409 = vmul.f32 %v389, %v397
      %v410 = vmul.f32 %v390, %v397
      %v411 = vmul.f32 %v391, %v397
      %v412 = vmul.f32 %v392, %v397
      %v413 = vmul.f32 %v393, %v397
      %v414 = vmul.f32 %v394, %v397
      %vm415 = vcmask 130048
      %v416 = vsel %vm415, %v399, 0.0
      %417 = vadd.xlane.f32.xlu0 %v416
      %v418 = vpop.xlane.xlu0 %417
      %v419 = vsel %vm415, %v400, 0.0
      %420 = vadd.xlane.f32.xlu0 %v419
      %v421 = vpop.xlane.xlu0 %420
      %v422 = vsel %vm415, %v401, 0.0
      %423 = vadd.xlane.f32.xlu0 %v422
      %v424 = vpop.xlane.xlu0 %423
      %v425 = vsel %vm415, %v402, 0.0
      %426 = vadd.xlane.f32.xlu0 %v425
      %v427 = vpop.xlane.xlu0 %426
      %v428 = vsel %vm415, %v403, 0.0
      %429 = vadd.xlane.f32.xlu0 %v428
      %v430 = vpop.xlane.xlu0 %429
      %v431 = vsel %vm415, %v404, 0.0
      %432 = vadd.xlane.f32.xlu0 %v431
      %v433 = vpop.xlane.xlu0 %432
      %v434 = vsel %vm415, %v405, 0.0
      %435 = vadd.xlane.f32.xlu0 %v434
      %v436 = vpop.xlane.xlu0 %435
      %v437 = vsel %vm415, %v406, 0.0
      %438 = vadd.xlane.f32.xlu0 %v437
      %v439 = vpop.xlane.xlu0 %438
      %v440 = vsel %vm415, %v407, 0.0
      %441 = vadd.xlane.f32.xlu0 %v440
      %v442 = vpop.xlane.xlu0 %441
      %v443 = vsel %vm415, %v408, 0.0
      %444 = vadd.xlane.f32.xlu0 %v443
      %v445 = vpop.xlane.xlu0 %444
      %v446 = vsel %vm415, %v409, 0.0
      %447 = vadd.xlane.f32.xlu0 %v446
      %v448 = vpop.xlane.xlu0 %447
      %v449 = vsel %vm415, %v410, 0.0
      %450 = vadd.xlane.f32.xlu0 %v449
      %v451 = vpop.xlane.xlu0 %450
      %v452 = vsel %vm415, %v411, 0.0
      %453 = vadd.xlane.f32.xlu0 %v452
      %v454 = vpop.xlane.xlu0 %453
      %v455 = vsel %vm415, %v412, 0.0
      %456 = vadd.xlane.f32.xlu0 %v455
      %v457 = vpop.xlane.xlu0 %456
      %v458 = vsel %vm415, %v413, 0.0
      %459 = vadd.xlane.f32.xlu0 %v458
      %v460 = vpop.xlane.xlu0 %459
      %v461 = vsel %vm415, %v414, 0.0
      %462 = vadd.xlane.f32.xlu0 %v461
      %v463 = vpop.xlane.xlu0 %462
      %v464 = vld [vmem:[#allocation2] sm:$0x1]
      %v466 = vperm.slane %v464, 0
      %v468 = vadd.f32 %v418, %v466
      %v469 = vadd.f32 %v421, %v466
      %v470 = vadd.f32 %v424, %v466
      %v471 = vadd.f32 %v427, %v466
      %v472 = vadd.f32 %v430, %v466
      %v473 = vadd.f32 %v433, %v466
      %v474 = vadd.f32 %v436, %v466
      %v475 = vadd.f32 %v439, %v466
      %v476 = vadd.f32 %v442, %v466
      %v477 = vadd.f32 %v445, %v466
      %v478 = vadd.f32 %v448, %v466
      %v479 = vadd.f32 %v451, %v466
      %v480 = vadd.f32 %v454, %v466
      %v481 = vadd.f32 %v457, %v466
      %v482 = vadd.f32 %v460, %v466
      %v483 = vadd.f32 %v463, %v466
      %v484 = vld [vmem:[%s296] sm:$0x1]
      %v485 = vxor.u32 %v468, 2147483648
      %v486 = vxor.u32 %v469, 2147483648
      %v487 = vxor.u32 %v470, 2147483648
      %v488 = vxor.u32 %v471, 2147483648
      %v489 = vxor.u32 %v472, 2147483648
      %v490 = vxor.u32 %v473, 2147483648
      %v491 = vxor.u32 %v474, 2147483648
      %v492 = vxor.u32 %v475, 2147483648
      %v493 = vxor.u32 %v476, 2147483648
      %v494 = vxor.u32 %v477, 2147483648
      %v495 = vxor.u32 %v478, 2147483648
      %v496 = vxor.u32 %v479, 2147483648
      %v497 = vxor.u32 %v480, 2147483648
      %v498 = vxor.u32 %v481, 2147483648
      %v499 = vxor.u32 %v482, 2147483648
      %v500 = vxor.u32 %v483, 2147483648
      %v501 = vmul.f32 %v485, 1.442695
      %v502 = vpow.pop %v501
      %v503 = vmul.f32 %v486, 1.442695
      %v504 = vpow.pop %v503
      %v505 = vmul.f32 %v487, 1.442695
      %v506 = vpow.pop %v505
      %v507 = vmul.f32 %v488, 1.442695
      %v508 = vpow.pop %v507
      %v509 = vmul.f32 %v489, 1.442695
      %v510 = vpow.pop %v509
      %v511 = vmul.f32 %v490, 1.442695
      %v512 = vpow.pop %v511
      %v513 = vmul.f32 %v491, 1.442695
      %v514 = vpow.pop %v513
      %v515 = vmul.f32 %v492, 1.442695
      %v516 = vpow.pop %v515
      %v517 = vmul.f32 %v493, 1.442695
      %v518 = vpow.pop %v517
      %v519 = vmul.f32 %v494, 1.442695
      %v520 = vpow.pop %v519
      %v521 = vmul.f32 %v495, 1.442695
      %v522 = vpow.pop %v521
      %v523 = vmul.f32 %v496, 1.442695
      %v524 = vpow.pop %v523
      %v525 = vmul.f32 %v497, 1.442695
      %v526 = vpow.pop %v525
      %v527 = vmul.f32 %v498, 1.442695
      %v528 = vpow.pop %v527
      %v529 = vmul.f32 %v499, 1.442695
      %v530 = vpow.pop %v529
      %v531 = vmul.f32 %v500, 1.442695
      %v532 = vpow.pop %v531
      %v533 = vadd.f32 %v502, 1.0
      %v534 = vadd.f32 %v504, 1.0
      %v535 = vadd.f32 %v506, 1.0
      %v536 = vadd.f32 %v508, 1.0
      %v537 = vadd.f32 %v510, 1.0
      %v538 = vadd.f32 %v512, 1.0
      %v539 = vadd.f32 %v514, 1.0
      %v540 = vadd.f32 %v516, 1.0
      %v541 = vadd.f32 %v518, 1.0
      %v542 = vadd.f32 %v520, 1.0
      %v543 = vadd.f32 %v522, 1.0
      %v544 = vadd.f32 %v524, 1.0
      %v545 = vadd.f32 %v526, 1.0
      %v546 = vadd.f32 %v528, 1.0
      %v547 = vadd.f32 %v530, 1.0
      %v548 = vadd.f32 %v532, 1.0
      %v549 = vrcp.pop %v533
      %v550 = vmul.f32 %v533, %v549
      %v551 = vsub.f32 1.0, %v550
      %v552 = vmul.f32 %v549, %v551
      %v553 = vadd.f32 %v549, %v552
      %vm554 = vweird.f32 %v533
      %vm555 = vweird.f32 %v549
      %vm556 = vmor %vm554, %vm555
      %v557 = vsel %vm556, %v549, %v553
      %v558 = vand.u32 2147483647, %v533
      %vm559 = vcmp.eq.f32.partialorder %v558, 8.507059e+37
      %v560 = vand.u32 %v533, 2147483648
      %v561 = vor.u32 1.1754944e-38, %v560
      %v562 = vsel %vm559, %v561, %v557
      %v563 = vmul.f32 1.0, %v562
      %v564 = vrcp.pop %v534
      %v565 = vmul.f32 %v534, %v564
      %v566 = vsub.f32 1.0, %v565
      %v567 = vmul.f32 %v564, %v566
      %v568 = vadd.f32 %v564, %v567
      %vm569 = vweird.f32 %v534
      %vm570 = vweird.f32 %v564
      %vm571 = vmor %vm569, %vm570
      %v572 = vsel %vm571, %v564, %v568
      %v573 = vand.u32 2147483647, %v534
      %vm574 = vcmp.eq.f32.partialorder %v573, 8.507059e+37
      %v575 = vand.u32 %v534, 2147483648
      %v576 = vor.u32 1.1754944e-38, %v575
      %v577 = vsel %vm574, %v576, %v572
      %v578 = vmul.f32 1.0, %v577
      %v579 = vrcp.pop %v535
      %v580 = vmul.f32 %v535, %v579
      %v581 = vsub.f32 1.0, %v580
      %v582 = vmul.f32 %v579, %v581
      %v583 = vadd.f32 %v579, %v582
      %vm584 = vweird.f32 %v535
      %vm585 = vweird.f32 %v579
      %vm586 = vmor %vm584, %vm585
      %v587 = vsel %vm586, %v579, %v583
      %v588 = vand.u32 2147483647, %v535
      %vm589 = vcmp.eq.f32.partialorder %v588, 8.507059e+37
      %v590 = vand.u32 %v535, 2147483648
      %v591 = vor.u32 1.1754944e-38, %v590
      %v592 = vsel %vm589, %v591, %v587
      %v593 = vmul.f32 1.0, %v592
      %v594 = vrcp.pop %v536
      %v595 = vmul.f32 %v536, %v594
      %v596 = vsub.f32 1.0, %v595
      %v597 = vmul.f32 %v594, %v596
      %v598 = vadd.f32 %v594, %v597
      %vm599 = vweird.f32 %v536
      %vm600 = vweird.f32 %v594
      %vm601 = vmor %vm599, %vm600
      %v602 = vsel %vm601, %v594, %v598
      %v603 = vand.u32 2147483647, %v536
      %vm604 = vcmp.eq.f32.partialorder %v603, 8.507059e+37
      %v605 = vand.u32 %v536, 2147483648
      %v606 = vor.u32 1.1754944e-38, %v605
      %v607 = vsel %vm604, %v606, %v602
      %v608 = vmul.f32 1.0, %v607
      %v609 = vrcp.pop %v537
      %v610 = vmul.f32 %v537, %v609
      %v611 = vsub.f32 1.0, %v610
      %v612 = vmul.f32 %v609, %v611
      %v613 = vadd.f32 %v609, %v612
      %vm614 = vweird.f32 %v537
      %vm615 = vweird.f32 %v609
      %vm616 = vmor %vm614, %vm615
      %v617 = vsel %vm616, %v609, %v613
      %v618 = vand.u32 2147483647, %v537
      %vm619 = vcmp.eq.f32.partialorder %v618, 8.507059e+37
      %v620 = vand.u32 %v537, 2147483648
      %v621 = vor.u32 1.1754944e-38, %v620
      %v622 = vsel %vm619, %v621, %v617
      %v623 = vmul.f32 1.0, %v622
      %v624 = vrcp.pop %v538
      %v625 = vmul.f32 %v538, %v624
      %v626 = vsub.f32 1.0, %v625
      %v627 = vmul.f32 %v624, %v626
      %v628 = vadd.f32 %v624, %v627
      %vm629 = vweird.f32 %v538
      %vm630 = vweird.f32 %v624
      %vm631 = vmor %vm629, %vm630
      %v632 = vsel %vm631, %v624, %v628
      %v633 = vand.u32 2147483647, %v538
      %vm634 = vcmp.eq.f32.partialorder %v633, 8.507059e+37
      %v635 = vand.u32 %v538, 2147483648
      %v636 = vor.u32 1.1754944e-38, %v635
      %v637 = vsel %vm634, %v636, %v632
      %v638 = vmul.f32 1.0, %v637
      %v639 = vrcp.pop %v539
      %v640 = vmul.f32 %v539, %v639
      %v641 = vsub.f32 1.0, %v640
      %v642 = vmul.f32 %v639, %v641
      %v643 = vadd.f32 %v639, %v642
      %vm644 = vweird.f32 %v539
      %vm645 = vweird.f32 %v639
      %vm646 = vmor %vm644, %vm645
      %v647 = vsel %vm646, %v639, %v643
      %v648 = vand.u32 2147483647, %v539
      %vm649 = vcmp.eq.f32.partialorder %v648, 8.507059e+37
      %v650 = vand.u32 %v539, 2147483648
      %v651 = vor.u32 1.1754944e-38, %v650
      %v652 = vsel %vm649, %v651, %v647
      %v653 = vmul.f32 1.0, %v652
      %v654 = vrcp.pop %v540
      %v655 = vmul.f32 %v540, %v654
      %v656 = vsub.f32 1.0, %v655
      %v657 = vmul.f32 %v654, %v656
      %v658 = vadd.f32 %v654, %v657
      %vm659 = vweird.f32 %v540
      %vm660 = vweird.f32 %v654
      %vm661 = vmor %vm659, %vm660
      %v662 = vsel %vm661, %v654, %v658
      %v663 = vand.u32 2147483647, %v540
      %vm664 = vcmp.eq.f32.partialorder %v663, 8.507059e+37
      %v665 = vand.u32 %v540, 2147483648
      %v666 = vor.u32 1.1754944e-38, %v665
      %v667 = vsel %vm664, %v666, %v662
      %v668 = vmul.f32 1.0, %v667
      %v669 = vrcp.pop %v541
      %v670 = vmul.f32 %v541, %v669
      %v671 = vsub.f32 1.0, %v670
      %v672 = vmul.f32 %v669, %v671
      %v673 = vadd.f32 %v669, %v672
      %vm674 = vweird.f32 %v541
      %vm675 = vweird.f32 %v669
      %vm676 = vmor %vm674, %vm675
      %v677 = vsel %vm676, %v669, %v673
      %v678 = vand.u32 2147483647, %v541
      %vm679 = vcmp.eq.f32.partialorder %v678, 8.507059e+37
      %v680 = vand.u32 %v541, 2147483648
      %v681 = vor.u32 1.1754944e-38, %v680
      %v682 = vsel %vm679, %v681, %v677
      %v683 = vmul.f32 1.0, %v682
      %v684 = vrcp.pop %v542
      %v685 = vmul.f32 %v542, %v684
      %v686 = vsub.f32 1.0, %v685
      %v687 = vmul.f32 %v684, %v686
      %v688 = vadd.f32 %v684, %v687
      %vm689 = vweird.f32 %v542
      %vm690 = vweird.f32 %v684
      %vm691 = vmor %vm689, %vm690
      %v692 = vsel %vm691, %v684, %v688
      %v693 = vand.u32 2147483647, %v542
      %vm694 = vcmp.eq.f32.partialorder %v693, 8.507059e+37
      %v695 = vand.u32 %v542, 2147483648
      %v696 = vor.u32 1.1754944e-38, %v695
      %v697 = vsel %vm694, %v696, %v692
      %v698 = vmul.f32 1.0, %v697
      %v699 = vrcp.pop %v543
      %v700 = vmul.f32 %v543, %v699
      %v701 = vsub.f32 1.0, %v700
      %v702 = vmul.f32 %v699, %v701
      %v703 = vadd.f32 %v699, %v702
      %vm704 = vweird.f32 %v543
      %vm705 = vweird.f32 %v699
      %vm706 = vmor %vm704, %vm705
      %v707 = vsel %vm706, %v699, %v703
      %v708 = vand.u32 2147483647, %v543
      %vm709 = vcmp.eq.f32.partialorder %v708, 8.507059e+37
      %v710 = vand.u32 %v543, 2147483648
      %v711 = vor.u32 1.1754944e-38, %v710
      %v712 = vsel %vm709, %v711, %v707
      %v713 = vmul.f32 1.0, %v712
      %v714 = vrcp.pop %v544
      %v715 = vmul.f32 %v544, %v714
      %v716 = vsub.f32 1.0, %v715
      %v717 = vmul.f32 %v714, %v716
      %v718 = vadd.f32 %v714, %v717
      %vm719 = vweird.f32 %v544
      %vm720 = vweird.f32 %v714
      %vm721 = vmor %vm719, %vm720
      %v722 = vsel %vm721, %v714, %v718
      %v723 = vand.u32 2147483647, %v544
      %vm724 = vcmp.eq.f32.partialorder %v723, 8.507059e+37
      %v725 = vand.u32 %v544, 2147483648
      %v726 = vor.u32 1.1754944e-38, %v725
      %v727 = vsel %vm724, %v726, %v722
      %v728 = vmul.f32 1.0, %v727
      %v729 = vrcp.pop %v545
      %v730 = vmul.f32 %v545, %v729
      %v731 = vsub.f32 1.0, %v730
      %v732 = vmul.f32 %v729, %v731
      %v733 = vadd.f32 %v729, %v732
      %vm734 = vweird.f32 %v545
      %vm735 = vweird.f32 %v729
      %vm736 = vmor %vm734, %vm735
      %v737 = vsel %vm736, %v729, %v733
      %v738 = vand.u32 2147483647, %v545
      %vm739 = vcmp.eq.f32.partialorder %v738, 8.507059e+37
      %v740 = vand.u32 %v545, 2147483648
      %v741 = vor.u32 1.1754944e-38, %v740
      %v742 = vsel %vm739, %v741, %v737
      %v743 = vmul.f32 1.0, %v742
      %v744 = vrcp.pop %v546
      %v745 = vmul.f32 %v546, %v744
      %v746 = vsub.f32 1.0, %v745
      %v747 = vmul.f32 %v744, %v746
      %v748 = vadd.f32 %v744, %v747
      %vm749 = vweird.f32 %v546
      %vm750 = vweird.f32 %v744
      %vm751 = vmor %vm749, %vm750
      %v752 = vsel %vm751, %v744, %v748
      %v753 = vand.u32 2147483647, %v546
      %vm754 = vcmp.eq.f32.partialorder %v753, 8.507059e+37
      %v755 = vand.u32 %v546, 2147483648
      %v756 = vor.u32 1.1754944e-38, %v755
      %v757 = vsel %vm754, %v756, %v752
      %v758 = vmul.f32 1.0, %v757
      %v759 = vrcp.pop %v547
      %v760 = vmul.f32 %v547, %v759
      %v761 = vsub.f32 1.0, %v760
      %v762 = vmul.f32 %v759, %v761
      %v763 = vadd.f32 %v759, %v762
      %vm764 = vweird.f32 %v547
      %vm765 = vweird.f32 %v759
      %vm766 = vmor %vm764, %vm765
      %v767 = vsel %vm766, %v759, %v763
      %v768 = vand.u32 2147483647, %v547
      %vm769 = vcmp.eq.f32.partialorder %v768, 8.507059e+37
      %v770 = vand.u32 %v547, 2147483648
      %v771 = vor.u32 1.1754944e-38, %v770
      %v772 = vsel %vm769, %v771, %v767
      %v773 = vmul.f32 1.0, %v772
      %v774 = vrcp.pop %v548
      %v775 = vmul.f32 %v548, %v774
      %v776 = vsub.f32 1.0, %v775
      %v777 = vmul.f32 %v774, %v776
      %v778 = vadd.f32 %v774, %v777
      %vm779 = vweird.f32 %v548
      %vm780 = vweird.f32 %v774
      %vm781 = vmor %vm779, %vm780
      %v782 = vsel %vm781, %v774, %v778
      %v783 = vand.u32 2147483647, %v548
      %vm784 = vcmp.eq.f32.partialorder %v783, 8.507059e+37
      %v785 = vand.u32 %v548, 2147483648
      %v786 = vor.u32 1.1754944e-38, %v785
      %v787 = vsel %vm784, %v786, %v782
      %v788 = vmul.f32 1.0, %v787
      %v790 = vperm.slane %v484, 0
      %793 = vset.pattern.permute.xlu0 0
      %794 = vperm.xlu0 %793, %v563
      %v795 = vpop.permute.xlu0 %794
      %798 = vset.pattern.permute.xlu0 0
      %799 = vperm.xlu0 %798, %v578
      %v800 = vpop.permute.xlu0 %799
      %803 = vset.pattern.permute.xlu0 0
      %804 = vperm.xlu0 %803, %v593
      %v805 = vpop.permute.xlu0 %804
      %808 = vset.pattern.permute.xlu0 0
      %809 = vperm.xlu0 %808, %v608
      %v810 = vpop.permute.xlu0 %809
      %813 = vset.pattern.permute.xlu0 0
      %814 = vperm.xlu0 %813, %v623
      %v815 = vpop.permute.xlu0 %814
      %818 = vset.pattern.permute.xlu0 0
      %819 = vperm.xlu0 %818, %v638
      %v820 = vpop.permute.xlu0 %819
      %823 = vset.pattern.permute.xlu0 0
      %824 = vperm.xlu0 %823, %v653
      %v825 = vpop.permute.xlu0 %824
      %828 = vset.pattern.permute.xlu0 0
      %829 = vperm.xlu0 %828, %v668
      %v830 = vpop.permute.xlu0 %829
      %833 = vset.pattern.permute.xlu0 0
      %834 = vperm.xlu0 %833, %v683
      %v835 = vpop.permute.xlu0 %834
      %838 = vset.pattern.permute.xlu0 0
      %839 = vperm.xlu0 %838, %v698
      %v840 = vpop.permute.xlu0 %839
      %843 = vset.pattern.permute.xlu0 0
      %844 = vperm.xlu0 %843, %v713
      %v845 = vpop.permute.xlu0 %844
      %848 = vset.pattern.permute.xlu0 0
      %849 = vperm.xlu0 %848, %v728
      %v850 = vpop.permute.xlu0 %849
      %853 = vset.pattern.permute.xlu0 0
      %854 = vperm.xlu0 %853, %v743
      %v855 = vpop.permute.xlu0 %854
      %858 = vset.pattern.permute.xlu0 0
      %859 = vperm.xlu0 %858, %v758
      %v860 = vpop.permute.xlu0 %859
      %863 = vset.pattern.permute.xlu0 0
      %864 = vperm.xlu0 %863, %v773
      %v865 = vpop.permute.xlu0 %864
      %868 = vset.pattern.permute.xlu0 0
      %869 = vperm.xlu0 %868, %v788
      %v870 = vpop.permute.xlu0 %869
      %v872 = vadd.f32 %v790, %v795
      %v873 = vadd.f32 %v790, %v800
      %v874 = vadd.f32 %v790, %v805
      %v875 = vadd.f32 %v790, %v810
      %v876 = vadd.f32 %v790, %v815
      %v877 = vadd.f32 %v790, %v820
      %v878 = vadd.f32 %v790, %v825
      %v879 = vadd.f32 %v790, %v830
      %v880 = vadd.f32 %v790, %v835
      %v881 = vadd.f32 %v790, %v840
      %v882 = vadd.f32 %v790, %v845
      %v883 = vadd.f32 %v790, %v850
      %v884 = vadd.f32 %v790, %v855
      %v885 = vadd.f32 %v790, %v860
      %v886 = vadd.f32 %v790, %v865
      %v887 = vadd.f32 %v790, %v870
      %v888 = vmul.f32 %v379, %v872
      %v889 = vmul.f32 %v380, %v873
      %v890 = vmul.f32 %v381, %v874
      %v891 = vmul.f32 %v382, %v875
      %v892 = vmul.f32 %v383, %v876
      %v893 = vmul.f32 %v384, %v877
      %v894 = vmul.f32 %v385, %v878
      %v895 = vmul.f32 %v386, %v879
      %v896 = vmul.f32 %v387, %v880
      %v897 = vmul.f32 %v388, %v881
      %v898 = vmul.f32 %v389, %v882
      %v899 = vmul.f32 %v390, %v883
      %v900 = vmul.f32 %v391, %v884
      %v901 = vmul.f32 %v392, %v885
      %v902 = vmul.f32 %v393, %v886
      %v903 = vmul.f32 %v394, %v887
      %904 = vst.msk [vmem:[%s305] sm:$0xff] %vm415, %v888
      %905 = vst.msk [vmem:[%s305 + $0x8] sm:$0xff] %vm415, %v889
      %906 = vst.msk [vmem:[%s305 + $0x10] sm:$0xff] %vm415, %v890
      %907 = vst.msk [vmem:[%s305 + $0x18] sm:$0xff] %vm415, %v891
      %908 = vst.msk [vmem:[%s305 + $0x20] sm:$0xff] %vm415, %v892
      %909 = vst.msk [vmem:[%s305 + $0x28] sm:$0xff] %vm415, %v893
      %910 = vst.msk [vmem:[%s305 + $0x30] sm:$0xff] %vm415, %v894
      %911 = vst.msk [vmem:[%s305 + $0x38] sm:$0xff] %vm415, %v895
      %912 = vst.msk [vmem:[%s305 + $0x40] sm:$0xff] %vm415, %v896
      %913 = vst.msk [vmem:[%s305 + $0x48] sm:$0xff] %vm415, %v897
      %914 = vst.msk [vmem:[%s305 + $0x50] sm:$0xff] %vm415, %v898
      %915 = vst.msk [vmem:[%s305 + $0x58] sm:$0xff] %vm415, %v899
      %916 = vst.msk [vmem:[%s305 + $0x60] sm:$0xff] %vm415, %v900
      %917 = vst.msk [vmem:[%s305 + $0x68] sm:$0xff] %vm415, %v901
      %918 = vst.msk [vmem:[%s305 + $0x70] sm:$0xff] %vm415, %v902
      %919 = vst.msk [vmem:[%s305 + $0x78] sm:$0xff] %vm415, %v903
      %s920 = smul.u32 16, %s24
      %p921 = scmp.lt.s32.totalorder %s23, 1
      %s922 = scalar_select %p921, %s23, 1
      %p923 = scmp.lt.s32.totalorder %s920, 31
      %s924 = scalar_select %p923, %s920, 31
      %s925 = smul.addr %s922, 32
      %s926 = sadd.s32 %s924, %s925
      %s927 = smul.addr %s926, 8
      %s928 = scalar_lea.vmem %s6, %s927
      // Predicated region
      $region45: #{decoder_forward.7} parent=43 // pred_check
        %p929 = pneg %p189
      $region46: #{decoder_forward.7} parent=43 // pred_check_branch
        %931 = sbr.rel (%p929) target = $region48
      $region47: #{decoder_forward.7} parent=43 // pred_region
        %s932 = smul.u32 16, %s24
      $region48: #{decoder_forward.7} parent=43 // pred_fallthru
        _
    $region44: #{decoder_forward.7} parent=5 // pred_fallthru
      _
    %p933 = scmp.le.s32.totalorder 2, %s14
    // Predicated region
    $region49: #{decoder_forward.7} parent=5 // pred_check
      %p934 = pneg %p933
    $region50: #{decoder_forward.7} parent=5 // pred_check_branch
      %936 = sbr.rel (%p934) target = $region52
    $region51: #{decoder_forward.7} parent=5 // pred_region
      %s937 = ssub.s32 %s14, 2
      // Predicated region
      $region53: #{decoder_forward.7} parent=51 // pred_check
        %p938 = pneg %p195
      $region54: #{decoder_forward.7} parent=51 // pred_check_branch
        %940 = sbr.rel (%p938) target = $region56
      $region55: #{decoder_forward.7} parent=51 // pred_region
        %s941 = smul.u32 16, %s26
        %p942 = scmp.lt.s32.totalorder %s25, 1
        %s943 = scalar_select %p942, %s25, 1
        %p944 = scmp.lt.s32.totalorder %s941, 31
        %s945 = scalar_select %p944, %s941, 31
        %s946 = smul.addr %s943, 32
        %s947 = sadd.s32 %s945, %s946
        %s948 = smul.addr %s947, 8
        %s949 = scalar_lea.vmem %s6, %s948
      $region56: #{decoder_forward.7} parent=51 // pred_fallthru
        _
    $region52: #{decoder_forward.7} parent=5 // pred_fallthru
      _
  $region6: #{decoder_forward.7} parent=0 // loop_footer
    %s18 = sadd.s32 1, %s14
  $region7: #{decoder_forward.7} parent=0 // loop_footer_branch
    %13 = sbr.rel target = $region3
  $region8: #{decoder_forward.7} parent=0 // loop_exit
    _

// kernel: decoder_forward.4
$region0: #{decoder_forward.4}
  #allocation0 [shape = 'u32[]', space=smem, size = 0x4, offset = 0x4, fixed_abs, tag = 'smem constant byte address 0x4 - core index']
  #allocation1 [shape = 'u32[72,128]{1,0:T(1,128)}', space=vmem, size = 0x9000, scoped, tag = 'internal scratch']
  #allocation2 [shape = 'bf16[10,18,8]{2,1,0:T(8,128)(2,1)}', space=vmem, size = 0xf000, scoped, tag = 'scratch operand']
  #allocation3 [shape = 'bf16[128,72]{1,0:T(8,128)(2,1)}', space=vmem, size = 0x8000, scoped, tag = 'scratch operand']
  %s0 = inlined_call_operand.vmem [shape: bf16[2,16,16,8], index: 0, kind: input, shape index: {}, may-alias: {0,1,2}]
  %s1 = inlined_call_operand.vmem [shape: bf16[2,16,16,8], index: 1, kind: input, shape index: {}, may-alias: {0,1,2}]
  %s2 = inlined_call_operand.vmem [shape: bf16[2,16,16,8], index: 2, kind: input, shape index: {}, may-alias: {0,1,2}]
  %s3 = inlined_call_operand.vmem [shape: bf16[72,16], index: 3, kind: input, shape index: {}]
  %s4 = inlined_call_operand.vmem [shape: f32[1,8], index: 4, kind: input, shape index: {}]
  %s5 = inlined_call_operand.vmem [shape: f32[1,8], index: 5, kind: input, shape index: {}]
  %s6 = inlined_call_operand.vmem [shape: bf16[512,16], index: 6, kind: output, shape index: {0}]
  %s7 = inlined_call_operand.vmem [shape: f32[4,2,16], index: 7, kind: output, shape index: {1}]
  %8 = xla_tuple %s6, %s7
  %s9 = sld [smem:[#allocation0]]
  $region65: #{decoder_forward.4} parent=0
    _
  %s11 = ssub.s32 1, %s9
  %s12 = scalar_select 0, %s11, %s9
  loop: start=0, step=1, limit=6
  $region2: #{decoder_forward.4} parent=0 // loop_pre_header
    _
  $region3: #{decoder_forward.4} parent=0 // loop_header
    %s14 = sphi 0, %s18
    %p15 = scmp.ge.s32.totalorder %s14, 6
    %s21 = sphi 0, %s33
    %s22 = sphi 0, %s29
    %s23 = sphi 0, %s21
    %s24 = sphi 0, %s22
    %s25 = sphi 0, %s23
    %s26 = sphi 0, %s24
    %s38 = sphi 0, %s40
    %s41 = sphi 0, %s38
    %s42 = sphi 0, %s41
    %s58 = sphi 0, %s42
    %s74 = sphi 0, %s76
    %s77 = sphi 0, %s74
    %s78 = sphi 0, %s77
    %s94 = sphi 0, %s78
    %s110 = sphi 0, %s112
    %s113 = sphi 0, %s110
    %s114 = sphi 0, %s113
    %s130 = sphi 0, %s114
    %s134 = sphi 0, %s134
    %s136 = sphi 0, %s134
    %s137 = sphi 0, %s136
    %s151 = sphi 0, %s137
    %s155 = sphi 0, %s155
    %s157 = sphi 0, %s155
    %s158 = sphi 0, %s157
    %s172 = sphi 0, %s158
    %s176 = sphi 0, %s176
    %s178 = sphi 0, %s176
    %s179 = sphi 0, %s178
    %s193 = sphi 0, %s179
    %s203 = sphi 0, %s205
    %s206 = sphi 0, %s203
    %s207 = sphi 0, %s206
    %s223 = sphi 0, %s207
    %s233 = sphi 0, %s235
    %s236 = sphi 0, %s233
    %s237 = sphi 0, %s236
    %s253 = sphi 0, %s237
  $region4: #{decoder_forward.4} parent=0 // loop_header_branch
    %17 = sbr.rel (%p15) target = $region8
  $region5: #{decoder_forward.4} parent=0 // loop_body
    %s19 = ssub.s32 %s14, 1
    %s20 = ssub.s32 %s14, 2
    %s27 = sadd.s32 1, %s22
    %p28 = scmp.ge.s32.totalorder %s27, 2
    %s29 = scalar_select %p28, 0, %s27
    %s30 = sadd.s32 1, %s21
    %s31 = scalar_select %p28, %s30, %s21
    %p32 = scmp.ge.s32.totalorder %s31, 2
    %s33 = scalar_select %p32, 0, %s31
    %s34 = ssub.s32 %s21, %s33
    %s35 = ssub.s32 %s22, %s29
    %s36 = sor.u32 %s34, %s35
    %p37 = scmp.eq.s32.totalorder %s36, 0
    %s39 = sadd.s32 %s38, 1
    %s40 = scalar_select %p37, %s38, %s39
    %p43 = pneg %p37
    %p44 = scmp.eq.s32.totalorder %s14, 3
    %p45 = por %p43, %p44
    %p46 = scmp.ne.s32.totalorder %s38, %s41
    %p47 = scmp.eq.s32.totalorder %s14, 0
    %p48 = por %p46, %p47
    %p49 = scmp.ne.s32.totalorder %s38, %s41
    %p50 = scmp.eq.s32.totalorder %s19, 3
    %p51 = por %p49, %p50
    %p52 = scmp.ne.s32.totalorder %s41, %s42
    %p53 = scmp.eq.s32.totalorder %s19, 0
    %p54 = por %p52, %p53
    %p55 = scmp.ne.s32.totalorder %s41, %s42
    %p56 = scmp.eq.s32.totalorder %s20, 3
    %p57 = por %p55, %p56
    %p59 = scmp.ne.s32.totalorder %s42, %s58
    %p60 = scmp.eq.s32.totalorder %s20, 0
    %p61 = por %p59, %p60
    %s62 = smul.u32 %s22, 8
    %s63 = ssub.s32 %s62, 1
    %p64 = scmp.gt.s32.totalorder %s63, 0
    %s65 = scalar_select %p64, %s63, 0
    %s66 = smul.u32 %s29, 8
    %s67 = ssub.s32 %s66, 1
    %p68 = scmp.gt.s32.totalorder %s67, 0
    %s69 = scalar_select %p68, %s67, 0
    %s70 = ssub.s32 %s21, %s33
    %s71 = ssub.s32 %s65, %s69
    %s72 = sor.u32 %s70, %s71
    %p73 = scmp.eq.s32.totalorder %s72, 0
    %s75 = sadd.s32 %s74, 1
    %s76 = scalar_select %p73, %s74, %s75
    %p79 = pneg %p73
    %p80 = scmp.eq.s32.totalorder %s14, 3
    %p81 = por %p79, %p80
    %p82 = scmp.ne.s32.totalorder %s74, %s77
    %p83 = scmp.eq.s32.totalorder %s14, 0
    %p84 = por %p82, %p83
    %p85 = scmp.ne.s32.totalorder %s74, %s77
    %p86 = scmp.eq.s32.totalorder %s19, 3
    %p87 = por %p85, %p86
    %p88 = scmp.ne.s32.totalorder %s77, %s78
    %p89 = scmp.eq.s32.totalorder %s19, 0
    %p90 = por %p88, %p89
    %p91 = scmp.ne.s32.totalorder %s77, %s78
    %p92 = scmp.eq.s32.totalorder %s20, 3
    %p93 = por %p91, %p92
    %p95 = scmp.ne.s32.totalorder %s78, %s94
    %p96 = scmp.eq.s32.totalorder %s20, 0
    %p97 = por %p95, %p96
    %s98 = smul.u32 %s22, 8
    %s99 = sadd.s32 %s98, 8
    %p100 = scmp.lt.s32.totalorder %s99, 15
    %s101 = scalar_select %p100, %s99, 15
    %s102 = smul.u32 %s29, 8
    %s103 = sadd.s32 %s102, 8
    %p104 = scmp.lt.s32.totalorder %s103, 15
    %s105 = scalar_select %p104, %s103, 15
    %s106 = ssub.s32 %s21, %s33
    %s107 = ssub.s32 %s101, %s105
    %s108 = sor.u32 %s106, %s107
    %p109 = scmp.eq.s32.totalorder %s108, 0
    %s111 = sadd.s32 %s110, 1
    %s112 = scalar_select %p109, %s110, %s111
    %p115 = pneg %p109
    %p116 = scmp.eq.s32.totalorder %s14, 3
    %p117 = por %p115, %p116
    %p118 = scmp.ne.s32.totalorder %s110, %s113
    %p119 = scmp.eq.s32.totalorder %s14, 0
    %p120 = por %p118, %p119
    %p121 = scmp.ne.s32.totalorder %s110, %s113
    %p122 = scmp.eq.s32.totalorder %s19, 3
    %p123 = por %p121, %p122
    %p124 = scmp.ne.s32.totalorder %s113, %s114
    %p125 = scmp.eq.s32.totalorder %s19, 0
    %p126 = por %p124, %p125
    %p127 = scmp.ne.s32.totalorder %s113, %s114
    %p128 = scmp.eq.s32.totalorder %s20, 3
    %p129 = por %p127, %p128
    %p131 = scmp.ne.s32.totalorder %s114, %s130
    %p132 = scmp.eq.s32.totalorder %s20, 0
    %p133 = por %p131, %p132
    %s135 = sadd.s32 %s134, 1
    %p138 = scmp.eq.s32.totalorder %s14, 3
    %p139 = scmp.ne.s32.totalorder %s134, %s136
    %p140 = scmp.eq.s32.totalorder %s14, 0
    %p141 = por %p139, %p140
    %p142 = scmp.ne.s32.totalorder %s134, %s136
    %p143 = scmp.eq.s32.totalorder %s19, 3
    %p144 = por %p142, %p143
    %p145 = scmp.ne.s32.totalorder %s136, %s137
    %p146 = scmp.eq.s32.totalorder %s19, 0
    %p147 = por %p145, %p146
    %p148 = scmp.ne.s32.totalorder %s136, %s137
    %p149 = scmp.eq.s32.totalorder %s20, 3
    %p150 = por %p148, %p149
    %p152 = scmp.ne.s32.totalorder %s137, %s151
    %p153 = scmp.eq.s32.totalorder %s20, 0
    %p154 = por %p152, %p153
    %s156 = sadd.s32 %s155, 1
    %p159 = scmp.eq.s32.totalorder %s14, 3
    %p160 = scmp.ne.s32.totalorder %s155, %s157
    %p161 = scmp.eq.s32.totalorder %s14, 0
    %p162 = por %p160, %p161
    %p163 = scmp.ne.s32.totalorder %s155, %s157
    %p164 = scmp.eq.s32.totalorder %s19, 3
    %p165 = por %p163, %p164
    %p166 = scmp.ne.s32.totalorder %s157, %s158
    %p167 = scmp.eq.s32.totalorder %s19, 0
    %p168 = por %p166, %p167
    %p169 = scmp.ne.s32.totalorder %s157, %s158
    %p170 = scmp.eq.s32.totalorder %s20, 3
    %p171 = por %p169, %p170
    %p173 = scmp.ne.s32.totalorder %s158, %s172
    %p174 = scmp.eq.s32.totalorder %s20, 0
    %p175 = por %p173, %p174
    %s177 = sadd.s32 %s176, 1
    %p180 = scmp.eq.s32.totalorder %s14, 3
    %p181 = scmp.ne.s32.totalorder %s176, %s178
    %p182 = scmp.eq.s32.totalorder %s14, 0
    %p183 = por %p181, %p182
    %p184 = scmp.ne.s32.totalorder %s176, %s178
    %p185 = scmp.eq.s32.totalorder %s19, 3
    %p186 = por %p184, %p185
    %p187 = scmp.ne.s32.totalorder %s178, %s179
    %p188 = scmp.eq.s32.totalorder %s19, 0
    %p189 = por %p187, %p188
    %p190 = scmp.ne.s32.totalorder %s178, %s179
    %p191 = scmp.eq.s32.totalorder %s20, 3
    %p192 = por %p190, %p191
    %p194 = scmp.ne.s32.totalorder %s179, %s193
    %p195 = scmp.eq.s32.totalorder %s20, 0
    %p196 = por %p194, %p195
    %s197 = smul.u32 %s21, 2
    %s198 = sadd.s32 %s197, %s22
    %s199 = smul.u32 %s33, 2
    %s200 = sadd.s32 %s199, %s29
    %s201 = ssub.s32 %s198, %s200
    %p202 = scmp.eq.s32.totalorder %s201, 0
    %s204 = sadd.s32 %s203, 1
    %s205 = scalar_select %p202, %s203, %s204
    %p208 = pneg %p202
    %p209 = scmp.eq.s32.totalorder %s14, 3
    %p210 = por %p208, %p209
    %p211 = scmp.ne.s32.totalorder %s203, %s206
    %p212 = scmp.eq.s32.totalorder %s14, 0
    %p213 = por %p211, %p212
    %p214 = scmp.ne.s32.totalorder %s203, %s206
    %p215 = scmp.eq.s32.totalorder %s19, 3
    %p216 = por %p214, %p215
    %p217 = scmp.ne.s32.totalorder %s206, %s207
    %p218 = scmp.eq.s32.totalorder %s19, 0
    %p219 = por %p217, %p218
    %p220 = scmp.ne.s32.totalorder %s206, %s207
    %p221 = scmp.eq.s32.totalorder %s20, 3
    %p222 = por %p220, %p221
    %p224 = scmp.ne.s32.totalorder %s207, %s223
    %p225 = scmp.eq.s32.totalorder %s20, 0
    %p226 = por %p224, %p225
    %s227 = smul.u32 %s21, 2
    %s228 = sadd.s32 %s227, %s22
    %s229 = smul.u32 %s33, 2
    %s230 = sadd.s32 %s229, %s29
    %s231 = ssub.s32 %s228, %s230
    %p232 = scmp.eq.s32.totalorder %s231, 0
    %s234 = sadd.s32 %s233, 1
    %s235 = scalar_select %p232, %s233, %s234
    %p238 = pneg %p232
    %p239 = scmp.eq.s32.totalorder %s14, 3
    %p240 = por %p238, %p239
    %p241 = scmp.ne.s32.totalorder %s233, %s236
    %p242 = scmp.eq.s32.totalorder %s14, 0
    %p243 = por %p241, %p242
    %p244 = scmp.ne.s32.totalorder %s233, %s236
    %p245 = scmp.eq.s32.totalorder %s19, 3
    %p246 = por %p244, %p245
    %p247 = scmp.ne.s32.totalorder %s236, %s237
    %p248 = scmp.eq.s32.totalorder %s19, 0
    %p249 = por %p247, %p248
    %p250 = scmp.ne.s32.totalorder %s236, %s237
    %p251 = scmp.eq.s32.totalorder %s20, 3
    %p252 = por %p250, %p251
    %p254 = scmp.ne.s32.totalorder %s237, %s253
    %p255 = scmp.eq.s32.totalorder %s20, 0
    %p256 = por %p254, %p255
    %p257 = scmp.le.s32.totalorder 1, %s14
    %p258 = scmp.lt.s32.totalorder %s14, 5
    %p259 = pnand %p257, %p258
    %p260 = pneg %p259
    // Predicated region
    $region9: #{decoder_forward.4} parent=5 // pred_check
      _
    $region10: #{decoder_forward.4} parent=5 // pred_check_branch
      %262 = sbr.rel (%p259) target = $region12
    $region11: #{decoder_forward.4} parent=5 // pred_region
      %s263 = ssub.s32 %s14, 1
      // Predicated region
      $region13: #{decoder_forward.4} parent=11 // pred_check
        %p264 = pneg %p147
      $region14: #{decoder_forward.4} parent=11 // pred_check_branch
        %266 = sbr.rel (%p264) target = $region16
      $region15: #{decoder_forward.4} parent=11 // pred_region
        _
      $region16: #{decoder_forward.4} parent=11 // pred_fallthru
        _
      // Predicated region
      $region17: #{decoder_forward.4} parent=11 // pred_check
        %p267 = pneg %p168
      $region18: #{decoder_forward.4} parent=11 // pred_check_branch
        %269 = sbr.rel (%p267) target = $region20
      $region19: #{decoder_forward.4} parent=11 // pred_region
        _
      $region20: #{decoder_forward.4} parent=11 // pred_fallthru
        _
      // Predicated region
      $region21: #{decoder_forward.4} parent=11 // pred_check
        %p270 = pneg %p189
      $region22: #{decoder_forward.4} parent=11 // pred_check_branch
        %272 = sbr.rel (%p270) target = $region24
      $region23: #{decoder_forward.4} parent=11 // pred_region
        _
      $region24: #{decoder_forward.4} parent=11 // pred_fallthru
        _
    $region12: #{decoder_forward.4} parent=5 // pred_fallthru
      _
    %p273 = scmp.lt.s32.totalorder %s14, 4
    // Predicated region
    $region25: #{decoder_forward.4} parent=5 // pred_check
      %p274 = pneg %p273
    $region26: #{decoder_forward.4} parent=5 // pred_check_branch
      %276 = sbr.rel (%p274) target = $region28
    $region27: #{decoder_forward.4} parent=5 // pred_region
      // Predicated region
      $region29: #{decoder_forward.4} parent=27 // pred_check
        %p277 = pneg %p48
      $region30: #{decoder_forward.4} parent=27 // pred_check_branch
        %279 = sbr.rel (%p277) target = $region32
      $region31: #{decoder_forward.4} parent=27 // pred_region
        %s280 = smul.u32 8, %s22
        %p281 = scmp.lt.s32.totalorder %s21, 1
        %s282 = scalar_select %p281, %s21, 1
        %p283 = scmp.lt.s32.totalorder %s280, 15
        %s284 = scalar_select %p283, %s280, 15
        %s285 = smul.addr %s284, 2
        %s286 = smul.addr %s282, 32
        %s287 = sadd.s32 %s285, %s286
        %s288 = smul.addr %s287, 4
        %s289 = scalar_lea.vmem %s0, %s288
        %s290 = smul.u32 8, %s22
      $region32: #{decoder_forward.4} parent=27 // pred_fallthru
        _
      // Predicated region
      $region33: #{decoder_forward.4} parent=27 // pred_check
        %p291 = pneg %p84
      $region34: #{decoder_forward.4} parent=27 // pred_check_branch
        %293 = sbr.rel (%p291) target = $region36
      $region35: #{decoder_forward.4} parent=27 // pred_region
        %s294 = smul.u32 %s22, 8
        %s295 = ssub.s32 %s294, 1
        %p296 = scmp.gt.s32.totalorder %s295, 0
        %s297 = scalar_select %p296, %s295, 0
        %p298 = scmp.lt.s32.totalorder %s21, 1
        %s299 = scalar_select %p298, %s21, 1
        %p300 = scmp.lt.s32.totalorder %s297, 15
        %s301 = scalar_select %p300, %s297, 15
        %s302 = smul.addr %s301, 2
        %s303 = smul.addr %s299, 32
        %s304 = sadd.s32 %s302, %s303
        %s305 = smul.addr %s304, 4
        %s306 = scalar_lea.vmem %s1, %s305
        %s307 = smul.u32 %s22, 8
        %s308 = ssub.s32 %s307, 1
        %p309 = scmp.gt.s32.totalorder %s308, 0
        %s310 = scalar_select %p309, %s308, 0
      $region36: #{decoder_forward.4} parent=27 // pred_fallthru
        _
      // Predicated region
      $region37: #{decoder_forward.4} parent=27 // pred_check
        %p311 = pneg %p120
      $region38: #{decoder_forward.4} parent=27 // pred_check_branch
        %313 = sbr.rel (%p311) target = $region40
      $region39: #{decoder_forward.4} parent=27 // pred_region
        %s314 = smul.u32 %s22, 8
        %s315 = sadd.s32 %s314, 8
        %p316 = scmp.lt.s32.totalorder %s315, 15
        %s317 = scalar_select %p316, %s315, 15
        %p318 = scmp.lt.s32.totalorder %s21, 1
        %s319 = scalar_select %p318, %s21, 1
        %p320 = scmp.lt.s32.totalorder %s317, 15
        %s321 = scalar_select %p320, %s317, 15
        %s322 = smul.addr %s321, 2
        %s323 = smul.addr %s319, 32
        %s324 = sadd.s32 %s322, %s323
        %s325 = smul.addr %s324, 4
        %s326 = scalar_lea.vmem %s2, %s325
        %s327 = smul.u32 %s22, 8
        %s328 = sadd.s32 %s327, 8
        %p329 = scmp.lt.s32.totalorder %s328, 15
        %s330 = scalar_select %p329, %s328, 15
      $region40: #{decoder_forward.4} parent=27 // pred_fallthru
        _
    $region28: #{decoder_forward.4} parent=5 // pred_fallthru
      _
    %p331 = scmp.le.s32.totalorder 1, %s14
    %p332 = scmp.lt.s32.totalorder %s14, 5
    %p333 = pnand %p331, %p332
    %p334 = pneg %p333
    // Predicated region
    $region41: #{decoder_forward.4} parent=5 // pred_check
      _
    $region42: #{decoder_forward.4} parent=5 // pred_check_branch
      %336 = sbr.rel (%p333) target = $region44
    $region43: #{decoder_forward.4} parent=5 // pred_region
      %s337 = ssub.s32 %s14, 1
      %s338 = smul.u32 8, %s24
      %p339 = scmp.lt.s32.totalorder %s23, 1
      %s340 = scalar_select %p339, %s23, 1
      %p341 = scmp.lt.s32.totalorder %s338, 15
      %s342 = scalar_select %p341, %s338, 15
      %s343 = smul.addr %s342, 2
      %s344 = smul.addr %s340, 32
      %s345 = sadd.s32 %s343, %s344
      %s346 = smul.addr %s345, 4
      %s347 = scalar_lea.vmem %s0, %s346
      %p348 = pneg %p54
      %p349 = pneg %p51
      %s350 = smul.u32 %s24, 8
      %s351 = ssub.s32 %s350, 1
      %p352 = scmp.gt.s32.totalorder %s351, 0
      %s353 = scalar_select %p352, %s351, 0
      %p354 = scmp.lt.s32.totalorder %s23, 1
      %s355 = scalar_select %p354, %s23, 1
      %p356 = scmp.lt.s32.totalorder %s353, 15
      %s357 = scalar_select %p356, %s353, 15
      %s358 = smul.addr %s357, 2
      %s359 = smul.addr %s355, 32
      %s360 = sadd.s32 %s358, %s359
      %s361 = smul.addr %s360, 4
      %s362 = scalar_lea.vmem %s1, %s361
      %p363 = pneg %p90
      %p364 = pneg %p87
      %s365 = smul.u32 %s24, 8
      %s366 = sadd.s32 %s365, 8
      %p367 = scmp.lt.s32.totalorder %s366, 15
      %s368 = scalar_select %p367, %s366, 15
      %p369 = scmp.lt.s32.totalorder %s23, 1
      %s370 = scalar_select %p369, %s23, 1
      %p371 = scmp.lt.s32.totalorder %s368, 15
      %s372 = scalar_select %p371, %s368, 15
      %s373 = smul.addr %s372, 2
      %s374 = smul.addr %s370, 32
      %s375 = sadd.s32 %s373, %s374
      %s376 = smul.addr %s375, 4
      %s377 = scalar_lea.vmem %s2, %s376
      %p378 = pneg %p126
      %p379 = pneg %p123
      %p380 = pneg %p147
      %p381 = pneg %p144
      %p382 = pneg %p168
      %p383 = pneg %p165
      %p384 = pneg %p189
      %p385 = pneg %p186
      %p386 = pneg %p219
      %p387 = pneg %p216
      %s388 = smul.u32 %s23, 2
      %s389 = sadd.s32 %s388, %s24
      %s390 = smul.u32 16, %s389
      %p391 = scmp.lt.s32.totalorder %s390, 63
      %s392 = scalar_select %p391, %s390, 63
      %s393 = smul.addr %s392, 4
      %s394 = scalar_lea.vmem %s6, %s393
      %p395 = pneg %p249
      %p396 = pneg %p246
      %s397 = smul.u32 %s23, 2
      %s398 = sadd.s32 %s397, %s24
      %p399 = scmp.lt.s32.totalorder %s398, 3
      %s400 = scalar_select %p399, %s398, 3
      %s401 = smul.addr %s400, 2
      %s402 = scalar_lea.vmem %s7, %s401
      %s403 = smul.u32 8, %s24
      %p404 = scmp.lt.s32.totalorder %s23, 1
      %s405 = scalar_select %p404, %s23, 1
      %p406 = scmp.lt.s32.totalorder %s403, 15
      %s407 = scalar_select %p406, %s403, 15
      %s408 = smul.addr %s407, 2
      %s409 = smul.addr %s405, 32
      %s410 = sadd.s32 %s408, %s409
      %s411 = smul.addr %s410, 4
      %s412 = scalar_lea.vmem %s0, %s411
      %s413 = smul.u32 8, %s24
      %s414 = smul.u32 %s24, 8
      %s415 = ssub.s32 %s414, 1
      %p416 = scmp.gt.s32.totalorder %s415, 0
      %s417 = scalar_select %p416, %s415, 0
      %p418 = scmp.lt.s32.totalorder %s23, 1
      %s419 = scalar_select %p418, %s23, 1
      %p420 = scmp.lt.s32.totalorder %s417, 15
      %s421 = scalar_select %p420, %s417, 15
      %s422 = smul.addr %s421, 2
      %s423 = smul.addr %s419, 32
      %s424 = sadd.s32 %s422, %s423
      %s425 = smul.addr %s424, 4
      %s426 = scalar_lea.vmem %s1, %s425
      %s427 = smul.u32 %s24, 8
      %s428 = ssub.s32 %s427, 1
      %p429 = scmp.gt.s32.totalorder %s428, 0
      %s430 = scalar_select %p429, %s428, 0
      %s431 = smul.u32 %s24, 8
      %s432 = sadd.s32 %s431, 8
      %p433 = scmp.lt.s32.totalorder %s432, 15
      %s434 = scalar_select %p433, %s432, 15
      %p435 = scmp.lt.s32.totalorder %s23, 1
      %s436 = scalar_select %p435, %s23, 1
      %p437 = scmp.lt.s32.totalorder %s434, 15
      %s438 = scalar_select %p437, %s434, 15
      %s439 = smul.addr %s438, 2
      %s440 = smul.addr %s436, 32
      %s441 = sadd.s32 %s439, %s440
      %s442 = smul.addr %s441, 4
      %s443 = scalar_lea.vmem %s2, %s442
      %s444 = smul.u32 %s24, 8
      %s445 = sadd.s32 %s444, 8
      %p446 = scmp.lt.s32.totalorder %s445, 15
      %s447 = scalar_select %p446, %s445, 15
      %s448 = smul.u32 %s23, 2
      %s449 = sadd.s32 %s448, %s24
      %s450 = smul.u32 16, %s449
      %p451 = scmp.lt.s32.totalorder %s450, 63
      %s452 = scalar_select %p451, %s450, 63
      %s453 = smul.addr %s452, 4
      %s454 = scalar_lea.vmem %s6, %s453
      %s455 = smul.u32 %s23, 2
      %s456 = sadd.s32 %s455, %s24
      %s457 = smul.u32 16, %s456
      %s458 = smul.u32 %s23, 2
      %s459 = sadd.s32 %s458, %s24
      %p460 = scmp.lt.s32.totalorder %s459, 3
      %s461 = scalar_select %p460, %s459, 3
      %s462 = smul.addr %s461, 2
      %s463 = scalar_lea.vmem %s7, %s462
      %s464 = smul.u32 %s23, 2
      %s465 = sadd.s32 %s464, %s24
      %v467 = vld [vmem:[%s412] sm:$0xf]
      %v468 = vld [vmem:[%s412 + $0x4] sm:$0xf]
      %v469 = vld [vmem:[%s412 + $0x8] sm:$0xf]
      %v470 = vld [vmem:[%s412 + $0xc] sm:$0xf]
      %v471 = vld [vmem:[%s412 + $0x10] sm:$0xf]
      %v472 = vld [vmem:[%s412 + $0x14] sm:$0xf]
      %v473 = vld [vmem:[%s412 + $0x18] sm:$0xf]
      %v474 = vld [vmem:[%s412 + $0x1c] sm:$0xf]
      %v475 = vld [vmem:[%s412 + $0x20] sm:$0xf]
      %v476 = vld [vmem:[%s412 + $0x24] sm:$0xf]
      %v477 = vld [vmem:[%s412 + $0x28] sm:$0xf]
      %v478 = vld [vmem:[%s412 + $0x2c] sm:$0xf]
      %v479 = vld [vmem:[%s412 + $0x30] sm:$0xf]
      %v480 = vld [vmem:[%s412 + $0x34] sm:$0xf]
      %v481 = vld [vmem:[%s412 + $0x38] sm:$0xf]
      %v482 = vld [vmem:[%s412 + $0x3c] sm:$0xf]
      %v483 = vld [vmem:[%s426] sm:$0xf]
      %v484 = vld [vmem:[%s426 + $0x4] sm:$0xf]
      %v485 = vld [vmem:[%s443] sm:$0xf]
      %v486 = vld [vmem:[%s443 + $0x4] sm:$0xf]
      %p487 = scmp.eq.s32.totalorder %s24, 0
      %s488 = scalar_select %p487, 1, 0
      %v489 = vstv %s488
      %vm490 = vcmp.eq.s32.totalorder %v489, 1
      %v491 = vsel %vm490, 0, %v483
      %v492 = vsel %vm490, 0, %v484
      %p493 = scmp.eq.s32.totalorder %s24, 1
      %s494 = scalar_select %p493, 1, 0
      %v495 = vstv %s494
      %vm496 = vcmp.eq.s32.totalorder %v495, 1
      %v497 = vsel %vm496, 0, %v485
      %v498 = vsel %vm496, 0, %v486
      %vm499 = vcmask 57344
      %vm500 = vsmask.f32 256
      %vm501 = vmand %vm499, %vm500
      %v502 = vld [vmem:[#allocation2] sm:$0x1]
      %v503 = vsel %vm501, 0, %v502
      %504 = vst [vmem:[#allocation2] sm:$0x1] %v503
      %v505 = vld [vmem:[#allocation2 + $0xc] sm:$0x1]
      %v506 = vsel %vm501, 0, %v505
      %507 = vst [vmem:[#allocation2 + $0xc] sm:$0x1] %v506
      %v508 = vld [vmem:[#allocation2 + $0x18] sm:$0x1]
      %v509 = vsel %vm501, 0, %v508
      %510 = vst [vmem:[#allocation2 + $0x18] sm:$0x1] %v509
      %v511 = vld [vmem:[#allocation2 + $0x24] sm:$0x1]
      %v512 = vsel %vm501, 0, %v511
      %513 = vst [vmem:[#allocation2 + $0x24] sm:$0x1] %v512
      %v514 = vld [vmem:[#allocation2 + $0x30] sm:$0x1]
      %v515 = vsel %vm501, 0, %v514
      %516 = vst [vmem:[#allocation2 + $0x30] sm:$0x1] %v515
      %v517 = vld [vmem:[#allocation2 + $0x3c] sm:$0x1]
      %v518 = vsel %vm501, 0, %v517
      %519 = vst [vmem:[#allocation2 + $0x3c] sm:$0x1] %v518
      %v520 = vld [vmem:[#allocation2 + $0x48] sm:$0x1]
      %v521 = vsel %vm501, 0, %v520
      %522 = vst [vmem:[#allocation2 + $0x48] sm:$0x1] %v521
      %v523 = vld [vmem:[#allocation2 + $0x54] sm:$0x1]
      %v524 = vsel %vm501, 0, %v523
      %525 = vst [vmem:[#allocation2 + $0x54] sm:$0x1] %v524
      %v526 = vld [vmem:[#allocation2 + $0x60] sm:$0x1]
      %v527 = vsel %vm501, 0, %v526
      %528 = vst [vmem:[#allocation2 + $0x60] sm:$0x1] %v527
      %v529 = vld [vmem:[#allocation2 + $0x6c] sm:$0x1]
      %v530 = vsel %vm501, 0, %v529
      %531 = vst [vmem:[#allocation2 + $0x6c] sm:$0x1] %v530
      %vm532 = vsmask.f32 7938
      %vm533 = vmand %vm499, %vm532
      %v534 = vld [vmem:[#allocation2 + $0x8] sm:$0x1]
      %v535 = vsel %vm533, 0, %v534
      %536 = vst [vmem:[#allocation2 + $0x8] sm:$0x1] %v535
      %v537 = vld [vmem:[#allocation2 + $0x14] sm:$0x1]
      %v538 = vsel %vm533, 0, %v537
      %539 = vst [vmem:[#allocation2 + $0x14] sm:$0x1] %v538
      %v540 = vld [vmem:[#allocation2 + $0x20] sm:$0x1]
      %v541 = vsel %vm533, 0, %v540
      %542 = vst [vmem:[#allocation2 + $0x20] sm:$0x1] %v541
      %v543 = vld [vmem:[#allocation2 + $0x2c] sm:$0x1]
      %v544 = vsel %vm533, 0, %v543
      %545 = vst [vmem:[#allocation2 + $0x2c] sm:$0x1] %v544
      %v546 = vld [vmem:[#allocation2 + $0x38] sm:$0x1]
      %v547 = vsel %vm533, 0, %v546
      %548 = vst [vmem:[#allocation2 + $0x38] sm:$0x1] %v547
      %v549 = vld [vmem:[#allocation2 + $0x44] sm:$0x1]
      %v550 = vsel %vm533, 0, %v549
      %551 = vst [vmem:[#allocation2 + $0x44] sm:$0x1] %v550
      %v552 = vld [vmem:[#allocation2 + $0x50] sm:$0x1]
      %v553 = vsel %vm533, 0, %v552
      %554 = vst [vmem:[#allocation2 + $0x50] sm:$0x1] %v553
      %v555 = vld [vmem:[#allocation2 + $0x5c] sm:$0x1]
      %v556 = vsel %vm533, 0, %v555
      %557 = vst [vmem:[#allocation2 + $0x5c] sm:$0x1] %v556
      %v558 = vld [vmem:[#allocation2 + $0x68] sm:$0x1]
      %v559 = vsel %vm533, 0, %v558
      %560 = vst [vmem:[#allocation2 + $0x68] sm:$0x1] %v559
      %v561 = vld [vmem:[#allocation2 + $0x74] sm:$0x1]
      %v562 = vsel %vm533, 0, %v561
      %563 = vst [vmem:[#allocation2 + $0x74] sm:$0x1] %v562
      %vm564 = vsmask.f32 4368
      %vm565 = vmor %vm500, %vm564
      %v567 = vshrl.u32 %v491, 16
      %v569 = vrot.slane %v567, 7
      %v570 = vshll.u32 %v491, 16
      %v572 = vor.u32 %v569, %v570
      %v573 = vrot.slane %v569, 4
      %v575 = vshrl.u32 %v492, 16
      %v577 = vrot.slane %v575, 7
      %v578 = vshll.u32 %v492, 16
      %v580 = vor.u32 %v577, %v578
      %v581 = vsel %vm565, %v573, %v580
      %v582 = vrot.slane %v577, 4
      %vm586 = vcmask 60416
      %vm587 = vmand %vm586, %vm532
      %v588 = vld [vmem:[#allocation2] sm:$0xf]
      %v589 = vsel %vm587, %v572, %v588
      %590 = vst [vmem:[#allocation2] sm:$0xf] %v589
      %vm591 = vcmask 60416
      %592 = vst.msk [vmem:[#allocation2 + $0x4] sm:$0xf] %vm591, %v581
      %v593 = vld [vmem:[#allocation2 + $0x8] sm:$0x1]
      %v594 = vsel %vm501, %v582, %v593
      %595 = vst [vmem:[#allocation2 + $0x8] sm:$0x1] %v594
      %v597 = vshrl.u32 %v467, 16
      %v599 = vrot.slane %v597, 7
      %v600 = vshll.u32 %v467, 16
      %v602 = vor.u32 %v599, %v600
      %v603 = vrot.slane %v599, 4
      %v605 = vshrl.u32 %v468, 16
      %v607 = vrot.slane %v605, 7
      %v608 = vshll.u32 %v468, 16
      %v610 = vor.u32 %v607, %v608
      %v611 = vsel %vm565, %v603, %v610
      %v612 = vrot.slane %v607, 4
      %v614 = vshrl.u32 %v469, 16
      %v616 = vrot.slane %v614, 7
      %v617 = vshll.u32 %v469, 16
      %v619 = vor.u32 %v616, %v617
      %v620 = vrot.slane %v616, 4
      %v622 = vshrl.u32 %v470, 16
      %v624 = vrot.slane %v622, 7
      %v625 = vshll.u32 %v470, 16
      %v627 = vor.u32 %v624, %v625
      %v628 = vsel %vm565, %v620, %v627
      %v629 = vrot.slane %v624, 4
      %v631 = vshrl.u32 %v471, 16
      %v633 = vrot.slane %v631, 7
      %v634 = vshll.u32 %v471, 16
      %v636 = vor.u32 %v633, %v634
      %v637 = vrot.slane %v633, 4
      %v639 = vshrl.u32 %v472, 16
      %v641 = vrot.slane %v639, 7
      %v642 = vshll.u32 %v472, 16
      %v644 = vor.u32 %v641, %v642
      %v645 = vsel %vm565, %v637, %v644
      %v646 = vrot.slane %v641, 4
      %v648 = vshrl.u32 %v473, 16
      %v650 = vrot.slane %v648, 7
      %v651 = vshll.u32 %v473, 16
      %v653 = vor.u32 %v650, %v651
      %v654 = vrot.slane %v650, 4
      %v656 = vshrl.u32 %v474, 16
      %v658 = vrot.slane %v656, 7
      %v659 = vshll.u32 %v474, 16
      %v661 = vor.u32 %v658, %v659
      %v662 = vsel %vm565, %v654, %v661
      %v663 = vrot.slane %v658, 4
      %v665 = vshrl.u32 %v475, 16
      %v667 = vrot.slane %v665, 7
      %v668 = vshll.u32 %v475, 16
      %v670 = vor.u32 %v667, %v668
      %v671 = vrot.slane %v667, 4
      %v673 = vshrl.u32 %v476, 16
      %v675 = vrot.slane %v673, 7
      %v676 = vshll.u32 %v476, 16
      %v678 = vor.u32 %v675, %v676
      %v679 = vsel %vm565, %v671, %v678
      %v680 = vrot.slane %v675, 4
      %v682 = vshrl.u32 %v477, 16
      %v684 = vrot.slane %v682, 7
      %v685 = vshll.u32 %v477, 16
      %v687 = vor.u32 %v684, %v685
      %v688 = vrot.slane %v684, 4
      %v690 = vshrl.u32 %v478, 16
      %v692 = vrot.slane %v690, 7
      %v693 = vshll.u32 %v478, 16
      %v695 = vor.u32 %v692, %v693
      %v696 = vsel %vm565, %v688, %v695
      %v697 = vrot.slane %v692, 4
      %v699 = vshrl.u32 %v479, 16
      %v701 = vrot.slane %v699, 7
      %v702 = vshll.u32 %v479, 16
      %v704 = vor.u32 %v701, %v702
      %v705 = vrot.slane %v701, 4
      %v707 = vshrl.u32 %v480, 16
      %v709 = vrot.slane %v707, 7
      %v710 = vshll.u32 %v480, 16
      %v712 = vor.u32 %v709, %v710
      %v713 = vsel %vm565, %v705, %v712
      %v714 = vrot.slane %v709, 4
      %v716 = vshrl.u32 %v481, 16
      %v718 = vrot.slane %v716, 7
      %v719 = vshll.u32 %v481, 16
      %v721 = vor.u32 %v718, %v719
      %v722 = vrot.slane %v718, 4
      %v724 = vshrl.u32 %v482, 16
      %v726 = vrot.slane %v724, 7
      %v727 = vshll.u32 %v482, 16
      %v729 = vor.u32 %v726, %v727
      %v730 = vsel %vm565, %v722, %v729
      %v731 = vrot.slane %v726, 4
      %s756 = scalar_lea.vmem [#allocation2], 12
      %v757 = vld [vmem:[%s756] sm:$0xf]
      %v758 = vsel %vm587, %v602, %v757
      %759 = vst [vmem:[%s756] sm:$0xf] %v758
      %760 = vst.msk [vmem:[%s756 + $0x4] sm:$0xf] %vm591, %v611
      %v761 = vld [vmem:[%s756 + $0x8] sm:$0x1]
      %v762 = vsel %vm501, %v612, %v761
      %763 = vst [vmem:[%s756 + $0x8] sm:$0x1] %v762
      %v764 = vld [vmem:[%s756 + $0xc] sm:$0xf]
      %v765 = vsel %vm587, %v619, %v764
      %766 = vst [vmem:[%s756 + $0xc] sm:$0xf] %v765
      %767 = vst.msk [vmem:[%s756 + $0x10] sm:$0xf] %vm591, %v628
      %v768 = vld [vmem:[%s756 + $0x14] sm:$0x1]
      %v769 = vsel %vm501, %v629, %v768
      %770 = vst [vmem:[%s756 + $0x14] sm:$0x1] %v769
      %v771 = vld [vmem:[%s756 + $0x18] sm:$0xf]
      %v772 = vsel %vm587, %v636, %v771
      %773 = vst [vmem:[%s756 + $0x18] sm:$0xf] %v772
      %774 = vst.msk [vmem:[%s756 + $0x1c] sm:$0xf] %vm591, %v645
      %v775 = vld [vmem:[%s756 + $0x20] sm:$0x1]
      %v776 = vsel %vm501, %v646, %v775
      %777 = vst [vmem:[%s756 + $0x20] sm:$0x1] %v776
      %v778 = vld [vmem:[%s756 + $0x24] sm:$0xf]
      %v779 = vsel %vm587, %v653, %v778
      %780 = vst [vmem:[%s756 + $0x24] sm:$0xf] %v779
      %781 = vst.msk [vmem:[%s756 + $0x28] sm:$0xf] %vm591, %v662
      %v782 = vld [vmem:[%s756 + $0x2c] sm:$0x1]
      %v783 = vsel %vm501, %v663, %v782
      %784 = vst [vmem:[%s756 + $0x2c] sm:$0x1] %v783
      %v785 = vld [vmem:[%s756 + $0x30] sm:$0xf]
      %v786 = vsel %vm587, %v670, %v785
      %787 = vst [vmem:[%s756 + $0x30] sm:$0xf] %v786
      %788 = vst.msk [vmem:[%s756 + $0x34] sm:$0xf] %vm591, %v679
      %v789 = vld [vmem:[%s756 + $0x38] sm:$0x1]
      %v790 = vsel %vm501, %v680, %v789
      %791 = vst [vmem:[%s756 + $0x38] sm:$0x1] %v790
      %v792 = vld [vmem:[%s756 + $0x3c] sm:$0xf]
      %v793 = vsel %vm587, %v687, %v792
      %794 = vst [vmem:[%s756 + $0x3c] sm:$0xf] %v793
      %795 = vst.msk [vmem:[%s756 + $0x40] sm:$0xf] %vm591, %v696
      %v796 = vld [vmem:[%s756 + $0x44] sm:$0x1]
      %v797 = vsel %vm501, %v697, %v796
      %798 = vst [vmem:[%s756 + $0x44] sm:$0x1] %v797
      %v799 = vld [vmem:[%s756 + $0x48] sm:$0xf]
      %v800 = vsel %vm587, %v704, %v799
      %801 = vst [vmem:[%s756 + $0x48] sm:$0xf] %v800
      %802 = vst.msk [vmem:[%s756 + $0x4c] sm:$0xf] %vm591, %v713
      %v803 = vld [vmem:[%s756 + $0x50] sm:$0x1]
      %v804 = vsel %vm501, %v714, %v803
      %805 = vst [vmem:[%s756 + $0x50] sm:$0x1] %v804
      %v806 = vld [vmem:[%s756 + $0x54] sm:$0xf]
      %v807 = vsel %vm587, %v721, %v806
      %808 = vst [vmem:[%s756 + $0x54] sm:$0xf] %v807
      %809 = vst.msk [vmem:[%s756 + $0x58] sm:$0xf] %vm591, %v730
      %v810 = vld [vmem:[%s756 + $0x5c] sm:$0x1]
      %v811 = vsel %vm501, %v731, %v810
      %812 = vst [vmem:[%s756 + $0x5c] sm:$0x1] %v811
      %v814 = vshrl.u32 %v497, 16
      %v816 = vrot.slane %v814, 7
      %v817 = vshll.u32 %v497, 16
      %v819 = vor.u32 %v816, %v817
      %v820 = vrot.slane %v816, 4
      %v822 = vshrl.u32 %v498, 16
      %v824 = vrot.slane %v822, 7
      %v825 = vshll.u32 %v498, 16
      %v827 = vor.u32 %v824, %v825
      %v828 = vsel %vm565, %v820, %v827
      %v829 = vrot.slane %v824, 4
      %s833 = scalar_lea.vmem [#allocation2], 108
      %v834 = vld [vmem:[%s833] sm:$0xf]
      %v835 = vsel %vm587, %v819, %v834
      %836 = vst [vmem:[%s833] sm:$0xf] %v835
      %837 = vst.msk [vmem:[%s833 + $0x4] sm:$0xf] %vm591, %v828
      %v838 = vld [vmem:[%s833 + $0x8] sm:$0x1]
      %v839 = vsel %vm501, %v829, %v838
      %840 = vst [vmem:[%s833 + $0x8] sm:$0x1] %v839
      %v841 = vld [vmem:[#allocation2] sm:$0xf]
      %v842 = vld [vmem:[#allocation2 + $0x4] sm:$0xf]
      %v843 = vld [vmem:[#allocation2 + $0xc] sm:$0xf]
      %v844 = vld [vmem:[#allocation2 + $0x10] sm:$0xf]
      %v845 = vld [vmem:[#allocation2 + $0x18] sm:$0xf]
      %v846 = vld [vmem:[#allocation2 + $0x1c] sm:$0xf]
      %v847 = vld [vmem:[#allocation2 + $0x24] sm:$0xf]
      %v848 = vld [vmem:[#allocation2 + $0x28] sm:$0xf]
      %v849 = vld [vmem:[#allocation2 + $0x30] sm:$0xf]
      %v850 = vld [vmem:[#allocation2 + $0x34] sm:$0xf]
      %v851 = vld [vmem:[#allocation2 + $0x3c] sm:$0xf]
      %v852 = vld [vmem:[#allocation2 + $0x40] sm:$0xf]
      %v853 = vld [vmem:[#allocation2 + $0x48] sm:$0xf]
      %v854 = vld [vmem:[#allocation2 + $0x4c] sm:$0xf]
      %v855 = vld [vmem:[#allocation2 + $0x54] sm:$0xf]
      %v856 = vld [vmem:[#allocation2 + $0x58] sm:$0xf]
      %857 = vst.msk [vmem:[#allocation3] sm:$0xf] %vm591, %v841
      %858 = vst.msk [vmem:[#allocation3 + $0x4] sm:$0xf] %vm591, %v842
      %859 = vst.msk [vmem:[#allocation3 + $0x8] sm:$0xf] %vm591, %v843
      %860 = vst.msk [vmem:[#allocation3 + $0xc] sm:$0xf] %vm591, %v844
      %861 = vst.msk [vmem:[#allocation3 + $0x10] sm:$0xf] %vm591, %v845
      %862 = vst.msk [vmem:[#allocation3 + $0x14] sm:$0xf] %vm591, %v846
      %863 = vst.msk [vmem:[#allocation3 + $0x18] sm:$0xf] %vm591, %v847
      %864 = vst.msk [vmem:[#allocation3 + $0x1c] sm:$0xf] %vm591, %v848
      %865 = vst.msk [vmem:[#allocation3 + $0x20] sm:$0xf] %vm591, %v849
      %866 = vst.msk [vmem:[#allocation3 + $0x24] sm:$0xf] %vm591, %v850
      %867 = vst.msk [vmem:[#allocation3 + $0x28] sm:$0xf] %vm591, %v851
      %868 = vst.msk [vmem:[#allocation3 + $0x2c] sm:$0xf] %vm591, %v852
      %869 = vst.msk [vmem:[#allocation3 + $0x30] sm:$0xf] %vm591, %v853
      %870 = vst.msk [vmem:[#allocation3 + $0x34] sm:$0xf] %vm591, %v854
      %871 = vst.msk [vmem:[#allocation3 + $0x38] sm:$0xf] %vm591, %v855
      %872 = vst.msk [vmem:[#allocation3 + $0x3c] sm:$0xf] %vm591, %v856
      %v873 = vld [vmem:[#allocation2] sm:$0xf]
      %v874 = vld [vmem:[#allocation2 + $0x4] sm:$0xf]
      %v875 = vld [vmem:[#allocation2 + $0x8] sm:$0x1]
      %v876 = vld [vmem:[#allocation2 + $0xc] sm:$0xf]
      %v877 = vld [vmem:[#allocation2 + $0x10] sm:$0xf]
      %v878 = vld [vmem:[#allocation2 + $0x14] sm:$0x1]
      %v879 = vld [vmem:[#allocation2 + $0x18] sm:$0xf]
      %v880 = vld [vmem:[#allocation2 + $0x1c] sm:$0xf]
      %v881 = vld [vmem:[#allocation2 + $0x20] sm:$0x1]
      %v882 = vld [vmem:[#allocation2 + $0x24] sm:$0xf]
      %v883 = vld [vmem:[#allocation2 + $0x28] sm:$0xf]
      %v884 = vld [vmem:[#allocation2 + $0x2c] sm:$0x1]
      %v885 = vld [vmem:[#allocation2 + $0x30] sm:$0xf]
      %v886 = vld [vmem:[#allocation2 + $0x34] sm:$0xf]
      %v887 = vld [vmem:[#allocation2 + $0x38] sm:$0x1]
      %v888 = vld [vmem:[#allocation2 + $0x3c] sm:$0xf]
      %v889 = vld [vmem:[#allocation2 + $0x40] sm:$0xf]
      %v890 = vld [vmem:[#allocation2 + $0x44] sm:$0x1]
      %v891 = vld [vmem:[#allocation2 + $0x48] sm:$0xf]
      %v892 = vld [vmem:[#allocation2 + $0x4c] sm:$0xf]
      %v893 = vld [vmem:[#allocation2 + $0x50] sm:$0x1]
      %v894 = vld [vmem:[#allocation2 + $0x54] sm:$0xf]
      %v895 = vld [vmem:[#allocation2 + $0x58] sm:$0xf]
      %v896 = vld [vmem:[#allocation2 + $0x5c] sm:$0x1]
      %vm897 = vsmask.f32 3328
      %vm898 = vsmask.f32 7440
      %vm899 = vmor %vm897, %vm898
      %v901 = vshrl.u32 %v873, 16
      %v903 = vrot.slane %v901, 4
      %v904 = vshll.u32 %v873, 16
      %v906 = vrot.slane %v904, 5
      %v907 = vor.u32 %v903, %v906
      %v908 = vrot.slane %v907, 4
      %v910 = vshll.u32 %v874, 16
      %v912 = vrot.slane %v910, 5
      %v913 = vsel %vm899, %v908, %v912
      %v914 = vshrl.u32 %v874, 16
      %v916 = vrot.slane %v914, 4
      %v917 = vor.u32 %v916, %v912
      %v918 = vrot.slane %v917, 4
      %v920 = vshll.u32 %v875, 16
      %v922 = vrot.slane %v920, 5
      %v923 = vsel %vm899, %v918, %v922
      %v925 = vshrl.u32 %v876, 16
      %v927 = vrot.slane %v925, 4
      %v928 = vshll.u32 %v876, 16
      %v930 = vrot.slane %v928, 5
      %v931 = vor.u32 %v927, %v930
      %v932 = vrot.slane %v931, 4
      %v934 = vshll.u32 %v877, 16
      %v936 = vrot.slane %v934, 5
      %v937 = vsel %vm899, %v932, %v936
      %v938 = vshrl.u32 %v877, 16
      %v940 = vrot.slane %v938, 4
      %v941 = vor.u32 %v940, %v936
      %v942 = vrot.slane %v941, 4
      %v944 = vshll.u32 %v878, 16
      %v946 = vrot.slane %v944, 5
      %v947 = vsel %vm899, %v942, %v946
      %v949 = vshrl.u32 %v879, 16
      %v951 = vrot.slane %v949, 4
      %v952 = vshll.u32 %v879, 16
      %v954 = vrot.slane %v952, 5
      %v955 = vor.u32 %v951, %v954
      %v956 = vrot.slane %v955, 4
      %v958 = vshll.u32 %v880, 16
      %v960 = vrot.slane %v958, 5
      %v961 = vsel %vm899, %v956, %v960
      %v962 = vshrl.u32 %v880, 16
      %v964 = vrot.slane %v962, 4
      %v965 = vor.u32 %v964, %v960
      %v966 = vrot.slane %v965, 4
      %v968 = vshll.u32 %v881, 16
      %v970 = vrot.slane %v968, 5
      %v971 = vsel %vm899, %v966, %v970
      %v973 = vshrl.u32 %v882, 16
      %v975 = vrot.slane %v973, 4
      %v976 = vshll.u32 %v882, 16
      %v978 = vrot.slane %v976, 5
      %v979 = vor.u32 %v975, %v978
      %v980 = vrot.slane %v979, 4
      %v982 = vshll.u32 %v883, 16
      %v984 = vrot.slane %v982, 5
      %v985 = vsel %vm899, %v980, %v984
      %v986 = vshrl.u32 %v883, 16
      %v988 = vrot.slane %v986, 4
      %v989 = vor.u32 %v988, %v984
      %v990 = vrot.slane %v989, 4
      %v992 = vshll.u32 %v884, 16
      %v994 = vrot.slane %v992, 5
      %v995 = vsel %vm899, %v990, %v994
      %v997 = vshrl.u32 %v885, 16
      %v999 = vrot.slane %v997, 4
      %v1000 = vshll.u32 %v885, 16
      %v1002 = vrot.slane %v1000, 5
      %v1003 = vor.u32 %v999, %v1002
      %v1004 = vrot.slane %v1003, 4
      %v1006 = vshll.u32 %v886, 16
      %v1008 = vrot.slane %v1006, 5
      %v1009 = vsel %vm899, %v1004, %v1008
      %v1010 = vshrl.u32 %v886, 16
      %v1012 = vrot.slane %v1010, 4
      %v1013 = vor.u32 %v1012, %v1008
      %v1014 = vrot.slane %v1013, 4
      %v1016 = vshll.u32 %v887, 16
      %v1018 = vrot.slane %v1016, 5
      %v1019 = vsel %vm899, %v1014, %v1018
      %v1021 = vshrl.u32 %v888, 16
      %v1023 = vrot.slane %v1021, 4
      %v1024 = vshll.u32 %v888, 16
      %v1026 = vrot.slane %v1024, 5
      %v1027 = vor.u32 %v1023, %v1026
      %v1028 = vrot.slane %v1027, 4
      %v1030 = vshll.u32 %v889, 16
      %v1032 = vrot.slane %v1030, 5
      %v1033 = vsel %vm899, %v1028, %v1032
      %v1034 = vshrl.u32 %v889, 16
      %v1036 = vrot.slane %v1034, 4
      %v1037 = vor.u32 %v1036, %v1032
      %v1038 = vrot.slane %v1037, 4
      %v1040 = vshll.u32 %v890, 16
      %v1042 = vrot.slane %v1040, 5
      %v1043 = vsel %vm899, %v1038, %v1042
      %v1045 = vshrl.u32 %v891, 16
      %v1047 = vrot.slane %v1045, 4
      %v1048 = vshll.u32 %v891, 16
      %v1050 = vrot.slane %v1048, 5
      %v1051 = vor.u32 %v1047, %v1050
      %v1052 = vrot.slane %v1051, 4
      %v1054 = vshll.u32 %v892, 16
      %v1056 = vrot.slane %v1054, 5
      %v1057 = vsel %vm899, %v1052, %v1056
      %v1058 = vshrl.u32 %v892, 16
      %v1060 = vrot.slane %v1058, 4
      %v1061 = vor.u32 %v1060, %v1056
      %v1062 = vrot.slane %v1061, 4
      %v1064 = vshll.u32 %v893, 16
      %v1066 = vrot.slane %v1064, 5
      %v1067 = vsel %vm899, %v1062, %v1066
      %v1069 = vshrl.u32 %v894, 16
      %v1071 = vrot.slane %v1069, 4
      %v1072 = vshll.u32 %v894, 16
      %v1074 = vrot.slane %v1072, 5
      %v1075 = vor.u32 %v1071, %v1074
      %v1076 = vrot.slane %v1075, 4
      %v1078 = vshll.u32 %v895, 16
      %v1080 = vrot.slane %v1078, 5
      %v1081 = vsel %vm899, %v1076, %v1080
      %v1082 = vshrl.u32 %v895, 16
      %v1084 = vrot.slane %v1082, 4
      %v1085 = vor.u32 %v1084, %v1080
      %v1086 = vrot.slane %v1085, 4
      %v1088 = vshll.u32 %v896, 16
      %v1090 = vrot.slane %v1088, 5
      %v1091 = vsel %vm899, %v1086, %v1090
      %1092 = vrot.lane.b32.xlu0 %v913, 8
      %v1093 = vpop.permute.xlu0 %1092
      %1094 = vrot.lane.b32.xlu0 %v923, 8
      %v1095 = vpop.permute.xlu0 %1094
      %1096 = vrot.lane.b32.xlu0 %v937, 8
      %v1097 = vpop.permute.xlu0 %1096
      %1098 = vrot.lane.b32.xlu0 %v947, 8
      %v1099 = vpop.permute.xlu0 %1098
      %1100 = vrot.lane.b32.xlu0 %v961, 8
      %v1101 = vpop.permute.xlu0 %1100
      %1102 = vrot.lane.b32.xlu0 %v971, 8
      %v1103 = vpop.permute.xlu0 %1102
      %1104 = vrot.lane.b32.xlu0 %v985, 8
      %v1105 = vpop.permute.xlu0 %1104
      %1106 = vrot.lane.b32.xlu0 %v995, 8
      %v1107 = vpop.permute.xlu0 %1106
      %1108 = vrot.lane.b32.xlu0 %v1009, 8
      %v1109 = vpop.permute.xlu0 %1108
      %1110 = vrot.lane.b32.xlu0 %v1019, 8
      %v1111 = vpop.permute.xlu0 %1110
      %1112 = vrot.lane.b32.xlu0 %v1033, 8
      %v1113 = vpop.permute.xlu0 %1112
      %1114 = vrot.lane.b32.xlu0 %v1043, 8
      %v1115 = vpop.permute.xlu0 %1114
      %1116 = vrot.lane.b32.xlu0 %v1057, 8
      %v1117 = vpop.permute.xlu0 %1116
      %1118 = vrot.lane.b32.xlu0 %v1067, 8
      %v1119 = vpop.permute.xlu0 %1118
      %1120 = vrot.lane.b32.xlu0 %v1081, 8
      %v1121 = vpop.permute.xlu0 %1120
      %1122 = vrot.lane.b32.xlu0 %v1091, 8
      %v1123 = vpop.permute.xlu0 %1122
      %vm1140 = vcmask 126016
      %1141 = vst.msk [vmem:[#allocation3] sm:$0xf] %vm1140, %v1093
      %1142 = vst.msk [vmem:[#allocation3 + $0x4] sm:$0xf] %vm1140, %v1095
      %1143 = vst.msk [vmem:[#allocation3 + $0x8] sm:$0xf] %vm1140, %v1097
      %1144 = vst.msk [vmem:[#allocation3 + $0xc] sm:$0xf] %vm1140, %v1099
      %1145 = vst.msk [vmem:[#allocation3 + $0x10] sm:$0xf] %vm1140, %v1101
      %1146 = vst.msk [vmem:[#allocation3 + $0x14] sm:$0xf] %vm1140, %v1103
      %1147 = vst.msk [vmem:[#allocation3 + $0x18] sm:$0xf] %vm1140, %v1105
      %1148 = vst.msk [vmem:[#allocation3 + $0x1c] sm:$0xf] %vm1140, %v1107
      %1149 = vst.msk [vmem:[#allocation3 + $0x20] sm:$0xf] %vm1140, %v1109
      %1150 = vst.msk [vmem:[#allocation3 + $0x24] sm:$0xf] %vm1140, %v1111
      %1151 = vst.msk [vmem:[#allocation3 + $0x28] sm:$0xf] %vm1140, %v1113
      %1152 = vst.msk [vmem:[#allocation3 + $0x2c] sm:$0xf] %vm1140, %v1115
      %1153 = vst.msk [vmem:[#allocation3 + $0x30] sm:$0xf] %vm1140, %v1117
      %1154 = vst.msk [vmem:[#allocation3 + $0x34] sm:$0xf] %vm1140, %v1119
      %1155 = vst.msk [vmem:[#allocation3 + $0x38] sm:$0xf] %vm1140, %v1121
      %1156 = vst.msk [vmem:[#allocation3 + $0x3c] sm:$0xf] %vm1140, %v1123
      %v1157 = vld [vmem:[#allocation2] sm:$0xe]
      %v1158 = vld [vmem:[#allocation2 + $0x4] sm:$0xf]
      %v1159 = vld [vmem:[#allocation2 + $0x8] sm:$0x1]
      %v1160 = vld [vmem:[#allocation2 + $0xc] sm:$0xe]
      %v1161 = vld [vmem:[#allocation2 + $0x10] sm:$0xf]
      %v1162 = vld [vmem:[#allocation2 + $0x14] sm:$0x1]
      %v1163 = vld [vmem:[#allocation2 + $0x18] sm:$0xe]
      %v1164 = vld [vmem:[#allocation2 + $0x1c] sm:$0xf]
      %v1165 = vld [vmem:[#allocation2 + $0x20] sm:$0x1]
      %v1166 = vld [vmem:[#allocation2 + $0x24] sm:$0xe]
      %v1167 = vld [vmem:[#allocation2 + $0x28] sm:$0xf]
      %v1168 = vld [vmem:[#allocation2 + $0x2c] sm:$0x1]
      %v1169 = vld [vmem:[#allocation2 + $0x30] sm:$0xe]
      %v1170 = vld [vmem:[#allocation2 + $0x34] sm:$0xf]
      %v1171 = vld [vmem:[#allocation2 + $0x38] sm:$0x1]
      %v1172 = vld [vmem:[#allocation2 + $0x3c] sm:$0xe]
      %v1173 = vld [vmem:[#allocation2 + $0x40] sm:$0xf]
      %v1174 = vld [vmem:[#allocation2 + $0x44] sm:$0x1]
      %v1175 = vld [vmem:[#allocation2 + $0x48] sm:$0xe]
      %v1176 = vld [vmem:[#allocation2 + $0x4c] sm:$0xf]
      %v1177 = vld [vmem:[#allocation2 + $0x50] sm:$0x1]
      %v1178 = vld [vmem:[#allocation2 + $0x54] sm:$0xe]
      %v1179 = vld [vmem:[#allocation2 + $0x58] sm:$0xf]
      %v1180 = vld [vmem:[#allocation2 + $0x5c] sm:$0x1]
      %vm1205 = vcmask 1042432
      %vm1206 = vcmask 1046532
      %vm1207 = vmor %vm1205, %vm1206
      %v1208 = vrot.slane %v1157, 5
      %v1209 = vrot.slane %v1208, 4
      %v1210 = vrot.slane %v1158, 5
      %v1211 = vsel %vm1207, %v1209, %v1210
      %v1212 = vrot.slane %v1210, 4
      %v1213 = vrot.slane %v1159, 5
      %v1214 = vsel %vm1207, %v1212, %v1213
      %v1215 = vrot.slane %v1160, 5
      %v1216 = vrot.slane %v1215, 4
      %v1217 = vrot.slane %v1161, 5
      %v1218 = vsel %vm1207, %v1216, %v1217
      %v1219 = vrot.slane %v1217, 4
      %v1220 = vrot.slane %v1162, 5
      %v1221 = vsel %vm1207, %v1219, %v1220
      %v1222 = vrot.slane %v1163, 5
      %v1223 = vrot.slane %v1222, 4
      %v1224 = vrot.slane %v1164, 5
      %v1225 = vsel %vm1207, %v1223, %v1224
      %v1226 = vrot.slane %v1224, 4
      %v1227 = vrot.slane %v1165, 5
      %v1228 = vsel %vm1207, %v1226, %v1227
      %v1229 = vrot.slane %v1166, 5
      %v1230 = vrot.slane %v1229, 4
      %v1231 = vrot.slane %v1167, 5
      %v1232 = vsel %vm1207, %v1230, %v1231
      %v1233 = vrot.slane %v1231, 4
      %v1234 = vrot.slane %v1168, 5
      %v1235 = vsel %vm1207, %v1233, %v1234
      %v1236 = vrot.slane %v1169, 5
      %v1237 = vrot.slane %v1236, 4
      %v1238 = vrot.slane %v1170, 5
      %v1239 = vsel %vm1207, %v1237, %v1238
      %v1240 = vrot.slane %v1238, 4
      %v1241 = vrot.slane %v1171, 5
      %v1242 = vsel %vm1207, %v1240, %v1241
      %v1243 = vrot.slane %v1172, 5
      %v1244 = vrot.slane %v1243, 4
      %v1245 = vrot.slane %v1173, 5
      %v1246 = vsel %vm1207, %v1244, %v1245
      %v1247 = vrot.slane %v1245, 4
      %v1248 = vrot.slane %v1174, 5
      %v1249 = vsel %vm1207, %v1247, %v1248
      %v1250 = vrot.slane %v1175, 5
      %v1251 = vrot.slane %v1250, 4
      %v1252 = vrot.slane %v1176, 5
      %v1253 = vsel %vm1207, %v1251, %v1252
      %v1254 = vrot.slane %v1252, 4
      %v1255 = vrot.slane %v1177, 5
      %v1256 = vsel %vm1207, %v1254, %v1255
      %v1257 = vrot.slane %v1178, 5
      %v1258 = vrot.slane %v1257, 4
      %v1259 = vrot.slane %v1179, 5
      %v1260 = vsel %vm1207, %v1258, %v1259
      %v1261 = vrot.slane %v1259, 4
      %v1262 = vrot.slane %v1180, 5
      %v1263 = vsel %vm1207, %v1261, %v1262
      %1264 = vrot.lane.b32.xlu0 %v1211, 16
      %v1265 = vpop.permute.xlu0 %1264
      %1266 = vrot.lane.b32.xlu0 %v1214, 16
      %v1267 = vpop.permute.xlu0 %1266
      %1268 = vrot.lane.b32.xlu0 %v1218, 16
      %v1269 = vpop.permute.xlu0 %1268
      %1270 = vrot.lane.b32.xlu0 %v1221, 16
      %v1271 = vpop.permute.xlu0 %1270
      %1272 = vrot.lane.b32.xlu0 %v1225, 16
      %v1273 = vpop.permute.xlu0 %1272
      %1274 = vrot.lane.b32.xlu0 %v1228, 16
      %v1275 = vpop.permute.xlu0 %1274
      %1276 = vrot.lane.b32.xlu0 %v1232, 16
      %v1277 = vpop.permute.xlu0 %1276
      %1278 = vrot.lane.b32.xlu0 %v1235, 16
      %v1279 = vpop.permute.xlu0 %1278
      %1280 = vrot.lane.b32.xlu0 %v1239, 16
      %v1281 = vpop.permute.xlu0 %1280
      %1282 = vrot.lane.b32.xlu0 %v1242, 16
      %v1283 = vpop.permute.xlu0 %1282
      %1284 = vrot.lane.b32.xlu0 %v1246, 16
      %v1285 = vpop.permute.xlu0 %1284
      %1286 = vrot.lane.b32.xlu0 %v1249, 16
      %v1287 = vpop.permute.xlu0 %1286
      %1288 = vrot.lane.b32.xlu0 %v1253, 16
      %v1289 = vpop.permute.xlu0 %1288
      %1290 = vrot.lane.b32.xlu0 %v1256, 16
      %v1291 = vpop.permute.xlu0 %1290
      %1292 = vrot.lane.b32.xlu0 %v1260, 16
      %v1293 = vpop.permute.xlu0 %1292
      %1294 = vrot.lane.b32.xlu0 %v1263, 16
      %v1295 = vpop.permute.xlu0 %1294
      %vm1312 = vcmask 191616
      %1313 = vst.msk [vmem:[#allocation3] sm:$0xf] %vm1312, %v1265
      %1314 = vst.msk [vmem:[#allocation3 + $0x4] sm:$0xf] %vm1312, %v1267
      %1315 = vst.msk [vmem:[#allocation3 + $0x8] sm:$0xf] %vm1312, %v1269
      %1316 = vst.msk [vmem:[#allocation3 + $0xc] sm:$0xf] %vm1312, %v1271
      %1317 = vst.msk [vmem:[#allocation3 + $0x10] sm:$0xf] %vm1312, %v1273
      %1318 = vst.msk [vmem:[#allocation3 + $0x14] sm:$0xf] %vm1312, %v1275
      %1319 = vst.msk [vmem:[#allocation3 + $0x18] sm:$0xf] %vm1312, %v1277
      %1320 = vst.msk [vmem:[#allocation3 + $0x1c] sm:$0xf] %vm1312, %v1279
      %1321 = vst.msk [vmem:[#allocation3 + $0x20] sm:$0xf] %vm1312, %v1281
      %1322 = vst.msk [vmem:[#allocation3 + $0x24] sm:$0xf] %vm1312, %v1283
      %1323 = vst.msk [vmem:[#allocation3 + $0x28] sm:$0xf] %vm1312, %v1285
      %1324 = vst.msk [vmem:[#allocation3 + $0x2c] sm:$0xf] %vm1312, %v1287
      %1325 = vst.msk [vmem:[#allocation3 + $0x30] sm:$0xf] %vm1312, %v1289
      %1326 = vst.msk [vmem:[#allocation3 + $0x34] sm:$0xf] %vm1312, %v1291
      %1327 = vst.msk [vmem:[#allocation3 + $0x38] sm:$0xf] %vm1312, %v1293
      %1328 = vst.msk [vmem:[#allocation3 + $0x3c] sm:$0xf] %vm1312, %v1295
      %v1329 = vld [vmem:[%s756] sm:$0xf]
      %v1330 = vld [vmem:[%s756 + $0x4] sm:$0xf]
      %v1331 = vld [vmem:[%s756 + $0xc] sm:$0xf]
      %v1332 = vld [vmem:[%s756 + $0x10] sm:$0xf]
      %v1333 = vld [vmem:[%s756 + $0x18] sm:$0xf]
      %v1334 = vld [vmem:[%s756 + $0x1c] sm:$0xf]
      %v1335 = vld [vmem:[%s756 + $0x24] sm:$0xf]
      %v1336 = vld [vmem:[%s756 + $0x28] sm:$0xf]
      %v1337 = vld [vmem:[%s756 + $0x30] sm:$0xf]
      %v1338 = vld [vmem:[%s756 + $0x34] sm:$0xf]
      %v1339 = vld [vmem:[%s756 + $0x3c] sm:$0xf]
      %v1340 = vld [vmem:[%s756 + $0x40] sm:$0xf]
      %v1341 = vld [vmem:[%s756 + $0x48] sm:$0xf]
      %v1342 = vld [vmem:[%s756 + $0x4c] sm:$0xf]
      %v1343 = vld [vmem:[%s756 + $0x54] sm:$0xf]
      %v1344 = vld [vmem:[%s756 + $0x58] sm:$0xf]
      %1361 = vrot.lane.b32.xlu0 %v1329, 24
      %v1362 = vpop.permute.xlu0 %1361
      %1363 = vrot.lane.b32.xlu0 %v1330, 24
      %v1364 = vpop.permute.xlu0 %1363
      %1365 = vrot.lane.b32.xlu0 %v1331, 24
      %v1366 = vpop.permute.xlu0 %1365
      %1367 = vrot.lane.b32.xlu0 %v1332, 24
      %v1368 = vpop.permute.xlu0 %1367
      %1369 = vrot.lane.b32.xlu0 %v1333, 24
      %v1370 = vpop.permute.xlu0 %1369
      %1371 = vrot.lane.b32.xlu0 %v1334, 24
      %v1372 = vpop.permute.xlu0 %1371
      %1373 = vrot.lane.b32.xlu0 %v1335, 24
      %v1374 = vpop.permute.xlu0 %1373
      %1375 = vrot.lane.b32.xlu0 %v1336, 24
      %v1376 = vpop.permute.xlu0 %1375
      %1377 = vrot.lane.b32.xlu0 %v1337, 24
      %v1378 = vpop.permute.xlu0 %1377
      %1379 = vrot.lane.b32.xlu0 %v1338, 24
      %v1380 = vpop.permute.xlu0 %1379
      %1381 = vrot.lane.b32.xlu0 %v1339, 24
      %v1382 = vpop.permute.xlu0 %1381
      %1383 = vrot.lane.b32.xlu0 %v1340, 24
      %v1384 = vpop.permute.xlu0 %1383
      %1385 = vrot.lane.b32.xlu0 %v1341, 24
      %v1386 = vpop.permute.xlu0 %1385
      %1387 = vrot.lane.b32.xlu0 %v1342, 24
      %v1388 = vpop.permute.xlu0 %1387
      %1389 = vrot.lane.b32.xlu0 %v1343, 24
      %v1390 = vpop.permute.xlu0 %1389
      %1391 = vrot.lane.b32.xlu0 %v1344, 24
      %v1392 = vpop.permute.xlu0 %1391
      %vm1409 = vcmask 257216
      %1410 = vst.msk [vmem:[#allocation3] sm:$0xf] %vm1409, %v1362
      %1411 = vst.msk [vmem:[#allocation3 + $0x4] sm:$0xf] %vm1409, %v1364
      %1412 = vst.msk [vmem:[#allocation3 + $0x8] sm:$0xf] %vm1409, %v1366
      %1413 = vst.msk [vmem:[#allocation3 + $0xc] sm:$0xf] %vm1409, %v1368
      %1414 = vst.msk [vmem:[#allocation3 + $0x10] sm:$0xf] %vm1409, %v1370
      %1415 = vst.msk [vmem:[#allocation3 + $0x14] sm:$0xf] %vm1409, %v1372
      %1416 = vst.msk [vmem:[#allocation3 + $0x18] sm:$0xf] %vm1409, %v1374
      %1417 = vst.msk [vmem:[#allocation3 + $0x1c] sm:$0xf] %vm1409, %v1376
      %1418 = vst.msk [vmem:[#allocation3 + $0x20] sm:$0xf] %vm1409, %v1378
      %1419 = vst.msk [vmem:[#allocation3 + $0x24] sm:$0xf] %vm1409, %v1380
      %1420 = vst.msk [vmem:[#allocation3 + $0x28] sm:$0xf] %vm1409, %v1382
      %1421 = vst.msk [vmem:[#allocation3 + $0x2c] sm:$0xf] %vm1409, %v1384
      %1422 = vst.msk [vmem:[#allocation3 + $0x30] sm:$0xf] %vm1409, %v1386
      %1423 = vst.msk [vmem:[#allocation3 + $0x34] sm:$0xf] %vm1409, %v1388
      %1424 = vst.msk [vmem:[#allocation3 + $0x38] sm:$0xf] %vm1409, %v1390
      %1425 = vst.msk [vmem:[#allocation3 + $0x3c] sm:$0xf] %vm1409, %v1392
      %v1426 = vld [vmem:[%s756] sm:$0xf]
      %v1427 = vld [vmem:[%s756 + $0x4] sm:$0xf]
      %v1428 = vld [vmem:[%s756 + $0x8] sm:$0x1]
      %v1429 = vld [vmem:[%s756 + $0xc] sm:$0xf]
      %v1430 = vld [vmem:[%s756 + $0x10] sm:$0xf]
      %v1431 = vld [vmem:[%s756 + $0x14] sm:$0x1]
      %v1432 = vld [vmem:[%s756 + $0x18] sm:$0xf]
      %v1433 = vld [vmem:[%s756 + $0x1c] sm:$0xf]
      %v1434 = vld [vmem:[%s756 + $0x20] sm:$0x1]
      %v1435 = vld [vmem:[%s756 + $0x24] sm:$0xf]
      %v1436 = vld [vmem:[%s756 + $0x28] sm:$0xf]
      %v1437 = vld [vmem:[%s756 + $0x2c] sm:$0x1]
      %v1438 = vld [vmem:[%s756 + $0x30] sm:$0xf]
      %v1439 = vld [vmem:[%s756 + $0x34] sm:$0xf]
      %v1440 = vld [vmem:[%s756 + $0x38] sm:$0x1]
      %v1441 = vld [vmem:[%s756 + $0x3c] sm:$0xf]
      %v1442 = vld [vmem:[%s756 + $0x40] sm:$0xf]
      %v1443 = vld [vmem:[%s756 + $0x44] sm:$0x1]
      %v1444 = vld [vmem:[%s756 + $0x48] sm:$0xf]
      %v1445 = vld [vmem:[%s756 + $0x4c] sm:$0xf]
      %v1446 = vld [vmem:[%s756 + $0x50] sm:$0x1]
      %v1447 = vld [vmem:[%s756 + $0x54] sm:$0xf]
      %v1448 = vld [vmem:[%s756 + $0x58] sm:$0xf]
      %v1449 = vld [vmem:[%s756 + $0x5c] sm:$0x1]
      %v1451 = vshrl.u32 %v1426, 16
      %v1453 = vrot.slane %v1451, 4
      %v1454 = vshll.u32 %v1426, 16
      %v1456 = vrot.slane %v1454, 5
      %v1457 = vor.u32 %v1453, %v1456
      %v1458 = vrot.slane %v1457, 4
      %v1460 = vshll.u32 %v1427, 16
      %v1462 = vrot.slane %v1460, 5
      %v1463 = vsel %vm899, %v1458, %v1462
      %v1464 = vshrl.u32 %v1427, 16
      %v1466 = vrot.slane %v1464, 4
      %v1467 = vor.u32 %v1466, %v1462
      %v1468 = vrot.slane %v1467, 4
      %v1470 = vshll.u32 %v1428, 16
      %v1472 = vrot.slane %v1470, 5
      %v1473 = vsel %vm899, %v1468, %v1472
      %v1475 = vshrl.u32 %v1429, 16
      %v1477 = vrot.slane %v1475, 4
      %v1478 = vshll.u32 %v1429, 16
      %v1480 = vrot.slane %v1478, 5
      %v1481 = vor.u32 %v1477, %v1480
      %v1482 = vrot.slane %v1481, 4
      %v1484 = vshll.u32 %v1430, 16
      %v1486 = vrot.slane %v1484, 5
      %v1487 = vsel %vm899, %v1482, %v1486
      %v1488 = vshrl.u32 %v1430, 16
      %v1490 = vrot.slane %v1488, 4
      %v1491 = vor.u32 %v1490, %v1486
      %v1492 = vrot.slane %v1491, 4
      %v1494 = vshll.u32 %v1431, 16
      %v1496 = vrot.slane %v1494, 5
      %v1497 = vsel %vm899, %v1492, %v1496
      %v1499 = vshrl.u32 %v1432, 16
      %v1501 = vrot.slane %v1499, 4
      %v1502 = vshll.u32 %v1432, 16
      %v1504 = vrot.slane %v1502, 5
      %v1505 = vor.u32 %v1501, %v1504
      %v1506 = vrot.slane %v1505, 4
      %v1508 = vshll.u32 %v1433, 16
      %v1510 = vrot.slane %v1508, 5
      %v1511 = vsel %vm899, %v1506, %v1510
      %v1512 = vshrl.u32 %v1433, 16
      %v1514 = vrot.slane %v1512, 4
      %v1515 = vor.u32 %v1514, %v1510
      %v1516 = vrot.slane %v1515, 4
      %v1518 = vshll.u32 %v1434, 16
      %v1520 = vrot.slane %v1518, 5
      %v1521 = vsel %vm899, %v1516, %v1520
      %v1523 = vshrl.u32 %v1435, 16
      %v1525 = vrot.slane %v1523, 4
      %v1526 = vshll.u32 %v1435, 16
      %v1528 = vrot.slane %v1526, 5
      %v1529 = vor.u32 %v1525, %v1528
      %v1530 = vrot.slane %v1529, 4
      %v1532 = vshll.u32 %v1436, 16
      %v1534 = vrot.slane %v1532, 5
      %v1535 = vsel %vm899, %v1530, %v1534
      %v1536 = vshrl.u32 %v1436, 16
      %v1538 = vrot.slane %v1536, 4
      %v1539 = vor.u32 %v1538, %v1534
      %v1540 = vrot.slane %v1539, 4
      %v1542 = vshll.u32 %v1437, 16
      %v1544 = vrot.slane %v1542, 5
      %v1545 = vsel %vm899, %v1540, %v1544
      %v1547 = vshrl.u32 %v1438, 16
      %v1549 = vrot.slane %v1547, 4
      %v1550 = vshll.u32 %v1438, 16
      %v1552 = vrot.slane %v1550, 5
      %v1553 = vor.u32 %v1549, %v1552
      %v1554 = vrot.slane %v1553, 4
      %v1556 = vshll.u32 %v1439, 16
      %v1558 = vrot.slane %v1556, 5
      %v1559 = vsel %vm899, %v1554, %v1558
      %v1560 = vshrl.u32 %v1439, 16
      %v1562 = vrot.slane %v1560, 4
      %v1563 = vor.u32 %v1562, %v1558
      %v1564 = vrot.slane %v1563, 4
      %v1566 = vshll.u32 %v1440, 16
      %v1568 = vrot.slane %v1566, 5
      %v1569 = vsel %vm899, %v1564, %v1568
      %v1571 = vshrl.u32 %v1441, 16
      %v1573 = vrot.slane %v1571, 4
      %v1574 = vshll.u32 %v1441, 16
      %v1576 = vrot.slane %v1574, 5
      %v1577 = vor.u32 %v1573, %v1576
      %v1578 = vrot.slane %v1577, 4
      %v1580 = vshll.u32 %v1442, 16
      %v1582 = vrot.slane %v1580, 5
      %v1583 = vsel %vm899, %v1578, %v1582
      %v1584 = vshrl.u32 %v1442, 16
      %v1586 = vrot.slane %v1584, 4
      %v1587 = vor.u32 %v1586, %v1582
      %v1588 = vrot.slane %v1587, 4
      %v1590 = vshll.u32 %v1443, 16
      %v1592 = vrot.slane %v1590, 5
      %v1593 = vsel %vm899, %v1588, %v1592
      %v1595 = vshrl.u32 %v1444, 16
      %v1597 = vrot.slane %v1595, 4
      %v1598 = vshll.u32 %v1444, 16
      %v1600 = vrot.slane %v1598, 5
      %v1601 = vor.u32 %v1597, %v1600
      %v1602 = vrot.slane %v1601, 4
      %v1604 = vshll.u32 %v1445, 16
      %v1606 = vrot.slane %v1604, 5
      %v1607 = vsel %vm899, %v1602, %v1606
      %v1608 = vshrl.u32 %v1445, 16
      %v1610 = vrot.slane %v1608, 4
      %v1611 = vor.u32 %v1610, %v1606
      %v1612 = vrot.slane %v1611, 4
      %v1614 = vshll.u32 %v1446, 16
      %v1616 = vrot.slane %v1614, 5
      %v1617 = vsel %vm899, %v1612, %v1616
      %v1619 = vshrl.u32 %v1447, 16
      %v1621 = vrot.slane %v1619, 4
      %v1622 = vshll.u32 %v1447, 16
      %v1624 = vrot.slane %v1622, 5
      %v1625 = vor.u32 %v1621, %v1624
      %v1626 = vrot.slane %v1625, 4
      %v1628 = vshll.u32 %v1448, 16
      %v1630 = vrot.slane %v1628, 5
      %v1631 = vsel %vm899, %v1626, %v1630
      %v1632 = vshrl.u32 %v1448, 16
      %v1634 = vrot.slane %v1632, 4
      %v1635 = vor.u32 %v1634, %v1630
      %v1636 = vrot.slane %v1635, 4
      %v1638 = vshll.u32 %v1449, 16
      %v1640 = vrot.slane %v1638, 5
      %v1641 = vsel %vm899, %v1636, %v1640
      %1642 = vrot.lane.b32.xlu0 %v1463, 32
      %v1643 = vpop.permute.xlu0 %1642
      %1644 = vrot.lane.b32.xlu0 %v1473, 32
      %v1645 = vpop.permute.xlu0 %1644
      %1646 = vrot.lane.b32.xlu0 %v1487, 32
      %v1647 = vpop.permute.xlu0 %1646
      %1648 = vrot.lane.b32.xlu0 %v1497, 32
      %v1649 = vpop.permute.xlu0 %1648
      %1650 = vrot.lane.b32.xlu0 %v1511, 32
      %v1651 = vpop.permute.xlu0 %1650
      %1652 = vrot.lane.b32.xlu0 %v1521, 32
      %v1653 = vpop.permute.xlu0 %1652
      %1654 = vrot.lane.b32.xlu0 %v1535, 32
      %v1655 = vpop.permute.xlu0 %1654
      %1656 = vrot.lane.b32.xlu0 %v1545, 32
      %v1657 = vpop.permute.xlu0 %1656
      %1658 = vrot.lane.b32.xlu0 %v1559, 32
      %v1659 = vpop.permute.xlu0 %1658
      %1660 = vrot.lane.b32.xlu0 %v1569, 32
      %v1661 = vpop.permute.xlu0 %1660
      %1662 = vrot.lane.b32.xlu0 %v1583, 32
      %v1663 = vpop.permute.xlu0 %1662
      %1664 = vrot.lane.b32.xlu0 %v1593, 32
      %v1665 = vpop.permute.xlu0 %1664
      %1666 = vrot.lane.b32.xlu0 %v1607, 32
      %v1667 = vpop.permute.xlu0 %1666
      %1668 = vrot.lane.b32.xlu0 %v1617, 32
      %v1669 = vpop.permute.xlu0 %1668
      %1670 = vrot.lane.b32.xlu0 %v1631, 32
      %v1671 = vpop.permute.xlu0 %1670
      %1672 = vrot.lane.b32.xlu0 %v1641, 32
      %v1673 = vpop.permute.xlu0 %1672
      %vm1690 = vcmask 322816
      %1691 = vst.msk [vmem:[#allocation3] sm:$0xf] %vm1690, %v1643
      %1692 = vst.msk [vmem:[#allocation3 + $0x4] sm:$0xf] %vm1690, %v1645
      %1693 = vst.msk [vmem:[#allocation3 + $0x8] sm:$0xf] %vm1690, %v1647
      %1694 = vst.msk [vmem:[#allocation3 + $0xc] sm:$0xf] %vm1690, %v1649
      %1695 = vst.msk [vmem:[#allocation3 + $0x10] sm:$0xf] %vm1690, %v1651
      %1696 = vst.msk [vmem:[#allocation3 + $0x14] sm:$0xf] %vm1690, %v1653
      %1697 = vst.msk [vmem:[#allocation3 + $0x18] sm:$0xf] %vm1690, %v1655
      %1698 = vst.msk [vmem:[#allocation3 + $0x1c] sm:$0xf] %vm1690, %v1657
      %1699 = vst.msk [vmem:[#allocation3 + $0x20] sm:$0xf] %vm1690, %v1659
      %1700 = vst.msk [vmem:[#allocation3 + $0x24] sm:$0xf] %vm1690, %v1661
      %1701 = vst.msk [vmem:[#allocation3 + $0x28] sm:$0xf] %vm1690, %v1663
      %1702 = vst.msk [vmem:[#allocation3 + $0x2c] sm:$0xf] %vm1690, %v1665
      %1703 = vst.msk [vmem:[#allocation3 + $0x30] sm:$0xf] %vm1690, %v1667
      %1704 = vst.msk [vmem:[#allocation3 + $0x34] sm:$0xf] %vm1690, %v1669
      %1705 = vst.msk [vmem:[#allocation3 + $0x38] sm:$0xf] %vm1690, %v1671
      %1706 = vst.msk [vmem:[#allocation3 + $0x3c] sm:$0xf] %vm1690, %v1673
      %v1707 = vld [vmem:[%s756] sm:$0xe]
      %v1708 = vld [vmem:[%s756 + $0x4] sm:$0xf]
      %v1709 = vld [vmem:[%s756 + $0x8] sm:$0x1]
      %v1710 = vld [vmem:[%s756 + $0xc] sm:$0xe]
      %v1711 = vld [vmem:[%s756 + $0x10] sm:$0xf]
      %v1712 = vld [vmem:[%s756 + $0x14] sm:$0x1]
      %v1713 = vld [vmem:[%s756 + $0x18] sm:$0xe]
      %v1714 = vld [vmem:[%s756 + $0x1c] sm:$0xf]
      %v1715 = vld [vmem:[%s756 + $0x20] sm:$0x1]
      %v1716 = vld [vmem:[%s756 + $0x24] sm:$0xe]
      %v1717 = vld [vmem:[%s756 + $0x28] sm:$0xf]
      %v1718 = vld [vmem:[%s756 + $0x2c] sm:$0x1]
      %v1719 = vld [vmem:[%s756 + $0x30] sm:$0xe]
      %v1720 = vld [vmem:[%s756 + $0x34] sm:$0xf]
      %v1721 = vld [vmem:[%s756 + $0x38] sm:$0x1]
      %v1722 = vld [vmem:[%s756 + $0x3c] sm:$0xe]
      %v1723 = vld [vmem:[%s756 + $0x40] sm:$0xf]
      %v1724 = vld [vmem:[%s756 + $0x44] sm:$0x1]
      %v1725 = vld [vmem:[%s756 + $0x48] sm:$0xe]
      %v1726 = vld [vmem:[%s756 + $0x4c] sm:$0xf]
      %v1727 = vld [vmem:[%s756 + $0x50] sm:$0x1]
      %v1728 = vld [vmem:[%s756 + $0x54] sm:$0xe]
      %v1729 = vld [vmem:[%s756 + $0x58] sm:$0xf]
      %v1730 = vld [vmem:[%s756 + $0x5c] sm:$0x1]
      %v1755 = vrot.slane %v1707, 5
      %v1756 = vrot.slane %v1755, 4
      %v1757 = vrot.slane %v1708, 5
      %v1758 = vsel %vm1207, %v1756, %v1757
      %v1759 = vrot.slane %v1757, 4
      %v1760 = vrot.slane %v1709, 5
      %v1761 = vsel %vm1207, %v1759, %v1760
      %v1762 = vrot.slane %v1710, 5
      %v1763 = vrot.slane %v1762, 4
      %v1764 = vrot.slane %v1711, 5
      %v1765 = vsel %vm1207, %v1763, %v1764
      %v1766 = vrot.slane %v1764, 4
      %v1767 = vrot.slane %v1712, 5
      %v1768 = vsel %vm1207, %v1766, %v1767
      %v1769 = vrot.slane %v1713, 5
      %v1770 = vrot.slane %v1769, 4
      %v1771 = vrot.slane %v1714, 5
      %v1772 = vsel %vm1207, %v1770, %v1771
      %v1773 = vrot.slane %v1771, 4
      %v1774 = vrot.slane %v1715, 5
      %v1775 = vsel %vm1207, %v1773, %v1774
      %v1776 = vrot.slane %v1716, 5
      %v1777 = vrot.slane %v1776, 4
      %v1778 = vrot.slane %v1717, 5
      %v1779 = vsel %vm1207, %v1777, %v1778
      %v1780 = vrot.slane %v1778, 4
      %v1781 = vrot.slane %v1718, 5
      %v1782 = vsel %vm1207, %v1780, %v1781
      %v1783 = vrot.slane %v1719, 5
      %v1784 = vrot.slane %v1783, 4
      %v1785 = vrot.slane %v1720, 5
      %v1786 = vsel %vm1207, %v1784, %v1785
      %v1787 = vrot.slane %v1785, 4
      %v1788 = vrot.slane %v1721, 5
      %v1789 = vsel %vm1207, %v1787, %v1788
      %v1790 = vrot.slane %v1722, 5
      %v1791 = vrot.slane %v1790, 4
      %v1792 = vrot.slane %v1723, 5
      %v1793 = vsel %vm1207, %v1791, %v1792
      %v1794 = vrot.slane %v1792, 4
      %v1795 = vrot.slane %v1724, 5
      %v1796 = vsel %vm1207, %v1794, %v1795
      %v1797 = vrot.slane %v1725, 5
      %v1798 = vrot.slane %v1797, 4
      %v1799 = vrot.slane %v1726, 5
      %v1800 = vsel %vm1207, %v1798, %v1799
      %v1801 = vrot.slane %v1799, 4
      %v1802 = vrot.slane %v1727, 5
      %v1803 = vsel %vm1207, %v1801, %v1802
      %v1804 = vrot.slane %v1728, 5
      %v1805 = vrot.slane %v1804, 4
      %v1806 = vrot.slane %v1729, 5
      %v1807 = vsel %vm1207, %v1805, %v1806
      %v1808 = vrot.slane %v1806, 4
      %v1809 = vrot.slane %v1730, 5
      %v1810 = vsel %vm1207, %v1808, %v1809
      %1811 = vrot.lane.b32.xlu0 %v1758, 40
      %v1812 = vpop.permute.xlu0 %1811
      %1813 = vrot.lane.b32.xlu0 %v1761, 40
      %v1814 = vpop.permute.xlu0 %1813
      %1815 = vrot.lane.b32.xlu0 %v1765, 40
      %v1816 = vpop.permute.xlu0 %1815
      %1817 = vrot.lane.b32.xlu0 %v1768, 40
      %v1818 = vpop.permute.xlu0 %1817
      %1819 = vrot.lane.b32.xlu0 %v1772, 40
      %v1820 = vpop.permute.xlu0 %1819
      %1821 = vrot.lane.b32.xlu0 %v1775, 40
      %v1822 = vpop.permute.xlu0 %1821
      %1823 = vrot.lane.b32.xlu0 %v1779, 40
      %v1824 = vpop.permute.xlu0 %1823
      %1825 = vrot.lane.b32.xlu0 %v1782, 40
      %v1826 = vpop.permute.xlu0 %1825
      %1827 = vrot.lane.b32.xlu0 %v1786, 40
      %v1828 = vpop.permute.xlu0 %1827
      %1829 = vrot.lane.b32.xlu0 %v1789, 40
      %v1830 = vpop.permute.xlu0 %1829
      %1831 = vrot.lane.b32.xlu0 %v1793, 40
      %v1832 = vpop.permute.xlu0 %1831
      %1833 = vrot.lane.b32.xlu0 %v1796, 40
      %v1834 = vpop.permute.xlu0 %1833
      %1835 = vrot.lane.b32.xlu0 %v1800, 40
      %v1836 = vpop.permute.xlu0 %1835
      %1837 = vrot.lane.b32.xlu0 %v1803, 40
      %v1838 = vpop.permute.xlu0 %1837
      %1839 = vrot.lane.b32.xlu0 %v1807, 40
      %v1840 = vpop.permute.xlu0 %1839
      %1841 = vrot.lane.b32.xlu0 %v1810, 40
      %v1842 = vpop.permute.xlu0 %1841
      %vm1859 = vcmask 388416
      %1860 = vst.msk [vmem:[#allocation3] sm:$0xf] %vm1859, %v1812
      %1861 = vst.msk [vmem:[#allocation3 + $0x4] sm:$0xf] %vm1859, %v1814
      %1862 = vst.msk [vmem:[#allocation3 + $0x8] sm:$0xf] %vm1859, %v1816
      %1863 = vst.msk [vmem:[#allocation3 + $0xc] sm:$0xf] %vm1859, %v1818
      %1864 = vst.msk [vmem:[#allocation3 + $0x10] sm:$0xf] %vm1859, %v1820
      %1865 = vst.msk [vmem:[#allocation3 + $0x14] sm:$0xf] %vm1859, %v1822
      %1866 = vst.msk [vmem:[#allocation3 + $0x18] sm:$0xf] %vm1859, %v1824
      %1867 = vst.msk [vmem:[#allocation3 + $0x1c] sm:$0xf] %vm1859, %v1826
      %1868 = vst.msk [vmem:[#allocation3 + $0x20] sm:$0xf] %vm1859, %v1828
      %1869 = vst.msk [vmem:[#allocation3 + $0x24] sm:$0xf] %vm1859, %v1830
      %1870 = vst.msk [vmem:[#allocation3 + $0x28] sm:$0xf] %vm1859, %v1832
      %1871 = vst.msk [vmem:[#allocation3 + $0x2c] sm:$0xf] %vm1859, %v1834
      %1872 = vst.msk [vmem:[#allocation3 + $0x30] sm:$0xf] %vm1859, %v1836
      %1873 = vst.msk [vmem:[#allocation3 + $0x34] sm:$0xf] %vm1859, %v1838
      %1874 = vst.msk [vmem:[#allocation3 + $0x38] sm:$0xf] %vm1859, %v1840
      %1875 = vst.msk [vmem:[#allocation3 + $0x3c] sm:$0xf] %vm1859, %v1842
      %s1876 = scalar_lea.vmem [#allocation2], 24
      %v1877 = vld [vmem:[%s1876] sm:$0xf]
      %v1878 = vld [vmem:[%s1876 + $0x4] sm:$0xf]
      %v1879 = vld [vmem:[%s1876 + $0xc] sm:$0xf]
      %v1880 = vld [vmem:[%s1876 + $0x10] sm:$0xf]
      %v1881 = vld [vmem:[%s1876 + $0x18] sm:$0xf]
      %v1882 = vld [vmem:[%s1876 + $0x1c] sm:$0xf]
      %v1883 = vld [vmem:[%s1876 + $0x24] sm:$0xf]
      %v1884 = vld [vmem:[%s1876 + $0x28] sm:$0xf]
      %v1885 = vld [vmem:[%s1876 + $0x30] sm:$0xf]
      %v1886 = vld [vmem:[%s1876 + $0x34] sm:$0xf]
      %v1887 = vld [vmem:[%s1876 + $0x3c] sm:$0xf]
      %v1888 = vld [vmem:[%s1876 + $0x40] sm:$0xf]
      %v1889 = vld [vmem:[%s1876 + $0x48] sm:$0xf]
      %v1890 = vld [vmem:[%s1876 + $0x4c] sm:$0xf]
      %v1891 = vld [vmem:[%s1876 + $0x54] sm:$0xf]
      %v1892 = vld [vmem:[%s1876 + $0x58] sm:$0xf]
      %1909 = vrot.lane.b32.xlu0 %v1877, 48
      %v1910 = vpop.permute.xlu0 %1909
      %1911 = vrot.lane.b32.xlu0 %v1878, 48
      %v1912 = vpop.permute.xlu0 %1911
      %1913 = vrot.lane.b32.xlu0 %v1879, 48
      %v1914 = vpop.permute.xlu0 %1913
      %1915 = vrot.lane.b32.xlu0 %v1880, 48
      %v1916 = vpop.permute.xlu0 %1915
      %1917 = vrot.lane.b32.xlu0 %v1881, 48
      %v1918 = vpop.permute.xlu0 %1917
      %1919 = vrot.lane.b32.xlu0 %v1882, 48
      %v1920 = vpop.permute.xlu0 %1919
      %1921 = vrot.lane.b32.xlu0 %v1883, 48
      %v1922 = vpop.permute.xlu0 %1921
      %1923 = vrot.lane.b32.xlu0 %v1884, 48
      %v1924 = vpop.permute.xlu0 %1923
      %1925 = vrot.lane.b32.xlu0 %v1885, 48
      %v1926 = vpop.permute.xlu0 %1925
      %1927 = vrot.lane.b32.xlu0 %v1886, 48
      %v1928 = vpop.permute.xlu0 %1927
      %1929 = vrot.lane.b32.xlu0 %v1887, 48
      %v1930 = vpop.permute.xlu0 %1929
      %1931 = vrot.lane.b32.xlu0 %v1888, 48
      %v1932 = vpop.permute.xlu0 %1931
      %1933 = vrot.lane.b32.xlu0 %v1889, 48
      %v1934 = vpop.permute.xlu0 %1933
      %1935 = vrot.lane.b32.xlu0 %v1890, 48
      %v1936 = vpop.permute.xlu0 %1935
      %1937 = vrot.lane.b32.xlu0 %v1891, 48
      %v1938 = vpop.permute.xlu0 %1937
      %1939 = vrot.lane.b32.xlu0 %v1892, 48
      %v1940 = vpop.permute.xlu0 %1939
      %vm1957 = vcmask 454016
      %1958 = vst.msk [vmem:[#allocation3] sm:$0xf] %vm1957, %v1910
      %1959 = vst.msk [vmem:[#allocation3 + $0x4] sm:$0xf] %vm1957, %v1912
      %1960 = vst.msk [vmem:[#allocation3 + $0x8] sm:$0xf] %vm1957, %v1914
      %1961 = vst.msk [vmem:[#allocation3 + $0xc] sm:$0xf] %vm1957, %v1916
      %1962 = vst.msk [vmem:[#allocation3 + $0x10] sm:$0xf] %vm1957, %v1918
      %1963 = vst.msk [vmem:[#allocation3 + $0x14] sm:$0xf] %vm1957, %v1920
      %1964 = vst.msk [vmem:[#allocation3 + $0x18] sm:$0xf] %vm1957, %v1922
      %1965 = vst.msk [vmem:[#allocation3 + $0x1c] sm:$0xf] %vm1957, %v1924
      %1966 = vst.msk [vmem:[#allocation3 + $0x20] sm:$0xf] %vm1957, %v1926
      %1967 = vst.msk [vmem:[#allocation3 + $0x24] sm:$0xf] %vm1957, %v1928
      %1968 = vst.msk [vmem:[#allocation3 + $0x28] sm:$0xf] %vm1957, %v1930
      %1969 = vst.msk [vmem:[#allocation3 + $0x2c] sm:$0xf] %vm1957, %v1932
      %1970 = vst.msk [vmem:[#allocation3 + $0x30] sm:$0xf] %vm1957, %v1934
      %1971 = vst.msk [vmem:[#allocation3 + $0x34] sm:$0xf] %vm1957, %v1936
      %1972 = vst.msk [vmem:[#allocation3 + $0x38] sm:$0xf] %vm1957, %v1938
      %1973 = vst.msk [vmem:[#allocation3 + $0x3c] sm:$0xf] %vm1957, %v1940
      %v1974 = vld [vmem:[%s1876] sm:$0xf]
      %v1975 = vld [vmem:[%s1876 + $0x4] sm:$0xf]
      %v1976 = vld [vmem:[%s1876 + $0x8] sm:$0x1]
      %v1977 = vld [vmem:[%s1876 + $0xc] sm:$0xf]
      %v1978 = vld [vmem:[%s1876 + $0x10] sm:$0xf]
      %v1979 = vld [vmem:[%s1876 + $0x14] sm:$0x1]
      %v1980 = vld [vmem:[%s1876 + $0x18] sm:$0xf]
      %v1981 = vld [vmem:[%s1876 + $0x1c] sm:$0xf]
      %v1982 = vld [vmem:[%s1876 + $0x20] sm:$0x1]
      %v1983 = vld [vmem:[%s1876 + $0x24] sm:$0xf]
      %v1984 = vld [vmem:[%s1876 + $0x28] sm:$0xf]
      %v1985 = vld [vmem:[%s1876 + $0x2c] sm:$0x1]
      %v1986 = vld [vmem:[%s1876 + $0x30] sm:$0xf]
      %v1987 = vld [vmem:[%s1876 + $0x34] sm:$0xf]
      %v1988 = vld [vmem:[%s1876 + $0x38] sm:$0x1]
      %v1989 = vld [vmem:[%s1876 + $0x3c] sm:$0xf]
      %v1990 = vld [vmem:[%s1876 + $0x40] sm:$0xf]
      %v1991 = vld [vmem:[%s1876 + $0x44] sm:$0x1]
      %v1992 = vld [vmem:[%s1876 + $0x48] sm:$0xf]
      %v1993 = vld [vmem:[%s1876 + $0x4c] sm:$0xf]
      %v1994 = vld [vmem:[%s1876 + $0x50] sm:$0x1]
      %v1995 = vld [vmem:[%s1876 + $0x54] sm:$0xf]
      %v1996 = vld [vmem:[%s1876 + $0x58] sm:$0xf]
      %v1997 = vld [vmem:[%s1876 + $0x5c] sm:$0x1]
      %v1999 = vshrl.u32 %v1974, 16
      %v2001 = vrot.slane %v1999, 4
      %v2002 = vshll.u32 %v1974, 16
      %v2004 = vrot.slane %v2002, 5
      %v2005 = vor.u32 %v2001, %v2004
      %v2006 = vrot.slane %v2005, 4
      %v2008 = vshll.u32 %v1975, 16
      %v2010 = vrot.slane %v2008, 5
      %v2011 = vsel %vm899, %v2006, %v2010
      %v2012 = vshrl.u32 %v1975, 16
      %v2014 = vrot.slane %v2012, 4
      %v2015 = vor.u32 %v2014, %v2010
      %v2016 = vrot.slane %v2015, 4
      %v2018 = vshll.u32 %v1976, 16
      %v2020 = vrot.slane %v2018, 5
      %v2021 = vsel %vm899, %v2016, %v2020
      %v2023 = vshrl.u32 %v1977, 16
      %v2025 = vrot.slane %v2023, 4
      %v2026 = vshll.u32 %v1977, 16
      %v2028 = vrot.slane %v2026, 5
      %v2029 = vor.u32 %v2025, %v2028
      %v2030 = vrot.slane %v2029, 4
      %v2032 = vshll.u32 %v1978, 16
      %v2034 = vrot.slane %v2032, 5
      %v2035 = vsel %vm899, %v2030, %v2034
      %v2036 = vshrl.u32 %v1978, 16
      %v2038 = vrot.slane %v2036, 4
      %v2039 = vor.u32 %v2038, %v2034
      %v2040 = vrot.slane %v2039, 4
      %v2042 = vshll.u32 %v1979, 16
      %v2044 = vrot.slane %v2042, 5
      %v2045 = vsel %vm899, %v2040, %v2044
      %v2047 = vshrl.u32 %v1980, 16
      %v2049 = vrot.slane %v2047, 4
      %v2050 = vshll.u32 %v1980, 16
      %v2052 = vrot.slane %v2050, 5
      %v2053 = vor.u32 %v2049, %v2052
      %v2054 = vrot.slane %v2053, 4
      %v2056 = vshll.u32 %v1981, 16
      %v2058 = vrot.slane %v2056, 5
      %v2059 = vsel %vm899, %v2054, %v2058
      %v2060 = vshrl.u32 %v1981, 16
      %v2062 = vrot.slane %v2060, 4
      %v2063 = vor.u32 %v2062, %v2058
      %v2064 = vrot.slane %v2063, 4
      %v2066 = vshll.u32 %v1982, 16
      %v2068 = vrot.slane %v2066, 5
      %v2069 = vsel %vm899, %v2064, %v2068
      %v2071 = vshrl.u32 %v1983, 16
      %v2073 = vrot.slane %v2071, 4
      %v2074 = vshll.u32 %v1983, 16
      %v2076 = vrot.slane %v2074, 5
      %v2077 = vor.u32 %v2073, %v2076
      %v2078 = vrot.slane %v2077, 4
      %v2080 = vshll.u32 %v1984, 16
      %v2082 = vrot.slane %v2080, 5
      %v2083 = vsel %vm899, %v2078, %v2082
      %v2084 = vshrl.u32 %v1984, 16
      %v2086 = vrot.slane %v2084, 4
      %v2087 = vor.u32 %v2086, %v2082
      %v2088 = vrot.slane %v2087, 4
      %v2090 = vshll.u32 %v1985, 16
      %v2092 = vrot.slane %v2090, 5
      %v2093 = vsel %vm899, %v2088, %v2092
      %v2095 = vshrl.u32 %v1986, 16
      %v2097 = vrot.slane %v2095, 4
      %v2098 = vshll.u32 %v1986, 16
      %v2100 = vrot.slane %v2098, 5
      %v2101 = vor.u32 %v2097, %v2100
      %v2102 = vrot.slane %v2101, 4
      %v2104 = vshll.u32 %v1987, 16
      %v2106 = vrot.slane %v2104, 5
      %v2107 = vsel %vm899, %v2102, %v2106
      %v2108 = vshrl.u32 %v1987, 16
      %v2110 = vrot.slane %v2108, 4
      %v2111 = vor.u32 %v2110, %v2106
      %v2112 = vrot.slane %v2111, 4
      %v2114 = vshll.u32 %v1988, 16
      %v2116 = vrot.slane %v2114, 5
      %v2117 = vsel %vm899, %v2112, %v2116
      %v2119 = vshrl.u32 %v1989, 16
      %v2121 = vrot.slane %v2119, 4
      %v2122 = vshll.u32 %v1989, 16
      %v2124 = vrot.slane %v2122, 5
      %v2125 = vor.u32 %v2121, %v2124
      %v2126 = vrot.slane %v2125, 4
      %v2128 = vshll.u32 %v1990, 16
      %v2130 = vrot.slane %v2128, 5
      %v2131 = vsel %vm899, %v2126, %v2130
      %v2132 = vshrl.u32 %v1990, 16
      %v2134 = vrot.slane %v2132, 4
      %v2135 = vor.u32 %v2134, %v2130
      %v2136 = vrot.slane %v2135, 4
      %v2138 = vshll.u32 %v1991, 16
      %v2140 = vrot.slane %v2138, 5
      %v2141 = vsel %vm899, %v2136, %v2140
      %v2143 = vshrl.u32 %v1992, 16
      %v2145 = vrot.slane %v2143, 4
      %v2146 = vshll.u32 %v1992, 16
      %v2148 = vrot.slane %v2146, 5
      %v2149 = vor.u32 %v2145, %v2148
      %v2150 = vrot.slane %v2149, 4
      %v2152 = vshll.u32 %v1993, 16
      %v2154 = vrot.slane %v2152, 5
      %v2155 = vsel %vm899, %v2150, %v2154
      %v2156 = vshrl.u32 %v1993, 16
      %v2158 = vrot.slane %v2156, 4
      %v2159 = vor.u32 %v2158, %v2154
      %v2160 = vrot.slane %v2159, 4
      %v2162 = vshll.u32 %v1994, 16
      %v2164 = vrot.slane %v2162, 5
      %v2165 = vsel %vm899, %v2160, %v2164
      %v2167 = vshrl.u32 %v1995, 16
      %v2169 = vrot.slane %v2167, 4
      %v2170 = vshll.u32 %v1995, 16
      %v2172 = vrot.slane %v2170, 5
      %v2173 = vor.u32 %v2169, %v2172
      %v2174 = vrot.slane %v2173, 4
      %v2176 = vshll.u32 %v1996, 16
      %v2178 = vrot.slane %v2176, 5
      %v2179 = vsel %vm899, %v2174, %v2178
      %v2180 = vshrl.u32 %v1996, 16
      %v2182 = vrot.slane %v2180, 4
      %v2183 = vor.u32 %v2182, %v2178
      %v2184 = vrot.slane %v2183, 4
      %v2186 = vshll.u32 %v1997, 16
      %v2188 = vrot.slane %v2186, 5
      %v2189 = vsel %vm899, %v2184, %v2188
      %2190 = vrot.lane.b32.xlu0 %v2011, 56
      %v2191 = vpop.permute.xlu0 %2190
      %2192 = vrot.lane.b32.xlu0 %v2021, 56
      %v2193 = vpop.permute.xlu0 %2192
      %2194 = vrot.lane.b32.xlu0 %v2035, 56
      %v2195 = vpop.permute.xlu0 %2194
      %2196 = vrot.lane.b32.xlu0 %v2045, 56
      %v2197 = vpop.permute.xlu0 %2196
      %2198 = vrot.lane.b32.xlu0 %v2059, 56
      %v2199 = vpop.permute.xlu0 %2198
      %2200 = vrot.lane.b32.xlu0 %v2069, 56
      %v2201 = vpop.permute.xlu0 %2200
      %2202 = vrot.lane.b32.xlu0 %v2083, 56
      %v2203 = vpop.permute.xlu0 %2202
      %2204 = vrot.lane.b32.xlu0 %v2093, 56
      %v2205 = vpop.permute.xlu0 %2204
      %2206 = vrot.lane.b32.xlu0 %v2107, 56
      %v2207 = vpop.permute.xlu0 %2206
      %2208 = vrot.lane.b32.xlu0 %v2117, 56
      %v2209 = vpop.permute.xlu0 %2208
      %2210 = vrot.lane.b32.xlu0 %v2131, 56
      %v2211 = vpop.permute.xlu0 %2210
      %2212 = vrot.lane.b32.xlu0 %v2141, 56
      %v2213 = vpop.permute.xlu0 %2212
      %2214 = vrot.lane.b32.xlu0 %v2155, 56
      %v2215 = vpop.permute.xlu0 %2214
      %2216 = vrot.lane.b32.xlu0 %v2165, 56
      %v2217 = vpop.permute.xlu0 %2216
      %2218 = vrot.lane.b32.xlu0 %v2179, 56
      %v2219 = vpop.permute.xlu0 %2218
      %2220 = vrot.lane.b32.xlu0 %v2189, 56
      %v2221 = vpop.permute.xlu0 %2220
      %vm2238 = vcmask 519616
      %2239 = vst.msk [vmem:[#allocation3] sm:$0xf] %vm2238, %v2191
      %2240 = vst.msk [vmem:[#allocation3 + $0x4] sm:$0xf] %vm2238, %v2193
      %2241 = vst.msk [vmem:[#allocation3 + $0x8] sm:$0xf] %vm2238, %v2195
      %2242 = vst.msk [vmem:[#allocation3 + $0xc] sm:$0xf] %vm2238, %v2197
      %2243 = vst.msk [vmem:[#allocation3 + $0x10] sm:$0xf] %vm2238, %v2199
      %2244 = vst.msk [vmem:[#allocation3 + $0x14] sm:$0xf] %vm2238, %v2201
      %2245 = vst.msk [vmem:[#allocation3 + $0x18] sm:$0xf] %vm2238, %v2203
      %2246 = vst.msk [vmem:[#allocation3 + $0x1c] sm:$0xf] %vm2238, %v2205
      %2247 = vst.msk [vmem:[#allocation3 + $0x20] sm:$0xf] %vm2238, %v2207
      %2248 = vst.msk [vmem:[#allocation3 + $0x24] sm:$0xf] %vm2238, %v2209
      %2249 = vst.msk [vmem:[#allocation3 + $0x28] sm:$0xf] %vm2238, %v2211
      %2250 = vst.msk [vmem:[#allocation3 + $0x2c] sm:$0xf] %vm2238, %v2213
      %2251 = vst.msk [vmem:[#allocation3 + $0x30] sm:$0xf] %vm2238, %v2215
      %2252 = vst.msk [vmem:[#allocation3 + $0x34] sm:$0xf] %vm2238, %v2217
      %2253 = vst.msk [vmem:[#allocation3 + $0x38] sm:$0xf] %vm2238, %v2219
      %2254 = vst.msk [vmem:[#allocation3 + $0x3c] sm:$0xf] %vm2238, %v2221
      %v2255 = vld [vmem:[%s1876] sm:$0xe]
      %v2256 = vld [vmem:[%s1876 + $0x4] sm:$0xf]
      %v2257 = vld [vmem:[%s1876 + $0x8] sm:$0x1]
      %v2258 = vld [vmem:[%s1876 + $0xc] sm:$0xe]
      %v2259 = vld [vmem:[%s1876 + $0x10] sm:$0xf]
      %v2260 = vld [vmem:[%s1876 + $0x14] sm:$0x1]
      %v2261 = vld [vmem:[%s1876 + $0x18] sm:$0xe]
      %v2262 = vld [vmem:[%s1876 + $0x1c] sm:$0xf]
      %v2263 = vld [vmem:[%s1876 + $0x20] sm:$0x1]
      %v2264 = vld [vmem:[%s1876 + $0x24] sm:$0xe]
      %v2265 = vld [vmem:[%s1876 + $0x28] sm:$0xf]
      %v2266 = vld [vmem:[%s1876 + $0x2c] sm:$0x1]
      %v2267 = vld [vmem:[%s1876 + $0x30] sm:$0xe]
      %v2268 = vld [vmem:[%s1876 + $0x34] sm:$0xf]
      %v2269 = vld [vmem:[%s1876 + $0x38] sm:$0x1]
      %v2270 = vld [vmem:[%s1876 + $0x3c] sm:$0xe]
      %v2271 = vld [vmem:[%s1876 + $0x40] sm:$0xf]
      %v2272 = vld [vmem:[%s1876 + $0x44] sm:$0x1]
      %v2273 = vld [vmem:[%s1876 + $0x48] sm:$0xe]
      %v2274 = vld [vmem:[%s1876 + $0x4c] sm:$0xf]
      %v2275 = vld [vmem:[%s1876 + $0x50] sm:$0x1]
      %v2276 = vld [vmem:[%s1876 + $0x54] sm:$0xe]
      %v2277 = vld [vmem:[%s1876 + $0x58] sm:$0xf]
      %v2278 = vld [vmem:[%s1876 + $0x5c] sm:$0x1]
      %v2303 = vrot.slane %v2255, 5
      %v2304 = vrot.slane %v2303, 4
      %v2305 = vrot.slane %v2256, 5
      %v2306 = vsel %vm1207, %v2304, %v2305
      %v2307 = vrot.slane %v2305, 4
      %v2308 = vrot.slane %v2257, 5
      %v2309 = vsel %vm1207, %v2307, %v2308
      %v2310 = vrot.slane %v2258, 5
      %v2311 = vrot.slane %v2310, 4
      %v2312 = vrot.slane %v2259, 5
      %v2313 = vsel %vm1207, %v2311, %v2312
      %v2314 = vrot.slane %v2312, 4
      %v2315 = vrot.slane %v2260, 5
      %v2316 = vsel %vm1207, %v2314, %v2315
      %v2317 = vrot.slane %v2261, 5
      %v2318 = vrot.slane %v2317, 4
      %v2319 = vrot.slane %v2262, 5
      %v2320 = vsel %vm1207, %v2318, %v2319
      %v2321 = vrot.slane %v2319, 4
      %v2322 = vrot.slane %v2263, 5
      %v2323 = vsel %vm1207, %v2321, %v2322
      %v2324 = vrot.slane %v2264, 5
      %v2325 = vrot.slane %v2324, 4
      %v2326 = vrot.slane %v2265, 5
      %v2327 = vsel %vm1207, %v2325, %v2326
      %v2328 = vrot.slane %v2326, 4
      %v2329 = vrot.slane %v2266, 5
      %v2330 = vsel %vm1207, %v2328, %v2329
      %v2331 = vrot.slane %v2267, 5
      %v2332 = vrot.slane %v2331, 4
      %v2333 = vrot.slane %v2268, 5
      %v2334 = vsel %vm1207, %v2332, %v2333
      %v2335 = vrot.slane %v2333, 4
      %v2336 = vrot.slane %v2269, 5
      %v2337 = vsel %vm1207, %v2335, %v2336
      %v2338 = vrot.slane %v2270, 5
      %v2339 = vrot.slane %v2338, 4
      %v2340 = vrot.slane %v2271, 5
      %v2341 = vsel %vm1207, %v2339, %v2340
      %v2342 = vrot.slane %v2340, 4
      %v2343 = vrot.slane %v2272, 5
      %v2344 = vsel %vm1207, %v2342, %v2343
      %v2345 = vrot.slane %v2273, 5
      %v2346 = vrot.slane %v2345, 4
      %v2347 = vrot.slane %v2274, 5
      %v2348 = vsel %vm1207, %v2346, %v2347
      %v2349 = vrot.slane %v2347, 4
      %v2350 = vrot.slane %v2275, 5
      %v2351 = vsel %vm1207, %v2349, %v2350
      %v2352 = vrot.slane %v2276, 5
      %v2353 = vrot.slane %v2352, 4
      %v2354 = vrot.slane %v2277, 5
      %v2355 = vsel %vm1207, %v2353, %v2354
      %v2356 = vrot.slane %v2354, 4
      %v2357 = vrot.slane %v2278, 5
      %v2358 = vsel %vm1207, %v2356, %v2357
      %2359 = vrot.lane.b32.xlu0 %v2306, 64
      %v2360 = vpop.permute.xlu0 %2359
      %2361 = vrot.lane.b32.xlu0 %v2309, 64
      %v2362 = vpop.permute.xlu0 %2361
      %2363 = vrot.lane.b32.xlu0 %v2313, 64
      %v2364 = vpop.permute.xlu0 %2363
      %2365 = vrot.lane.b32.xlu0 %v2316, 64
      %v2366 = vpop.permute.xlu0 %2365
      %2367 = vrot.lane.b32.xlu0 %v2320, 64
      %v2368 = vpop.permute.xlu0 %2367
      %2369 = vrot.lane.b32.xlu0 %v2323, 64
      %v2370 = vpop.permute.xlu0 %2369
      %2371 = vrot.lane.b32.xlu0 %v2327, 64
      %v2372 = vpop.permute.xlu0 %2371
      %2373 = vrot.lane.b32.xlu0 %v2330, 64
      %v2374 = vpop.permute.xlu0 %2373
      %2375 = vrot.lane.b32.xlu0 %v2334, 64
      %v2376 = vpop.permute.xlu0 %2375
      %2377 = vrot.lane.b32.xlu0 %v2337, 64
      %v2378 = vpop.permute.xlu0 %2377
      %2379 = vrot.lane.b32.xlu0 %v2341, 64
      %v2380 = vpop.permute.xlu0 %2379
      %2381 = vrot.lane.b32.xlu0 %v2344, 64
      %v2382 = vpop.permute.xlu0 %2381
      %2383 = vrot.lane.b32.xlu0 %v2348, 64
      %v2384 = vpop.permute.xlu0 %2383
      %2385 = vrot.lane.b32.xlu0 %v2351, 64
      %v2386 = vpop.permute.xlu0 %2385
      %2387 = vrot.lane.b32.xlu0 %v2355, 64
      %v2388 = vpop.permute.xlu0 %2387
      %2389 = vrot.lane.b32.xlu0 %v2358, 64
      %v2390 = vpop.permute.xlu0 %2389
      %vm2407 = vcmask 585216
      %2408 = vst.msk [vmem:[#allocation3] sm:$0xf] %vm2407, %v2360
      %2409 = vst.msk [vmem:[#allocation3 + $0x4] sm:$0xf] %vm2407, %v2362
      %2410 = vst.msk [vmem:[#allocation3 + $0x8] sm:$0xf] %vm2407, %v2364
      %2411 = vst.msk [vmem:[#allocation3 + $0xc] sm:$0xf] %vm2407, %v2366
      %2412 = vst.msk [vmem:[#allocation3 + $0x10] sm:$0xf] %vm2407, %v2368
      %2413 = vst.msk [vmem:[#allocation3 + $0x14] sm:$0xf] %vm2407, %v2370
      %2414 = vst.msk [vmem:[#allocation3 + $0x18] sm:$0xf] %vm2407, %v2372
      %2415 = vst.msk [vmem:[#allocation3 + $0x1c] sm:$0xf] %vm2407, %v2374
      %2416 = vst.msk [vmem:[#allocation3 + $0x20] sm:$0xf] %vm2407, %v2376
      %2417 = vst.msk [vmem:[#allocation3 + $0x24] sm:$0xf] %vm2407, %v2378
      %2418 = vst.msk [vmem:[#allocation3 + $0x28] sm:$0xf] %vm2407, %v2380
      %2419 = vst.msk [vmem:[#allocation3 + $0x2c] sm:$0xf] %vm2407, %v2382
      %2420 = vst.msk [vmem:[#allocation3 + $0x30] sm:$0xf] %vm2407, %v2384
      %2421 = vst.msk [vmem:[#allocation3 + $0x34] sm:$0xf] %vm2407, %v2386
      %2422 = vst.msk [vmem:[#allocation3 + $0x38] sm:$0xf] %vm2407, %v2388
      %2423 = vst.msk [vmem:[#allocation3 + $0x3c] sm:$0xf] %vm2407, %v2390
      %v2424 = vld [vmem:[#allocation3] sm:$0xf]
      %v2425 = vld [vmem:[#allocation3 + $0x4] sm:$0xf]
      %v2426 = vld [vmem:[#allocation3 + $0x8] sm:$0xf]
      %v2427 = vld [vmem:[#allocation3 + $0xc] sm:$0xf]
      %v2428 = vld [vmem:[#allocation3 + $0x10] sm:$0xf]
      %v2429 = vld [vmem:[#allocation3 + $0x14] sm:$0xf]
      %v2430 = vld [vmem:[#allocation3 + $0x18] sm:$0xf]
      %v2431 = vld [vmem:[#allocation3 + $0x1c] sm:$0xf]
      %v2432 = vld [vmem:[#allocation3 + $0x20] sm:$0xf]
      %v2433 = vld [vmem:[#allocation3 + $0x24] sm:$0xf]
      %v2434 = vld [vmem:[#allocation3 + $0x28] sm:$0xf]
      %v2435 = vld [vmem:[#allocation3 + $0x2c] sm:$0xf]
      %v2436 = vld [vmem:[#allocation3 + $0x30] sm:$0xf]
      %v2437 = vld [vmem:[#allocation3 + $0x34] sm:$0xf]
      %v2438 = vld [vmem:[#allocation3 + $0x38] sm:$0xf]
      %v2439 = vld [vmem:[#allocation3 + $0x3c] sm:$0xf]
      %v2440 = vld [vmem:[%s3] sm:$0xf]
      %v2441 = vld [vmem:[%s3 + $0x4] sm:$0xf]
      %v2442 = vld [vmem:[%s3 + $0x8] sm:$0xf]
      %v2443 = vld [vmem:[%s3 + $0xc] sm:$0xf]
      %v2444 = vld [vmem:[%s3 + $0x10] sm:$0xf]
      %v2445 = vld [vmem:[%s3 + $0x14] sm:$0xf]
      %v2446 = vld [vmem:[%s3 + $0x18] sm:$0xf]
      %v2447 = vld [vmem:[%s3 + $0x1c] sm:$0xf]
      %v2448 = vld [vmem:[%s3 + $0x20] sm:$0xf]
      %v2465 = vunpack.c.l.b16 %v2424
      %v2466 = vunpack.c.l.b16 %v2425
      %v2467 = vunpack.c.l.b16 %v2426
      %v2468 = vunpack.c.l.b16 %v2427
      %v2469 = vunpack.c.l.b16 %v2428
      %v2470 = vunpack.c.l.b16 %v2429
      %v2471 = vunpack.c.l.b16 %v2430
      %v2472 = vunpack.c.l.b16 %v2431
      %v2473 = vunpack.c.l.b16 %v2432
      %v2474 = vunpack.c.l.b16 %v2433
      %v2475 = vunpack.c.l.b16 %v2434
      %v2476 = vunpack.c.l.b16 %v2435
      %v2477 = vunpack.c.l.b16 %v2436
      %v2478 = vunpack.c.l.b16 %v2437
      %v2479 = vunpack.c.l.b16 %v2438
      %v2480 = vunpack.c.l.b16 %v2439
      %v2481 = vpack.c.b16 %v2466, %v2465
      %v2482 = vpack.c.b16 %v2468, %v2467
      %v2483 = vpack.c.b16 %v2470, %v2469
      %v2484 = vpack.c.b16 %v2472, %v2471
      %v2485 = vpack.c.b16 %v2474, %v2473
      %v2486 = vpack.c.b16 %v2476, %v2475
      %v2487 = vpack.c.b16 %v2478, %v2477
      %v2488 = vpack.c.b16 %v2480, %v2479
      %v2498 = vunpack.c.l.b16 %v2440
      %v2499 = vunpack.c.l.b16 %v2441
      %v2500 = vunpack.c.l.b16 %v2442
      %v2501 = vunpack.c.l.b16 %v2443
      %v2502 = vunpack.c.l.b16 %v2444
      %v2503 = vunpack.c.l.b16 %v2445
      %v2504 = vunpack.c.l.b16 %v2446
      %v2505 = vunpack.c.l.b16 %v2447
      %v2506 = vunpack.c.l.b16 %v2448
      %v2507 = vpack.c.b16 %v2499, %v2498
      %v2508 = vpack.c.b16 %v2501, %v2500
      %v2509 = vpack.c.b16 %v2503, %v2502
      %v2510 = vpack.c.b16 %v2505, %v2504
      %v2511 = vpack.c.b16 %v2506, %v2506
      %vm2516 = vcmask 588800
      %v2518 = vsel %vm2516, %v2481, 0
      %v2521 = vsel %vm2516, %v2482, 0
      %v2524 = vsel %vm2516, %v2483, 0
      %v2527 = vsel %vm2516, %v2484, 0
      %v2530 = vsel %vm2516, %v2485, 0
      %v2533 = vsel %vm2516, %v2486, 0
      %v2536 = vsel %vm2516, %v2487, 0
      %v2539 = vsel %vm2516, %v2488, 0
      %vm2541 = vcmask 1043456
      %v2543 = vsel %vm2541, %v2511, 0
      %2545 = vmatpush.bf16.msra.mxu0 0
      %2546 = vmatpush.bf16.msra.mxu0 0
      %2547 = vmatpush.bf16.msra.mxu0 0
      %2548 = vmatpush.bf16.msra.mxu0 %v2543
      %2549 = vmatpush.bf16.msra.mxu0 %v2510
      %2550 = vmatpush.bf16.msra.mxu0 %v2509
      %2551 = vmatpush.bf16.msra.mxu0 %v2508
      %2552 = vmatpush.bf16.msra.mxu0 %v2507
      %2553 = vmatmul.bf16.gmra.mxu0 %v2518
      %v2554 = vpop.f32.mrf.mxu0
      %v2555 = vadd.f32 0.0, %v2554
      %v2556 = vpop.f32.mrf.mxu0
      %v2557 = vadd.f32 0.0, %v2556
      %2558 = vmatmul.bf16.gmra.mxu0 %v2521
      %v2559 = vpop.f32.mrf.mxu0
      %v2560 = vadd.f32 0.0, %v2559
      %v2561 = vpop.f32.mrf.mxu0
      %v2562 = vadd.f32 0.0, %v2561
      %2563 = vmatmul.bf16.gmra.mxu0 %v2524
      %v2564 = vpop.f32.mrf.mxu0
      %v2565 = vadd.f32 0.0, %v2564
      %v2566 = vpop.f32.mrf.mxu0
      %v2567 = vadd.f32 0.0, %v2566
      %2568 = vmatmul.bf16.gmra.mxu0 %v2527
      %v2569 = vpop.f32.mrf.mxu0
      %v2570 = vadd.f32 0.0, %v2569
      %v2571 = vpop.f32.mrf.mxu0
      %v2572 = vadd.f32 0.0, %v2571
      %2573 = vmatmul.bf16.gmra.mxu0 %v2530
      %v2574 = vpop.f32.mrf.mxu0
      %v2575 = vadd.f32 0.0, %v2574
      %v2576 = vpop.f32.mrf.mxu0
      %v2577 = vadd.f32 0.0, %v2576
      %2578 = vmatmul.bf16.gmra.mxu0 %v2533
      %v2579 = vpop.f32.mrf.mxu0
      %v2580 = vadd.f32 0.0, %v2579
      %v2581 = vpop.f32.mrf.mxu0
      %v2582 = vadd.f32 0.0, %v2581
      %2583 = vmatmul.bf16.gmra.mxu0 %v2536
      %v2584 = vpop.f32.mrf.mxu0
      %v2585 = vadd.f32 0.0, %v2584
      %v2586 = vpop.f32.mrf.mxu0
      %v2587 = vadd.f32 0.0, %v2586
      %2588 = vmatmul.bf16.gmra.mxu0 %v2539
      %v2589 = vpop.f32.mrf.mxu0
      %v2590 = vadd.f32 0.0, %v2589
      %v2591 = vpop.f32.mrf.mxu0
      %v2592 = vadd.f32 0.0, %v2591
      %2593 = vdwg.mxu0
      %v2594 = vpack.c.bf16 %v2555, %v2555
      %v2595 = vpack.c.bf16 %v2557, %v2557
      %v2596 = vpack.c.bf16 %v2560, %v2560
      %v2597 = vpack.c.bf16 %v2562, %v2562
      %v2598 = vpack.c.bf16 %v2565, %v2565
      %v2599 = vpack.c.bf16 %v2567, %v2567
      %v2600 = vpack.c.bf16 %v2570, %v2570
      %v2601 = vpack.c.bf16 %v2572, %v2572
      %v2602 = vpack.c.bf16 %v2575, %v2575
      %v2603 = vpack.c.bf16 %v2577, %v2577
      %v2604 = vpack.c.bf16 %v2580, %v2580
      %v2605 = vpack.c.bf16 %v2582, %v2582
      %v2606 = vpack.c.bf16 %v2585, %v2585
      %v2607 = vpack.c.bf16 %v2587, %v2587
      %v2608 = vpack.c.bf16 %v2590, %v2590
      %v2609 = vpack.c.bf16 %v2592, %v2592
      %vm2610 = vcmask 125952
      %2611 = vst.msk [vmem:[%s454] sm:$0xf] %vm2610, %v2594
      %2612 = vst.msk [vmem:[%s454 + $0x4] sm:$0xf] %vm2610, %v2595
      %2613 = vst.msk [vmem:[%s454 + $0x8] sm:$0xf] %vm2610, %v2596
      %2614 = vst.msk [vmem:[%s454 + $0xc] sm:$0xf] %vm2610, %v2597
      %2615 = vst.msk [vmem:[%s454 + $0x10] sm:$0xf] %vm2610, %v2598
      %2616 = vst.msk [vmem:[%s454 + $0x14] sm:$0xf] %vm2610, %v2599
      %2617 = vst.msk [vmem:[%s454 + $0x18] sm:$0xf] %vm2610, %v2600
      %2618 = vst.msk [vmem:[%s454 + $0x1c] sm:$0xf] %vm2610, %v2601
      %2619 = vst.msk [vmem:[%s454 + $0x20] sm:$0xf] %vm2610, %v2602
      %2620 = vst.msk [vmem:[%s454 + $0x24] sm:$0xf] %vm2610, %v2603
      %2621 = vst.msk [vmem:[%s454 + $0x28] sm:$0xf] %vm2610, %v2604
      %2622 = vst.msk [vmem:[%s454 + $0x2c] sm:$0xf] %vm2610, %v2605
      %2623 = vst.msk [vmem:[%s454 + $0x30] sm:$0xf] %vm2610, %v2606
      %2624 = vst.msk [vmem:[%s454 + $0x34] sm:$0xf] %vm2610, %v2607
      %2625 = vst.msk [vmem:[%s454 + $0x38] sm:$0xf] %vm2610, %v2608
      %2626 = vst.msk [vmem:[%s454 + $0x3c] sm:$0xf] %vm2610, %v2609
      %vm2627 = vcmask 130048
      %v2628 = vsel %vm2627, %v2555, 0.0
      %v2629 = vsel %vm2627, %v2557, 0.0
      %v2630 = vadd.f32 %v2628, %v2629
      %v2631 = vsel %vm2627, %v2560, 0.0
      %v2632 = vadd.f32 %v2630, %v2631
      %v2633 = vsel %vm2627, %v2562, 0.0
      %v2634 = vadd.f32 %v2632, %v2633
      %v2635 = vsel %vm2627, %v2565, 0.0
      %v2636 = vadd.f32 %v2634, %v2635
      %v2637 = vsel %vm2627, %v2567, 0.0
      %v2638 = vadd.f32 %v2636, %v2637
      %v2639 = vsel %vm2627, %v2570, 0.0
      %v2640 = vadd.f32 %v2638, %v2639
      %v2641 = vsel %vm2627, %v2572, 0.0
      %v2642 = vadd.f32 %v2640, %v2641
      %v2643 = vsel %vm2627, %v2575, 0.0
      %v2644 = vadd.f32 %v2642, %v2643
      %v2645 = vsel %vm2627, %v2577, 0.0
      %v2646 = vadd.f32 %v2644, %v2645
      %v2647 = vsel %vm2627, %v2580, 0.0
      %v2648 = vadd.f32 %v2646, %v2647
      %v2649 = vsel %vm2627, %v2582, 0.0
      %v2650 = vadd.f32 %v2648, %v2649
      %v2651 = vsel %vm2627, %v2585, 0.0
      %v2652 = vadd.f32 %v2650, %v2651
      %v2653 = vsel %vm2627, %v2587, 0.0
      %v2654 = vadd.f32 %v2652, %v2653
      %v2655 = vsel %vm2627, %v2590, 0.0
      %v2656 = vadd.f32 %v2654, %v2655
      %v2657 = vsel %vm2627, %v2592, 0.0
      %v2658 = vadd.f32 %v2656, %v2657
      %v2659 = vrot.slane %v2658, 4
      %v2660 = vadd.f32 %v2658, %v2659
      %v2661 = vrot.slane %v2660, 2
      %v2662 = vadd.f32 %v2660, %v2661
      %v2663 = vrot.slane %v2662, 1
      %v2664 = vadd.f32 %v2662, %v2663
      %v2665 = vmul.f32 %v2555, %v2555
      %v2666 = vmul.f32 %v2557, %v2557
      %v2667 = vmul.f32 %v2560, %v2560
      %v2668 = vmul.f32 %v2562, %v2562
      %v2669 = vmul.f32 %v2565, %v2565
      %v2670 = vmul.f32 %v2567, %v2567
      %v2671 = vmul.f32 %v2570, %v2570
      %v2672 = vmul.f32 %v2572, %v2572
      %v2673 = vmul.f32 %v2575, %v2575
      %v2674 = vmul.f32 %v2577, %v2577
      %v2675 = vmul.f32 %v2580, %v2580
      %v2676 = vmul.f32 %v2582, %v2582
      %v2677 = vmul.f32 %v2585, %v2585
      %v2678 = vmul.f32 %v2587, %v2587
      %v2679 = vmul.f32 %v2590, %v2590
      %v2680 = vmul.f32 %v2592, %v2592
      %v2681 = vsel %vm2627, %v2665, 0.0
      %v2682 = vsel %vm2627, %v2666, 0.0
      %v2683 = vadd.f32 %v2681, %v2682
      %v2684 = vsel %vm2627, %v2667, 0.0
      %v2685 = vadd.f32 %v2683, %v2684
      %v2686 = vsel %vm2627, %v2668, 0.0
      %v2687 = vadd.f32 %v2685, %v2686
      %v2688 = vsel %vm2627, %v2669, 0.0
      %v2689 = vadd.f32 %v2687, %v2688
      %v2690 = vsel %vm2627, %v2670, 0.0
      %v2691 = vadd.f32 %v2689, %v2690
      %v2692 = vsel %vm2627, %v2671, 0.0
      %v2693 = vadd.f32 %v2691, %v2692
      %v2694 = vsel %vm2627, %v2672, 0.0
      %v2695 = vadd.f32 %v2693, %v2694
      %v2696 = vsel %vm2627, %v2673, 0.0
      %v2697 = vadd.f32 %v2695, %v2696
      %v2698 = vsel %vm2627, %v2674, 0.0
      %v2699 = vadd.f32 %v2697, %v2698
      %v2700 = vsel %vm2627, %v2675, 0.0
      %v2701 = vadd.f32 %v2699, %v2700
      %v2702 = vsel %vm2627, %v2676, 0.0
      %v2703 = vadd.f32 %v2701, %v2702
      %v2704 = vsel %vm2627, %v2677, 0.0
      %v2705 = vadd.f32 %v2703, %v2704
      %v2706 = vsel %vm2627, %v2678, 0.0
      %v2707 = vadd.f32 %v2705, %v2706
      %v2708 = vsel %vm2627, %v2679, 0.0
      %v2709 = vadd.f32 %v2707, %v2708
      %v2710 = vsel %vm2627, %v2680, 0.0
      %v2711 = vadd.f32 %v2709, %v2710
      %v2712 = vrot.slane %v2711, 4
      %v2713 = vadd.f32 %v2711, %v2712
      %v2714 = vrot.slane %v2713, 2
      %v2715 = vadd.f32 %v2713, %v2714
      %v2716 = vrot.slane %v2715, 1
      %v2717 = vadd.f32 %v2715, %v2716
      %vm2718 = vcmask 1040384
      %v2719 = vsel %vm2718, %v2664, %v2717
      %vm2720 = vcmask 123904
      %2721 = vst.msk [vmem:[%s463] sm:$0x3] %vm2720, %v2719
      %s2722 = smul.u32 %s23, 2
      %s2723 = sadd.s32 %s2722, %s24
      %s2724 = smul.u32 16, %s2723
      %p2725 = scmp.lt.s32.totalorder %s2724, 63
      %s2726 = scalar_select %p2725, %s2724, 63
      %s2727 = smul.addr %s2726, 4
      %s2728 = scalar_lea.vmem %s6, %s2727
      %s2729 = smul.u32 %s23, 2
      %s2730 = sadd.s32 %s2729, %s24
      %p2731 = scmp.lt.s32.totalorder %s2730, 3
      %s2732 = scalar_select %p2731, %s2730, 3
      %s2733 = smul.addr %s2732, 2
      %s2734 = scalar_lea.vmem %s7, %s2733
      // Predicated region
      $region45: #{decoder_forward.4} parent=43 // pred_check
        %p2735 = pneg %p216
      $region46: #{decoder_forward.4} parent=43 // pred_check_branch
        %2737 = sbr.rel (%p2735) target = $region48
      $region47: #{decoder_forward.4} parent=43 // pred_region
        %s2738 = smul.u32 %s23, 2
        %s2739 = sadd.s32 %s2738, %s24
        %s2740 = smul.u32 16, %s2739
      $region48: #{decoder_forward.4} parent=43 // pred_fallthru
        _
      // Predicated region
      $region49: #{decoder_forward.4} parent=43 // pred_check
        %p2741 = pneg %p246
      $region50: #{decoder_forward.4} parent=43 // pred_check_branch
        %2743 = sbr.rel (%p2741) target = $region52
      $region51: #{decoder_forward.4} parent=43 // pred_region
        %s2744 = smul.u32 %s23, 2
        %s2745 = sadd.s32 %s2744, %s24
      $region52: #{decoder_forward.4} parent=43 // pred_fallthru
        _
    $region44: #{decoder_forward.4} parent=5 // pred_fallthru
      _
    %p2746 = scmp.le.s32.totalorder 2, %s14
    // Predicated region
    $region53: #{decoder_forward.4} parent=5 // pred_check
      %p2747 = pneg %p2746
    $region54: #{decoder_forward.4} parent=5 // pred_check_branch
      %2749 = sbr.rel (%p2747) target = $region56
    $region55: #{decoder_forward.4} parent=5 // pred_region
      %s2750 = ssub.s32 %s14, 2
      // Predicated region
      $region57: #{decoder_forward.4} parent=55 // pred_check
        %p2751 = pneg %p222
      $region58: #{decoder_forward.4} parent=55 // pred_check_branch
        %2753 = sbr.rel (%p2751) target = $region60
      $region59: #{decoder_forward.4} parent=55 // pred_region
        %s2754 = smul.u32 %s25, 2
        %s2755 = sadd.s32 %s2754, %s26
        %s2756 = smul.u32 16, %s2755
        %p2757 = scmp.lt.s32.totalorder %s2756, 63
        %s2758 = scalar_select %p2757, %s2756, 63
        %s2759 = smul.addr %s2758, 4
        %s2760 = scalar_lea.vmem %s6, %s2759
      $region60: #{decoder_forward.4} parent=55 // pred_fallthru
        _
      // Predicated region
      $region61: #{decoder_forward.4} parent=55 // pred_check
        %p2761 = pneg %p252
      $region62: #{decoder_forward.4} parent=55 // pred_check_branch
        %2763 = sbr.rel (%p2761) target = $region64
      $region63: #{decoder_forward.4} parent=55 // pred_region
        %s2764 = smul.u32 %s25, 2
        %s2765 = sadd.s32 %s2764, %s26
        %p2766 = scmp.lt.s32.totalorder %s2765, 3
        %s2767 = scalar_select %p2766, %s2765, 3
        %s2768 = smul.addr %s2767, 2
        %s2769 = scalar_lea.vmem %s7, %s2768
      $region64: #{decoder_forward.4} parent=55 // pred_fallthru
        _
    $region56: #{decoder_forward.4} parent=5 // pred_fallthru
      _
  $region6: #{decoder_forward.4} parent=0 // loop_footer
    %s18 = sadd.s32 1, %s14
  $region7: #{decoder_forward.4} parent=0 // loop_footer_branch
    %13 = sbr.rel target = $region3
  $region8: #{decoder_forward.4} parent=0 // loop_exit
    _

// kernel: decoder_forward.5
$region0: #{decoder_forward.5}
  #allocation0 [shape = 'u32[]', space=smem, size = 0x4, offset = 0x4, fixed_abs, tag = 'smem constant byte address 0x4 - core index']
  #allocation1 [shape = 'u32[72,128]{1,0:T(1,128)}', space=vmem, size = 0x9000, scoped, tag = 'internal scratch']
  #allocation2 [shape = 'bf16[10,18,16]{2,1,0:T(8,128)(2,1)}', space=vmem, size = 0xf000, scoped, tag = 'scratch operand']
  #allocation3 [shape = 'bf16[128,144]{1,0:T(8,128)(2,1)}', space=vmem, size = 0x10000, scoped, tag = 'scratch operand']
  %s0 = inlined_call_operand.vmem [shape: bf16[2,16,16,16], index: 0, kind: input, shape index: {}, may-alias: {0,1,2}]
  %s1 = inlined_call_operand.vmem [shape: bf16[2,16,16,16], index: 1, kind: input, shape index: {}, may-alias: {0,1,2}]
  %s2 = inlined_call_operand.vmem [shape: bf16[2,16,16,16], index: 2, kind: input, shape index: {}, may-alias: {0,1,2}]
  %s3 = inlined_call_operand.vmem [shape: bf16[144,16], index: 3, kind: input, shape index: {}]
  %s4 = inlined_call_operand.vmem [shape: f32[1,16], index: 4, kind: input, shape index: {}]
  %s5 = inlined_call_operand.vmem [shape: f32[1,16], index: 5, kind: input, shape index: {}]
  %s6 = inlined_call_operand.vmem [shape: bf16[512,16], index: 6, kind: output, shape index: {0}]
  %s7 = inlined_call_operand.vmem [shape: f32[4,2,16], index: 7, kind: output, shape index: {1}]
  %8 = xla_tuple %s6, %s7
  %s9 = sld [smem:[#allocation0]]
  $region65: #{decoder_forward.5} parent=0
    _
  %s11 = ssub.s32 1, %s9
  %s12 = scalar_select 0, %s11, %s9
  loop: start=0, step=1, limit=6
  $region2: #{decoder_forward.5} parent=0 // loop_pre_header
    _
  $region3: #{decoder_forward.5} parent=0 // loop_header
    %s14 = sphi 0, %s18
    %p15 = scmp.ge.s32.totalorder %s14, 6
    %s21 = sphi 0, %s33
    %s22 = sphi 0, %s29
    %s23 = sphi 0, %s21
    %s24 = sphi 0, %s22
    %s25 = sphi 0, %s23
    %s26 = sphi 0, %s24
    %s38 = sphi 0, %s40
    %s41 = sphi 0, %s38
    %s42 = sphi 0, %s41
    %s58 = sphi 0, %s42
    %s74 = sphi 0, %s76
    %s77 = sphi 0, %s74
    %s78 = sphi 0, %s77
    %s94 = sphi 0, %s78
    %s110 = sphi 0, %s112
    %s113 = sphi 0, %s110
    %s114 = sphi 0, %s113
    %s130 = sphi 0, %s114
    %s134 = sphi 0, %s134
    %s136 = sphi 0, %s134
    %s137 = sphi 0, %s136
    %s151 = sphi 0, %s137
    %s155 = sphi 0, %s155
    %s157 = sphi 0, %s155
    %s158 = sphi 0, %s157
    %s172 = sphi 0, %s158
    %s176 = sphi 0, %s176
    %s178 = sphi 0, %s176
    %s179 = sphi 0, %s178
    %s193 = sphi 0, %s179
    %s203 = sphi 0, %s205
    %s206 = sphi 0, %s203
    %s207 = sphi 0, %s206
    %s223 = sphi 0, %s207
    %s233 = sphi 0, %s235
    %s236 = sphi 0, %s233
    %s237 = sphi 0, %s236
    %s253 = sphi 0, %s237
  $region4: #{decoder_forward.5} parent=0 // loop_header_branch
    %17 = sbr.rel (%p15) target = $region8
  $region5: #{decoder_forward.5} parent=0 // loop_body
    %s19 = ssub.s32 %s14, 1
    %s20 = ssub.s32 %s14, 2
    %s27 = sadd.s32 1, %s22
    %p28 = scmp.ge.s32.totalorder %s27, 2
    %s29 = scalar_select %p28, 0, %s27
    %s30 = sadd.s32 1, %s21
    %s31 = scalar_select %p28, %s30, %s21
    %p32 = scmp.ge.s32.totalorder %s31, 2
    %s33 = scalar_select %p32, 0, %s31
    %s34 = ssub.s32 %s21, %s33
    %s35 = ssub.s32 %s22, %s29
    %s36 = sor.u32 %s34, %s35
    %p37 = scmp.eq.s32.totalorder %s36, 0
    %s39 = sadd.s32 %s38, 1
    %s40 = scalar_select %p37, %s38, %s39
    %p43 = pneg %p37
    %p44 = scmp.eq.s32.totalorder %s14, 3
    %p45 = por %p43, %p44
    %p46 = scmp.ne.s32.totalorder %s38, %s41
    %p47 = scmp.eq.s32.totalorder %s14, 0
    %p48 = por %p46, %p47
    %p49 = scmp.ne.s32.totalorder %s38, %s41
    %p50 = scmp.eq.s32.totalorder %s19, 3
    %p51 = por %p49, %p50
    %p52 = scmp.ne.s32.totalorder %s41, %s42
    %p53 = scmp.eq.s32.totalorder %s19, 0
    %p54 = por %p52, %p53
    %p55 = scmp.ne.s32.totalorder %s41, %s42
    %p56 = scmp.eq.s32.totalorder %s20, 3
    %p57 = por %p55, %p56
    %p59 = scmp.ne.s32.totalorder %s42, %s58
    %p60 = scmp.eq.s32.totalorder %s20, 0
    %p61 = por %p59, %p60
    %s62 = smul.u32 %s22, 8
    %s63 = ssub.s32 %s62, 1
    %p64 = scmp.gt.s32.totalorder %s63, 0
    %s65 = scalar_select %p64, %s63, 0
    %s66 = smul.u32 %s29, 8
    %s67 = ssub.s32 %s66, 1
    %p68 = scmp.gt.s32.totalorder %s67, 0
    %s69 = scalar_select %p68, %s67, 0
    %s70 = ssub.s32 %s21, %s33
    %s71 = ssub.s32 %s65, %s69
    %s72 = sor.u32 %s70, %s71
    %p73 = scmp.eq.s32.totalorder %s72, 0
    %s75 = sadd.s32 %s74, 1
    %s76 = scalar_select %p73, %s74, %s75
    %p79 = pneg %p73
    %p80 = scmp.eq.s32.totalorder %s14, 3
    %p81 = por %p79, %p80
    %p82 = scmp.ne.s32.totalorder %s74, %s77
    %p83 = scmp.eq.s32.totalorder %s14, 0
    %p84 = por %p82, %p83
    %p85 = scmp.ne.s32.totalorder %s74, %s77
    %p86 = scmp.eq.s32.totalorder %s19, 3
    %p87 = por %p85, %p86
    %p88 = scmp.ne.s32.totalorder %s77, %s78
    %p89 = scmp.eq.s32.totalorder %s19, 0
    %p90 = por %p88, %p89
    %p91 = scmp.ne.s32.totalorder %s77, %s78
    %p92 = scmp.eq.s32.totalorder %s20, 3
    %p93 = por %p91, %p92
    %p95 = scmp.ne.s32.totalorder %s78, %s94
    %p96 = scmp.eq.s32.totalorder %s20, 0
    %p97 = por %p95, %p96
    %s98 = smul.u32 %s22, 8
    %s99 = sadd.s32 %s98, 8
    %p100 = scmp.lt.s32.totalorder %s99, 15
    %s101 = scalar_select %p100, %s99, 15
    %s102 = smul.u32 %s29, 8
    %s103 = sadd.s32 %s102, 8
    %p104 = scmp.lt.s32.totalorder %s103, 15
    %s105 = scalar_select %p104, %s103, 15
    %s106 = ssub.s32 %s21, %s33
    %s107 = ssub.s32 %s101, %s105
    %s108 = sor.u32 %s106, %s107
    %p109 = scmp.eq.s32.totalorder %s108, 0
    %s111 = sadd.s32 %s110, 1
    %s112 = scalar_select %p109, %s110, %s111
    %p115 = pneg %p109
    %p116 = scmp.eq.s32.totalorder %s14, 3
    %p117 = por %p115, %p116
    %p118 = scmp.ne.s32.totalorder %s110, %s113
    %p119 = scmp.eq.s32.totalorder %s14, 0
    %p120 = por %p118, %p119
    %p121 = scmp.ne.s32.totalorder %s110, %s113
    %p122 = scmp.eq.s32.totalorder %s19, 3
    %p123 = por %p121, %p122
    %p124 = scmp.ne.s32.totalorder %s113, %s114
    %p125 = scmp.eq.s32.totalorder %s19, 0
    %p126 = por %p124, %p125
    %p127 = scmp.ne.s32.totalorder %s113, %s114
    %p128 = scmp.eq.s32.totalorder %s20, 3
    %p129 = por %p127, %p128
    %p131 = scmp.ne.s32.totalorder %s114, %s130
    %p132 = scmp.eq.s32.totalorder %s20, 0
    %p133 = por %p131, %p132
    %s135 = sadd.s32 %s134, 1
    %p138 = scmp.eq.s32.totalorder %s14, 3
    %p139 = scmp.ne.s32.totalorder %s134, %s136
    %p140 = scmp.eq.s32.totalorder %s14, 0
    %p141 = por %p139, %p140
    %p142 = scmp.ne.s32.totalorder %s134, %s136
    %p143 = scmp.eq.s32.totalorder %s19, 3
    %p144 = por %p142, %p143
    %p145 = scmp.ne.s32.totalorder %s136, %s137
    %p146 = scmp.eq.s32.totalorder %s19, 0
    %p147 = por %p145, %p146
    %p148 = scmp.ne.s32.totalorder %s136, %s137
    %p149 = scmp.eq.s32.totalorder %s20, 3
    %p150 = por %p148, %p149
    %p152 = scmp.ne.s32.totalorder %s137, %s151
    %p153 = scmp.eq.s32.totalorder %s20, 0
    %p154 = por %p152, %p153
    %s156 = sadd.s32 %s155, 1
    %p159 = scmp.eq.s32.totalorder %s14, 3
    %p160 = scmp.ne.s32.totalorder %s155, %s157
    %p161 = scmp.eq.s32.totalorder %s14, 0
    %p162 = por %p160, %p161
    %p163 = scmp.ne.s32.totalorder %s155, %s157
    %p164 = scmp.eq.s32.totalorder %s19, 3
    %p165 = por %p163, %p164
    %p166 = scmp.ne.s32.totalorder %s157, %s158
    %p167 = scmp.eq.s32.totalorder %s19, 0
    %p168 = por %p166, %p167
    %p169 = scmp.ne.s32.totalorder %s157, %s158
    %p170 = scmp.eq.s32.totalorder %s20, 3
    %p171 = por %p169, %p170
    %p173 = scmp.ne.s32.totalorder %s158, %s172
    %p174 = scmp.eq.s32.totalorder %s20, 0
    %p175 = por %p173, %p174
    %s177 = sadd.s32 %s176, 1
    %p180 = scmp.eq.s32.totalorder %s14, 3
    %p181 = scmp.ne.s32.totalorder %s176, %s178
    %p182 = scmp.eq.s32.totalorder %s14, 0
    %p183 = por %p181, %p182
    %p184 = scmp.ne.s32.totalorder %s176, %s178
    %p185 = scmp.eq.s32.totalorder %s19, 3
    %p186 = por %p184, %p185
    %p187 = scmp.ne.s32.totalorder %s178, %s179
    %p188 = scmp.eq.s32.totalorder %s19, 0
    %p189 = por %p187, %p188
    %p190 = scmp.ne.s32.totalorder %s178, %s179
    %p191 = scmp.eq.s32.totalorder %s20, 3
    %p192 = por %p190, %p191
    %p194 = scmp.ne.s32.totalorder %s179, %s193
    %p195 = scmp.eq.s32.totalorder %s20, 0
    %p196 = por %p194, %p195
    %s197 = smul.u32 %s21, 2
    %s198 = sadd.s32 %s197, %s22
    %s199 = smul.u32 %s33, 2
    %s200 = sadd.s32 %s199, %s29
    %s201 = ssub.s32 %s198, %s200
    %p202 = scmp.eq.s32.totalorder %s201, 0
    %s204 = sadd.s32 %s203, 1
    %s205 = scalar_select %p202, %s203, %s204
    %p208 = pneg %p202
    %p209 = scmp.eq.s32.totalorder %s14, 3
    %p210 = por %p208, %p209
    %p211 = scmp.ne.s32.totalorder %s203, %s206
    %p212 = scmp.eq.s32.totalorder %s14, 0
    %p213 = por %p211, %p212
    %p214 = scmp.ne.s32.totalorder %s203, %s206
    %p215 = scmp.eq.s32.totalorder %s19, 3
    %p216 = por %p214, %p215
    %p217 = scmp.ne.s32.totalorder %s206, %s207
    %p218 = scmp.eq.s32.totalorder %s19, 0
    %p219 = por %p217, %p218
    %p220 = scmp.ne.s32.totalorder %s206, %s207
    %p221 = scmp.eq.s32.totalorder %s20, 3
    %p222 = por %p220, %p221
    %p224 = scmp.ne.s32.totalorder %s207, %s223
    %p225 = scmp.eq.s32.totalorder %s20, 0
    %p226 = por %p224, %p225
    %s227 = smul.u32 %s21, 2
    %s228 = sadd.s32 %s227, %s22
    %s229 = smul.u32 %s33, 2
    %s230 = sadd.s32 %s229, %s29
    %s231 = ssub.s32 %s228, %s230
    %p232 = scmp.eq.s32.totalorder %s231, 0
    %s234 = sadd.s32 %s233, 1
    %s235 = scalar_select %p232, %s233, %s234
    %p238 = pneg %p232
    %p239 = scmp.eq.s32.totalorder %s14, 3
    %p240 = por %p238, %p239
    %p241 = scmp.ne.s32.totalorder %s233, %s236
    %p242 = scmp.eq.s32.totalorder %s14, 0
    %p243 = por %p241, %p242
    %p244 = scmp.ne.s32.totalorder %s233, %s236
    %p245 = scmp.eq.s32.totalorder %s19, 3
    %p246 = por %p244, %p245
    %p247 = scmp.ne.s32.totalorder %s236, %s237
    %p248 = scmp.eq.s32.totalorder %s19, 0
    %p249 = por %p247, %p248
    %p250 = scmp.ne.s32.totalorder %s236, %s237
    %p251 = scmp.eq.s32.totalorder %s20, 3
    %p252 = por %p250, %p251
    %p254 = scmp.ne.s32.totalorder %s237, %s253
    %p255 = scmp.eq.s32.totalorder %s20, 0
    %p256 = por %p254, %p255
    %p257 = scmp.le.s32.totalorder 1, %s14
    %p258 = scmp.lt.s32.totalorder %s14, 5
    %p259 = pnand %p257, %p258
    %p260 = pneg %p259
    // Predicated region
    $region9: #{decoder_forward.5} parent=5 // pred_check
      _
    $region10: #{decoder_forward.5} parent=5 // pred_check_branch
      %262 = sbr.rel (%p259) target = $region12
    $region11: #{decoder_forward.5} parent=5 // pred_region
      %s263 = ssub.s32 %s14, 1
      // Predicated region
      $region13: #{decoder_forward.5} parent=11 // pred_check
        %p264 = pneg %p147
      $region14: #{decoder_forward.5} parent=11 // pred_check_branch
        %266 = sbr.rel (%p264) target = $region16
      $region15: #{decoder_forward.5} parent=11 // pred_region
        _
      $region16: #{decoder_forward.5} parent=11 // pred_fallthru
        _
      // Predicated region
      $region17: #{decoder_forward.5} parent=11 // pred_check
        %p267 = pneg %p168
      $region18: #{decoder_forward.5} parent=11 // pred_check_branch
        %269 = sbr.rel (%p267) target = $region20
      $region19: #{decoder_forward.5} parent=11 // pred_region
        _
      $region20: #{decoder_forward.5} parent=11 // pred_fallthru
        _
      // Predicated region
      $region21: #{decoder_forward.5} parent=11 // pred_check
        %p270 = pneg %p189
      $region22: #{decoder_forward.5} parent=11 // pred_check_branch
        %272 = sbr.rel (%p270) target = $region24
      $region23: #{decoder_forward.5} parent=11 // pred_region
        _
      $region24: #{decoder_forward.5} parent=11 // pred_fallthru
        _
    $region12: #{decoder_forward.5} parent=5 // pred_fallthru
      _
    %p273 = scmp.lt.s32.totalorder %s14, 4
    // Predicated region
    $region25: #{decoder_forward.5} parent=5 // pred_check
      %p274 = pneg %p273
    $region26: #{decoder_forward.5} parent=5 // pred_check_branch
      %276 = sbr.rel (%p274) target = $region28
    $region27: #{decoder_forward.5} parent=5 // pred_region
      // Predicated region
      $region29: #{decoder_forward.5} parent=27 // pred_check
        %p277 = pneg %p48
      $region30: #{decoder_forward.5} parent=27 // pred_check_branch
        %279 = sbr.rel (%p277) target = $region32
      $region31: #{decoder_forward.5} parent=27 // pred_region
        %s280 = smul.u32 8, %s22
        %p281 = scmp.lt.s32.totalorder %s21, 1
        %s282 = scalar_select %p281, %s21, 1
        %p283 = scmp.lt.s32.totalorder %s280, 15
        %s284 = scalar_select %p283, %s280, 15
        %s285 = smul.addr %s284, 2
        %s286 = smul.addr %s282, 32
        %s287 = sadd.s32 %s285, %s286
        %s288 = smul.addr %s287, 4
        %s289 = scalar_lea.vmem %s0, %s288
        %s290 = smul.u32 8, %s22
      $region32: #{decoder_forward.5} parent=27 // pred_fallthru
        _
      // Predicated region
      $region33: #{decoder_forward.5} parent=27 // pred_check
        %p291 = pneg %p84
      $region34: #{decoder_forward.5} parent=27 // pred_check_branch
        %293 = sbr.rel (%p291) target = $region36
      $region35: #{decoder_forward.5} parent=27 // pred_region
        %s294 = smul.u32 %s22, 8
        %s295 = ssub.s32 %s294, 1
        %p296 = scmp.gt.s32.totalorder %s295, 0
        %s297 = scalar_select %p296, %s295, 0
        %p298 = scmp.lt.s32.totalorder %s21, 1
        %s299 = scalar_select %p298, %s21, 1
        %p300 = scmp.lt.s32.totalorder %s297, 15
        %s301 = scalar_select %p300, %s297, 15
        %s302 = smul.addr %s301, 2
        %s303 = smul.addr %s299, 32
        %s304 = sadd.s32 %s302, %s303
        %s305 = smul.addr %s304, 4
        %s306 = scalar_lea.vmem %s1, %s305
        %s307 = smul.u32 %s22, 8
        %s308 = ssub.s32 %s307, 1
        %p309 = scmp.gt.s32.totalorder %s308, 0
        %s310 = scalar_select %p309, %s308, 0
      $region36: #{decoder_forward.5} parent=27 // pred_fallthru
        _
      // Predicated region
      $region37: #{decoder_forward.5} parent=27 // pred_check
        %p311 = pneg %p120
      $region38: #{decoder_forward.5} parent=27 // pred_check_branch
        %313 = sbr.rel (%p311) target = $region40
      $region39: #{decoder_forward.5} parent=27 // pred_region
        %s314 = smul.u32 %s22, 8
        %s315 = sadd.s32 %s314, 8
        %p316 = scmp.lt.s32.totalorder %s315, 15
        %s317 = scalar_select %p316, %s315, 15
        %p318 = scmp.lt.s32.totalorder %s21, 1
        %s319 = scalar_select %p318, %s21, 1
        %p320 = scmp.lt.s32.totalorder %s317, 15
        %s321 = scalar_select %p320, %s317, 15
        %s322 = smul.addr %s321, 2
        %s323 = smul.addr %s319, 32
        %s324 = sadd.s32 %s322, %s323
        %s325 = smul.addr %s324, 4
        %s326 = scalar_lea.vmem %s2, %s325
        %s327 = smul.u32 %s22, 8
        %s328 = sadd.s32 %s327, 8
        %p329 = scmp.lt.s32.totalorder %s328, 15
        %s330 = scalar_select %p329, %s328, 15
      $region40: #{decoder_forward.5} parent=27 // pred_fallthru
        _
    $region28: #{decoder_forward.5} parent=5 // pred_fallthru
      _
    %p331 = scmp.le.s32.totalorder 1, %s14
    %p332 = scmp.lt.s32.totalorder %s14, 5
    %p333 = pnand %p331, %p332
    %p334 = pneg %p333
    // Predicated region
    $region41: #{decoder_forward.5} parent=5 // pred_check
      _
    $region42: #{decoder_forward.5} parent=5 // pred_check_branch
      %336 = sbr.rel (%p333) target = $region44
    $region43: #{decoder_forward.5} parent=5 // pred_region
      %s337 = ssub.s32 %s14, 1
      %s338 = smul.u32 8, %s24
      %p339 = scmp.lt.s32.totalorder %s23, 1
      %s340 = scalar_select %p339, %s23, 1
      %p341 = scmp.lt.s32.totalorder %s338, 15
      %s342 = scalar_select %p341, %s338, 15
      %s343 = smul.addr %s342, 2
      %s344 = smul.addr %s340, 32
      %s345 = sadd.s32 %s343, %s344
      %s346 = smul.addr %s345, 4
      %s347 = scalar_lea.vmem %s0, %s346
      %p348 = pneg %p54
      %p349 = pneg %p51
      %s350 = smul.u32 %s24, 8
      %s351 = ssub.s32 %s350, 1
      %p352 = scmp.gt.s32.totalorder %s351, 0
      %s353 = scalar_select %p352, %s351, 0
      %p354 = scmp.lt.s32.totalorder %s23, 1
      %s355 = scalar_select %p354, %s23, 1
      %p356 = scmp.lt.s32.totalorder %s353, 15
      %s357 = scalar_select %p356, %s353, 15
      %s358 = smul.addr %s357, 2
      %s359 = smul.addr %s355, 32
      %s360 = sadd.s32 %s358, %s359
      %s361 = smul.addr %s360, 4
      %s362 = scalar_lea.vmem %s1, %s361
      %p363 = pneg %p90
      %p364 = pneg %p87
      %s365 = smul.u32 %s24, 8
      %s366 = sadd.s32 %s365, 8
      %p367 = scmp.lt.s32.totalorder %s366, 15
      %s368 = scalar_select %p367, %s366, 15
      %p369 = scmp.lt.s32.totalorder %s23, 1
      %s370 = scalar_select %p369, %s23, 1
      %p371 = scmp.lt.s32.totalorder %s368, 15
      %s372 = scalar_select %p371, %s368, 15
      %s373 = smul.addr %s372, 2
      %s374 = smul.addr %s370, 32
      %s375 = sadd.s32 %s373, %s374
      %s376 = smul.addr %s375, 4
      %s377 = scalar_lea.vmem %s2, %s376
      %p378 = pneg %p126
      %p379 = pneg %p123
      %p380 = pneg %p147
      %p381 = pneg %p144
      %p382 = pneg %p168
      %p383 = pneg %p165
      %p384 = pneg %p189
      %p385 = pneg %p186
      %p386 = pneg %p219
      %p387 = pneg %p216
      %s388 = smul.u32 %s23, 2
      %s389 = sadd.s32 %s388, %s24
      %s390 = smul.u32 16, %s389
      %p391 = scmp.lt.s32.totalorder %s390, 63
      %s392 = scalar_select %p391, %s390, 63
      %s393 = smul.addr %s392, 4
      %s394 = scalar_lea.vmem %s6, %s393
      %p395 = pneg %p249
      %p396 = pneg %p246
      %s397 = smul.u32 %s23, 2
      %s398 = sadd.s32 %s397, %s24
      %p399 = scmp.lt.s32.totalorder %s398, 3
      %s400 = scalar_select %p399, %s398, 3
      %s401 = smul.addr %s400, 2
      %s402 = scalar_lea.vmem %s7, %s401
      %s403 = smul.u32 8, %s24
      %p404 = scmp.lt.s32.totalorder %s23, 1
      %s405 = scalar_select %p404, %s23, 1
      %p406 = scmp.lt.s32.totalorder %s403, 15
      %s407 = scalar_select %p406, %s403, 15
      %s408 = smul.addr %s407, 2
      %s409 = smul.addr %s405, 32
      %s410 = sadd.s32 %s408, %s409
      %s411 = smul.addr %s410, 4
      %s412 = scalar_lea.vmem %s0, %s411
      %s413 = smul.u32 8, %s24
      %s414 = smul.u32 %s24, 8
      %s415 = ssub.s32 %s414, 1
      %p416 = scmp.gt.s32.totalorder %s415, 0
      %s417 = scalar_select %p416, %s415, 0
      %p418 = scmp.lt.s32.totalorder %s23, 1
      %s419 = scalar_select %p418, %s23, 1
      %p420 = scmp.lt.s32.totalorder %s417, 15
      %s421 = scalar_select %p420, %s417, 15
      %s422 = smul.addr %s421, 2
      %s423 = smul.addr %s419, 32
      %s424 = sadd.s32 %s422, %s423
      %s425 = smul.addr %s424, 4
      %s426 = scalar_lea.vmem %s1, %s425
      %s427 = smul.u32 %s24, 8
      %s428 = ssub.s32 %s427, 1
      %p429 = scmp.gt.s32.totalorder %s428, 0
      %s430 = scalar_select %p429, %s428, 0
      %s431 = smul.u32 %s24, 8
      %s432 = sadd.s32 %s431, 8
      %p433 = scmp.lt.s32.totalorder %s432, 15
      %s434 = scalar_select %p433, %s432, 15
      %p435 = scmp.lt.s32.totalorder %s23, 1
      %s436 = scalar_select %p435, %s23, 1
      %p437 = scmp.lt.s32.totalorder %s434, 15
      %s438 = scalar_select %p437, %s434, 15
      %s439 = smul.addr %s438, 2
      %s440 = smul.addr %s436, 32
      %s441 = sadd.s32 %s439, %s440
      %s442 = smul.addr %s441, 4
      %s443 = scalar_lea.vmem %s2, %s442
      %s444 = smul.u32 %s24, 8
      %s445 = sadd.s32 %s444, 8
      %p446 = scmp.lt.s32.totalorder %s445, 15
      %s447 = scalar_select %p446, %s445, 15
      %s448 = smul.u32 %s23, 2
      %s449 = sadd.s32 %s448, %s24
      %s450 = smul.u32 16, %s449
      %p451 = scmp.lt.s32.totalorder %s450, 63
      %s452 = scalar_select %p451, %s450, 63
      %s453 = smul.addr %s452, 4
      %s454 = scalar_lea.vmem %s6, %s453
      %s455 = smul.u32 %s23, 2
      %s456 = sadd.s32 %s455, %s24
      %s457 = smul.u32 16, %s456
      %s458 = smul.u32 %s23, 2
      %s459 = sadd.s32 %s458, %s24
      %p460 = scmp.lt.s32.totalorder %s459, 3
      %s461 = scalar_select %p460, %s459, 3
      %s462 = smul.addr %s461, 2
      %s463 = scalar_lea.vmem %s7, %s462
      %s464 = smul.u32 %s23, 2
      %s465 = sadd.s32 %s464, %s24
      %v467 = vld [vmem:[%s412] sm:$0xf]
      %v468 = vld [vmem:[%s412 + $0x4] sm:$0xf]
      %v469 = vld [vmem:[%s412 + $0x8] sm:$0xf]
      %v470 = vld [vmem:[%s412 + $0xc] sm:$0xf]
      %v471 = vld [vmem:[%s412 + $0x10] sm:$0xf]
      %v472 = vld [vmem:[%s412 + $0x14] sm:$0xf]
      %v473 = vld [vmem:[%s412 + $0x18] sm:$0xf]
      %v474 = vld [vmem:[%s412 + $0x1c] sm:$0xf]
      %v475 = vld [vmem:[%s412 + $0x20] sm:$0xf]
      %v476 = vld [vmem:[%s412 + $0x24] sm:$0xf]
      %v477 = vld [vmem:[%s412 + $0x28] sm:$0xf]
      %v478 = vld [vmem:[%s412 + $0x2c] sm:$0xf]
      %v479 = vld [vmem:[%s412 + $0x30] sm:$0xf]
      %v480 = vld [vmem:[%s412 + $0x34] sm:$0xf]
      %v481 = vld [vmem:[%s412 + $0x38] sm:$0xf]
      %v482 = vld [vmem:[%s412 + $0x3c] sm:$0xf]
      %v483 = vunpack.c.l.bf16 %v467
      %v484 = vunpack.c.l.bf16 %v468
      %v485 = vunpack.c.l.bf16 %v469
      %v486 = vunpack.c.l.bf16 %v470
      %v487 = vunpack.c.l.bf16 %v471
      %v488 = vunpack.c.l.bf16 %v472
      %v489 = vunpack.c.l.bf16 %v473
      %v490 = vunpack.c.l.bf16 %v474
      %v491 = vunpack.c.l.bf16 %v475
      %v492 = vunpack.c.l.bf16 %v476
      %v493 = vunpack.c.l.bf16 %v477
      %v494 = vunpack.c.l.bf16 %v478
      %v495 = vunpack.c.l.bf16 %v479
      %v496 = vunpack.c.l.bf16 %v480
      %v497 = vunpack.c.l.bf16 %v481
      %v498 = vunpack.c.l.bf16 %v482
      %v499 = vld [vmem:[%s4] sm:$0x1]
      %v501 = vperm.slane %v499, 0
      %v503 = vmul.f32 %v483, %v501
      %v504 = vmul.f32 %v484, %v501
      %v505 = vmul.f32 %v485, %v501
      %v506 = vmul.f32 %v486, %v501
      %v507 = vmul.f32 %v487, %v501
      %v508 = vmul.f32 %v488, %v501
      %v509 = vmul.f32 %v489, %v501
      %v510 = vmul.f32 %v490, %v501
      %v511 = vmul.f32 %v491, %v501
      %v512 = vmul.f32 %v492, %v501
      %v513 = vmul.f32 %v493, %v501
      %v514 = vmul.f32 %v494, %v501
      %v515 = vmul.f32 %v495, %v501
      %v516 = vmul.f32 %v496, %v501
      %v517 = vmul.f32 %v497, %v501
      %v518 = vmul.f32 %v498, %v501
      %v519 = vld [vmem:[%s5] sm:$0x1]
      %v521 = vperm.slane %v519, 0
      %v523 = vadd.f32 %v503, %v521
      %v524 = vadd.f32 %v504, %v521
      %v525 = vadd.f32 %v505, %v521
      %v526 = vadd.f32 %v506, %v521
      %v527 = vadd.f32 %v507, %v521
      %v528 = vadd.f32 %v508, %v521
      %v529 = vadd.f32 %v509, %v521
      %v530 = vadd.f32 %v510, %v521
      %v531 = vadd.f32 %v511, %v521
      %v532 = vadd.f32 %v512, %v521
      %v533 = vadd.f32 %v513, %v521
      %v534 = vadd.f32 %v514, %v521
      %v535 = vadd.f32 %v515, %v521
      %v536 = vadd.f32 %v516, %v521
      %v537 = vadd.f32 %v517, %v521
      %v538 = vadd.f32 %v518, %v521
      %v539 = vmax.f32 %v523, 0.0
      %v540 = vmax.f32 %v524, 0.0
      %v541 = vmax.f32 %v525, 0.0
      %v542 = vmax.f32 %v526, 0.0
      %v543 = vmax.f32 %v527, 0.0
      %v544 = vmax.f32 %v528, 0.0
      %v545 = vmax.f32 %v529, 0.0
      %v546 = vmax.f32 %v530, 0.0
      %v547 = vmax.f32 %v531, 0.0
      %v548 = vmax.f32 %v532, 0.0
      %v549 = vmax.f32 %v533, 0.0
      %v550 = vmax.f32 %v534, 0.0
      %v551 = vmax.f32 %v535, 0.0
      %v552 = vmax.f32 %v536, 0.0
      %v553 = vmax.f32 %v537, 0.0
      %v554 = vmax.f32 %v538, 0.0
      %v555 = vpack.c.bf16 %v539, %v539
      %v556 = vpack.c.bf16 %v540, %v540
      %v557 = vpack.c.bf16 %v541, %v541
      %v558 = vpack.c.bf16 %v542, %v542
      %v559 = vpack.c.bf16 %v543, %v543
      %v560 = vpack.c.bf16 %v544, %v544
      %v561 = vpack.c.bf16 %v545, %v545
      %v562 = vpack.c.bf16 %v546, %v546
      %v563 = vpack.c.bf16 %v547, %v547
      %v564 = vpack.c.bf16 %v548, %v548
      %v565 = vpack.c.bf16 %v549, %v549
      %v566 = vpack.c.bf16 %v550, %v550
      %v567 = vpack.c.bf16 %v551, %v551
      %v568 = vpack.c.bf16 %v552, %v552
      %v569 = vpack.c.bf16 %v553, %v553
      %v570 = vpack.c.bf16 %v554, %v554
      %v571 = vld [vmem:[%s426] sm:$0xf]
      %v572 = vld [vmem:[%s426 + $0x4] sm:$0xf]
      %v573 = vunpack.c.l.bf16 %v571
      %v574 = vunpack.c.l.bf16 %v572
      %v575 = vmul.f32 %v573, %v501
      %v576 = vmul.f32 %v574, %v501
      %v577 = vadd.f32 %v575, %v521
      %v578 = vadd.f32 %v576, %v521
      %v579 = vmax.f32 %v577, 0.0
      %v580 = vmax.f32 %v578, 0.0
      %v581 = vpack.c.bf16 %v579, %v579
      %v582 = vpack.c.bf16 %v580, %v580
      %v583 = vld [vmem:[%s443] sm:$0xf]
      %v584 = vld [vmem:[%s443 + $0x4] sm:$0xf]
      %v585 = vunpack.c.l.bf16 %v583
      %v586 = vunpack.c.l.bf16 %v584
      %v587 = vmul.f32 %v585, %v501
      %v588 = vmul.f32 %v586, %v501
      %v589 = vadd.f32 %v587, %v521
      %v590 = vadd.f32 %v588, %v521
      %v591 = vmax.f32 %v589, 0.0
      %v592 = vmax.f32 %v590, 0.0
      %v593 = vpack.c.bf16 %v591, %v591
      %v594 = vpack.c.bf16 %v592, %v592
      %p595 = scmp.eq.s32.totalorder %s24, 0
      %s596 = scalar_select %p595, 1, 0
      %v597 = vstv %s596
      %vm598 = vcmp.eq.s32.totalorder %v597, 1
      %v599 = vsel %vm598, 0, %v581
      %v600 = vsel %vm598, 0, %v582
      %p601 = scmp.eq.s32.totalorder %s24, 1
      %s602 = scalar_select %p601, 1, 0
      %v603 = vstv %s602
      %vm604 = vcmp.eq.s32.totalorder %v603, 1
      %v605 = vsel %vm604, 0, %v593
      %v606 = vsel %vm604, 0, %v594
      %vm607 = vcmask 122880
      %vm608 = vsmask.f32 256
      %vm609 = vmand %vm607, %vm608
      %v610 = vld [vmem:[#allocation2] sm:$0x1]
      %v611 = vsel %vm609, 0, %v610
      %612 = vst [vmem:[#allocation2] sm:$0x1] %v611
      %v613 = vld [vmem:[#allocation2 + $0xc] sm:$0x1]
      %v614 = vsel %vm609, 0, %v613
      %615 = vst [vmem:[#allocation2 + $0xc] sm:$0x1] %v614
      %v616 = vld [vmem:[#allocation2 + $0x18] sm:$0x1]
      %v617 = vsel %vm609, 0, %v616
      %618 = vst [vmem:[#allocation2 + $0x18] sm:$0x1] %v617
      %v619 = vld [vmem:[#allocation2 + $0x24] sm:$0x1]
      %v620 = vsel %vm609, 0, %v619
      %621 = vst [vmem:[#allocation2 + $0x24] sm:$0x1] %v620
      %v622 = vld [vmem:[#allocation2 + $0x30] sm:$0x1]
      %v623 = vsel %vm609, 0, %v622
      %624 = vst [vmem:[#allocation2 + $0x30] sm:$0x1] %v623
      %v625 = vld [vmem:[#allocation2 + $0x3c] sm:$0x1]
      %v626 = vsel %vm609, 0, %v625
      %627 = vst [vmem:[#allocation2 + $0x3c] sm:$0x1] %v626
      %v628 = vld [vmem:[#allocation2 + $0x48] sm:$0x1]
      %v629 = vsel %vm609, 0, %v628
      %630 = vst [vmem:[#allocation2 + $0x48] sm:$0x1] %v629
      %v631 = vld [vmem:[#allocation2 + $0x54] sm:$0x1]
      %v632 = vsel %vm609, 0, %v631
      %633 = vst [vmem:[#allocation2 + $0x54] sm:$0x1] %v632
      %v634 = vld [vmem:[#allocation2 + $0x60] sm:$0x1]
      %v635 = vsel %vm609, 0, %v634
      %636 = vst [vmem:[#allocation2 + $0x60] sm:$0x1] %v635
      %v637 = vld [vmem:[#allocation2 + $0x6c] sm:$0x1]
      %v638 = vsel %vm609, 0, %v637
      %639 = vst [vmem:[#allocation2 + $0x6c] sm:$0x1] %v638
      %vm640 = vsmask.f32 7938
      %vm641 = vmand %vm607, %vm640
      %v642 = vld [vmem:[#allocation2 + $0x8] sm:$0x1]
      %v643 = vsel %vm641, 0, %v642
      %644 = vst [vmem:[#allocation2 + $0x8] sm:$0x1] %v643
      %v645 = vld [vmem:[#allocation2 + $0x14] sm:$0x1]
      %v646 = vsel %vm641, 0, %v645
      %647 = vst [vmem:[#allocation2 + $0x14] sm:$0x1] %v646
      %v648 = vld [vmem:[#allocation2 + $0x20] sm:$0x1]
      %v649 = vsel %vm641, 0, %v648
      %650 = vst [vmem:[#allocation2 + $0x20] sm:$0x1] %v649
      %v651 = vld [vmem:[#allocation2 + $0x2c] sm:$0x1]
      %v652 = vsel %vm641, 0, %v651
      %653 = vst [vmem:[#allocation2 + $0x2c] sm:$0x1] %v652
      %v654 = vld [vmem:[#allocation2 + $0x38] sm:$0x1]
      %v655 = vsel %vm641, 0, %v654
      %656 = vst [vmem:[#allocation2 + $0x38] sm:$0x1] %v655
      %v657 = vld [vmem:[#allocation2 + $0x44] sm:$0x1]
      %v658 = vsel %vm641, 0, %v657
      %659 = vst [vmem:[#allocation2 + $0x44] sm:$0x1] %v658
      %v660 = vld [vmem:[#allocation2 + $0x50] sm:$0x1]
      %v661 = vsel %vm641, 0, %v660
      %662 = vst [vmem:[#allocation2 + $0x50] sm:$0x1] %v661
      %v663 = vld [vmem:[#allocation2 + $0x5c] sm:$0x1]
      %v664 = vsel %vm641, 0, %v663
      %665 = vst [vmem:[#allocation2 + $0x5c] sm:$0x1] %v664
      %v666 = vld [vmem:[#allocation2 + $0x68] sm:$0x1]
      %v667 = vsel %vm641, 0, %v666
      %668 = vst [vmem:[#allocation2 + $0x68] sm:$0x1] %v667
      %v669 = vld [vmem:[#allocation2 + $0x74] sm:$0x1]
      %v670 = vsel %vm641, 0, %v669
      %671 = vst [vmem:[#allocation2 + $0x74] sm:$0x1] %v670
      %vm672 = vsmask.f32 4368
      %vm673 = vmor %vm608, %vm672
      %v675 = vshrl.u32 %v599, 16
      %v677 = vrot.slane %v675, 7
      %v678 = vshll.u32 %v599, 16
      %v680 = vor.u32 %v677, %v678
      %v681 = vrot.slane %v677, 4
      %v683 = vshrl.u32 %v600, 16
      %v685 = vrot.slane %v683, 7
      %v686 = vshll.u32 %v600, 16
      %v688 = vor.u32 %v685, %v686
      %v689 = vsel %vm673, %v681, %v688
      %v690 = vrot.slane %v685, 4
      %vm694 = vcmask 125952
      %vm695 = vmand %vm694, %vm640
      %v696 = vld [vmem:[#allocation2] sm:$0xf]
      %v697 = vsel %vm695, %v680, %v696
      %698 = vst [vmem:[#allocation2] sm:$0xf] %v697
      %vm699 = vcmask 125952
      %700 = vst.msk [vmem:[#allocation2 + $0x4] sm:$0xf] %vm699, %v689
      %v701 = vld [vmem:[#allocation2 + $0x8] sm:$0x1]
      %v702 = vsel %vm609, %v690, %v701
      %703 = vst [vmem:[#allocation2 + $0x8] sm:$0x1] %v702
      %v705 = vshrl.u32 %v555, 16
      %v707 = vrot.slane %v705, 7
      %v708 = vshll.u32 %v555, 16
      %v710 = vor.u32 %v707, %v708
      %v711 = vrot.slane %v707, 4
      %v713 = vshrl.u32 %v556, 16
      %v715 = vrot.slane %v713, 7
      %v716 = vshll.u32 %v556, 16
      %v718 = vor.u32 %v715, %v716
      %v719 = vsel %vm673, %v711, %v718
      %v720 = vrot.slane %v715, 4
      %v722 = vshrl.u32 %v557, 16
      %v724 = vrot.slane %v722, 7
      %v725 = vshll.u32 %v557, 16
      %v727 = vor.u32 %v724, %v725
      %v728 = vrot.slane %v724, 4
      %v730 = vshrl.u32 %v558, 16
      %v732 = vrot.slane %v730, 7
      %v733 = vshll.u32 %v558, 16
      %v735 = vor.u32 %v732, %v733
      %v736 = vsel %vm673, %v728, %v735
      %v737 = vrot.slane %v732, 4
      %v739 = vshrl.u32 %v559, 16
      %v741 = vrot.slane %v739, 7
      %v742 = vshll.u32 %v559, 16
      %v744 = vor.u32 %v741, %v742
      %v745 = vrot.slane %v741, 4
      %v747 = vshrl.u32 %v560, 16
      %v749 = vrot.slane %v747, 7
      %v750 = vshll.u32 %v560, 16
      %v752 = vor.u32 %v749, %v750
      %v753 = vsel %vm673, %v745, %v752
      %v754 = vrot.slane %v749, 4
      %v756 = vshrl.u32 %v561, 16
      %v758 = vrot.slane %v756, 7
      %v759 = vshll.u32 %v561, 16
      %v761 = vor.u32 %v758, %v759
      %v762 = vrot.slane %v758, 4
      %v764 = vshrl.u32 %v562, 16
      %v766 = vrot.slane %v764, 7
      %v767 = vshll.u32 %v562, 16
      %v769 = vor.u32 %v766, %v767
      %v770 = vsel %vm673, %v762, %v769
      %v771 = vrot.slane %v766, 4
      %v773 = vshrl.u32 %v563, 16
      %v775 = vrot.slane %v773, 7
      %v776 = vshll.u32 %v563, 16
      %v778 = vor.u32 %v775, %v776
      %v779 = vrot.slane %v775, 4
      %v781 = vshrl.u32 %v564, 16
      %v783 = vrot.slane %v781, 7
      %v784 = vshll.u32 %v564, 16
      %v786 = vor.u32 %v783, %v784
      %v787 = vsel %vm673, %v779, %v786
      %v788 = vrot.slane %v783, 4
      %v790 = vshrl.u32 %v565, 16
      %v792 = vrot.slane %v790, 7
      %v793 = vshll.u32 %v565, 16
      %v795 = vor.u32 %v792, %v793
      %v796 = vrot.slane %v792, 4
      %v798 = vshrl.u32 %v566, 16
      %v800 = vrot.slane %v798, 7
      %v801 = vshll.u32 %v566, 16
      %v803 = vor.u32 %v800, %v801
      %v804 = vsel %vm673, %v796, %v803
      %v805 = vrot.slane %v800, 4
      %v807 = vshrl.u32 %v567, 16
      %v809 = vrot.slane %v807, 7
      %v810 = vshll.u32 %v567, 16
      %v812 = vor.u32 %v809, %v810
      %v813 = vrot.slane %v809, 4
      %v815 = vshrl.u32 %v568, 16
      %v817 = vrot.slane %v815, 7
      %v818 = vshll.u32 %v568, 16
      %v820 = vor.u32 %v817, %v818
      %v821 = vsel %vm673, %v813, %v820
      %v822 = vrot.slane %v817, 4
      %v824 = vshrl.u32 %v569, 16
      %v826 = vrot.slane %v824, 7
      %v827 = vshll.u32 %v569, 16
      %v829 = vor.u32 %v826, %v827
      %v830 = vrot.slane %v826, 4
      %v832 = vshrl.u32 %v570, 16
      %v834 = vrot.slane %v832, 7
      %v835 = vshll.u32 %v570, 16
      %v837 = vor.u32 %v834, %v835
      %v838 = vsel %vm673, %v830, %v837
      %v839 = vrot.slane %v834, 4
      %s864 = scalar_lea.vmem [#allocation2], 12
      %v865 = vld [vmem:[%s864] sm:$0xf]
      %v866 = vsel %vm695, %v710, %v865
      %867 = vst [vmem:[%s864] sm:$0xf] %v866
      %868 = vst.msk [vmem:[%s864 + $0x4] sm:$0xf] %vm699, %v719
      %v869 = vld [vmem:[%s864 + $0x8] sm:$0x1]
      %v870 = vsel %vm609, %v720, %v869
      %871 = vst [vmem:[%s864 + $0x8] sm:$0x1] %v870
      %v872 = vld [vmem:[%s864 + $0xc] sm:$0xf]
      %v873 = vsel %vm695, %v727, %v872
      %874 = vst [vmem:[%s864 + $0xc] sm:$0xf] %v873
      %875 = vst.msk [vmem:[%s864 + $0x10] sm:$0xf] %vm699, %v736
      %v876 = vld [vmem:[%s864 + $0x14] sm:$0x1]
      %v877 = vsel %vm609, %v737, %v876
      %878 = vst [vmem:[%s864 + $0x14] sm:$0x1] %v877
      %v879 = vld [vmem:[%s864 + $0x18] sm:$0xf]
      %v880 = vsel %vm695, %v744, %v879
      %881 = vst [vmem:[%s864 + $0x18] sm:$0xf] %v880
      %882 = vst.msk [vmem:[%s864 + $0x1c] sm:$0xf] %vm699, %v753
      %v883 = vld [vmem:[%s864 + $0x20] sm:$0x1]
      %v884 = vsel %vm609, %v754, %v883
      %885 = vst [vmem:[%s864 + $0x20] sm:$0x1] %v884
      %v886 = vld [vmem:[%s864 + $0x24] sm:$0xf]
      %v887 = vsel %vm695, %v761, %v886
      %888 = vst [vmem:[%s864 + $0x24] sm:$0xf] %v887
      %889 = vst.msk [vmem:[%s864 + $0x28] sm:$0xf] %vm699, %v770
      %v890 = vld [vmem:[%s864 + $0x2c] sm:$0x1]
      %v891 = vsel %vm609, %v771, %v890
      %892 = vst [vmem:[%s864 + $0x2c] sm:$0x1] %v891
      %v893 = vld [vmem:[%s864 + $0x30] sm:$0xf]
      %v894 = vsel %vm695, %v778, %v893
      %895 = vst [vmem:[%s864 + $0x30] sm:$0xf] %v894
      %896 = vst.msk [vmem:[%s864 + $0x34] sm:$0xf] %vm699, %v787
      %v897 = vld [vmem:[%s864 + $0x38] sm:$0x1]
      %v898 = vsel %vm609, %v788, %v897
      %899 = vst [vmem:[%s864 + $0x38] sm:$0x1] %v898
      %v900 = vld [vmem:[%s864 + $0x3c] sm:$0xf]
      %v901 = vsel %vm695, %v795, %v900
      %902 = vst [vmem:[%s864 + $0x3c] sm:$0xf] %v901
      %903 = vst.msk [vmem:[%s864 + $0x40] sm:$0xf] %vm699, %v804
      %v904 = vld [vmem:[%s864 + $0x44] sm:$0x1]
      %v905 = vsel %vm609, %v805, %v904
      %906 = vst [vmem:[%s864 + $0x44] sm:$0x1] %v905
      %v907 = vld [vmem:[%s864 + $0x48] sm:$0xf]
      %v908 = vsel %vm695, %v812, %v907
      %909 = vst [vmem:[%s864 + $0x48] sm:$0xf] %v908
      %910 = vst.msk [vmem:[%s864 + $0x4c] sm:$0xf] %vm699, %v821
      %v911 = vld [vmem:[%s864 + $0x50] sm:$0x1]
      %v912 = vsel %vm609, %v822, %v911
      %913 = vst [vmem:[%s864 + $0x50] sm:$0x1] %v912
      %v914 = vld [vmem:[%s864 + $0x54] sm:$0xf]
      %v915 = vsel %vm695, %v829, %v914
      %916 = vst [vmem:[%s864 + $0x54] sm:$0xf] %v915
      %917 = vst.msk [vmem:[%s864 + $0x58] sm:$0xf] %vm699, %v838
      %v918 = vld [vmem:[%s864 + $0x5c] sm:$0x1]
      %v919 = vsel %vm609, %v839, %v918
      %920 = vst [vmem:[%s864 + $0x5c] sm:$0x1] %v919
      %v922 = vshrl.u32 %v605, 16
      %v924 = vrot.slane %v922, 7
      %v925 = vshll.u32 %v605, 16
      %v927 = vor.u32 %v924, %v925
      %v928 = vrot.slane %v924, 4
      %v930 = vshrl.u32 %v606, 16
      %v932 = vrot.slane %v930, 7
      %v933 = vshll.u32 %v606, 16
      %v935 = vor.u32 %v932, %v933
      %v936 = vsel %vm673, %v928, %v935
      %v937 = vrot.slane %v932, 4
      %s941 = scalar_lea.vmem [#allocation2], 108
      %v942 = vld [vmem:[%s941] sm:$0xf]
      %v943 = vsel %vm695, %v927, %v942
      %944 = vst [vmem:[%s941] sm:$0xf] %v943
      %945 = vst.msk [vmem:[%s941 + $0x4] sm:$0xf] %vm699, %v936
      %v946 = vld [vmem:[%s941 + $0x8] sm:$0x1]
      %v947 = vsel %vm609, %v937, %v946
      %948 = vst [vmem:[%s941 + $0x8] sm:$0x1] %v947
      %v949 = vld [vmem:[#allocation2] sm:$0xf]
      %v950 = vld [vmem:[#allocation2 + $0x4] sm:$0xf]
      %v951 = vld [vmem:[#allocation2 + $0xc] sm:$0xf]
      %v952 = vld [vmem:[#allocation2 + $0x10] sm:$0xf]
      %v953 = vld [vmem:[#allocation2 + $0x18] sm:$0xf]
      %v954 = vld [vmem:[#allocation2 + $0x1c] sm:$0xf]
      %v955 = vld [vmem:[#allocation2 + $0x24] sm:$0xf]
      %v956 = vld [vmem:[#allocation2 + $0x28] sm:$0xf]
      %v957 = vld [vmem:[#allocation2 + $0x30] sm:$0xf]
      %v958 = vld [vmem:[#allocation2 + $0x34] sm:$0xf]
      %v959 = vld [vmem:[#allocation2 + $0x3c] sm:$0xf]
      %v960 = vld [vmem:[#allocation2 + $0x40] sm:$0xf]
      %v961 = vld [vmem:[#allocation2 + $0x48] sm:$0xf]
      %v962 = vld [vmem:[#allocation2 + $0x4c] sm:$0xf]
      %v963 = vld [vmem:[#allocation2 + $0x54] sm:$0xf]
      %v964 = vld [vmem:[#allocation2 + $0x58] sm:$0xf]
      %965 = vst.msk [vmem:[#allocation3] sm:$0xf] %vm699, %v949
      %966 = vst.msk [vmem:[#allocation3 + $0x8] sm:$0xf] %vm699, %v950
      %967 = vst.msk [vmem:[#allocation3 + $0x10] sm:$0xf] %vm699, %v951
      %968 = vst.msk [vmem:[#allocation3 + $0x18] sm:$0xf] %vm699, %v952
      %969 = vst.msk [vmem:[#allocation3 + $0x20] sm:$0xf] %vm699, %v953
      %970 = vst.msk [vmem:[#allocation3 + $0x28] sm:$0xf] %vm699, %v954
      %971 = vst.msk [vmem:[#allocation3 + $0x30] sm:$0xf] %vm699, %v955
      %972 = vst.msk [vmem:[#allocation3 + $0x38] sm:$0xf] %vm699, %v956
      %973 = vst.msk [vmem:[#allocation3 + $0x40] sm:$0xf] %vm699, %v957
      %974 = vst.msk [vmem:[#allocation3 + $0x48] sm:$0xf] %vm699, %v958
      %975 = vst.msk [vmem:[#allocation3 + $0x50] sm:$0xf] %vm699, %v959
      %976 = vst.msk [vmem:[#allocation3 + $0x58] sm:$0xf] %vm699, %v960
      %977 = vst.msk [vmem:[#allocation3 + $0x60] sm:$0xf] %vm699, %v961
      %978 = vst.msk [vmem:[#allocation3 + $0x68] sm:$0xf] %vm699, %v962
      %979 = vst.msk [vmem:[#allocation3 + $0x70] sm:$0xf] %vm699, %v963
      %980 = vst.msk [vmem:[#allocation3 + $0x78] sm:$0xf] %vm699, %v964
      %v981 = vld [vmem:[#allocation2] sm:$0xf]
      %v982 = vld [vmem:[#allocation2 + $0x4] sm:$0xf]
      %v983 = vld [vmem:[#allocation2 + $0x8] sm:$0x1]
      %v984 = vld [vmem:[#allocation2 + $0xc] sm:$0xf]
      %v985 = vld [vmem:[#allocation2 + $0x10] sm:$0xf]
      %v986 = vld [vmem:[#allocation2 + $0x14] sm:$0x1]
      %v987 = vld [vmem:[#allocation2 + $0x18] sm:$0xf]
      %v988 = vld [vmem:[#allocation2 + $0x1c] sm:$0xf]
      %v989 = vld [vmem:[#allocation2 + $0x20] sm:$0x1]
      %v990 = vld [vmem:[#allocation2 + $0x24] sm:$0xf]
      %v991 = vld [vmem:[#allocation2 + $0x28] sm:$0xf]
      %v992 = vld [vmem:[#allocation2 + $0x2c] sm:$0x1]
      %v993 = vld [vmem:[#allocation2 + $0x30] sm:$0xf]
      %v994 = vld [vmem:[#allocation2 + $0x34] sm:$0xf]
      %v995 = vld [vmem:[#allocation2 + $0x38] sm:$0x1]
      %v996 = vld [vmem:[#allocation2 + $0x3c] sm:$0xf]
      %v997 = vld [vmem:[#allocation2 + $0x40] sm:$0xf]
      %v998 = vld [vmem:[#allocation2 + $0x44] sm:$0x1]
      %v999 = vld [vmem:[#allocation2 + $0x48] sm:$0xf]
      %v1000 = vld [vmem:[#allocation2 + $0x4c] sm:$0xf]
      %v1001 = vld [vmem:[#allocation2 + $0x50] sm:$0x1]
      %v1002 = vld [vmem:[#allocation2 + $0x54] sm:$0xf]
      %v1003 = vld [vmem:[#allocation2 + $0x58] sm:$0xf]
      %v1004 = vld [vmem:[#allocation2 + $0x5c] sm:$0x1]
      %vm1005 = vsmask.f32 3328
      %vm1006 = vsmask.f32 7440
      %vm1007 = vmor %vm1005, %vm1006
      %v1009 = vshrl.u32 %v981, 16
      %v1011 = vrot.slane %v1009, 4
      %v1012 = vshll.u32 %v981, 16
      %v1014 = vrot.slane %v1012, 5
      %v1015 = vor.u32 %v1011, %v1014
      %v1016 = vrot.slane %v1015, 4
      %v1018 = vshll.u32 %v982, 16
      %v1020 = vrot.slane %v1018, 5
      %v1021 = vsel %vm1007, %v1016, %v1020
      %v1022 = vshrl.u32 %v982, 16
      %v1024 = vrot.slane %v1022, 4
      %v1025 = vor.u32 %v1024, %v1020
      %v1026 = vrot.slane %v1025, 4
      %v1028 = vshll.u32 %v983, 16
      %v1030 = vrot.slane %v1028, 5
      %v1031 = vsel %vm1007, %v1026, %v1030
      %v1033 = vshrl.u32 %v984, 16
      %v1035 = vrot.slane %v1033, 4
      %v1036 = vshll.u32 %v984, 16
      %v1038 = vrot.slane %v1036, 5
      %v1039 = vor.u32 %v1035, %v1038
      %v1040 = vrot.slane %v1039, 4
      %v1042 = vshll.u32 %v985, 16
      %v1044 = vrot.slane %v1042, 5
      %v1045 = vsel %vm1007, %v1040, %v1044
      %v1046 = vshrl.u32 %v985, 16
      %v1048 = vrot.slane %v1046, 4
      %v1049 = vor.u32 %v1048, %v1044
      %v1050 = vrot.slane %v1049, 4
      %v1052 = vshll.u32 %v986, 16
      %v1054 = vrot.slane %v1052, 5
      %v1055 = vsel %vm1007, %v1050, %v1054
      %v1057 = vshrl.u32 %v987, 16
      %v1059 = vrot.slane %v1057, 4
      %v1060 = vshll.u32 %v987, 16
      %v1062 = vrot.slane %v1060, 5
      %v1063 = vor.u32 %v1059, %v1062
      %v1064 = vrot.slane %v1063, 4
      %v1066 = vshll.u32 %v988, 16
      %v1068 = vrot.slane %v1066, 5
      %v1069 = vsel %vm1007, %v1064, %v1068
      %v1070 = vshrl.u32 %v988, 16
      %v1072 = vrot.slane %v1070, 4
      %v1073 = vor.u32 %v1072, %v1068
      %v1074 = vrot.slane %v1073, 4
      %v1076 = vshll.u32 %v989, 16
      %v1078 = vrot.slane %v1076, 5
      %v1079 = vsel %vm1007, %v1074, %v1078
      %v1081 = vshrl.u32 %v990, 16
      %v1083 = vrot.slane %v1081, 4
      %v1084 = vshll.u32 %v990, 16
      %v1086 = vrot.slane %v1084, 5
      %v1087 = vor.u32 %v1083, %v1086
      %v1088 = vrot.slane %v1087, 4
      %v1090 = vshll.u32 %v991, 16
      %v1092 = vrot.slane %v1090, 5
      %v1093 = vsel %vm1007, %v1088, %v1092
      %v1094 = vshrl.u32 %v991, 16
      %v1096 = vrot.slane %v1094, 4
      %v1097 = vor.u32 %v1096, %v1092
      %v1098 = vrot.slane %v1097, 4
      %v1100 = vshll.u32 %v992, 16
      %v1102 = vrot.slane %v1100, 5
      %v1103 = vsel %vm1007, %v1098, %v1102
      %v1105 = vshrl.u32 %v993, 16
      %v1107 = vrot.slane %v1105, 4
      %v1108 = vshll.u32 %v993, 16
      %v1110 = vrot.slane %v1108, 5
      %v1111 = vor.u32 %v1107, %v1110
      %v1112 = vrot.slane %v1111, 4
      %v1114 = vshll.u32 %v994, 16
      %v1116 = vrot.slane %v1114, 5
      %v1117 = vsel %vm1007, %v1112, %v1116
      %v1118 = vshrl.u32 %v994, 16
      %v1120 = vrot.slane %v1118, 4
      %v1121 = vor.u32 %v1120, %v1116
      %v1122 = vrot.slane %v1121, 4
      %v1124 = vshll.u32 %v995, 16
      %v1126 = vrot.slane %v1124, 5
      %v1127 = vsel %vm1007, %v1122, %v1126
      %v1129 = vshrl.u32 %v996, 16
      %v1131 = vrot.slane %v1129, 4
      %v1132 = vshll.u32 %v996, 16
      %v1134 = vrot.slane %v1132, 5
      %v1135 = vor.u32 %v1131, %v1134
      %v1136 = vrot.slane %v1135, 4
      %v1138 = vshll.u32 %v997, 16
      %v1140 = vrot.slane %v1138, 5
      %v1141 = vsel %vm1007, %v1136, %v1140
      %v1142 = vshrl.u32 %v997, 16
      %v1144 = vrot.slane %v1142, 4
      %v1145 = vor.u32 %v1144, %v1140
      %v1146 = vrot.slane %v1145, 4
      %v1148 = vshll.u32 %v998, 16
      %v1150 = vrot.slane %v1148, 5
      %v1151 = vsel %vm1007, %v1146, %v1150
      %v1153 = vshrl.u32 %v999, 16
      %v1155 = vrot.slane %v1153, 4
      %v1156 = vshll.u32 %v999, 16
      %v1158 = vrot.slane %v1156, 5
      %v1159 = vor.u32 %v1155, %v1158
      %v1160 = vrot.slane %v1159, 4
      %v1162 = vshll.u32 %v1000, 16
      %v1164 = vrot.slane %v1162, 5
      %v1165 = vsel %vm1007, %v1160, %v1164
      %v1166 = vshrl.u32 %v1000, 16
      %v1168 = vrot.slane %v1166, 4
      %v1169 = vor.u32 %v1168, %v1164
      %v1170 = vrot.slane %v1169, 4
      %v1172 = vshll.u32 %v1001, 16
      %v1174 = vrot.slane %v1172, 5
      %v1175 = vsel %vm1007, %v1170, %v1174
      %v1177 = vshrl.u32 %v1002, 16
      %v1179 = vrot.slane %v1177, 4
      %v1180 = vshll.u32 %v1002, 16
      %v1182 = vrot.slane %v1180, 5
      %v1183 = vor.u32 %v1179, %v1182
      %v1184 = vrot.slane %v1183, 4
      %v1186 = vshll.u32 %v1003, 16
      %v1188 = vrot.slane %v1186, 5
      %v1189 = vsel %vm1007, %v1184, %v1188
      %v1190 = vshrl.u32 %v1003, 16
      %v1192 = vrot.slane %v1190, 4
      %v1193 = vor.u32 %v1192, %v1188
      %v1194 = vrot.slane %v1193, 4
      %v1196 = vshll.u32 %v1004, 16
      %v1198 = vrot.slane %v1196, 5
      %v1199 = vsel %vm1007, %v1194, %v1198
      %1200 = vrot.lane.b32.xlu0 %v1021, 16
      %v1201 = vpop.permute.xlu0 %1200
      %1202 = vrot.lane.b32.xlu0 %v1031, 16
      %v1203 = vpop.permute.xlu0 %1202
      %1204 = vrot.lane.b32.xlu0 %v1045, 16
      %v1205 = vpop.permute.xlu0 %1204
      %1206 = vrot.lane.b32.xlu0 %v1055, 16
      %v1207 = vpop.permute.xlu0 %1206
      %1208 = vrot.lane.b32.xlu0 %v1069, 16
      %v1209 = vpop.permute.xlu0 %1208
      %1210 = vrot.lane.b32.xlu0 %v1079, 16
      %v1211 = vpop.permute.xlu0 %1210
      %1212 = vrot.lane.b32.xlu0 %v1093, 16
      %v1213 = vpop.permute.xlu0 %1212
      %1214 = vrot.lane.b32.xlu0 %v1103, 16
      %v1215 = vpop.permute.xlu0 %1214
      %1216 = vrot.lane.b32.xlu0 %v1117, 16
      %v1217 = vpop.permute.xlu0 %1216
      %1218 = vrot.lane.b32.xlu0 %v1127, 16
      %v1219 = vpop.permute.xlu0 %1218
      %1220 = vrot.lane.b32.xlu0 %v1141, 16
      %v1221 = vpop.permute.xlu0 %1220
      %1222 = vrot.lane.b32.xlu0 %v1151, 16
      %v1223 = vpop.permute.xlu0 %1222
      %1224 = vrot.lane.b32.xlu0 %v1165, 16
      %v1225 = vpop.permute.xlu0 %1224
      %1226 = vrot.lane.b32.xlu0 %v1175, 16
      %v1227 = vpop.permute.xlu0 %1226
      %1228 = vrot.lane.b32.xlu0 %v1189, 16
      %v1229 = vpop.permute.xlu0 %1228
      %1230 = vrot.lane.b32.xlu0 %v1199, 16
      %v1231 = vpop.permute.xlu0 %1230
      %vm1248 = vcmask 257152
      %1249 = vst.msk [vmem:[#allocation3] sm:$0xf] %vm1248, %v1201
      %1250 = vst.msk [vmem:[#allocation3 + $0x8] sm:$0xf] %vm1248, %v1203
      %1251 = vst.msk [vmem:[#allocation3 + $0x10] sm:$0xf] %vm1248, %v1205
      %1252 = vst.msk [vmem:[#allocation3 + $0x18] sm:$0xf] %vm1248, %v1207
      %1253 = vst.msk [vmem:[#allocation3 + $0x20] sm:$0xf] %vm1248, %v1209
      %1254 = vst.msk [vmem:[#allocation3 + $0x28] sm:$0xf] %vm1248, %v1211
      %1255 = vst.msk [vmem:[#allocation3 + $0x30] sm:$0xf] %vm1248, %v1213
      %1256 = vst.msk [vmem:[#allocation3 + $0x38] sm:$0xf] %vm1248, %v1215
      %1257 = vst.msk [vmem:[#allocation3 + $0x40] sm:$0xf] %vm1248, %v1217
      %1258 = vst.msk [vmem:[#allocation3 + $0x48] sm:$0xf] %vm1248, %v1219
      %1259 = vst.msk [vmem:[#allocation3 + $0x50] sm:$0xf] %vm1248, %v1221
      %1260 = vst.msk [vmem:[#allocation3 + $0x58] sm:$0xf] %vm1248, %v1223
      %1261 = vst.msk [vmem:[#allocation3 + $0x60] sm:$0xf] %vm1248, %v1225
      %1262 = vst.msk [vmem:[#allocation3 + $0x68] sm:$0xf] %vm1248, %v1227
      %1263 = vst.msk [vmem:[#allocation3 + $0x70] sm:$0xf] %vm1248, %v1229
      %1264 = vst.msk [vmem:[#allocation3 + $0x78] sm:$0xf] %vm1248, %v1231
      %v1265 = vld [vmem:[#allocation2] sm:$0xe]
      %v1266 = vld [vmem:[#allocation2 + $0x4] sm:$0xf]
      %v1267 = vld [vmem:[#allocation2 + $0x8] sm:$0x1]
      %v1268 = vld [vmem:[#allocation2 + $0xc] sm:$0xe]
      %v1269 = vld [vmem:[#allocation2 + $0x10] sm:$0xf]
      %v1270 = vld [vmem:[#allocation2 + $0x14] sm:$0x1]
      %v1271 = vld [vmem:[#allocation2 + $0x18] sm:$0xe]
      %v1272 = vld [vmem:[#allocation2 + $0x1c] sm:$0xf]
      %v1273 = vld [vmem:[#allocation2 + $0x20] sm:$0x1]
      %v1274 = vld [vmem:[#allocation2 + $0x24] sm:$0xe]
      %v1275 = vld [vmem:[#allocation2 + $0x28] sm:$0xf]
      %v1276 = vld [vmem:[#allocation2 + $0x2c] sm:$0x1]
      %v1277 = vld [vmem:[#allocation2 + $0x30] sm:$0xe]
      %v1278 = vld [vmem:[#allocation2 + $0x34] sm:$0xf]
      %v1279 = vld [vmem:[#allocation2 + $0x38] sm:$0x1]
      %v1280 = vld [vmem:[#allocation2 + $0x3c] sm:$0xe]
      %v1281 = vld [vmem:[#allocation2 + $0x40] sm:$0xf]
      %v1282 = vld [vmem:[#allocation2 + $0x44] sm:$0x1]
      %v1283 = vld [vmem:[#allocation2 + $0x48] sm:$0xe]
      %v1284 = vld [vmem:[#allocation2 + $0x4c] sm:$0xf]
      %v1285 = vld [vmem:[#allocation2 + $0x50] sm:$0x1]
      %v1286 = vld [vmem:[#allocation2 + $0x54] sm:$0xe]
      %v1287 = vld [vmem:[#allocation2 + $0x58] sm:$0xf]
      %v1288 = vld [vmem:[#allocation2 + $0x5c] sm:$0x1]
      %vm1313 = vcmask 1042432
      %vm1314 = vcmask 1046532
      %vm1315 = vmor %vm1313, %vm1314
      %v1316 = vrot.slane %v1265, 5
      %v1317 = vrot.slane %v1316, 4
      %v1318 = vrot.slane %v1266, 5
      %v1319 = vsel %vm1315, %v1317, %v1318
      %v1320 = vrot.slane %v1318, 4
      %v1321 = vrot.slane %v1267, 5
      %v1322 = vsel %vm1315, %v1320, %v1321
      %v1323 = vrot.slane %v1268, 5
      %v1324 = vrot.slane %v1323, 4
      %v1325 = vrot.slane %v1269, 5
      %v1326 = vsel %vm1315, %v1324, %v1325
      %v1327 = vrot.slane %v1325, 4
      %v1328 = vrot.slane %v1270, 5
      %v1329 = vsel %vm1315, %v1327, %v1328
      %v1330 = vrot.slane %v1271, 5
      %v1331 = vrot.slane %v1330, 4
      %v1332 = vrot.slane %v1272, 5
      %v1333 = vsel %vm1315, %v1331, %v1332
      %v1334 = vrot.slane %v1332, 4
      %v1335 = vrot.slane %v1273, 5
      %v1336 = vsel %vm1315, %v1334, %v1335
      %v1337 = vrot.slane %v1274, 5
      %v1338 = vrot.slane %v1337, 4
      %v1339 = vrot.slane %v1275, 5
      %v1340 = vsel %vm1315, %v1338, %v1339
      %v1341 = vrot.slane %v1339, 4
      %v1342 = vrot.slane %v1276, 5
      %v1343 = vsel %vm1315, %v1341, %v1342
      %v1344 = vrot.slane %v1277, 5
      %v1345 = vrot.slane %v1344, 4
      %v1346 = vrot.slane %v1278, 5
      %v1347 = vsel %vm1315, %v1345, %v1346
      %v1348 = vrot.slane %v1346, 4
      %v1349 = vrot.slane %v1279, 5
      %v1350 = vsel %vm1315, %v1348, %v1349
      %v1351 = vrot.slane %v1280, 5
      %v1352 = vrot.slane %v1351, 4
      %v1353 = vrot.slane %v1281, 5
      %v1354 = vsel %vm1315, %v1352, %v1353
      %v1355 = vrot.slane %v1353, 4
      %v1356 = vrot.slane %v1282, 5
      %v1357 = vsel %vm1315, %v1355, %v1356
      %v1358 = vrot.slane %v1283, 5
      %v1359 = vrot.slane %v1358, 4
      %v1360 = vrot.slane %v1284, 5
      %v1361 = vsel %vm1315, %v1359, %v1360
      %v1362 = vrot.slane %v1360, 4
      %v1363 = vrot.slane %v1285, 5
      %v1364 = vsel %vm1315, %v1362, %v1363
      %v1365 = vrot.slane %v1286, 5
      %v1366 = vrot.slane %v1365, 4
      %v1367 = vrot.slane %v1287, 5
      %v1368 = vsel %vm1315, %v1366, %v1367
      %v1369 = vrot.slane %v1367, 4
      %v1370 = vrot.slane %v1288, 5
      %v1371 = vsel %vm1315, %v1369, %v1370
      %1372 = vrot.lane.b32.xlu0 %v1319, 32
      %v1373 = vpop.permute.xlu0 %1372
      %1374 = vrot.lane.b32.xlu0 %v1322, 32
      %v1375 = vpop.permute.xlu0 %1374
      %1376 = vrot.lane.b32.xlu0 %v1326, 32
      %v1377 = vpop.permute.xlu0 %1376
      %1378 = vrot.lane.b32.xlu0 %v1329, 32
      %v1379 = vpop.permute.xlu0 %1378
      %1380 = vrot.lane.b32.xlu0 %v1333, 32
      %v1381 = vpop.permute.xlu0 %1380
      %1382 = vrot.lane.b32.xlu0 %v1336, 32
      %v1383 = vpop.permute.xlu0 %1382
      %1384 = vrot.lane.b32.xlu0 %v1340, 32
      %v1385 = vpop.permute.xlu0 %1384
      %1386 = vrot.lane.b32.xlu0 %v1343, 32
      %v1387 = vpop.permute.xlu0 %1386
      %1388 = vrot.lane.b32.xlu0 %v1347, 32
      %v1389 = vpop.permute.xlu0 %1388
      %1390 = vrot.lane.b32.xlu0 %v1350, 32
      %v1391 = vpop.permute.xlu0 %1390
      %1392 = vrot.lane.b32.xlu0 %v1354, 32
      %v1393 = vpop.permute.xlu0 %1392
      %1394 = vrot.lane.b32.xlu0 %v1357, 32
      %v1395 = vpop.permute.xlu0 %1394
      %1396 = vrot.lane.b32.xlu0 %v1361, 32
      %v1397 = vpop.permute.xlu0 %1396
      %1398 = vrot.lane.b32.xlu0 %v1364, 32
      %v1399 = vpop.permute.xlu0 %1398
      %1400 = vrot.lane.b32.xlu0 %v1368, 32
      %v1401 = vpop.permute.xlu0 %1400
      %1402 = vrot.lane.b32.xlu0 %v1371, 32
      %v1403 = vpop.permute.xlu0 %1402
      %vm1420 = vcmask 388352
      %1421 = vst.msk [vmem:[#allocation3] sm:$0xf] %vm1420, %v1373
      %1422 = vst.msk [vmem:[#allocation3 + $0x8] sm:$0xf] %vm1420, %v1375
      %1423 = vst.msk [vmem:[#allocation3 + $0x10] sm:$0xf] %vm1420, %v1377
      %1424 = vst.msk [vmem:[#allocation3 + $0x18] sm:$0xf] %vm1420, %v1379
      %1425 = vst.msk [vmem:[#allocation3 + $0x20] sm:$0xf] %vm1420, %v1381
      %1426 = vst.msk [vmem:[#allocation3 + $0x28] sm:$0xf] %vm1420, %v1383
      %1427 = vst.msk [vmem:[#allocation3 + $0x30] sm:$0xf] %vm1420, %v1385
      %1428 = vst.msk [vmem:[#allocation3 + $0x38] sm:$0xf] %vm1420, %v1387
      %1429 = vst.msk [vmem:[#allocation3 + $0x40] sm:$0xf] %vm1420, %v1389
      %1430 = vst.msk [vmem:[#allocation3 + $0x48] sm:$0xf] %vm1420, %v1391
      %1431 = vst.msk [vmem:[#allocation3 + $0x50] sm:$0xf] %vm1420, %v1393
      %1432 = vst.msk [vmem:[#allocation3 + $0x58] sm:$0xf] %vm1420, %v1395
      %1433 = vst.msk [vmem:[#allocation3 + $0x60] sm:$0xf] %vm1420, %v1397
      %1434 = vst.msk [vmem:[#allocation3 + $0x68] sm:$0xf] %vm1420, %v1399
      %1435 = vst.msk [vmem:[#allocation3 + $0x70] sm:$0xf] %vm1420, %v1401
      %1436 = vst.msk [vmem:[#allocation3 + $0x78] sm:$0xf] %vm1420, %v1403
      %v1437 = vld [vmem:[%s864] sm:$0xf]
      %v1438 = vld [vmem:[%s864 + $0x4] sm:$0xf]
      %v1439 = vld [vmem:[%s864 + $0xc] sm:$0xf]
      %v1440 = vld [vmem:[%s864 + $0x10] sm:$0xf]
      %v1441 = vld [vmem:[%s864 + $0x18] sm:$0xf]
      %v1442 = vld [vmem:[%s864 + $0x1c] sm:$0xf]
      %v1443 = vld [vmem:[%s864 + $0x24] sm:$0xf]
      %v1444 = vld [vmem:[%s864 + $0x28] sm:$0xf]
      %v1445 = vld [vmem:[%s864 + $0x30] sm:$0xf]
      %v1446 = vld [vmem:[%s864 + $0x34] sm:$0xf]
      %v1447 = vld [vmem:[%s864 + $0x3c] sm:$0xf]
      %v1448 = vld [vmem:[%s864 + $0x40] sm:$0xf]
      %v1449 = vld [vmem:[%s864 + $0x48] sm:$0xf]
      %v1450 = vld [vmem:[%s864 + $0x4c] sm:$0xf]
      %v1451 = vld [vmem:[%s864 + $0x54] sm:$0xf]
      %v1452 = vld [vmem:[%s864 + $0x58] sm:$0xf]
      %1469 = vrot.lane.b32.xlu0 %v1437, 48
      %v1470 = vpop.permute.xlu0 %1469
      %1471 = vrot.lane.b32.xlu0 %v1438, 48
      %v1472 = vpop.permute.xlu0 %1471
      %1473 = vrot.lane.b32.xlu0 %v1439, 48
      %v1474 = vpop.permute.xlu0 %1473
      %1475 = vrot.lane.b32.xlu0 %v1440, 48
      %v1476 = vpop.permute.xlu0 %1475
      %1477 = vrot.lane.b32.xlu0 %v1441, 48
      %v1478 = vpop.permute.xlu0 %1477
      %1479 = vrot.lane.b32.xlu0 %v1442, 48
      %v1480 = vpop.permute.xlu0 %1479
      %1481 = vrot.lane.b32.xlu0 %v1443, 48
      %v1482 = vpop.permute.xlu0 %1481
      %1483 = vrot.lane.b32.xlu0 %v1444, 48
      %v1484 = vpop.permute.xlu0 %1483
      %1485 = vrot.lane.b32.xlu0 %v1445, 48
      %v1486 = vpop.permute.xlu0 %1485
      %1487 = vrot.lane.b32.xlu0 %v1446, 48
      %v1488 = vpop.permute.xlu0 %1487
      %1489 = vrot.lane.b32.xlu0 %v1447, 48
      %v1490 = vpop.permute.xlu0 %1489
      %1491 = vrot.lane.b32.xlu0 %v1448, 48
      %v1492 = vpop.permute.xlu0 %1491
      %1493 = vrot.lane.b32.xlu0 %v1449, 48
      %v1494 = vpop.permute.xlu0 %1493
      %1495 = vrot.lane.b32.xlu0 %v1450, 48
      %v1496 = vpop.permute.xlu0 %1495
      %1497 = vrot.lane.b32.xlu0 %v1451, 48
      %v1498 = vpop.permute.xlu0 %1497
      %1499 = vrot.lane.b32.xlu0 %v1452, 48
      %v1500 = vpop.permute.xlu0 %1499
      %vm1517 = vcmask 519552
      %1518 = vst.msk [vmem:[#allocation3] sm:$0xf] %vm1517, %v1470
      %1519 = vst.msk [vmem:[#allocation3 + $0x8] sm:$0xf] %vm1517, %v1472
      %1520 = vst.msk [vmem:[#allocation3 + $0x10] sm:$0xf] %vm1517, %v1474
      %1521 = vst.msk [vmem:[#allocation3 + $0x18] sm:$0xf] %vm1517, %v1476
      %1522 = vst.msk [vmem:[#allocation3 + $0x20] sm:$0xf] %vm1517, %v1478
      %1523 = vst.msk [vmem:[#allocation3 + $0x28] sm:$0xf] %vm1517, %v1480
      %1524 = vst.msk [vmem:[#allocation3 + $0x30] sm:$0xf] %vm1517, %v1482
      %1525 = vst.msk [vmem:[#allocation3 + $0x38] sm:$0xf] %vm1517, %v1484
      %1526 = vst.msk [vmem:[#allocation3 + $0x40] sm:$0xf] %vm1517, %v1486
      %1527 = vst.msk [vmem:[#allocation3 + $0x48] sm:$0xf] %vm1517, %v1488
      %1528 = vst.msk [vmem:[#allocation3 + $0x50] sm:$0xf] %vm1517, %v1490
      %1529 = vst.msk [vmem:[#allocation3 + $0x58] sm:$0xf] %vm1517, %v1492
      %1530 = vst.msk [vmem:[#allocation3 + $0x60] sm:$0xf] %vm1517, %v1494
      %1531 = vst.msk [vmem:[#allocation3 + $0x68] sm:$0xf] %vm1517, %v1496
      %1532 = vst.msk [vmem:[#allocation3 + $0x70] sm:$0xf] %vm1517, %v1498
      %1533 = vst.msk [vmem:[#allocation3 + $0x78] sm:$0xf] %vm1517, %v1500
      %v1534 = vld [vmem:[%s864] sm:$0xf]
      %v1535 = vld [vmem:[%s864 + $0x4] sm:$0xf]
      %v1536 = vld [vmem:[%s864 + $0x8] sm:$0x1]
      %v1537 = vld [vmem:[%s864 + $0xc] sm:$0xf]
      %v1538 = vld [vmem:[%s864 + $0x10] sm:$0xf]
      %v1539 = vld [vmem:[%s864 + $0x14] sm:$0x1]
      %v1540 = vld [vmem:[%s864 + $0x18] sm:$0xf]
      %v1541 = vld [vmem:[%s864 + $0x1c] sm:$0xf]
      %v1542 = vld [vmem:[%s864 + $0x20] sm:$0x1]
      %v1543 = vld [vmem:[%s864 + $0x24] sm:$0xf]
      %v1544 = vld [vmem:[%s864 + $0x28] sm:$0xf]
      %v1545 = vld [vmem:[%s864 + $0x2c] sm:$0x1]
      %v1546 = vld [vmem:[%s864 + $0x30] sm:$0xf]
      %v1547 = vld [vmem:[%s864 + $0x34] sm:$0xf]
      %v1548 = vld [vmem:[%s864 + $0x38] sm:$0x1]
      %v1549 = vld [vmem:[%s864 + $0x3c] sm:$0xf]
      %v1550 = vld [vmem:[%s864 + $0x40] sm:$0xf]
      %v1551 = vld [vmem:[%s864 + $0x44] sm:$0x1]
      %v1552 = vld [vmem:[%s864 + $0x48] sm:$0xf]
      %v1553 = vld [vmem:[%s864 + $0x4c] sm:$0xf]
      %v1554 = vld [vmem:[%s864 + $0x50] sm:$0x1]
      %v1555 = vld [vmem:[%s864 + $0x54] sm:$0xf]
      %v1556 = vld [vmem:[%s864 + $0x58] sm:$0xf]
      %v1557 = vld [vmem:[%s864 + $0x5c] sm:$0x1]
      %v1559 = vshrl.u32 %v1534, 16
      %v1561 = vrot.slane %v1559, 4
      %v1562 = vshll.u32 %v1534, 16
      %v1564 = vrot.slane %v1562, 5
      %v1565 = vor.u32 %v1561, %v1564
      %v1566 = vrot.slane %v1565, 4
      %v1568 = vshll.u32 %v1535, 16
      %v1570 = vrot.slane %v1568, 5
      %v1571 = vsel %vm1007, %v1566, %v1570
      %v1572 = vshrl.u32 %v1535, 16
      %v1574 = vrot.slane %v1572, 4
      %v1575 = vor.u32 %v1574, %v1570
      %v1576 = vrot.slane %v1575, 4
      %v1578 = vshll.u32 %v1536, 16
      %v1580 = vrot.slane %v1578, 5
      %v1581 = vsel %vm1007, %v1576, %v1580
      %v1583 = vshrl.u32 %v1537, 16
      %v1585 = vrot.slane %v1583, 4
      %v1586 = vshll.u32 %v1537, 16
      %v1588 = vrot.slane %v1586, 5
      %v1589 = vor.u32 %v1585, %v1588
      %v1590 = vrot.slane %v1589, 4
      %v1592 = vshll.u32 %v1538, 16
      %v1594 = vrot.slane %v1592, 5
      %v1595 = vsel %vm1007, %v1590, %v1594
      %v1596 = vshrl.u32 %v1538, 16
      %v1598 = vrot.slane %v1596, 4
      %v1599 = vor.u32 %v1598, %v1594
      %v1600 = vrot.slane %v1599, 4
      %v1602 = vshll.u32 %v1539, 16
      %v1604 = vrot.slane %v1602, 5
      %v1605 = vsel %vm1007, %v1600, %v1604
      %v1607 = vshrl.u32 %v1540, 16
      %v1609 = vrot.slane %v1607, 4
      %v1610 = vshll.u32 %v1540, 16
      %v1612 = vrot.slane %v1610, 5
      %v1613 = vor.u32 %v1609, %v1612
      %v1614 = vrot.slane %v1613, 4
      %v1616 = vshll.u32 %v1541, 16
      %v1618 = vrot.slane %v1616, 5
      %v1619 = vsel %vm1007, %v1614, %v1618
      %v1620 = vshrl.u32 %v1541, 16
      %v1622 = vrot.slane %v1620, 4
      %v1623 = vor.u32 %v1622, %v1618
      %v1624 = vrot.slane %v1623, 4
      %v1626 = vshll.u32 %v1542, 16
      %v1628 = vrot.slane %v1626, 5
      %v1629 = vsel %vm1007, %v1624, %v1628
      %v1631 = vshrl.u32 %v1543, 16
      %v1633 = vrot.slane %v1631, 4
      %v1634 = vshll.u32 %v1543, 16
      %v1636 = vrot.slane %v1634, 5
      %v1637 = vor.u32 %v1633, %v1636
      %v1638 = vrot.slane %v1637, 4
      %v1640 = vshll.u32 %v1544, 16
      %v1642 = vrot.slane %v1640, 5
      %v1643 = vsel %vm1007, %v1638, %v1642
      %v1644 = vshrl.u32 %v1544, 16
      %v1646 = vrot.slane %v1644, 4
      %v1647 = vor.u32 %v1646, %v1642
      %v1648 = vrot.slane %v1647, 4
      %v1650 = vshll.u32 %v1545, 16
      %v1652 = vrot.slane %v1650, 5
      %v1653 = vsel %vm1007, %v1648, %v1652
      %v1655 = vshrl.u32 %v1546, 16
      %v1657 = vrot.slane %v1655, 4
      %v1658 = vshll.u32 %v1546, 16
      %v1660 = vrot.slane %v1658, 5
      %v1661 = vor.u32 %v1657, %v1660
      %v1662 = vrot.slane %v1661, 4
      %v1664 = vshll.u32 %v1547, 16
      %v1666 = vrot.slane %v1664, 5
      %v1667 = vsel %vm1007, %v1662, %v1666
      %v1668 = vshrl.u32 %v1547, 16
      %v1670 = vrot.slane %v1668, 4
      %v1671 = vor.u32 %v1670, %v1666
      %v1672 = vrot.slane %v1671, 4
      %v1674 = vshll.u32 %v1548, 16
      %v1676 = vrot.slane %v1674, 5
      %v1677 = vsel %vm1007, %v1672, %v1676
      %v1679 = vshrl.u32 %v1549, 16
      %v1681 = vrot.slane %v1679, 4
      %v1682 = vshll.u32 %v1549, 16
      %v1684 = vrot.slane %v1682, 5
      %v1685 = vor.u32 %v1681, %v1684
      %v1686 = vrot.slane %v1685, 4
      %v1688 = vshll.u32 %v1550, 16
      %v1690 = vrot.slane %v1688, 5
      %v1691 = vsel %vm1007, %v1686, %v1690
      %v1692 = vshrl.u32 %v1550, 16
      %v1694 = vrot.slane %v1692, 4
      %v1695 = vor.u32 %v1694, %v1690
      %v1696 = vrot.slane %v1695, 4
      %v1698 = vshll.u32 %v1551, 16
      %v1700 = vrot.slane %v1698, 5
      %v1701 = vsel %vm1007, %v1696, %v1700
      %v1703 = vshrl.u32 %v1552, 16
      %v1705 = vrot.slane %v1703, 4
      %v1706 = vshll.u32 %v1552, 16
      %v1708 = vrot.slane %v1706, 5
      %v1709 = vor.u32 %v1705, %v1708
      %v1710 = vrot.slane %v1709, 4
      %v1712 = vshll.u32 %v1553, 16
      %v1714 = vrot.slane %v1712, 5
      %v1715 = vsel %vm1007, %v1710, %v1714
      %v1716 = vshrl.u32 %v1553, 16
      %v1718 = vrot.slane %v1716, 4
      %v1719 = vor.u32 %v1718, %v1714
      %v1720 = vrot.slane %v1719, 4
      %v1722 = vshll.u32 %v1554, 16
      %v1724 = vrot.slane %v1722, 5
      %v1725 = vsel %vm1007, %v1720, %v1724
      %v1727 = vshrl.u32 %v1555, 16
      %v1729 = vrot.slane %v1727, 4
      %v1730 = vshll.u32 %v1555, 16
      %v1732 = vrot.slane %v1730, 5
      %v1733 = vor.u32 %v1729, %v1732
      %v1734 = vrot.slane %v1733, 4
      %v1736 = vshll.u32 %v1556, 16
      %v1738 = vrot.slane %v1736, 5
      %v1739 = vsel %vm1007, %v1734, %v1738
      %v1740 = vshrl.u32 %v1556, 16
      %v1742 = vrot.slane %v1740, 4
      %v1743 = vor.u32 %v1742, %v1738
      %v1744 = vrot.slane %v1743, 4
      %v1746 = vshll.u32 %v1557, 16
      %v1748 = vrot.slane %v1746, 5
      %v1749 = vsel %vm1007, %v1744, %v1748
      %1750 = vrot.lane.b32.xlu0 %v1571, 64
      %v1751 = vpop.permute.xlu0 %1750
      %1752 = vrot.lane.b32.xlu0 %v1581, 64
      %v1753 = vpop.permute.xlu0 %1752
      %1754 = vrot.lane.b32.xlu0 %v1595, 64
      %v1755 = vpop.permute.xlu0 %1754
      %1756 = vrot.lane.b32.xlu0 %v1605, 64
      %v1757 = vpop.permute.xlu0 %1756
      %1758 = vrot.lane.b32.xlu0 %v1619, 64
      %v1759 = vpop.permute.xlu0 %1758
      %1760 = vrot.lane.b32.xlu0 %v1629, 64
      %v1761 = vpop.permute.xlu0 %1760
      %1762 = vrot.lane.b32.xlu0 %v1643, 64
      %v1763 = vpop.permute.xlu0 %1762
      %1764 = vrot.lane.b32.xlu0 %v1653, 64
      %v1765 = vpop.permute.xlu0 %1764
      %1766 = vrot.lane.b32.xlu0 %v1667, 64
      %v1767 = vpop.permute.xlu0 %1766
      %1768 = vrot.lane.b32.xlu0 %v1677, 64
      %v1769 = vpop.permute.xlu0 %1768
      %1770 = vrot.lane.b32.xlu0 %v1691, 64
      %v1771 = vpop.permute.xlu0 %1770
      %1772 = vrot.lane.b32.xlu0 %v1701, 64
      %v1773 = vpop.permute.xlu0 %1772
      %1774 = vrot.lane.b32.xlu0 %v1715, 64
      %v1775 = vpop.permute.xlu0 %1774
      %1776 = vrot.lane.b32.xlu0 %v1725, 64
      %v1777 = vpop.permute.xlu0 %1776
      %1778 = vrot.lane.b32.xlu0 %v1739, 64
      %v1779 = vpop.permute.xlu0 %1778
      %1780 = vrot.lane.b32.xlu0 %v1749, 64
      %v1781 = vpop.permute.xlu0 %1780
      %vm1798 = vcmask 650752
      %1799 = vst.msk [vmem:[#allocation3] sm:$0xf] %vm1798, %v1751
      %1800 = vst.msk [vmem:[#allocation3 + $0x8] sm:$0xf] %vm1798, %v1753
      %1801 = vst.msk [vmem:[#allocation3 + $0x10] sm:$0xf] %vm1798, %v1755
      %1802 = vst.msk [vmem:[#allocation3 + $0x18] sm:$0xf] %vm1798, %v1757
      %1803 = vst.msk [vmem:[#allocation3 + $0x20] sm:$0xf] %vm1798, %v1759
      %1804 = vst.msk [vmem:[#allocation3 + $0x28] sm:$0xf] %vm1798, %v1761
      %1805 = vst.msk [vmem:[#allocation3 + $0x30] sm:$0xf] %vm1798, %v1763
      %1806 = vst.msk [vmem:[#allocation3 + $0x38] sm:$0xf] %vm1798, %v1765
      %1807 = vst.msk [vmem:[#allocation3 + $0x40] sm:$0xf] %vm1798, %v1767
      %1808 = vst.msk [vmem:[#allocation3 + $0x48] sm:$0xf] %vm1798, %v1769
      %1809 = vst.msk [vmem:[#allocation3 + $0x50] sm:$0xf] %vm1798, %v1771
      %1810 = vst.msk [vmem:[#allocation3 + $0x58] sm:$0xf] %vm1798, %v1773
      %1811 = vst.msk [vmem:[#allocation3 + $0x60] sm:$0xf] %vm1798, %v1775
      %1812 = vst.msk [vmem:[#allocation3 + $0x68] sm:$0xf] %vm1798, %v1777
      %1813 = vst.msk [vmem:[#allocation3 + $0x70] sm:$0xf] %vm1798, %v1779
      %1814 = vst.msk [vmem:[#allocation3 + $0x78] sm:$0xf] %vm1798, %v1781
      %v1815 = vld [vmem:[%s864] sm:$0xe]
      %v1816 = vld [vmem:[%s864 + $0x4] sm:$0xf]
      %v1817 = vld [vmem:[%s864 + $0x8] sm:$0x1]
      %v1818 = vld [vmem:[%s864 + $0xc] sm:$0xe]
      %v1819 = vld [vmem:[%s864 + $0x10] sm:$0xf]
      %v1820 = vld [vmem:[%s864 + $0x14] sm:$0x1]
      %v1821 = vld [vmem:[%s864 + $0x18] sm:$0xe]
      %v1822 = vld [vmem:[%s864 + $0x1c] sm:$0xf]
      %v1823 = vld [vmem:[%s864 + $0x20] sm:$0x1]
      %v1824 = vld [vmem:[%s864 + $0x24] sm:$0xe]
      %v1825 = vld [vmem:[%s864 + $0x28] sm:$0xf]
      %v1826 = vld [vmem:[%s864 + $0x2c] sm:$0x1]
      %v1827 = vld [vmem:[%s864 + $0x30] sm:$0xe]
      %v1828 = vld [vmem:[%s864 + $0x34] sm:$0xf]
      %v1829 = vld [vmem:[%s864 + $0x38] sm:$0x1]
      %v1830 = vld [vmem:[%s864 + $0x3c] sm:$0xe]
      %v1831 = vld [vmem:[%s864 + $0x40] sm:$0xf]
      %v1832 = vld [vmem:[%s864 + $0x44] sm:$0x1]
      %v1833 = vld [vmem:[%s864 + $0x48] sm:$0xe]
      %v1834 = vld [vmem:[%s864 + $0x4c] sm:$0xf]
      %v1835 = vld [vmem:[%s864 + $0x50] sm:$0x1]
      %v1836 = vld [vmem:[%s864 + $0x54] sm:$0xe]
      %v1837 = vld [vmem:[%s864 + $0x58] sm:$0xf]
      %v1838 = vld [vmem:[%s864 + $0x5c] sm:$0x1]
      %v1863 = vrot.slane %v1815, 5
      %v1864 = vrot.slane %v1863, 4
      %v1865 = vrot.slane %v1816, 5
      %v1866 = vsel %vm1315, %v1864, %v1865
      %v1867 = vrot.slane %v1865, 4
      %v1868 = vrot.slane %v1817, 5
      %v1869 = vsel %vm1315, %v1867, %v1868
      %v1870 = vrot.slane %v1818, 5
      %v1871 = vrot.slane %v1870, 4
      %v1872 = vrot.slane %v1819, 5
      %v1873 = vsel %vm1315, %v1871, %v1872
      %v1874 = vrot.slane %v1872, 4
      %v1875 = vrot.slane %v1820, 5
      %v1876 = vsel %vm1315, %v1874, %v1875
      %v1877 = vrot.slane %v1821, 5
      %v1878 = vrot.slane %v1877, 4
      %v1879 = vrot.slane %v1822, 5
      %v1880 = vsel %vm1315, %v1878, %v1879
      %v1881 = vrot.slane %v1879, 4
      %v1882 = vrot.slane %v1823, 5
      %v1883 = vsel %vm1315, %v1881, %v1882
      %v1884 = vrot.slane %v1824, 5
      %v1885 = vrot.slane %v1884, 4
      %v1886 = vrot.slane %v1825, 5
      %v1887 = vsel %vm1315, %v1885, %v1886
      %v1888 = vrot.slane %v1886, 4
      %v1889 = vrot.slane %v1826, 5
      %v1890 = vsel %vm1315, %v1888, %v1889
      %v1891 = vrot.slane %v1827, 5
      %v1892 = vrot.slane %v1891, 4
      %v1893 = vrot.slane %v1828, 5
      %v1894 = vsel %vm1315, %v1892, %v1893
      %v1895 = vrot.slane %v1893, 4
      %v1896 = vrot.slane %v1829, 5
      %v1897 = vsel %vm1315, %v1895, %v1896
      %v1898 = vrot.slane %v1830, 5
      %v1899 = vrot.slane %v1898, 4
      %v1900 = vrot.slane %v1831, 5
      %v1901 = vsel %vm1315, %v1899, %v1900
      %v1902 = vrot.slane %v1900, 4
      %v1903 = vrot.slane %v1832, 5
      %v1904 = vsel %vm1315, %v1902, %v1903
      %v1905 = vrot.slane %v1833, 5
      %v1906 = vrot.slane %v1905, 4
      %v1907 = vrot.slane %v1834, 5
      %v1908 = vsel %vm1315, %v1906, %v1907
      %v1909 = vrot.slane %v1907, 4
      %v1910 = vrot.slane %v1835, 5
      %v1911 = vsel %vm1315, %v1909, %v1910
      %v1912 = vrot.slane %v1836, 5
      %v1913 = vrot.slane %v1912, 4
      %v1914 = vrot.slane %v1837, 5
      %v1915 = vsel %vm1315, %v1913, %v1914
      %v1916 = vrot.slane %v1914, 4
      %v1917 = vrot.slane %v1838, 5
      %v1918 = vsel %vm1315, %v1916, %v1917
      %1919 = vrot.lane.b32.xlu0 %v1866, 80
      %v1920 = vpop.permute.xlu0 %1919
      %1921 = vrot.lane.b32.xlu0 %v1869, 80
      %v1922 = vpop.permute.xlu0 %1921
      %1923 = vrot.lane.b32.xlu0 %v1873, 80
      %v1924 = vpop.permute.xlu0 %1923
      %1925 = vrot.lane.b32.xlu0 %v1876, 80
      %v1926 = vpop.permute.xlu0 %1925
      %1927 = vrot.lane.b32.xlu0 %v1880, 80
      %v1928 = vpop.permute.xlu0 %1927
      %1929 = vrot.lane.b32.xlu0 %v1883, 80
      %v1930 = vpop.permute.xlu0 %1929
      %1931 = vrot.lane.b32.xlu0 %v1887, 80
      %v1932 = vpop.permute.xlu0 %1931
      %1933 = vrot.lane.b32.xlu0 %v1890, 80
      %v1934 = vpop.permute.xlu0 %1933
      %1935 = vrot.lane.b32.xlu0 %v1894, 80
      %v1936 = vpop.permute.xlu0 %1935
      %1937 = vrot.lane.b32.xlu0 %v1897, 80
      %v1938 = vpop.permute.xlu0 %1937
      %1939 = vrot.lane.b32.xlu0 %v1901, 80
      %v1940 = vpop.permute.xlu0 %1939
      %1941 = vrot.lane.b32.xlu0 %v1904, 80
      %v1942 = vpop.permute.xlu0 %1941
      %1943 = vrot.lane.b32.xlu0 %v1908, 80
      %v1944 = vpop.permute.xlu0 %1943
      %1945 = vrot.lane.b32.xlu0 %v1911, 80
      %v1946 = vpop.permute.xlu0 %1945
      %1947 = vrot.lane.b32.xlu0 %v1915, 80
      %v1948 = vpop.permute.xlu0 %1947
      %1949 = vrot.lane.b32.xlu0 %v1918, 80
      %v1950 = vpop.permute.xlu0 %1949
      %vm1967 = vcmask 781952
      %1968 = vst.msk [vmem:[#allocation3] sm:$0xf] %vm1967, %v1920
      %1969 = vst.msk [vmem:[#allocation3 + $0x8] sm:$0xf] %vm1967, %v1922
      %1970 = vst.msk [vmem:[#allocation3 + $0x10] sm:$0xf] %vm1967, %v1924
      %1971 = vst.msk [vmem:[#allocation3 + $0x18] sm:$0xf] %vm1967, %v1926
      %1972 = vst.msk [vmem:[#allocation3 + $0x20] sm:$0xf] %vm1967, %v1928
      %1973 = vst.msk [vmem:[#allocation3 + $0x28] sm:$0xf] %vm1967, %v1930
      %1974 = vst.msk [vmem:[#allocation3 + $0x30] sm:$0xf] %vm1967, %v1932
      %1975 = vst.msk [vmem:[#allocation3 + $0x38] sm:$0xf] %vm1967, %v1934
      %1976 = vst.msk [vmem:[#allocation3 + $0x40] sm:$0xf] %vm1967, %v1936
      %1977 = vst.msk [vmem:[#allocation3 + $0x48] sm:$0xf] %vm1967, %v1938
      %1978 = vst.msk [vmem:[#allocation3 + $0x50] sm:$0xf] %vm1967, %v1940
      %1979 = vst.msk [vmem:[#allocation3 + $0x58] sm:$0xf] %vm1967, %v1942
      %1980 = vst.msk [vmem:[#allocation3 + $0x60] sm:$0xf] %vm1967, %v1944
      %1981 = vst.msk [vmem:[#allocation3 + $0x68] sm:$0xf] %vm1967, %v1946
      %1982 = vst.msk [vmem:[#allocation3 + $0x70] sm:$0xf] %vm1967, %v1948
      %1983 = vst.msk [vmem:[#allocation3 + $0x78] sm:$0xf] %vm1967, %v1950
      %s1984 = scalar_lea.vmem [#allocation2], 24
      %v1985 = vld [vmem:[%s1984] sm:$0xf]
      %v1986 = vld [vmem:[%s1984 + $0x4] sm:$0xf]
      %v1987 = vld [vmem:[%s1984 + $0xc] sm:$0xf]
      %v1988 = vld [vmem:[%s1984 + $0x10] sm:$0xf]
      %v1989 = vld [vmem:[%s1984 + $0x18] sm:$0xf]
      %v1990 = vld [vmem:[%s1984 + $0x1c] sm:$0xf]
      %v1991 = vld [vmem:[%s1984 + $0x24] sm:$0xf]
      %v1992 = vld [vmem:[%s1984 + $0x28] sm:$0xf]
      %v1993 = vld [vmem:[%s1984 + $0x30] sm:$0xf]
      %v1994 = vld [vmem:[%s1984 + $0x34] sm:$0xf]
      %v1995 = vld [vmem:[%s1984 + $0x3c] sm:$0xf]
      %v1996 = vld [vmem:[%s1984 + $0x40] sm:$0xf]
      %v1997 = vld [vmem:[%s1984 + $0x48] sm:$0xf]
      %v1998 = vld [vmem:[%s1984 + $0x4c] sm:$0xf]
      %v1999 = vld [vmem:[%s1984 + $0x54] sm:$0xf]
      %v2000 = vld [vmem:[%s1984 + $0x58] sm:$0xf]
      %2017 = vrot.lane.b32.xlu0 %v1985, 96
      %v2018 = vpop.permute.xlu0 %2017
      %2019 = vrot.lane.b32.xlu0 %v1986, 96
      %v2020 = vpop.permute.xlu0 %2019
      %2021 = vrot.lane.b32.xlu0 %v1987, 96
      %v2022 = vpop.permute.xlu0 %2021
      %2023 = vrot.lane.b32.xlu0 %v1988, 96
      %v2024 = vpop.permute.xlu0 %2023
      %2025 = vrot.lane.b32.xlu0 %v1989, 96
      %v2026 = vpop.permute.xlu0 %2025
      %2027 = vrot.lane.b32.xlu0 %v1990, 96
      %v2028 = vpop.permute.xlu0 %2027
      %2029 = vrot.lane.b32.xlu0 %v1991, 96
      %v2030 = vpop.permute.xlu0 %2029
      %2031 = vrot.lane.b32.xlu0 %v1992, 96
      %v2032 = vpop.permute.xlu0 %2031
      %2033 = vrot.lane.b32.xlu0 %v1993, 96
      %v2034 = vpop.permute.xlu0 %2033
      %2035 = vrot.lane.b32.xlu0 %v1994, 96
      %v2036 = vpop.permute.xlu0 %2035
      %2037 = vrot.lane.b32.xlu0 %v1995, 96
      %v2038 = vpop.permute.xlu0 %2037
      %2039 = vrot.lane.b32.xlu0 %v1996, 96
      %v2040 = vpop.permute.xlu0 %2039
      %2041 = vrot.lane.b32.xlu0 %v1997, 96
      %v2042 = vpop.permute.xlu0 %2041
      %2043 = vrot.lane.b32.xlu0 %v1998, 96
      %v2044 = vpop.permute.xlu0 %2043
      %2045 = vrot.lane.b32.xlu0 %v1999, 96
      %v2046 = vpop.permute.xlu0 %2045
      %2047 = vrot.lane.b32.xlu0 %v2000, 96
      %v2048 = vpop.permute.xlu0 %2047
      %vm2065 = vcmask 913152
      %2066 = vst.msk [vmem:[#allocation3] sm:$0xf] %vm2065, %v2018
      %2067 = vst.msk [vmem:[#allocation3 + $0x8] sm:$0xf] %vm2065, %v2020
      %2068 = vst.msk [vmem:[#allocation3 + $0x10] sm:$0xf] %vm2065, %v2022
      %2069 = vst.msk [vmem:[#allocation3 + $0x18] sm:$0xf] %vm2065, %v2024
      %2070 = vst.msk [vmem:[#allocation3 + $0x20] sm:$0xf] %vm2065, %v2026
      %2071 = vst.msk [vmem:[#allocation3 + $0x28] sm:$0xf] %vm2065, %v2028
      %2072 = vst.msk [vmem:[#allocation3 + $0x30] sm:$0xf] %vm2065, %v2030
      %2073 = vst.msk [vmem:[#allocation3 + $0x38] sm:$0xf] %vm2065, %v2032
      %2074 = vst.msk [vmem:[#allocation3 + $0x40] sm:$0xf] %vm2065, %v2034
      %2075 = vst.msk [vmem:[#allocation3 + $0x48] sm:$0xf] %vm2065, %v2036
      %2076 = vst.msk [vmem:[#allocation3 + $0x50] sm:$0xf] %vm2065, %v2038
      %2077 = vst.msk [vmem:[#allocation3 + $0x58] sm:$0xf] %vm2065, %v2040
      %2078 = vst.msk [vmem:[#allocation3 + $0x60] sm:$0xf] %vm2065, %v2042
      %2079 = vst.msk [vmem:[#allocation3 + $0x68] sm:$0xf] %vm2065, %v2044
      %2080 = vst.msk [vmem:[#allocation3 + $0x70] sm:$0xf] %vm2065, %v2046
      %2081 = vst.msk [vmem:[#allocation3 + $0x78] sm:$0xf] %vm2065, %v2048
      %v2082 = vld [vmem:[%s1984] sm:$0xf]
      %v2083 = vld [vmem:[%s1984 + $0x4] sm:$0xf]
      %v2084 = vld [vmem:[%s1984 + $0x8] sm:$0x1]
      %v2085 = vld [vmem:[%s1984 + $0xc] sm:$0xf]
      %v2086 = vld [vmem:[%s1984 + $0x10] sm:$0xf]
      %v2087 = vld [vmem:[%s1984 + $0x14] sm:$0x1]
      %v2088 = vld [vmem:[%s1984 + $0x18] sm:$0xf]
      %v2089 = vld [vmem:[%s1984 + $0x1c] sm:$0xf]
      %v2090 = vld [vmem:[%s1984 + $0x20] sm:$0x1]
      %v2091 = vld [vmem:[%s1984 + $0x24] sm:$0xf]
      %v2092 = vld [vmem:[%s1984 + $0x28] sm:$0xf]
      %v2093 = vld [vmem:[%s1984 + $0x2c] sm:$0x1]
      %v2094 = vld [vmem:[%s1984 + $0x30] sm:$0xf]
      %v2095 = vld [vmem:[%s1984 + $0x34] sm:$0xf]
      %v2096 = vld [vmem:[%s1984 + $0x38] sm:$0x1]
      %v2097 = vld [vmem:[%s1984 + $0x3c] sm:$0xf]
      %v2098 = vld [vmem:[%s1984 + $0x40] sm:$0xf]
      %v2099 = vld [vmem:[%s1984 + $0x44] sm:$0x1]
      %v2100 = vld [vmem:[%s1984 + $0x48] sm:$0xf]
      %v2101 = vld [vmem:[%s1984 + $0x4c] sm:$0xf]
      %v2102 = vld [vmem:[%s1984 + $0x50] sm:$0x1]
      %v2103 = vld [vmem:[%s1984 + $0x54] sm:$0xf]
      %v2104 = vld [vmem:[%s1984 + $0x58] sm:$0xf]
      %v2105 = vld [vmem:[%s1984 + $0x5c] sm:$0x1]
      %v2107 = vshrl.u32 %v2082, 16
      %v2109 = vrot.slane %v2107, 4
      %v2110 = vshll.u32 %v2082, 16
      %v2112 = vrot.slane %v2110, 5
      %v2113 = vor.u32 %v2109, %v2112
      %v2114 = vrot.slane %v2113, 4
      %v2116 = vshll.u32 %v2083, 16
      %v2118 = vrot.slane %v2116, 5
      %v2119 = vsel %vm1007, %v2114, %v2118
      %v2120 = vshrl.u32 %v2083, 16
      %v2122 = vrot.slane %v2120, 4
      %v2123 = vor.u32 %v2122, %v2118
      %v2124 = vrot.slane %v2123, 4
      %v2126 = vshll.u32 %v2084, 16
      %v2128 = vrot.slane %v2126, 5
      %v2129 = vsel %vm1007, %v2124, %v2128
      %v2131 = vshrl.u32 %v2085, 16
      %v2133 = vrot.slane %v2131, 4
      %v2134 = vshll.u32 %v2085, 16
      %v2136 = vrot.slane %v2134, 5
      %v2137 = vor.u32 %v2133, %v2136
      %v2138 = vrot.slane %v2137, 4
      %v2140 = vshll.u32 %v2086, 16
      %v2142 = vrot.slane %v2140, 5
      %v2143 = vsel %vm1007, %v2138, %v2142
      %v2144 = vshrl.u32 %v2086, 16
      %v2146 = vrot.slane %v2144, 4
      %v2147 = vor.u32 %v2146, %v2142
      %v2148 = vrot.slane %v2147, 4
      %v2150 = vshll.u32 %v2087, 16
      %v2152 = vrot.slane %v2150, 5
      %v2153 = vsel %vm1007, %v2148, %v2152
      %v2155 = vshrl.u32 %v2088, 16
      %v2157 = vrot.slane %v2155, 4
      %v2158 = vshll.u32 %v2088, 16
      %v2160 = vrot.slane %v2158, 5
      %v2161 = vor.u32 %v2157, %v2160
      %v2162 = vrot.slane %v2161, 4
      %v2164 = vshll.u32 %v2089, 16
      %v2166 = vrot.slane %v2164, 5
      %v2167 = vsel %vm1007, %v2162, %v2166
      %v2168 = vshrl.u32 %v2089, 16
      %v2170 = vrot.slane %v2168, 4
      %v2171 = vor.u32 %v2170, %v2166
      %v2172 = vrot.slane %v2171, 4
      %v2174 = vshll.u32 %v2090, 16
      %v2176 = vrot.slane %v2174, 5
      %v2177 = vsel %vm1007, %v2172, %v2176
      %v2179 = vshrl.u32 %v2091, 16
      %v2181 = vrot.slane %v2179, 4
      %v2182 = vshll.u32 %v2091, 16
      %v2184 = vrot.slane %v2182, 5
      %v2185 = vor.u32 %v2181, %v2184
      %v2186 = vrot.slane %v2185, 4
      %v2188 = vshll.u32 %v2092, 16
      %v2190 = vrot.slane %v2188, 5
      %v2191 = vsel %vm1007, %v2186, %v2190
      %v2192 = vshrl.u32 %v2092, 16
      %v2194 = vrot.slane %v2192, 4
      %v2195 = vor.u32 %v2194, %v2190
      %v2196 = vrot.slane %v2195, 4
      %v2198 = vshll.u32 %v2093, 16
      %v2200 = vrot.slane %v2198, 5
      %v2201 = vsel %vm1007, %v2196, %v2200
      %v2203 = vshrl.u32 %v2094, 16
      %v2205 = vrot.slane %v2203, 4
      %v2206 = vshll.u32 %v2094, 16
      %v2208 = vrot.slane %v2206, 5
      %v2209 = vor.u32 %v2205, %v2208
      %v2210 = vrot.slane %v2209, 4
      %v2212 = vshll.u32 %v2095, 16
      %v2214 = vrot.slane %v2212, 5
      %v2215 = vsel %vm1007, %v2210, %v2214
      %v2216 = vshrl.u32 %v2095, 16
      %v2218 = vrot.slane %v2216, 4
      %v2219 = vor.u32 %v2218, %v2214
      %v2220 = vrot.slane %v2219, 4
      %v2222 = vshll.u32 %v2096, 16
      %v2224 = vrot.slane %v2222, 5
      %v2225 = vsel %vm1007, %v2220, %v2224
      %v2227 = vshrl.u32 %v2097, 16
      %v2229 = vrot.slane %v2227, 4
      %v2230 = vshll.u32 %v2097, 16
      %v2232 = vrot.slane %v2230, 5
      %v2233 = vor.u32 %v2229, %v2232
      %v2234 = vrot.slane %v2233, 4
      %v2236 = vshll.u32 %v2098, 16
      %v2238 = vrot.slane %v2236, 5
      %v2239 = vsel %vm1007, %v2234, %v2238
      %v2240 = vshrl.u32 %v2098, 16
      %v2242 = vrot.slane %v2240, 4
      %v2243 = vor.u32 %v2242, %v2238
      %v2244 = vrot.slane %v2243, 4
      %v2246 = vshll.u32 %v2099, 16
      %v2248 = vrot.slane %v2246, 5
      %v2249 = vsel %vm1007, %v2244, %v2248
      %v2251 = vshrl.u32 %v2100, 16
      %v2253 = vrot.slane %v2251, 4
      %v2254 = vshll.u32 %v2100, 16
      %v2256 = vrot.slane %v2254, 5
      %v2257 = vor.u32 %v2253, %v2256
      %v2258 = vrot.slane %v2257, 4
      %v2260 = vshll.u32 %v2101, 16
      %v2262 = vrot.slane %v2260, 5
      %v2263 = vsel %vm1007, %v2258, %v2262
      %v2264 = vshrl.u32 %v2101, 16
      %v2266 = vrot.slane %v2264, 4
      %v2267 = vor.u32 %v2266, %v2262
      %v2268 = vrot.slane %v2267, 4
      %v2270 = vshll.u32 %v2102, 16
      %v2272 = vrot.slane %v2270, 5
      %v2273 = vsel %vm1007, %v2268, %v2272
      %v2275 = vshrl.u32 %v2103, 16
      %v2277 = vrot.slane %v2275, 4
      %v2278 = vshll.u32 %v2103, 16
      %v2280 = vrot.slane %v2278, 5
      %v2281 = vor.u32 %v2277, %v2280
      %v2282 = vrot.slane %v2281, 4
      %v2284 = vshll.u32 %v2104, 16
      %v2286 = vrot.slane %v2284, 5
      %v2287 = vsel %vm1007, %v2282, %v2286
      %v2288 = vshrl.u32 %v2104, 16
      %v2290 = vrot.slane %v2288, 4
      %v2291 = vor.u32 %v2290, %v2286
      %v2292 = vrot.slane %v2291, 4
      %v2294 = vshll.u32 %v2105, 16
      %v2296 = vrot.slane %v2294, 5
      %v2297 = vsel %vm1007, %v2292, %v2296
      %2298 = vrot.lane.b32.xlu0 %v2119, 112
      %v2299 = vpop.permute.xlu0 %2298
      %2300 = vrot.lane.b32.xlu0 %v2129, 112
      %v2301 = vpop.permute.xlu0 %2300
      %2302 = vrot.lane.b32.xlu0 %v2143, 112
      %v2303 = vpop.permute.xlu0 %2302
      %2304 = vrot.lane.b32.xlu0 %v2153, 112
      %v2305 = vpop.permute.xlu0 %2304
      %2306 = vrot.lane.b32.xlu0 %v2167, 112
      %v2307 = vpop.permute.xlu0 %2306
      %2308 = vrot.lane.b32.xlu0 %v2177, 112
      %v2309 = vpop.permute.xlu0 %2308
      %2310 = vrot.lane.b32.xlu0 %v2191, 112
      %v2311 = vpop.permute.xlu0 %2310
      %2312 = vrot.lane.b32.xlu0 %v2201, 112
      %v2313 = vpop.permute.xlu0 %2312
      %2314 = vrot.lane.b32.xlu0 %v2215, 112
      %v2315 = vpop.permute.xlu0 %2314
      %2316 = vrot.lane.b32.xlu0 %v2225, 112
      %v2317 = vpop.permute.xlu0 %2316
      %2318 = vrot.lane.b32.xlu0 %v2239, 112
      %v2319 = vpop.permute.xlu0 %2318
      %2320 = vrot.lane.b32.xlu0 %v2249, 112
      %v2321 = vpop.permute.xlu0 %2320
      %2322 = vrot.lane.b32.xlu0 %v2263, 112
      %v2323 = vpop.permute.xlu0 %2322
      %2324 = vrot.lane.b32.xlu0 %v2273, 112
      %v2325 = vpop.permute.xlu0 %2324
      %2326 = vrot.lane.b32.xlu0 %v2287, 112
      %v2327 = vpop.permute.xlu0 %2326
      %2328 = vrot.lane.b32.xlu0 %v2297, 112
      %v2329 = vpop.permute.xlu0 %2328
      %vm2346 = vcmask 1044352
      %2347 = vst.msk [vmem:[#allocation3] sm:$0xf] %vm2346, %v2299
      %2348 = vst.msk [vmem:[#allocation3 + $0x8] sm:$0xf] %vm2346, %v2301
      %2349 = vst.msk [vmem:[#allocation3 + $0x10] sm:$0xf] %vm2346, %v2303
      %2350 = vst.msk [vmem:[#allocation3 + $0x18] sm:$0xf] %vm2346, %v2305
      %2351 = vst.msk [vmem:[#allocation3 + $0x20] sm:$0xf] %vm2346, %v2307
      %2352 = vst.msk [vmem:[#allocation3 + $0x28] sm:$0xf] %vm2346, %v2309
      %2353 = vst.msk [vmem:[#allocation3 + $0x30] sm:$0xf] %vm2346, %v2311
      %2354 = vst.msk [vmem:[#allocation3 + $0x38] sm:$0xf] %vm2346, %v2313
      %2355 = vst.msk [vmem:[#allocation3 + $0x40] sm:$0xf] %vm2346, %v2315
      %2356 = vst.msk [vmem:[#allocation3 + $0x48] sm:$0xf] %vm2346, %v2317
      %2357 = vst.msk [vmem:[#allocation3 + $0x50] sm:$0xf] %vm2346, %v2319
      %2358 = vst.msk [vmem:[#allocation3 + $0x58] sm:$0xf] %vm2346, %v2321
      %2359 = vst.msk [vmem:[#allocation3 + $0x60] sm:$0xf] %vm2346, %v2323
      %2360 = vst.msk [vmem:[#allocation3 + $0x68] sm:$0xf] %vm2346, %v2325
      %2361 = vst.msk [vmem:[#allocation3 + $0x70] sm:$0xf] %vm2346, %v2327
      %2362 = vst.msk [vmem:[#allocation3 + $0x78] sm:$0xf] %vm2346, %v2329
      %v2363 = vld [vmem:[%s1984] sm:$0xe]
      %v2364 = vld [vmem:[%s1984 + $0x4] sm:$0xf]
      %v2365 = vld [vmem:[%s1984 + $0x8] sm:$0x1]
      %v2366 = vld [vmem:[%s1984 + $0xc] sm:$0xe]
      %v2367 = vld [vmem:[%s1984 + $0x10] sm:$0xf]
      %v2368 = vld [vmem:[%s1984 + $0x14] sm:$0x1]
      %v2369 = vld [vmem:[%s1984 + $0x18] sm:$0xe]
      %v2370 = vld [vmem:[%s1984 + $0x1c] sm:$0xf]
      %v2371 = vld [vmem:[%s1984 + $0x20] sm:$0x1]
      %v2372 = vld [vmem:[%s1984 + $0x24] sm:$0xe]
      %v2373 = vld [vmem:[%s1984 + $0x28] sm:$0xf]
      %v2374 = vld [vmem:[%s1984 + $0x2c] sm:$0x1]
      %v2375 = vld [vmem:[%s1984 + $0x30] sm:$0xe]
      %v2376 = vld [vmem:[%s1984 + $0x34] sm:$0xf]
      %v2377 = vld [vmem:[%s1984 + $0x38] sm:$0x1]
      %v2378 = vld [vmem:[%s1984 + $0x3c] sm:$0xe]
      %v2379 = vld [vmem:[%s1984 + $0x40] sm:$0xf]
      %v2380 = vld [vmem:[%s1984 + $0x44] sm:$0x1]
      %v2381 = vld [vmem:[%s1984 + $0x48] sm:$0xe]
      %v2382 = vld [vmem:[%s1984 + $0x4c] sm:$0xf]
      %v2383 = vld [vmem:[%s1984 + $0x50] sm:$0x1]
      %v2384 = vld [vmem:[%s1984 + $0x54] sm:$0xe]
      %v2385 = vld [vmem:[%s1984 + $0x58] sm:$0xf]
      %v2386 = vld [vmem:[%s1984 + $0x5c] sm:$0x1]
      %v2411 = vrot.slane %v2363, 5
      %v2412 = vrot.slane %v2411, 4
      %v2413 = vrot.slane %v2364, 5
      %v2414 = vsel %vm1315, %v2412, %v2413
      %v2415 = vrot.slane %v2413, 4
      %v2416 = vrot.slane %v2365, 5
      %v2417 = vsel %vm1315, %v2415, %v2416
      %v2418 = vrot.slane %v2366, 5
      %v2419 = vrot.slane %v2418, 4
      %v2420 = vrot.slane %v2367, 5
      %v2421 = vsel %vm1315, %v2419, %v2420
      %v2422 = vrot.slane %v2420, 4
      %v2423 = vrot.slane %v2368, 5
      %v2424 = vsel %vm1315, %v2422, %v2423
      %v2425 = vrot.slane %v2369, 5
      %v2426 = vrot.slane %v2425, 4
      %v2427 = vrot.slane %v2370, 5
      %v2428 = vsel %vm1315, %v2426, %v2427
      %v2429 = vrot.slane %v2427, 4
      %v2430 = vrot.slane %v2371, 5
      %v2431 = vsel %vm1315, %v2429, %v2430
      %v2432 = vrot.slane %v2372, 5
      %v2433 = vrot.slane %v2432, 4
      %v2434 = vrot.slane %v2373, 5
      %v2435 = vsel %vm1315, %v2433, %v2434
      %v2436 = vrot.slane %v2434, 4
      %v2437 = vrot.slane %v2374, 5
      %v2438 = vsel %vm1315, %v2436, %v2437
      %v2439 = vrot.slane %v2375, 5
      %v2440 = vrot.slane %v2439, 4
      %v2441 = vrot.slane %v2376, 5
      %v2442 = vsel %vm1315, %v2440, %v2441
      %v2443 = vrot.slane %v2441, 4
      %v2444 = vrot.slane %v2377, 5
      %v2445 = vsel %vm1315, %v2443, %v2444
      %v2446 = vrot.slane %v2378, 5
      %v2447 = vrot.slane %v2446, 4
      %v2448 = vrot.slane %v2379, 5
      %v2449 = vsel %vm1315, %v2447, %v2448
      %v2450 = vrot.slane %v2448, 4
      %v2451 = vrot.slane %v2380, 5
      %v2452 = vsel %vm1315, %v2450, %v2451
      %v2453 = vrot.slane %v2381, 5
      %v2454 = vrot.slane %v2453, 4
      %v2455 = vrot.slane %v2382, 5
      %v2456 = vsel %vm1315, %v2454, %v2455
      %v2457 = vrot.slane %v2455, 4
      %v2458 = vrot.slane %v2383, 5
      %v2459 = vsel %vm1315, %v2457, %v2458
      %v2460 = vrot.slane %v2384, 5
      %v2461 = vrot.slane %v2460, 4
      %v2462 = vrot.slane %v2385, 5
      %v2463 = vsel %vm1315, %v2461, %v2462
      %v2464 = vrot.slane %v2462, 4
      %v2465 = vrot.slane %v2386, 5
      %v2466 = vsel %vm1315, %v2464, %v2465
      %2483 = vst.msk [vmem:[#allocation3 + $0x4] sm:$0xf] %vm699, %v2414
      %2484 = vst.msk [vmem:[#allocation3 + $0xc] sm:$0xf] %vm699, %v2417
      %2485 = vst.msk [vmem:[#allocation3 + $0x14] sm:$0xf] %vm699, %v2421
      %2486 = vst.msk [vmem:[#allocation3 + $0x1c] sm:$0xf] %vm699, %v2424
      %2487 = vst.msk [vmem:[#allocation3 + $0x24] sm:$0xf] %vm699, %v2428
      %2488 = vst.msk [vmem:[#allocation3 + $0x2c] sm:$0xf] %vm699, %v2431
      %2489 = vst.msk [vmem:[#allocation3 + $0x34] sm:$0xf] %vm699, %v2435
      %2490 = vst.msk [vmem:[#allocation3 + $0x3c] sm:$0xf] %vm699, %v2438
      %2491 = vst.msk [vmem:[#allocation3 + $0x44] sm:$0xf] %vm699, %v2442
      %2492 = vst.msk [vmem:[#allocation3 + $0x4c] sm:$0xf] %vm699, %v2445
      %2493 = vst.msk [vmem:[#allocation3 + $0x54] sm:$0xf] %vm699, %v2449
      %2494 = vst.msk [vmem:[#allocation3 + $0x5c] sm:$0xf] %vm699, %v2452
      %2495 = vst.msk [vmem:[#allocation3 + $0x64] sm:$0xf] %vm699, %v2456
      %2496 = vst.msk [vmem:[#allocation3 + $0x6c] sm:$0xf] %vm699, %v2459
      %2497 = vst.msk [vmem:[#allocation3 + $0x74] sm:$0xf] %vm699, %v2463
      %2498 = vst.msk [vmem:[#allocation3 + $0x7c] sm:$0xf] %vm699, %v2466
      %v2499 = vld [vmem:[#allocation3] sm:$0xff]
      %v2500 = vld [vmem:[#allocation3 + $0x8] sm:$0xff]
      %v2501 = vld [vmem:[#allocation3 + $0x10] sm:$0xff]
      %v2502 = vld [vmem:[#allocation3 + $0x18] sm:$0xff]
      %v2503 = vld [vmem:[#allocation3 + $0x20] sm:$0xff]
      %v2504 = vld [vmem:[#allocation3 + $0x28] sm:$0xff]
      %v2505 = vld [vmem:[#allocation3 + $0x30] sm:$0xff]
      %v2506 = vld [vmem:[#allocation3 + $0x38] sm:$0xff]
      %v2507 = vld [vmem:[#allocation3 + $0x40] sm:$0xff]
      %v2508 = vld [vmem:[#allocation3 + $0x48] sm:$0xff]
      %v2509 = vld [vmem:[#allocation3 + $0x50] sm:$0xff]
      %v2510 = vld [vmem:[#allocation3 + $0x58] sm:$0xff]
      %v2511 = vld [vmem:[#allocation3 + $0x60] sm:$0xff]
      %v2512 = vld [vmem:[#allocation3 + $0x68] sm:$0xff]
      %v2513 = vld [vmem:[#allocation3 + $0x70] sm:$0xff]
      %v2514 = vld [vmem:[#allocation3 + $0x78] sm:$0xff]
      %v2515 = vld [vmem:[%s3] sm:$0xf]
      %v2516 = vld [vmem:[%s3 + $0x4] sm:$0xf]
      %v2517 = vld [vmem:[%s3 + $0x8] sm:$0xf]
      %v2518 = vld [vmem:[%s3 + $0xc] sm:$0xf]
      %v2519 = vld [vmem:[%s3 + $0x10] sm:$0xf]
      %v2520 = vld [vmem:[%s3 + $0x14] sm:$0xf]
      %v2521 = vld [vmem:[%s3 + $0x18] sm:$0xf]
      %v2522 = vld [vmem:[%s3 + $0x1c] sm:$0xf]
      %v2523 = vld [vmem:[%s3 + $0x20] sm:$0xf]
      %v2524 = vld [vmem:[%s3 + $0x24] sm:$0xf]
      %v2525 = vld [vmem:[%s3 + $0x28] sm:$0xf]
      %v2526 = vld [vmem:[%s3 + $0x2c] sm:$0xf]
      %v2527 = vld [vmem:[%s3 + $0x30] sm:$0xf]
      %v2528 = vld [vmem:[%s3 + $0x34] sm:$0xf]
      %v2529 = vld [vmem:[%s3 + $0x38] sm:$0xf]
      %v2530 = vld [vmem:[%s3 + $0x3c] sm:$0xf]
      %v2531 = vld [vmem:[%s3 + $0x40] sm:$0xf]
      %v2532 = vld [vmem:[%s3 + $0x44] sm:$0xf]
      %v2549 = vunpack.c.l.b16 %v2499
      %v2550 = vunpack.c.h.b16 %v2499
      %v2551 = vunpack.c.l.b16 %v2500
      %v2552 = vunpack.c.h.b16 %v2500
      %v2553 = vunpack.c.l.b16 %v2501
      %v2554 = vunpack.c.h.b16 %v2501
      %v2555 = vunpack.c.l.b16 %v2502
      %v2556 = vunpack.c.h.b16 %v2502
      %v2557 = vunpack.c.l.b16 %v2503
      %v2558 = vunpack.c.h.b16 %v2503
      %v2559 = vunpack.c.l.b16 %v2504
      %v2560 = vunpack.c.h.b16 %v2504
      %v2561 = vunpack.c.l.b16 %v2505
      %v2562 = vunpack.c.h.b16 %v2505
      %v2563 = vunpack.c.l.b16 %v2506
      %v2564 = vunpack.c.h.b16 %v2506
      %v2565 = vunpack.c.l.b16 %v2507
      %v2566 = vunpack.c.h.b16 %v2507
      %v2567 = vunpack.c.l.b16 %v2508
      %v2568 = vunpack.c.h.b16 %v2508
      %v2569 = vunpack.c.l.b16 %v2509
      %v2570 = vunpack.c.h.b16 %v2509
      %v2571 = vunpack.c.l.b16 %v2510
      %v2572 = vunpack.c.h.b16 %v2510
      %v2573 = vunpack.c.l.b16 %v2511
      %v2574 = vunpack.c.h.b16 %v2511
      %v2575 = vunpack.c.l.b16 %v2512
      %v2576 = vunpack.c.h.b16 %v2512
      %v2577 = vunpack.c.l.b16 %v2513
      %v2578 = vunpack.c.h.b16 %v2513
      %v2579 = vunpack.c.l.b16 %v2514
      %v2580 = vunpack.c.h.b16 %v2514
      %v2581 = vpack.c.b16 %v2551, %v2549
      %v2582 = vpack.c.b16 %v2552, %v2550
      %v2583 = vpack.c.b16 %v2555, %v2553
      %v2584 = vpack.c.b16 %v2556, %v2554
      %v2585 = vpack.c.b16 %v2559, %v2557
      %v2586 = vpack.c.b16 %v2560, %v2558
      %v2587 = vpack.c.b16 %v2563, %v2561
      %v2588 = vpack.c.b16 %v2564, %v2562
      %v2589 = vpack.c.b16 %v2567, %v2565
      %v2590 = vpack.c.b16 %v2568, %v2566
      %v2591 = vpack.c.b16 %v2571, %v2569
      %v2592 = vpack.c.b16 %v2572, %v2570
      %v2593 = vpack.c.b16 %v2575, %v2573
      %v2594 = vpack.c.b16 %v2576, %v2574
      %v2595 = vpack.c.b16 %v2579, %v2577
      %v2596 = vpack.c.b16 %v2580, %v2578
      %v2623 = vunpack.c.l.b16 %v2515
      %v2624 = vunpack.c.l.b16 %v2516
      %v2625 = vunpack.c.l.b16 %v2517
      %v2626 = vunpack.c.l.b16 %v2518
      %v2627 = vunpack.c.l.b16 %v2519
      %v2628 = vunpack.c.l.b16 %v2520
      %v2629 = vunpack.c.l.b16 %v2521
      %v2630 = vunpack.c.l.b16 %v2522
      %v2631 = vunpack.c.l.b16 %v2523
      %v2632 = vunpack.c.l.b16 %v2524
      %v2633 = vunpack.c.l.b16 %v2525
      %v2634 = vunpack.c.l.b16 %v2526
      %v2635 = vunpack.c.l.b16 %v2527
      %v2636 = vunpack.c.l.b16 %v2528
      %v2637 = vunpack.c.l.b16 %v2529
      %v2638 = vunpack.c.l.b16 %v2530
      %v2639 = vunpack.c.l.b16 %v2531
      %v2640 = vunpack.c.l.b16 %v2532
      %v2641 = vpack.c.b16 %v2624, %v2623
      %v2642 = vpack.c.b16 %v2626, %v2625
      %v2643 = vpack.c.b16 %v2628, %v2627
      %v2644 = vpack.c.b16 %v2630, %v2629
      %v2645 = vpack.c.b16 %v2632, %v2631
      %v2646 = vpack.c.b16 %v2634, %v2633
      %v2647 = vpack.c.b16 %v2636, %v2635
      %v2648 = vpack.c.b16 %v2638, %v2637
      %v2649 = vpack.c.b16 %v2640, %v2639
      %vm2659 = vcmask 130048
      %v2661 = vsel %vm2659, %v2582, 0
      %v2664 = vsel %vm2659, %v2584, 0
      %v2667 = vsel %vm2659, %v2586, 0
      %v2670 = vsel %vm2659, %v2588, 0
      %v2673 = vsel %vm2659, %v2590, 0
      %v2676 = vsel %vm2659, %v2592, 0
      %v2679 = vsel %vm2659, %v2594, 0
      %v2682 = vsel %vm2659, %v2596, 0
      %2684 = vmatpush.bf16.msra.mxu0 %v2648
      %2685 = vmatpush.bf16.msra.mxu0 %v2647
      %2686 = vmatpush.bf16.msra.mxu0 %v2646
      %2687 = vmatpush.bf16.msra.mxu0 %v2645
      %2688 = vmatpush.bf16.msra.mxu0 %v2644
      %2689 = vmatpush.bf16.msra.mxu0 %v2643
      %2690 = vmatpush.bf16.msra.mxu0 %v2642
      %2691 = vmatpush.bf16.msra.mxu0 %v2641
      %2692 = vmatmul.bf16.gmra.mxu0 %v2581
      %v2693 = vpop.f32.mrf.mxu0
      %v2694 = vadd.f32 0.0, %v2693
      %v2695 = vpop.f32.mrf.mxu0
      %v2696 = vadd.f32 0.0, %v2695
      %2697 = vmatmul.bf16.gmra.mxu0 %v2583
      %v2698 = vpop.f32.mrf.mxu0
      %v2699 = vadd.f32 0.0, %v2698
      %v2700 = vpop.f32.mrf.mxu0
      %v2701 = vadd.f32 0.0, %v2700
      %2702 = vmatmul.bf16.gmra.mxu0 %v2585
      %v2703 = vpop.f32.mrf.mxu0
      %v2704 = vadd.f32 0.0, %v2703
      %v2705 = vpop.f32.mrf.mxu0
      %v2706 = vadd.f32 0.0, %v2705
      %2707 = vmatmul.bf16.gmra.mxu0 %v2587
      %v2708 = vpop.f32.mrf.mxu0
      %v2709 = vadd.f32 0.0, %v2708
      %v2710 = vpop.f32.mrf.mxu0
      %v2711 = vadd.f32 0.0, %v2710
      %2712 = vmatmul.bf16.gmra.mxu0 %v2589
      %v2713 = vpop.f32.mrf.mxu0
      %v2714 = vadd.f32 0.0, %v2713
      %v2715 = vpop.f32.mrf.mxu0
      %v2716 = vadd.f32 0.0, %v2715
      %2717 = vmatmul.bf16.gmra.mxu0 %v2591
      %v2718 = vpop.f32.mrf.mxu0
      %v2719 = vadd.f32 0.0, %v2718
      %v2720 = vpop.f32.mrf.mxu0
      %v2721 = vadd.f32 0.0, %v2720
      %2722 = vmatmul.bf16.gmra.mxu0 %v2593
      %v2723 = vpop.f32.mrf.mxu0
      %v2724 = vadd.f32 0.0, %v2723
      %v2725 = vpop.f32.mrf.mxu0
      %v2726 = vadd.f32 0.0, %v2725
      %2727 = vmatmul.bf16.gmra.mxu0 %v2595
      %v2728 = vpop.f32.mrf.mxu0
      %v2729 = vadd.f32 0.0, %v2728
      %v2730 = vpop.f32.mrf.mxu0
      %v2731 = vadd.f32 0.0, %v2730
      %2732 = vdwg.mxu0
      %2733 = vmatpush.bf16.msra.mxu0 0
      %2734 = vmatpush.bf16.msra.mxu0 0
      %2735 = vmatpush.bf16.msra.mxu0 0
      %2736 = vmatpush.bf16.msra.mxu0 0
      %2737 = vmatpush.bf16.msra.mxu0 0
      %2738 = vmatpush.bf16.msra.mxu0 0
      %2739 = vmatpush.bf16.msra.mxu0 0
      %2740 = vmatpush.bf16.msra.mxu0 %v2649
      %2741 = vmatmul.bf16.gmra.mxu0 %v2661
      %v2742 = vpop.f32.mrf.mxu0
      %v2743 = vadd.f32 %v2694, %v2742
      %v2744 = vpop.f32.mrf.mxu0
      %v2745 = vadd.f32 %v2696, %v2744
      %2746 = vmatmul.bf16.gmra.mxu0 %v2664
      %v2747 = vpop.f32.mrf.mxu0
      %v2748 = vadd.f32 %v2699, %v2747
      %v2749 = vpop.f32.mrf.mxu0
      %v2750 = vadd.f32 %v2701, %v2749
      %2751 = vmatmul.bf16.gmra.mxu0 %v2667
      %v2752 = vpop.f32.mrf.mxu0
      %v2753 = vadd.f32 %v2704, %v2752
      %v2754 = vpop.f32.mrf.mxu0
      %v2755 = vadd.f32 %v2706, %v2754
      %2756 = vmatmul.bf16.gmra.mxu0 %v2670
      %v2757 = vpop.f32.mrf.mxu0
      %v2758 = vadd.f32 %v2709, %v2757
      %v2759 = vpop.f32.mrf.mxu0
      %v2760 = vadd.f32 %v2711, %v2759
      %2761 = vmatmul.bf16.gmra.mxu0 %v2673
      %v2762 = vpop.f32.mrf.mxu0
      %v2763 = vadd.f32 %v2714, %v2762
      %v2764 = vpop.f32.mrf.mxu0
      %v2765 = vadd.f32 %v2716, %v2764
      %2766 = vmatmul.bf16.gmra.mxu0 %v2676
      %v2767 = vpop.f32.mrf.mxu0
      %v2768 = vadd.f32 %v2719, %v2767
      %v2769 = vpop.f32.mrf.mxu0
      %v2770 = vadd.f32 %v2721, %v2769
      %2771 = vmatmul.bf16.gmra.mxu0 %v2679
      %v2772 = vpop.f32.mrf.mxu0
      %v2773 = vadd.f32 %v2724, %v2772
      %v2774 = vpop.f32.mrf.mxu0
      %v2775 = vadd.f32 %v2726, %v2774
      %2776 = vmatmul.bf16.gmra.mxu0 %v2682
      %v2777 = vpop.f32.mrf.mxu0
      %v2778 = vadd.f32 %v2729, %v2777
      %v2779 = vpop.f32.mrf.mxu0
      %v2780 = vadd.f32 %v2731, %v2779
      %2781 = vdwg.mxu0
      %v2782 = vpack.c.bf16 %v2743, %v2743
      %v2783 = vpack.c.bf16 %v2745, %v2745
      %v2784 = vpack.c.bf16 %v2748, %v2748
      %v2785 = vpack.c.bf16 %v2750, %v2750
      %v2786 = vpack.c.bf16 %v2753, %v2753
      %v2787 = vpack.c.bf16 %v2755, %v2755
      %v2788 = vpack.c.bf16 %v2758, %v2758
      %v2789 = vpack.c.bf16 %v2760, %v2760
      %v2790 = vpack.c.bf16 %v2763, %v2763
      %v2791 = vpack.c.bf16 %v2765, %v2765
      %v2792 = vpack.c.bf16 %v2768, %v2768
      %v2793 = vpack.c.bf16 %v2770, %v2770
      %v2794 = vpack.c.bf16 %v2773, %v2773
      %v2795 = vpack.c.bf16 %v2775, %v2775
      %v2796 = vpack.c.bf16 %v2778, %v2778
      %v2797 = vpack.c.bf16 %v2780, %v2780
      %2798 = vst.msk [vmem:[%s454] sm:$0xf] %vm699, %v2782
      %2799 = vst.msk [vmem:[%s454 + $0x4] sm:$0xf] %vm699, %v2783
      %2800 = vst.msk [vmem:[%s454 + $0x8] sm:$0xf] %vm699, %v2784
      %2801 = vst.msk [vmem:[%s454 + $0xc] sm:$0xf] %vm699, %v2785
      %2802 = vst.msk [vmem:[%s454 + $0x10] sm:$0xf] %vm699, %v2786
      %2803 = vst.msk [vmem:[%s454 + $0x14] sm:$0xf] %vm699, %v2787
      %2804 = vst.msk [vmem:[%s454 + $0x18] sm:$0xf] %vm699, %v2788
      %2805 = vst.msk [vmem:[%s454 + $0x1c] sm:$0xf] %vm699, %v2789
      %2806 = vst.msk [vmem:[%s454 + $0x20] sm:$0xf] %vm699, %v2790
      %2807 = vst.msk [vmem:[%s454 + $0x24] sm:$0xf] %vm699, %v2791
      %2808 = vst.msk [vmem:[%s454 + $0x28] sm:$0xf] %vm699, %v2792
      %2809 = vst.msk [vmem:[%s454 + $0x2c] sm:$0xf] %vm699, %v2793
      %2810 = vst.msk [vmem:[%s454 + $0x30] sm:$0xf] %vm699, %v2794
      %2811 = vst.msk [vmem:[%s454 + $0x34] sm:$0xf] %vm699, %v2795
      %2812 = vst.msk [vmem:[%s454 + $0x38] sm:$0xf] %vm699, %v2796
      %2813 = vst.msk [vmem:[%s454 + $0x3c] sm:$0xf] %vm699, %v2797
      %v2814 = vsel %vm2659, %v2743, 0.0
      %v2815 = vsel %vm2659, %v2745, 0.0
      %v2816 = vadd.f32 %v2814, %v2815
      %v2817 = vsel %vm2659, %v2748, 0.0
      %v2818 = vadd.f32 %v2816, %v2817
      %v2819 = vsel %vm2659, %v2750, 0.0
      %v2820 = vadd.f32 %v2818, %v2819
      %v2821 = vsel %vm2659, %v2753, 0.0
      %v2822 = vadd.f32 %v2820, %v2821
      %v2823 = vsel %vm2659, %v2755, 0.0
      %v2824 = vadd.f32 %v2822, %v2823
      %v2825 = vsel %vm2659, %v2758, 0.0
      %v2826 = vadd.f32 %v2824, %v2825
      %v2827 = vsel %vm2659, %v2760, 0.0
      %v2828 = vadd.f32 %v2826, %v2827
      %v2829 = vsel %vm2659, %v2763, 0.0
      %v2830 = vadd.f32 %v2828, %v2829
      %v2831 = vsel %vm2659, %v2765, 0.0
      %v2832 = vadd.f32 %v2830, %v2831
      %v2833 = vsel %vm2659, %v2768, 0.0
      %v2834 = vadd.f32 %v2832, %v2833
      %v2835 = vsel %vm2659, %v2770, 0.0
      %v2836 = vadd.f32 %v2834, %v2835
      %v2837 = vsel %vm2659, %v2773, 0.0
      %v2838 = vadd.f32 %v2836, %v2837
      %v2839 = vsel %vm2659, %v2775, 0.0
      %v2840 = vadd.f32 %v2838, %v2839
      %v2841 = vsel %vm2659, %v2778, 0.0
      %v2842 = vadd.f32 %v2840, %v2841
      %v2843 = vsel %vm2659, %v2780, 0.0
      %v2844 = vadd.f32 %v2842, %v2843
      %v2845 = vrot.slane %v2844, 4
      %v2846 = vadd.f32 %v2844, %v2845
      %v2847 = vrot.slane %v2846, 2
      %v2848 = vadd.f32 %v2846, %v2847
      %v2849 = vrot.slane %v2848, 1
      %v2850 = vadd.f32 %v2848, %v2849
      %v2851 = vmul.f32 %v2743, %v2743
      %v2852 = vmul.f32 %v2745, %v2745
      %v2853 = vmul.f32 %v2748, %v2748
      %v2854 = vmul.f32 %v2750, %v2750
      %v2855 = vmul.f32 %v2753, %v2753
      %v2856 = vmul.f32 %v2755, %v2755
      %v2857 = vmul.f32 %v2758, %v2758
      %v2858 = vmul.f32 %v2760, %v2760
      %v2859 = vmul.f32 %v2763, %v2763
      %v2860 = vmul.f32 %v2765, %v2765
      %v2861 = vmul.f32 %v2768, %v2768
      %v2862 = vmul.f32 %v2770, %v2770
      %v2863 = vmul.f32 %v2773, %v2773
      %v2864 = vmul.f32 %v2775, %v2775
      %v2865 = vmul.f32 %v2778, %v2778
      %v2866 = vmul.f32 %v2780, %v2780
      %v2867 = vsel %vm2659, %v2851, 0.0
      %v2868 = vsel %vm2659, %v2852, 0.0
      %v2869 = vadd.f32 %v2867, %v2868
      %v2870 = vsel %vm2659, %v2853, 0.0
      %v2871 = vadd.f32 %v2869, %v2870
      %v2872 = vsel %vm2659, %v2854, 0.0
      %v2873 = vadd.f32 %v2871, %v2872
      %v2874 = vsel %vm2659, %v2855, 0.0
      %v2875 = vadd.f32 %v2873, %v2874
      %v2876 = vsel %vm2659, %v2856, 0.0
      %v2877 = vadd.f32 %v2875, %v2876
      %v2878 = vsel %vm2659, %v2857, 0.0
      %v2879 = vadd.f32 %v2877, %v2878
      %v2880 = vsel %vm2659, %v2858, 0.0
      %v2881 = vadd.f32 %v2879, %v2880
      %v2882 = vsel %vm2659, %v2859, 0.0
      %v2883 = vadd.f32 %v2881, %v2882
      %v2884 = vsel %vm2659, %v2860, 0.0
      %v2885 = vadd.f32 %v2883, %v2884
      %v2886 = vsel %vm2659, %v2861, 0.0
      %v2887 = vadd.f32 %v2885, %v2886
      %v2888 = vsel %vm2659, %v2862, 0.0
      %v2889 = vadd.f32 %v2887, %v2888
      %v2890 = vsel %vm2659, %v2863, 0.0
      %v2891 = vadd.f32 %v2889, %v2890
      %v2892 = vsel %vm2659, %v2864, 0.0
      %v2893 = vadd.f32 %v2891, %v2892
      %v2894 = vsel %vm2659, %v2865, 0.0
      %v2895 = vadd.f32 %v2893, %v2894
      %v2896 = vsel %vm2659, %v2866, 0.0
      %v2897 = vadd.f32 %v2895, %v2896
      %v2898 = vrot.slane %v2897, 4
      %v2899 = vadd.f32 %v2897, %v2898
      %v2900 = vrot.slane %v2899, 2
      %v2901 = vadd.f32 %v2899, %v2900
      %v2902 = vrot.slane %v2901, 1
      %v2903 = vadd.f32 %v2901, %v2902
      %vm2904 = vcmask 1040384
      %v2905 = vsel %vm2904, %v2850, %v2903
      %vm2906 = vcmask 123904
      %2907 = vst.msk [vmem:[%s463] sm:$0x3] %vm2906, %v2905
      %s2908 = smul.u32 %s23, 2
      %s2909 = sadd.s32 %s2908, %s24
      %s2910 = smul.u32 16, %s2909
      %p2911 = scmp.lt.s32.totalorder %s2910, 63
      %s2912 = scalar_select %p2911, %s2910, 63
      %s2913 = smul.addr %s2912, 4
      %s2914 = scalar_lea.vmem %s6, %s2913
      %s2915 = smul.u32 %s23, 2
      %s2916 = sadd.s32 %s2915, %s24
      %p2917 = scmp.lt.s32.totalorder %s2916, 3
      %s2918 = scalar_select %p2917, %s2916, 3
      %s2919 = smul.addr %s2918, 2
      %s2920 = scalar_lea.vmem %s7, %s2919
      // Predicated region
      $region45: #{decoder_forward.5} parent=43 // pred_check
        %p2921 = pneg %p216
      $region46: #{decoder_forward.5} parent=43 // pred_check_branch
        %2923 = sbr.rel (%p2921) target = $region48
      $region47: #{decoder_forward.5} parent=43 // pred_region
        %s2924 = smul.u32 %s23, 2
        %s2925 = sadd.s32 %s2924, %s24
        %s2926 = smul.u32 16, %s2925
      $region48: #{decoder_forward.5} parent=43 // pred_fallthru
        _
      // Predicated region
      $region49: #{decoder_forward.5} parent=43 // pred_check
        %p2927 = pneg %p246
      $region50: #{decoder_forward.5} parent=43 // pred_check_branch
        %2929 = sbr.rel (%p2927) target = $region52
      $region51: #{decoder_forward.5} parent=43 // pred_region
        %s2930 = smul.u32 %s23, 2
        %s2931 = sadd.s32 %s2930, %s24
      $region52: #{decoder_forward.5} parent=43 // pred_fallthru
        _
    $region44: #{decoder_forward.5} parent=5 // pred_fallthru
      _
    %p2932 = scmp.le.s32.totalorder 2, %s14
    // Predicated region
    $region53: #{decoder_forward.5} parent=5 // pred_check
      %p2933 = pneg %p2932
    $region54: #{decoder_forward.5} parent=5 // pred_check_branch
      %2935 = sbr.rel (%p2933) target = $region56
    $region55: #{decoder_forward.5} parent=5 // pred_region
      %s2936 = ssub.s32 %s14, 2
      // Predicated region
      $region57: #{decoder_forward.5} parent=55 // pred_check
        %p2937 = pneg %p222
      $region58: #{decoder_forward.5} parent=55 // pred_check_branch
        %2939 = sbr.rel (%p2937) target = $region60
      $region59: #{decoder_forward.5} parent=55 // pred_region
        %s2940 = smul.u32 %s25, 2
        %s2941 = sadd.s32 %s2940, %s26
        %s2942 = smul.u32 16, %s2941
        %p2943 = scmp.lt.s32.totalorder %s2942, 63
        %s2944 = scalar_select %p2943, %s2942, 63
        %s2945 = smul.addr %s2944, 4
        %s2946 = scalar_lea.vmem %s6, %s2945
      $region60: #{decoder_forward.5} parent=55 // pred_fallthru
        _
      // Predicated region
      $region61: #{decoder_forward.5} parent=55 // pred_check
        %p2947 = pneg %p252
      $region62: #{decoder_forward.5} parent=55 // pred_check_branch
        %2949 = sbr.rel (%p2947) target = $region64
      $region63: #{decoder_forward.5} parent=55 // pred_region
        %s2950 = smul.u32 %s25, 2
        %s2951 = sadd.s32 %s2950, %s26
        %p2952 = scmp.lt.s32.totalorder %s2951, 3
        %s2953 = scalar_select %p2952, %s2951, 3
        %s2954 = smul.addr %s2953, 2
        %s2955 = scalar_lea.vmem %s7, %s2954
      $region64: #{decoder_forward.5} parent=55 // pred_fallthru
        _
    $region56: #{decoder_forward.5} parent=5 // pred_fallthru
      _
  $region6: #{decoder_forward.5} parent=0 // loop_footer
    %s18 = sadd.s32 1, %s14
  $region7: #{decoder_forward.5} parent=0 // loop_footer_branch
    %13 = sbr.rel target = $region3
  $region8: #{decoder_forward.5} parent=0 // loop_exit
    _

</llo_original>
